<compile_context>
chip_gen: v6e
topology: v6e:2x2x1
jax: 0.10.0
libtpu: 0.0.40
codegen_flags: <defaults>
</compile_context>

<pallas_src>
import jax
import jax.numpy as jnp
from jax.experimental import pallas as pl
from jax.experimental.pallas import tpu as pltpu


_VMEM_LIMIT = 32 * 1024 * 1024  # explicit scoped-VMEM budget (safe on v5e/v6e/v7x)


# ----------------------------------------------------------------------------
# helpers
# ----------------------------------------------------------------------------
def _round_up(x, m):
    return (x + m - 1) // m * m


def _pick_tile(full, cap, quantum=128):
    """Largest multiple of `quantum` that divides `full`, capped at `cap`."""
    if full <= cap:
        return full
    t = (cap // quantum) * quantum
    while t > quantum and full % t != 0:
        t -= quantum
    return t


# ----------------------------------------------------------------------------
# Pallas kernels
# ----------------------------------------------------------------------------
def _conv_lrelu_kernel(a_ref, w_ref, b_ref, o_ref):
    # a: (TM, K) bf16   w: (K, C) bf16   b: (1, C) f32   o: (TM, C) bf16
    y = jnp.dot(a_ref[...], w_ref[...], preferred_element_type=jnp.float32)
    y = y + b_ref[...]
    o_ref[...] = jnp.maximum(y, 0.2 * y).astype(o_ref.dtype)


def _conv_in_lrelu_kernel(a_ref, w_ref, b_ref, o_ref, acc_ref):
    # grid = (N, C_tiles, K_tiles); one sample per n, K accumulated in f32.
    # a: (P, TK) bf16   w: (TK, TC) bf16   b: (1, TC) f32
    # o: (P, TC) bf16   acc: (P, TC) f32
    k = pl.program_id(2)

    @pl.when(k == 0)
    def _():
        acc_ref[...] = jnp.zeros_like(acc_ref)

    acc_ref[...] += jnp.dot(a_ref[...], w_ref[...],
                            preferred_element_type=jnp.float32)

    @pl.when(k == pl.num_programs(2) - 1)
    def _():
        y = acc_ref[...] + b_ref[...]
        # InstanceNorm2d defaults: affine=False, biased variance, eps=1e-5.
        # Per-sample, per-channel statistics over the full spatial extent P.
        mean = jnp.mean(y, axis=0, keepdims=True)
        var = jnp.mean((y - mean) * (y - mean), axis=0, keepdims=True)
        yn = (y - mean) * jax.lax.rsqrt(var + 1e-5)
        o_ref[...] = jnp.maximum(yn, 0.2 * yn).astype(o_ref.dtype)


def _conv_sigmoid_kernel(a_ref, w_ref, o_ref, acc_ref):
    # grid = (M_tiles, K_tiles).  Cout is zero-padded to 128 for lane-dense
    # stores; the real channel lives in column 0.
    # a: (TM, TK) bf16   w: (TK, 128) bf16   o: (TM, 128) f32   acc f32
    k = pl.program_id(1)

    @pl.when(k == 0)
    def _():
        acc_ref[...] = jnp.zeros_like(acc_ref)

    acc_ref[...] += jnp.dot(a_ref[...], w_ref[...],
                            preferred_element_type=jnp.float32)

    @pl.when(k == pl.num_programs(1) - 1)
    def _():
        o_ref[...] = jax.nn.sigmoid(acc_ref[...]).astype(o_ref.dtype)


# ----------------------------------------------------------------------------
# pallas_call wrappers
# ----------------------------------------------------------------------------
def conv_lrelu(a, w, b, *, tm_cap=256):
    # a: (M, K) bf16, w: (K, C) bf16, b: (C,) f32 -> (M, C) bf16
    M, K = a.shape
    C = w.shape[1]
    tm = min(tm_cap, _round_up(M, 8))
    Mp = _round_up(M, tm)
    if Mp != M:
        a = jnp.pad(a, ((0, Mp - M), (0, 0)))
    out = pl.pallas_call(
        _conv_lrelu_kernel,
        out_shape=jax.ShapeDtypeStruct((Mp, C), jnp.bfloat16),
        grid=(Mp // tm,),
        in_specs=[
            pl.BlockSpec((tm, K), lambda i: (i, 0)),
            pl.BlockSpec((K, C), lambda i: (0, 0)),
            pl.BlockSpec((1, C), lambda i: (0, 0)),
        ],
        out_specs=pl.BlockSpec((tm, C), lambda i: (i, 0)),
        compiler_params=pltpu.CompilerParams(
            dimension_semantics=("parallel",),
            vmem_limit_bytes=_VMEM_LIMIT),
    )(a, w, b.reshape(1, C).astype(jnp.float32))
    return out[:M]


def conv_in_lrelu(a, w, b, *, tk_cap=2048, tc_cap=256):
    # a: (N, P, K) bf16, w: (K, C) bf16, b: (C,) f32 -> (N, P, C) bf16
    N, P, K = a.shape
    C = w.shape[1]
    tk = _pick_tile(K, tk_cap)
    tc = _pick_tile(C, tc_cap)
    return pl.pallas_call(
        _conv_in_lrelu_kernel,
        out_shape=jax.ShapeDtypeStruct((N, P, C), jnp.bfloat16),
        grid=(N, C // tc, K // tk),
        in_specs=[
            pl.BlockSpec((None, P, tk), lambda n, c, k: (n, 0, k)),
            pl.BlockSpec((tk, tc), lambda n, c, k: (k, c)),
            pl.BlockSpec((1, tc), lambda n, c, k: (0, c)),
        ],
        out_specs=pl.BlockSpec((None, P, tc), lambda n, c, k: (n, 0, c)),
        scratch_shapes=[pltpu.VMEM((P, tc), jnp.float32)],
        compiler_params=pltpu.CompilerParams(
            dimension_semantics=("parallel", "parallel", "arbitrary"),
            vmem_limit_bytes=_VMEM_LIMIT),
    )(a, w, b.reshape(1, C).astype(jnp.float32))


def conv_sigmoid(a, w, *, tm_cap=256, tk_cap=2048):
    # a: (M, K) bf16, w: (K, 128) bf16 (real channel in col 0) -> (M, 1) f32
    M, K = a.shape
    Cp = w.shape[1]
    tm = min(tm_cap, _round_up(M, 8))
    Mp = _round_up(M, tm)
    if Mp != M:
        a = jnp.pad(a, ((0, Mp - M), (0, 0)))
    tk = _pick_tile(K, tk_cap)
    out = pl.pallas_call(
        _conv_sigmoid_kernel,
        out_shape=jax.ShapeDtypeStruct((Mp, Cp), jnp.float32),
        grid=(Mp // tm, K // tk),
        in_specs=[
            pl.BlockSpec((tm, tk), lambda i, k: (i, k)),
            pl.BlockSpec((tk, Cp), lambda i, k: (k, 0)),
        ],
        out_specs=pl.BlockSpec((tm, Cp), lambda i, k: (i, 0)),
        scratch_shapes=[pltpu.VMEM((tm, Cp), jnp.float32)],
        compiler_params=pltpu.CompilerParams(
            dimension_semantics=("parallel", "arbitrary"),
            vmem_limit_bytes=_VMEM_LIMIT),
    )(a, w)
    return out[:M, :1]


# ----------------------------------------------------------------------------
# Glue: im2col patch extraction (plain JAX) + parameter construction
# ----------------------------------------------------------------------------
def im2col(x, k, stride, pad):
    # x: (N, H, W, C) -> (N, OH*OW, k*k*C), patch index = (kh*k + kw)*C + c
    if pad:
        x = jnp.pad(x, ((0, 0), (pad, pad), (pad, pad), (0, 0)))
    N, Hp, Wp, C = x.shape
    OH = (Hp - k) // stride + 1
    OW = (Wp - k) // stride + 1
    cols = []
    for i in range(k):
        for j in range(k):
            cols.append(
                x[:, i:i + stride * (OH - 1) + 1:stride,
                  j:j + stride * (OW - 1) + 1:stride, :])
    p = jnp.stack(cols, axis=3)                 # (N, OH, OW, k*k, C)
    return p.reshape(N, OH * OW, k * k * C), OH, OW


def make_conv_params(key, cin, cout, k=4, bias=True, scale=0.05,
                     pad_k_to=None, pad_cout_to=None):
    kw, kb = jax.random.split(key)
    # PyTorch conv weight layout (Cout, Cin, KH, KW) -> matmul (KH*KW*Cin, Cout)
    w = jax.random.normal(kw, (cout, cin, k, k), jnp.float32) * scale
    wm = jnp.transpose(w, (2, 3, 1, 0)).reshape(k * k * cin, cout)
    if pad_k_to is not None and pad_k_to > wm.shape[0]:
        wm = jnp.pad(wm, ((0, pad_k_to - wm.shape[0]), (0, 0)))
    if pad_cout_to is not None and pad_cout_to > wm.shape[1]:
        wm = jnp.pad(wm, ((0, 0), (0, pad_cout_to - wm.shape[1])))
    b = (jax.random.normal(kb, (cout,), jnp.float32) * scale
         if bias else None)
    return wm.astype(jnp.bfloat16), b


def init_params(key, in_channels=3):
    keys = jax.random.split(key, 5)
    p = {}
    # block 1: K = 4*4*(2*in_channels) = 96 -> zero-pad to 128 for lane tiles.
    p["w1"], p["b1"] = make_conv_params(keys[0], in_channels * 2, 64,
                                        pad_k_to=128)
    p["w2"], p["b2"] = make_conv_params(keys[1], 64, 128)
    p["w3"], p["b3"] = make_conv_params(keys[2], 128, 256)
    p["w4"], p["b4"] = make_conv_params(keys[3], 256, 512)
    # final conv: single output channel zero-padded to 128 (lane-dense stores).
    p["w5"], _ = make_conv_params(keys[4], 512, 1, bias=False,
                                  pad_cout_to=128)
    return p


# ----------------------------------------------------------------------------
# Forward pass (matches nn.Sequential in the PyTorch module)
# ----------------------------------------------------------------------------
@jax.jit
def discriminator_forward(img_A, img_B, params):
    # img_A, img_B: NCHW float32
    x = jnp.concatenate([img_A, img_B], axis=1)               # (N, 2*Cin, H, W)
    x = jnp.transpose(x, (0, 2, 3, 1)).astype(jnp.bfloat16)   # -> NHWC bf16
    N = x.shape[0]

    # block 1: Conv(6->64, k4, s2, p1) + LeakyReLU(0.2)   (no norm)
    a, OH, OW = im2col(x, 4, 2, 1)
    a = a.reshape(N * OH * OW, -1)
    Kp = params["w1"].shape[0]
    if Kp > a.shape[1]:                                       # K 96 -> 128
        a = jnp.pad(a, ((0, 0), (0, Kp - a.shape[1])))
    y = conv_lrelu(a, params["w1"], params["b1"])
    x = y.reshape(N, OH, OW, 64)

    # blocks 2-4: Conv + InstanceNorm2d + LeakyReLU(0.2)
    for idx, cout in ((2, 128), (3, 256), (4, 512)):
        a, OH, OW = im2col(x, 4, 2, 1)
        y = conv_in_lrelu(a, params[f"w{idx}"], params[f"b{idx}"])
        x = y.reshape(N, OH, OW, cout)

    # ZeroPad2d((left=1, right=0, top=1, bottom=0)) followed by
    # Conv(512->1, k4, p1, bias=False) -> combined padding top/left=2, bot/right=1
    x = jnp.pad(x, ((0, 0), (2, 1), (2, 1), (0, 0)))
    a, OH, OW = im2col(x, 4, 1, 0)
    y = conv_sigmoid(a.reshape(N * OH * OW, -1), params["w5"])
    out = y.reshape(N, OH, OW, 1)
    return jnp.transpose(out, (0, 3, 1, 2)).astype(jnp.float32)  # back to NCHW


# ----------------------------------------------------------------------------
if __name__ == "__main__":
    key = jax.random.PRNGKey(0)
    k_a, k_b, k_p = jax.random.split(key, 3)

    N, C, H, W = 2, 3, 32, 32
    img_A = jax.random.normal(k_a, (N, C, H, W), jnp.float32)
    img_B = jax.random.normal(k_b, (N, C, H, W), jnp.float32)
    params = init_params(k_p, in_channels=C)

    out = discriminator_forward(img_A, img_B, params)
    out = jax.block_until_ready(out)

    # PatchGAN output for 32x32 inputs: (N, 1, 2, 2), values in (0, 1)
    assert out.shape == (N, 1, 2, 2), out.shape
    assert bool(jnp.all(jnp.isfinite(out)))
    assert bool(jnp.all((out > 0.0) & (out < 1.0)))
    print("KERNEL_OK")
</pallas_src>

<mosaic_0001>
module attributes {stable_mosaic.version = 11 : i64} {
  func.func @_conv_lrelu_kernel(%arg0: i32, %arg1: memref<256x128xbf16, #tpu.memory_space<vmem>>, %arg2: memref<128x64xbf16, #tpu.memory_space<vmem>>, %arg3: memref<1x64xf32, #tpu.memory_space<vmem>>, %arg4: memref<256x64xbf16, #tpu.memory_space<vmem>>) attributes {dimension_semantics = [#tpu.dimension_semantics<parallel>], iteration_bounds = array<i64: 2>, scalar_prefetch = 0 : i64, scratch_operands = 0 : i64, tpu.core_type = #tpu.core_type<tc>, window_params = [{transform_indices = @transform_0, window_bounds = array<i64: 256, 128>}, {pipeline_mode = #tpu.pipeline_mode<synchronous>, transform_indices = @transform_1, window_bounds = array<i64: 128, 64>}, {pipeline_mode = #tpu.pipeline_mode<synchronous>, transform_indices = @transform_2, window_bounds = array<i64: 1, 64>}, {transform_indices = @transform_3, window_bounds = array<i64: 256, 64>}]} {
    %c0 = arith.constant 0 : index
    %c0_0 = arith.constant 0 : index
    %0 = vector.load %arg1[%c0, %c0_0] : memref<256x128xbf16, #tpu.memory_space<vmem>>, vector<256x128xbf16>
    %c0_1 = arith.constant 0 : index
    %c0_2 = arith.constant 0 : index
    %1 = vector.load %arg2[%c0_1, %c0_2] : memref<128x64xbf16, #tpu.memory_space<vmem>>, vector<128x64xbf16>
    %cst = arith.constant dense<0.000000e+00> : vector<256x64xf32>
    %2 = tpu.matmul %0, %1, %cst {dimension_numbers = #tpu.dot_dimension_numbers<[1], [0], [0], [1], [0, 0, 1, 1], [], []>} : vector<256x128xbf16>, vector<128x64xbf16>, vector<256x64xf32> -> vector<256x64xf32>
    %c0_3 = arith.constant 0 : index
    %c0_4 = arith.constant 0 : index
    %3 = vector.load %arg3[%c0_3, %c0_4] : memref<1x64xf32, #tpu.memory_space<vmem>>, vector<1x64xf32>
    %4 = vector.broadcast %3 : vector<1x64xf32> to vector<256x64xf32>
    %5 = arith.addf %2, %4 : vector<256x64xf32>
    %cst_5 = arith.constant 2.000000e-01 : f32
    %6 = vector.broadcast %cst_5 : f32 to vector<256x64xf32>
    %7 = arith.mulf %6, %5 : vector<256x64xf32>
    %8 = arith.maximumf %5, %7 : vector<256x64xf32>
    %9 = arith.truncf %8 : vector<256x64xf32> to vector<256x64xbf16>
    %c0_6 = arith.constant 0 : index
    %c0_7 = arith.constant 0 : index
    %10 = vector.load %arg4[%c0_6, %c0_7] : memref<256x64xbf16, #tpu.memory_space<vmem>>, vector<256x64xbf16>
    tpu.vector_store %arg4[%c0_6, %c0_7], %9 {strides = array<i32>} : memref<256x64xbf16, #tpu.memory_space<vmem>>, vector<256x64xbf16>,
    return
  }
  func.func @transform_0(%arg0: i32) -> (i32, i32) {
    %c0_i32 = arith.constant 0 : i32
    %c0_i32_0 = arith.constant 0 : i32
    return %arg0, %c0_i32 : i32, i32
  }
  func.func @transform_1(%arg0: i32) -> (i32, i32) {
    %c0_i32 = arith.constant 0 : i32
    %c0_i32_0 = arith.constant 0 : i32
    %c0_i32_1 = arith.constant 0 : i32
    return %c0_i32, %c0_i32_0 : i32, i32
  }
  func.func @transform_2(%arg0: i32) -> (i32, i32) {
    %c0_i32 = arith.constant 0 : i32
    %c0_i32_0 = arith.constant 0 : i32
    %c0_i32_1 = arith.constant 0 : i32
    return %c0_i32, %c0_i32_0 : i32, i32
  }
  func.func @transform_3(%arg0: i32) -> (i32, i32) {
    %c0_i32 = arith.constant 0 : i32
    %c0_i32_0 = arith.constant 0 : i32
    return %arg0, %c0_i32 : i32, i32
  }
}

module attributes {stable_mosaic.version = 11 : i64} {
  func.func @_conv_in_lrelu_kernel(%arg0: i32, %arg1: i32, %arg2: i32, %arg3: memref<1x64x1024xbf16, #tpu.memory_space<vmem>>, %arg4: memref<1024x128xbf16, #tpu.memory_space<vmem>>, %arg5: memref<1x128xf32, #tpu.memory_space<vmem>>, %arg6: memref<1x64x128xbf16, #tpu.memory_space<vmem>>, %arg7: memref<64x128xf32, #tpu.memory_space<vmem>>) attributes {dimension_semantics = [#tpu.dimension_semantics<parallel>, #tpu.dimension_semantics<parallel>, #tpu.dimension_semantics<arbitrary>], iteration_bounds = array<i64: 2, 1, 1>, scalar_prefetch = 0 : i64, scratch_operands = 1 : i64, tpu.core_type = #tpu.core_type<tc>, window_params = [{transform_indices = @transform_0, window_bounds = array<i64: 1, 64, 1024>}, {transform_indices = @transform_1, window_bounds = array<i64: 1024, 128>}, {transform_indices = @transform_2, window_bounds = array<i64: 1, 128>}, {transform_indices = @transform_3, window_bounds = array<i64: 1, 64, 128>}]} {
    %c0_i32 = arith.constant 0 : i32
    %0 = arith.cmpi eq, %arg2, %c0_i32 : i32
    %1 = arith.extui %0 : i1 to i32
    %c0_i32_0 = arith.constant 0 : i32
    %2 = arith.cmpi ne, %1, %c0_i32_0 : i32
    scf.if %2 {
      %cst_11 = arith.constant 0.000000e+00 : f32
      %13 = vector.broadcast %cst_11 : f32 to vector<64x128xf32>
      %c0_12 = arith.constant 0 : index
      %c0_13 = arith.constant 0 : index
      %14 = vector.load %arg7[%c0_12, %c0_13] : memref<64x128xf32, #tpu.memory_space<vmem>>, vector<64x128xf32>
      tpu.vector_store %arg7[%c0_12, %c0_13], %13 {strides = array<i32>} : memref<64x128xf32, #tpu.memory_space<vmem>>, vector<64x128xf32>,
    } else {
    }
    %c0 = arith.constant 0 : index
    %c0_1 = arith.constant 0 : index
    %3 = vector.load %arg7[%c0, %c0_1] : memref<64x128xf32, #tpu.memory_space<vmem>>, vector<64x128xf32>
    %c0_2 = arith.constant 0 : index
    %c0_3 = arith.constant 0 : index
    %c0_4 = arith.constant 0 : index
    %4 = vector.load %arg3[%c0_2, %c0_3, %c0_4] : memref<1x64x1024xbf16, #tpu.memory_space<vmem>>, vector<1x64x1024xbf16>
    %5 = vector.shape_cast %4 : vector<1x64x1024xbf16> to vector<64x1024xbf16>
    %c0_5 = arith.constant 0 : index
    %c0_6 = arith.constant 0 : index
    %6 = vector.load %arg4[%c0_5, %c0_6] : memref<1024x128xbf16, #tpu.memory_space<vmem>>, vector<1024x128xbf16>
    %cst = arith.constant dense<0.000000e+00> : vector<64x128xf32>
    %7 = tpu.matmul %5, %6, %cst {dimension_numbers = #tpu.dot_dimension_numbers<[1], [0], [0], [1], [0, 0, 1, 1], [], []>} : vector<64x1024xbf16>, vector<1024x128xbf16>, vector<64x128xf32> -> vector<64x128xf32>
    %8 = arith.addf %3, %7 : vector<64x128xf32>
    %c0_7 = arith.constant 0 : index
    %c0_8 = arith.constant 0 : index
    %9 = vector.load %arg7[%c0_7, %c0_8] : memref<64x128xf32, #tpu.memory_space<vmem>>, vector<64x128xf32>
    tpu.vector_store %arg7[%c0_7, %c0_8], %8 {strides = array<i32>} : memref<64x128xf32, #tpu.memory_space<vmem>>, vector<64x128xf32>,
    %c0_i32_9 = arith.constant 0 : i32
    %10 = arith.cmpi eq, %arg2, %c0_i32_9 : i32
    %11 = arith.extui %10 : i1 to i32
    %c0_i32_10 = arith.constant 0 : i32
    %12 = arith.cmpi ne, %11, %c0_i32_10 : i32
    scf.if %12 {
      %c0_11 = arith.constant 0 : index
      %c0_12 = arith.constant 0 : index
      %13 = vector.load %arg7[%c0_11, %c0_12] : memref<64x128xf32, #tpu.memory_space<vmem>>, vector<64x128xf32>
      %c0_13 = arith.constant 0 : index
      %c0_14 = arith.constant 0 : index
      %14 = vector.load %arg5[%c0_13, %c0_14] : memref<1x128xf32, #tpu.memory_space<vmem>>, vector<1x128xf32>
      %15 = vector.broadcast %14 : vector<1x128xf32> to vector<64x128xf32>
      %16 = arith.addf %13, %15 : vector<64x128xf32>
      %cst_15 = arith.constant dense<0.000000e+00> : vector<128xf32>
      %17 = vector.multi_reduction <add>, %16, %cst_15 [0] : vector<64x128xf32> to vector<128xf32>
      %18 = vector.shape_cast %17 : vector<128xf32> to vector<1x128xf32>
      %cst_16 = arith.constant 6.400000e+01 : f32
      %19 = vector.broadcast %cst_16 : f32 to vector<1x128xf32>
      %20 = arith.divf %18, %19 : vector<1x128xf32>
      %21 = vector.broadcast %20 : vector<1x128xf32> to vector<64x128xf32>
      %22 = arith.subf %16, %21 : vector<64x128xf32>
      %23 = vector.broadcast %20 : vector<1x128xf32> to vector<64x128xf32>
      %24 = arith.subf %16, %23 : vector<64x128xf32>
      %25 = arith.mulf %22, %24 : vector<64x128xf32>
      %cst_17 = arith.constant dense<0.000000e+00> : vector<128xf32>
      %26 = vector.multi_reduction <add>, %25, %cst_17 [0] : vector<64x128xf32> to vector<128xf32>
      %27 = vector.shape_cast %26 : vector<128xf32> to vector<1x128xf32>
      %cst_18 = arith.constant 6.400000e+01 : f32
      %28 = vector.broadcast %cst_18 : f32 to vector<1x128xf32>
      %29 = arith.divf %27, %28 : vector<1x128xf32>
      %30 = vector.broadcast %20 : vector<1x128xf32> to vector<64x128xf32>
      %31 = arith.subf %16, %30 : vector<64x128xf32>
      %cst_19 = arith.constant 9.99999974E-6 : f32
      %32 = vector.broadcast %cst_19 : f32 to vector<1x128xf32>
      %33 = arith.addf %29, %32 : vector<1x128xf32>
      %34 = math.rsqrt %33 : vector<1x128xf32>
      %35 = vector.broadcast %34 : vector<1x128xf32> to vector<64x128xf32>
      %36 = arith.mulf %31, %35 : vector<64x128xf32>
      %cst_20 = arith.constant 2.000000e-01 : f32
      %37 = vector.broadcast %cst_20 : f32 to vector<64x128xf32>
      %38 = arith.mulf %37, %36 : vector<64x128xf32>
      %39 = arith.maximumf %36, %38 : vector<64x128xf32>
      %40 = arith.truncf %39 : vector<64x128xf32> to vector<64x128xbf16>
      %c0_21 = arith.constant 0 : index
      %c0_22 = arith.constant 0 : index
      %c0_23 = arith.constant 0 : index
      %41 = vector.load %arg6[%c0_21, %c0_22, %c0_23] : memref<1x64x128xbf16, #tpu.memory_space<vmem>>, vector<1x64x128xbf16>
      %42 = vector.shape_cast %41 : vector<1x64x128xbf16> to vector<64x128xbf16>
      %43 = vector.shape_cast %40 : vector<64x128xbf16> to vector<1x64x128xbf16>
      tpu.vector_store %arg6[%c0_21, %c0_22, %c0_23], %43 {strides = array<i32>} : memref<1x64x128xbf16, #tpu.memory_space<vmem>>, vector<1x64x128xbf16>,
    } else {
    }
    return
  }
  func.func @transform_0(%arg0: i32, %arg1: i32, %arg2: i32) -> (i32, i32, i32) {
    %c0_i32 = arith.constant 0 : i32
    %c0_i32_0 = arith.constant 0 : i32
    return %arg0, %c0_i32, %arg2 : i32, i32, i32
  }
  func.func @transform_1(%arg0: i32, %arg1: i32, %arg2: i32) -> (i32, i32) {
    %c0_i32 = arith.constant 0 : i32
    return %arg2, %arg1 : i32, i32
  }
  func.func @transform_2(%arg0: i32, %arg1: i32, %arg2: i32) -> (i32, i32) {
    %c0_i32 = arith.constant 0 : i32
    %c0_i32_0 = arith.constant 0 : i32
    return %c0_i32, %arg1 : i32, i32
  }
  func.func @transform_3(%arg0: i32, %arg1: i32, %arg2: i32) -> (i32, i32, i32) {
    %c0_i32 = arith.constant 0 : i32
    %c0_i32_0 = arith.constant 0 : i32
    return %arg0, %c0_i32, %arg1 : i32, i32, i32
  }
}

module attributes {stable_mosaic.version = 11 : i64} {
  func.func @_conv_in_lrelu_kernel(%arg0: i32, %arg1: i32, %arg2: i32, %arg3: memref<1x16x2048xbf16, #tpu.memory_space<vmem>>, %arg4: memref<2048x256xbf16, #tpu.memory_space<vmem>>, %arg5: memref<1x256xf32, #tpu.memory_space<vmem>>, %arg6: memref<1x16x256xbf16, #tpu.memory_space<vmem>>, %arg7: memref<16x256xf32, #tpu.memory_space<vmem>>) attributes {dimension_semantics = [#tpu.dimension_semantics<parallel>, #tpu.dimension_semantics<parallel>, #tpu.dimension_semantics<arbitrary>], iteration_bounds = array<i64: 2, 1, 1>, scalar_prefetch = 0 : i64, scratch_operands = 1 : i64, tpu.core_type = #tpu.core_type<tc>, window_params = [{transform_indices = @transform_0, window_bounds = array<i64: 1, 16, 2048>}, {transform_indices = @transform_1, window_bounds = array<i64: 2048, 256>}, {transform_indices = @transform_2, window_bounds = array<i64: 1, 256>}, {transform_indices = @transform_3, window_bounds = array<i64: 1, 16, 256>}]} {
    %c0_i32 = arith.constant 0 : i32
    %0 = arith.cmpi eq, %arg2, %c0_i32 : i32
    %1 = arith.extui %0 : i1 to i32
    %c0_i32_0 = arith.constant 0 : i32
    %2 = arith.cmpi ne, %1, %c0_i32_0 : i32
    scf.if %2 {
      %cst_11 = arith.constant 0.000000e+00 : f32
      %13 = vector.broadcast %cst_11 : f32 to vector<16x256xf32>
      %c0_12 = arith.constant 0 : index
      %c0_13 = arith.constant 0 : index
      %14 = vector.load %arg7[%c0_12, %c0_13] : memref<16x256xf32, #tpu.memory_space<vmem>>, vector<16x256xf32>
      tpu.vector_store %arg7[%c0_12, %c0_13], %13 {strides = array<i32>} : memref<16x256xf32, #tpu.memory_space<vmem>>, vector<16x256xf32>,
    } else {
    }
    %c0 = arith.constant 0 : index
    %c0_1 = arith.constant 0 : index
    %3 = vector.load %arg7[%c0, %c0_1] : memref<16x256xf32, #tpu.memory_space<vmem>>, vector<16x256xf32>
    %c0_2 = arith.constant 0 : index
    %c0_3 = arith.constant 0 : index
    %c0_4 = arith.constant 0 : index
    %4 = vector.load %arg3[%c0_2, %c0_3, %c0_4] : memref<1x16x2048xbf16, #tpu.memory_space<vmem>>, vector<1x16x2048xbf16>
    %5 = vector.shape_cast %4 : vector<1x16x2048xbf16> to vector<16x2048xbf16>
    %c0_5 = arith.constant 0 : index
    %c0_6 = arith.constant 0 : index
    %6 = vector.load %arg4[%c0_5, %c0_6] : memref<2048x256xbf16, #tpu.memory_space<vmem>>, vector<2048x256xbf16>
    %cst = arith.constant dense<0.000000e+00> : vector<16x256xf32>
    %7 = tpu.matmul %5, %6, %cst {dimension_numbers = #tpu.dot_dimension_numbers<[1], [0], [0], [1], [0, 0, 1, 1], [], []>} : vector<16x2048xbf16>, vector<2048x256xbf16>, vector<16x256xf32> -> vector<16x256xf32>
    %8 = arith.addf %3, %7 : vector<16x256xf32>
    %c0_7 = arith.constant 0 : index
    %c0_8 = arith.constant 0 : index
    %9 = vector.load %arg7[%c0_7, %c0_8] : memref<16x256xf32, #tpu.memory_space<vmem>>, vector<16x256xf32>
    tpu.vector_store %arg7[%c0_7, %c0_8], %8 {strides = array<i32>} : memref<16x256xf32, #tpu.memory_space<vmem>>, vector<16x256xf32>,
    %c0_i32_9 = arith.constant 0 : i32
    %10 = arith.cmpi eq, %arg2, %c0_i32_9 : i32
    %11 = arith.extui %10 : i1 to i32
    %c0_i32_10 = arith.constant 0 : i32
    %12 = arith.cmpi ne, %11, %c0_i32_10 : i32
    scf.if %12 {
      %c0_11 = arith.constant 0 : index
      %c0_12 = arith.constant 0 : index
      %13 = vector.load %arg7[%c0_11, %c0_12] : memref<16x256xf32, #tpu.memory_space<vmem>>, vector<16x256xf32>
      %c0_13 = arith.constant 0 : index
      %c0_14 = arith.constant 0 : index
      %14 = vector.load %arg5[%c0_13, %c0_14] : memref<1x256xf32, #tpu.memory_space<vmem>>, vector<1x256xf32>
      %15 = vector.broadcast %14 : vector<1x256xf32> to vector<16x256xf32>
      %16 = arith.addf %13, %15 : vector<16x256xf32>
      %cst_15 = arith.constant dense<0.000000e+00> : vector<256xf32>
      %17 = vector.multi_reduction <add>, %16, %cst_15 [0] : vector<16x256xf32> to vector<256xf32>
      %18 = vector.shape_cast %17 : vector<256xf32> to vector<1x256xf32>
      %cst_16 = arith.constant 1.600000e+01 : f32
      %19 = vector.broadcast %cst_16 : f32 to vector<1x256xf32>
      %20 = arith.divf %18, %19 : vector<1x256xf32>
      %21 = vector.broadcast %20 : vector<1x256xf32> to vector<16x256xf32>
      %22 = arith.subf %16, %21 : vector<16x256xf32>
      %23 = vector.broadcast %20 : vector<1x256xf32> to vector<16x256xf32>
      %24 = arith.subf %16, %23 : vector<16x256xf32>
      %25 = arith.mulf %22, %24 : vector<16x256xf32>
      %cst_17 = arith.constant dense<0.000000e+00> : vector<256xf32>
      %26 = vector.multi_reduction <add>, %25, %cst_17 [0] : vector<16x256xf32> to vector<256xf32>
      %27 = vector.shape_cast %26 : vector<256xf32> to vector<1x256xf32>
      %cst_18 = arith.constant 1.600000e+01 : f32
      %28 = vector.broadcast %cst_18 : f32 to vector<1x256xf32>
      %29 = arith.divf %27, %28 : vector<1x256xf32>
      %30 = vector.broadcast %20 : vector<1x256xf32> to vector<16x256xf32>
      %31 = arith.subf %16, %30 : vector<16x256xf32>
      %cst_19 = arith.constant 9.99999974E-6 : f32
      %32 = vector.broadcast %cst_19 : f32 to vector<1x256xf32>
      %33 = arith.addf %29, %32 : vector<1x256xf32>
      %34 = math.rsqrt %33 : vector<1x256xf32>
      %35 = vector.broadcast %34 : vector<1x256xf32> to vector<16x256xf32>
      %36 = arith.mulf %31, %35 : vector<16x256xf32>
      %cst_20 = arith.constant 2.000000e-01 : f32
      %37 = vector.broadcast %cst_20 : f32 to vector<16x256xf32>
      %38 = arith.mulf %37, %36 : vector<16x256xf32>
      %39 = arith.maximumf %36, %38 : vector<16x256xf32>
      %40 = arith.truncf %39 : vector<16x256xf32> to vector<16x256xbf16>
      %c0_21 = arith.constant 0 : index
      %c0_22 = arith.constant 0 : index
      %c0_23 = arith.constant 0 : index
      %41 = vector.load %arg6[%c0_21, %c0_22, %c0_23] : memref<1x16x256xbf16, #tpu.memory_space<vmem>>, vector<1x16x256xbf16>
      %42 = vector.shape_cast %41 : vector<1x16x256xbf16> to vector<16x256xbf16>
      %43 = vector.shape_cast %40 : vector<16x256xbf16> to vector<1x16x256xbf16>
      tpu.vector_store %arg6[%c0_21, %c0_22, %c0_23], %43 {strides = array<i32>} : memref<1x16x256xbf16, #tpu.memory_space<vmem>>, vector<1x16x256xbf16>,
    } else {
    }
    return
  }
  func.func @transform_0(%arg0: i32, %arg1: i32, %arg2: i32) -> (i32, i32, i32) {
    %c0_i32 = arith.constant 0 : i32
    %c0_i32_0 = arith.constant 0 : i32
    return %arg0, %c0_i32, %arg2 : i32, i32, i32
  }
  func.func @transform_1(%arg0: i32, %arg1: i32, %arg2: i32) -> (i32, i32) {
    %c0_i32 = arith.constant 0 : i32
    return %arg2, %arg1 : i32, i32
  }
  func.func @transform_2(%arg0: i32, %arg1: i32, %arg2: i32) -> (i32, i32) {
    %c0_i32 = arith.constant 0 : i32
    %c0_i32_0 = arith.constant 0 : i32
    return %c0_i32, %arg1 : i32, i32
  }
  func.func @transform_3(%arg0: i32, %arg1: i32, %arg2: i32) -> (i32, i32, i32) {
    %c0_i32 = arith.constant 0 : i32
    %c0_i32_0 = arith.constant 0 : i32
    return %arg0, %c0_i32, %arg1 : i32, i32, i32
  }
}

module attributes {stable_mosaic.version = 11 : i64} {
  func.func @_conv_in_lrelu_kernel(%arg0: i32, %arg1: i32, %arg2: i32, %arg3: memref<1x4x2048xbf16, #tpu.memory_space<vmem>>, %arg4: memref<2048x256xbf16, #tpu.memory_space<vmem>>, %arg5: memref<1x256xf32, #tpu.memory_space<vmem>>, %arg6: memref<1x4x256xbf16, #tpu.memory_space<vmem>>, %arg7: memref<4x256xf32, #tpu.memory_space<vmem>>) attributes {dimension_semantics = [#tpu.dimension_semantics<parallel>, #tpu.dimension_semantics<parallel>, #tpu.dimension_semantics<arbitrary>], iteration_bounds = array<i64: 2, 2, 2>, scalar_prefetch = 0 : i64, scratch_operands = 1 : i64, tpu.core_type = #tpu.core_type<tc>, window_params = [{transform_indices = @transform_0, window_bounds = array<i64: 1, 4, 2048>}, {transform_indices = @transform_1, window_bounds = array<i64: 2048, 256>}, {transform_indices = @transform_2, window_bounds = array<i64: 1, 256>}, {transform_indices = @transform_3, window_bounds = array<i64: 1, 4, 256>}]} {
    %c0_i32 = arith.constant 0 : i32
    %0 = arith.cmpi eq, %arg2, %c0_i32 : i32
    %1 = arith.extui %0 : i1 to i32
    %c0_i32_0 = arith.constant 0 : i32
    %2 = arith.cmpi ne, %1, %c0_i32_0 : i32
    scf.if %2 {
      %cst_10 = arith.constant 0.000000e+00 : f32
      %13 = vector.broadcast %cst_10 : f32 to vector<4x256xf32>
      %c0_11 = arith.constant 0 : index
      %c0_12 = arith.constant 0 : index
      %14 = vector.load %arg7[%c0_11, %c0_12] : memref<4x256xf32, #tpu.memory_space<vmem>>, vector<4x256xf32>
      tpu.vector_store %arg7[%c0_11, %c0_12], %13 {strides = array<i32>} : memref<4x256xf32, #tpu.memory_space<vmem>>, vector<4x256xf32>,
    } else {
    }
    %c0 = arith.constant 0 : index
    %c0_1 = arith.constant 0 : index
    %3 = vector.load %arg7[%c0, %c0_1] : memref<4x256xf32, #tpu.memory_space<vmem>>, vector<4x256xf32>
    %c0_2 = arith.constant 0 : index
    %c0_3 = arith.constant 0 : index
    %c0_4 = arith.constant 0 : index
    %4 = vector.load %arg3[%c0_2, %c0_3, %c0_4] : memref<1x4x2048xbf16, #tpu.memory_space<vmem>>, vector<1x4x2048xbf16>
    %5 = vector.shape_cast %4 : vector<1x4x2048xbf16> to vector<4x2048xbf16>
    %c0_5 = arith.constant 0 : index
    %c0_6 = arith.constant 0 : index
    %6 = vector.load %arg4[%c0_5, %c0_6] : memref<2048x256xbf16, #tpu.memory_space<vmem>>, vector<2048x256xbf16>
    %cst = arith.constant dense<0.000000e+00> : vector<4x256xf32>
    %7 = tpu.matmul %5, %6, %cst {dimension_numbers = #tpu.dot_dimension_numbers<[1], [0], [0], [1], [0, 0, 1, 1], [], []>} : vector<4x2048xbf16>, vector<2048x256xbf16>, vector<4x256xf32> -> vector<4x256xf32>
    %8 = arith.addf %3, %7 : vector<4x256xf32>
    %c0_7 = arith.constant 0 : index
    %c0_8 = arith.constant 0 : index
    %9 = vector.load %arg7[%c0_7, %c0_8] : memref<4x256xf32, #tpu.memory_space<vmem>>, vector<4x256xf32>
    tpu.vector_store %arg7[%c0_7, %c0_8], %8 {strides = array<i32>} : memref<4x256xf32, #tpu.memory_space<vmem>>, vector<4x256xf32>,
    %c1_i32 = arith.constant 1 : i32
    %10 = arith.cmpi eq, %arg2, %c1_i32 : i32
    %11 = arith.extui %10 : i1 to i32
    %c0_i32_9 = arith.constant 0 : i32
    %12 = arith.cmpi ne, %11, %c0_i32_9 : i32
    scf.if %12 {
      %c0_10 = arith.constant 0 : index
      %c0_11 = arith.constant 0 : index
      %13 = vector.load %arg7[%c0_10, %c0_11] : memref<4x256xf32, #tpu.memory_space<vmem>>, vector<4x256xf32>
      %c0_12 = arith.constant 0 : index
      %c0_13 = arith.constant 0 : index
      %14 = vector.load %arg5[%c0_12, %c0_13] : memref<1x256xf32, #tpu.memory_space<vmem>>, vector<1x256xf32>
      %15 = vector.broadcast %14 : vector<1x256xf32> to vector<4x256xf32>
      %16 = arith.addf %13, %15 : vector<4x256xf32>
      %cst_14 = arith.constant dense<0.000000e+00> : vector<256xf32>
      %17 = vector.multi_reduction <add>, %16, %cst_14 [0] : vector<4x256xf32> to vector<256xf32>
      %18 = vector.shape_cast %17 : vector<256xf32> to vector<1x256xf32>
      %cst_15 = arith.constant 4.000000e+00 : f32
      %19 = vector.broadcast %cst_15 : f32 to vector<1x256xf32>
      %20 = arith.divf %18, %19 : vector<1x256xf32>
      %21 = vector.broadcast %20 : vector<1x256xf32> to vector<4x256xf32>
      %22 = arith.subf %16, %21 : vector<4x256xf32>
      %23 = vector.broadcast %20 : vector<1x256xf32> to vector<4x256xf32>
      %24 = arith.subf %16, %23 : vector<4x256xf32>
      %25 = arith.mulf %22, %24 : vector<4x256xf32>
      %cst_16 = arith.constant dense<0.000000e+00> : vector<256xf32>
      %26 = vector.multi_reduction <add>, %25, %cst_16 [0] : vector<4x256xf32> to vector<256xf32>
      %27 = vector.shape_cast %26 : vector<256xf32> to vector<1x256xf32>
      %cst_17 = arith.constant 4.000000e+00 : f32
      %28 = vector.broadcast %cst_17 : f32 to vector<1x256xf32>
      %29 = arith.divf %27, %28 : vector<1x256xf32>
      %30 = vector.broadcast %20 : vector<1x256xf32> to vector<4x256xf32>
      %31 = arith.subf %16, %30 : vector<4x256xf32>
      %cst_18 = arith.constant 9.99999974E-6 : f32
      %32 = vector.broadcast %cst_18 : f32 to vector<1x256xf32>
      %33 = arith.addf %29, %32 : vector<1x256xf32>
      %34 = math.rsqrt %33 : vector<1x256xf32>
      %35 = vector.broadcast %34 : vector<1x256xf32> to vector<4x256xf32>
      %36 = arith.mulf %31, %35 : vector<4x256xf32>
      %cst_19 = arith.constant 2.000000e-01 : f32
      %37 = vector.broadcast %cst_19 : f32 to vector<4x256xf32>
      %38 = arith.mulf %37, %36 : vector<4x256xf32>
      %39 = arith.maximumf %36, %38 : vector<4x256xf32>
      %40 = arith.truncf %39 : vector<4x256xf32> to vector<4x256xbf16>
      %c0_20 = arith.constant 0 : index
      %c0_21 = arith.constant 0 : index
      %c0_22 = arith.constant 0 : index
      %41 = vector.load %arg6[%c0_20, %c0_21, %c0_22] : memref<1x4x256xbf16, #tpu.memory_space<vmem>>, vector<1x4x256xbf16>
      %42 = vector.shape_cast %41 : vector<1x4x256xbf16> to vector<4x256xbf16>
      %43 = vector.shape_cast %40 : vector<4x256xbf16> to vector<1x4x256xbf16>
      tpu.vector_store %arg6[%c0_20, %c0_21, %c0_22], %43 {strides = array<i32>} : memref<1x4x256xbf16, #tpu.memory_space<vmem>>, vector<1x4x256xbf16>,
    } else {
    }
    return
  }
  func.func @transform_0(%arg0: i32, %arg1: i32, %arg2: i32) -> (i32, i32, i32) {
    %c0_i32 = arith.constant 0 : i32
    %c0_i32_0 = arith.constant 0 : i32
    return %arg0, %c0_i32, %arg2 : i32, i32, i32
  }
  func.func @transform_1(%arg0: i32, %arg1: i32, %arg2: i32) -> (i32, i32) {
    %c0_i32 = arith.constant 0 : i32
    return %arg2, %arg1 : i32, i32
  }
  func.func @transform_2(%arg0: i32, %arg1: i32, %arg2: i32) -> (i32, i32) {
    %c0_i32 = arith.constant 0 : i32
    %c0_i32_0 = arith.constant 0 : i32
    return %c0_i32, %arg1 : i32, i32
  }
  func.func @transform_3(%arg0: i32, %arg1: i32, %arg2: i32) -> (i32, i32, i32) {
    %c0_i32 = arith.constant 0 : i32
    %c0_i32_0 = arith.constant 0 : i32
    return %arg0, %c0_i32, %arg1 : i32, i32, i32
  }
}

module attributes {stable_mosaic.version = 11 : i64} {
  func.func @_conv_sigmoid_kernel(%arg0: i32, %arg1: i32, %arg2: memref<8x2048xbf16, #tpu.memory_space<vmem>>, %arg3: memref<2048x128xbf16, #tpu.memory_space<vmem>>, %arg4: memref<8x128xf32, #tpu.memory_space<vmem>>, %arg5: memref<8x128xf32, #tpu.memory_space<vmem>>) attributes {dimension_semantics = [#tpu.dimension_semantics<parallel>, #tpu.dimension_semantics<arbitrary>], iteration_bounds = array<i64: 1, 4>, scalar_prefetch = 0 : i64, scratch_operands = 1 : i64, tpu.core_type = #tpu.core_type<tc>, window_params = [{transform_indices = @transform_0, window_bounds = array<i64: 8, 2048>}, {transform_indices = @transform_1, window_bounds = array<i64: 2048, 128>}, {transform_indices = @transform_2, window_bounds = array<i64: 8, 128>}]} {
    %c0_i32 = arith.constant 0 : i32
    %0 = arith.cmpi eq, %arg1, %c0_i32 : i32
    %1 = arith.extui %0 : i1 to i32
    %c0_i32_0 = arith.constant 0 : i32
    %2 = arith.cmpi ne, %1, %c0_i32_0 : i32
    scf.if %2 {
      %cst_9 = arith.constant 0.000000e+00 : f32
      %12 = vector.broadcast %cst_9 : f32 to vector<8x128xf32>
      %c0_10 = arith.constant 0 : index
      %c0_11 = arith.constant 0 : index
      %13 = vector.load %arg5[%c0_10, %c0_11] : memref<8x128xf32, #tpu.memory_space<vmem>>, vector<8x128xf32>
      tpu.vector_store %arg5[%c0_10, %c0_11], %12 {strides = array<i32>} : memref<8x128xf32, #tpu.memory_space<vmem>>, vector<8x128xf32>,
    } else {
    }
    %c0 = arith.constant 0 : index
    %c0_1 = arith.constant 0 : index
    %3 = vector.load %arg5[%c0, %c0_1] : memref<8x128xf32, #tpu.memory_space<vmem>>, vector<8x128xf32>
    %c0_2 = arith.constant 0 : index
    %c0_3 = arith.constant 0 : index
    %4 = vector.load %arg2[%c0_2, %c0_3] : memref<8x2048xbf16, #tpu.memory_space<vmem>>, vector<8x2048xbf16>
    %c0_4 = arith.constant 0 : index
    %c0_5 = arith.constant 0 : index
    %5 = vector.load %arg3[%c0_4, %c0_5] : memref<2048x128xbf16, #tpu.memory_space<vmem>>, vector<2048x128xbf16>
    %cst = arith.constant dense<0.000000e+00> : vector<8x128xf32>
    %6 = tpu.matmul %4, %5, %cst {dimension_numbers = #tpu.dot_dimension_numbers<[1], [0], [0], [1], [0, 0, 1, 1], [], []>} : vector<8x2048xbf16>, vector<2048x128xbf16>, vector<8x128xf32> -> vector<8x128xf32>
    %7 = arith.addf %3, %6 : vector<8x128xf32>
    %c0_6 = arith.constant 0 : index
    %c0_7 = arith.constant 0 : index
    %8 = vector.load %arg5[%c0_6, %c0_7] : memref<8x128xf32, #tpu.memory_space<vmem>>, vector<8x128xf32>
    tpu.vector_store %arg5[%c0_6, %c0_7], %7 {strides = array<i32>} : memref<8x128xf32, #tpu.memory_space<vmem>>, vector<8x128xf32>,
    %c3_i32 = arith.constant 3 : i32
    %9 = arith.cmpi eq, %arg1, %c3_i32 : i32
    %10 = arith.extui %9 : i1 to i32
    %c0_i32_8 = arith.constant 0 : i32
    %11 = arith.cmpi ne, %10, %c0_i32_8 : i32
    scf.if %11 {
      %c0_9 = arith.constant 0 : index
      %c0_10 = arith.constant 0 : index
      %12 = vector.load %arg5[%c0_9, %c0_10] : memref<8x128xf32, #tpu.memory_space<vmem>>, vector<8x128xf32>
      %13 = arith.negf %12 : vector<8x128xf32>
      %14 = math.exp %13 : vector<8x128xf32>
      %cst_11 = arith.constant 1.000000e+00 : f32
      %15 = vector.broadcast %cst_11 : f32 to vector<8x128xf32>
      %16 = arith.addf %15, %14 : vector<8x128xf32>
      %17 = arith.divf %15, %16 : vector<8x128xf32>
      %c0_12 = arith.constant 0 : index
      %c0_13 = arith.constant 0 : index
      %18 = vector.load %arg4[%c0_12, %c0_13] : memref<8x128xf32, #tpu.memory_space<vmem>>, vector<8x128xf32>
      tpu.vector_store %arg4[%c0_12, %c0_13], %17 {strides = array<i32>} : memref<8x128xf32, #tpu.memory_space<vmem>>, vector<8x128xf32>,
    } else {
    }
    return
  }
  func.func @transform_0(%arg0: i32, %arg1: i32) -> (i32, i32) {
    %c0_i32 = arith.constant 0 : i32
    return %arg0, %arg1 : i32, i32
  }
  func.func @transform_1(%arg0: i32, %arg1: i32) -> (i32, i32) {
    %c0_i32 = arith.constant 0 : i32
    %c0_i32_0 = arith.constant 0 : i32
    return %arg1, %c0_i32 : i32, i32
  }
  func.func @transform_2(%arg0: i32, %arg1: i32) -> (i32, i32) {
    %c0_i32 = arith.constant 0 : i32
    %c0_i32_0 = arith.constant 0 : i32
    return %arg0, %c0_i32 : i32, i32
  }
}

</mosaic_0001>

<llo_original>
// kernel: discriminator_forward.5
$region0: #{discriminator_forward.5}
  #allocation0 [shape = 'u32[]', space=smem, size = 0x4, offset = 0x4, fixed_abs, tag = 'smem constant byte address 0x4 - core index']
  #allocation1 [shape = 'u32[144,128]{1,0:T(1,128)}', space=vmem, size = 0x12000, scoped, tag = 'internal scratch']
  %s0 = inlined_call_operand.vmem [shape: bf16[512,128], index: 0, kind: input, shape index: {}]
  %s1 = inlined_call_operand.vmem [shape: bf16[128,64], index: 1, kind: input, shape index: {}]
  %s2 = inlined_call_operand.vmem [shape: f32[1,64], index: 2, kind: input, shape index: {}]
  %s3 = inlined_call_operand.vmem [shape: bf16[512,64], index: 3, kind: output, shape index: {}]
  %s4 = sld [smem:[#allocation0]]
  $region45: #{discriminator_forward.5} parent=0
    _
  %s6 = ssub.s32 1, %s4
  %s7 = scalar_select 0, %s6, %s4
  loop: start=0, step=1, limit=4
  $region2: #{discriminator_forward.5} parent=0 // loop_pre_header
    _
  $region3: #{discriminator_forward.5} parent=0 // loop_header
    %s9 = sphi 0, %s13
    %p10 = scmp.ge.s32.totalorder %s9, 4
    %s19 = sphi 0, %s21
    %s22 = sphi 0, %s19
    %s23 = sphi 0, %s22
    %s39 = sphi 0, %s23
    %s43 = sphi 0, %s43
    %s45 = sphi 0, %s43
    %s46 = sphi 0, %s45
    %s60 = sphi 0, %s46
    %s64 = sphi 0, %s64
    %s66 = sphi 0, %s64
    %s67 = sphi 0, %s66
    %s81 = sphi 0, %s67
    %s87 = sphi 0, %s89
    %s90 = sphi 0, %s87
    %s91 = sphi 0, %s90
    %s107 = sphi 0, %s91
  $region4: #{discriminator_forward.5} parent=0 // loop_header_branch
    %12 = sbr.rel (%p10) target = $region8
  $region5: #{discriminator_forward.5} parent=0 // loop_body
    %s14 = ssub.s32 %s9, 1
    %s15 = ssub.s32 %s9, 2
    %s16 = sadd.s32 %s9, 1
    %s17 = ssub.s32 %s9, %s16
    %p18 = scmp.eq.s32.totalorder %s17, 0
    %s20 = sadd.s32 %s19, 1
    %s21 = scalar_select %p18, %s19, %s20
    %p24 = pneg %p18
    %p25 = scmp.eq.s32.totalorder %s9, 1
    %p26 = por %p24, %p25
    %p27 = scmp.ne.s32.totalorder %s19, %s22
    %p28 = scmp.eq.s32.totalorder %s9, 0
    %p29 = por %p27, %p28
    %p30 = scmp.ne.s32.totalorder %s19, %s22
    %p31 = scmp.eq.s32.totalorder %s14, 1
    %p32 = por %p30, %p31
    %p33 = scmp.ne.s32.totalorder %s22, %s23
    %p34 = scmp.eq.s32.totalorder %s14, 0
    %p35 = por %p33, %p34
    %p36 = scmp.ne.s32.totalorder %s22, %s23
    %p37 = scmp.eq.s32.totalorder %s15, 1
    %p38 = por %p36, %p37
    %p40 = scmp.ne.s32.totalorder %s23, %s39
    %p41 = scmp.eq.s32.totalorder %s15, 0
    %p42 = por %p40, %p41
    %s44 = sadd.s32 %s43, 1
    %p47 = scmp.eq.s32.totalorder %s9, 1
    %p48 = scmp.ne.s32.totalorder %s43, %s45
    %p49 = scmp.eq.s32.totalorder %s9, 0
    %p50 = por %p48, %p49
    %p51 = scmp.ne.s32.totalorder %s43, %s45
    %p52 = scmp.eq.s32.totalorder %s14, 1
    %p53 = por %p51, %p52
    %p54 = scmp.ne.s32.totalorder %s45, %s46
    %p55 = scmp.eq.s32.totalorder %s14, 0
    %p56 = por %p54, %p55
    %p57 = scmp.ne.s32.totalorder %s45, %s46
    %p58 = scmp.eq.s32.totalorder %s15, 1
    %p59 = por %p57, %p58
    %p61 = scmp.ne.s32.totalorder %s46, %s60
    %p62 = scmp.eq.s32.totalorder %s15, 0
    %p63 = por %p61, %p62
    %s65 = sadd.s32 %s64, 1
    %p68 = scmp.eq.s32.totalorder %s9, 1
    %p69 = scmp.ne.s32.totalorder %s64, %s66
    %p70 = scmp.eq.s32.totalorder %s9, 0
    %p71 = por %p69, %p70
    %p72 = scmp.ne.s32.totalorder %s64, %s66
    %p73 = scmp.eq.s32.totalorder %s14, 1
    %p74 = por %p72, %p73
    %p75 = scmp.ne.s32.totalorder %s66, %s67
    %p76 = scmp.eq.s32.totalorder %s14, 0
    %p77 = por %p75, %p76
    %p78 = scmp.ne.s32.totalorder %s66, %s67
    %p79 = scmp.eq.s32.totalorder %s15, 1
    %p80 = por %p78, %p79
    %p82 = scmp.ne.s32.totalorder %s67, %s81
    %p83 = scmp.eq.s32.totalorder %s15, 0
    %p84 = por %p82, %p83
    %s85 = ssub.s32 %s9, %s16
    %p86 = scmp.eq.s32.totalorder %s85, 0
    %s88 = sadd.s32 %s87, 1
    %s89 = scalar_select %p86, %s87, %s88
    %p92 = pneg %p86
    %p93 = scmp.eq.s32.totalorder %s9, 1
    %p94 = por %p92, %p93
    %p95 = scmp.ne.s32.totalorder %s87, %s90
    %p96 = scmp.eq.s32.totalorder %s9, 0
    %p97 = por %p95, %p96
    %p98 = scmp.ne.s32.totalorder %s87, %s90
    %p99 = scmp.eq.s32.totalorder %s14, 1
    %p100 = por %p98, %p99
    %p101 = scmp.ne.s32.totalorder %s90, %s91
    %p102 = scmp.eq.s32.totalorder %s14, 0
    %p103 = por %p101, %p102
    %p104 = scmp.ne.s32.totalorder %s90, %s91
    %p105 = scmp.eq.s32.totalorder %s15, 1
    %p106 = por %p104, %p105
    %p108 = scmp.ne.s32.totalorder %s91, %s107
    %p109 = scmp.eq.s32.totalorder %s15, 0
    %p110 = por %p108, %p109
    %p111 = scmp.le.s32.totalorder 1, %s9
    %p112 = scmp.lt.s32.totalorder %s9, 3
    %p113 = pnand %p111, %p112
    %p114 = pneg %p113
    // Predicated region
    $region9: #{discriminator_forward.5} parent=5 // pred_check
      _
    $region10: #{discriminator_forward.5} parent=5 // pred_check_branch
      %116 = sbr.rel (%p113) target = $region12
    $region11: #{discriminator_forward.5} parent=5 // pred_region
      %s117 = ssub.s32 %s9, 1
      // Predicated region
      $region13: #{discriminator_forward.5} parent=11 // pred_check
        %p118 = pneg %p56
      $region14: #{discriminator_forward.5} parent=11 // pred_check_branch
        %120 = sbr.rel (%p118) target = $region16
      $region15: #{discriminator_forward.5} parent=11 // pred_region
        _
      $region16: #{discriminator_forward.5} parent=11 // pred_fallthru
        _
      // Predicated region
      $region17: #{discriminator_forward.5} parent=11 // pred_check
        %p121 = pneg %p77
      $region18: #{discriminator_forward.5} parent=11 // pred_check_branch
        %123 = sbr.rel (%p121) target = $region20
      $region19: #{discriminator_forward.5} parent=11 // pred_region
        _
      $region20: #{discriminator_forward.5} parent=11 // pred_fallthru
        _
    $region12: #{discriminator_forward.5} parent=5 // pred_fallthru
      _
    %p124 = scmp.lt.s32.totalorder %s9, 2
    // Predicated region
    $region21: #{discriminator_forward.5} parent=5 // pred_check
      %p125 = pneg %p124
    $region22: #{discriminator_forward.5} parent=5 // pred_check_branch
      %127 = sbr.rel (%p125) target = $region24
    $region23: #{discriminator_forward.5} parent=5 // pred_region
      // Predicated region
      $region25: #{discriminator_forward.5} parent=23 // pred_check
        %p128 = pneg %p29
      $region26: #{discriminator_forward.5} parent=23 // pred_check_branch
        %130 = sbr.rel (%p128) target = $region28
      $region27: #{discriminator_forward.5} parent=23 // pred_region
        %s131 = smul.u32 32, %s9
        %p132 = scmp.lt.s32.totalorder %s131, 63
        %s133 = scalar_select %p132, %s131, 63
        %s134 = smul.addr %s133, 4
        %s135 = scalar_lea.vmem %s0, %s134
        %s136 = smul.u32 32, %s9
      $region28: #{discriminator_forward.5} parent=23 // pred_fallthru
        _
    $region24: #{discriminator_forward.5} parent=5 // pred_fallthru
      _
    %p137 = scmp.le.s32.totalorder 1, %s9
    %p138 = scmp.lt.s32.totalorder %s9, 3
    %p139 = pnand %p137, %p138
    %p140 = pneg %p139
    // Predicated region
    $region29: #{discriminator_forward.5} parent=5 // pred_check
      _
    $region30: #{discriminator_forward.5} parent=5 // pred_check_branch
      %142 = sbr.rel (%p139) target = $region32
    $region31: #{discriminator_forward.5} parent=5 // pred_region
      %s143 = ssub.s32 %s9, 1
      %s144 = smul.u32 32, %s14
      %p145 = scmp.lt.s32.totalorder %s144, 63
      %s146 = scalar_select %p145, %s144, 63
      %s147 = smul.addr %s146, 4
      %s148 = scalar_lea.vmem %s0, %s147
      %p149 = pneg %p35
      %p150 = pneg %p32
      %p151 = pneg %p56
      %p152 = pneg %p53
      %p153 = pneg %p77
      %p154 = pneg %p74
      %p155 = pneg %p103
      %p156 = pneg %p100
      %s157 = smul.u32 32, %s14
      %p158 = scmp.lt.s32.totalorder %s157, 63
      %s159 = scalar_select %p158, %s157, 63
      %s160 = smul.addr %s159, 4
      %s161 = scalar_lea.vmem %s3, %s160
      %s162 = smul.u32 32, %s14
      %p163 = scmp.lt.s32.totalorder %s162, 63
      %s164 = scalar_select %p163, %s162, 63
      %s165 = smul.addr %s164, 4
      %s166 = scalar_lea.vmem %s0, %s165
      %s167 = smul.u32 32, %s14
      %s168 = smul.u32 32, %s14
      %p169 = scmp.lt.s32.totalorder %s168, 63
      %s170 = scalar_select %p169, %s168, 63
      %s171 = smul.addr %s170, 4
      %s172 = scalar_lea.vmem %s3, %s171
      %s173 = smul.u32 32, %s14
      %v175 = vld [vmem:[%s166] sm:$0xf]
      %v176 = vld [vmem:[%s166 + $0x4] sm:$0xf]
      %v177 = vld [vmem:[%s166 + $0x8] sm:$0xf]
      %v178 = vld [vmem:[%s166 + $0xc] sm:$0xf]
      %v179 = vld [vmem:[%s166 + $0x10] sm:$0xf]
      %v180 = vld [vmem:[%s166 + $0x14] sm:$0xf]
      %v181 = vld [vmem:[%s166 + $0x18] sm:$0xf]
      %v182 = vld [vmem:[%s166 + $0x1c] sm:$0xf]
      %v183 = vld [vmem:[%s166 + $0x20] sm:$0xf]
      %v184 = vld [vmem:[%s166 + $0x24] sm:$0xf]
      %v185 = vld [vmem:[%s166 + $0x28] sm:$0xf]
      %v186 = vld [vmem:[%s166 + $0x2c] sm:$0xf]
      %v187 = vld [vmem:[%s166 + $0x30] sm:$0xf]
      %v188 = vld [vmem:[%s166 + $0x34] sm:$0xf]
      %v189 = vld [vmem:[%s166 + $0x38] sm:$0xf]
      %v190 = vld [vmem:[%s166 + $0x3c] sm:$0xf]
      %v191 = vld [vmem:[%s166 + $0x40] sm:$0xf]
      %v192 = vld [vmem:[%s166 + $0x44] sm:$0xf]
      %v193 = vld [vmem:[%s166 + $0x48] sm:$0xf]
      %v194 = vld [vmem:[%s166 + $0x4c] sm:$0xf]
      %v195 = vld [vmem:[%s166 + $0x50] sm:$0xf]
      %v196 = vld [vmem:[%s166 + $0x54] sm:$0xf]
      %v197 = vld [vmem:[%s166 + $0x58] sm:$0xf]
      %v198 = vld [vmem:[%s166 + $0x5c] sm:$0xf]
      %v199 = vld [vmem:[%s166 + $0x60] sm:$0xf]
      %v200 = vld [vmem:[%s166 + $0x64] sm:$0xf]
      %v201 = vld [vmem:[%s166 + $0x68] sm:$0xf]
      %v202 = vld [vmem:[%s166 + $0x6c] sm:$0xf]
      %v203 = vld [vmem:[%s166 + $0x70] sm:$0xf]
      %v204 = vld [vmem:[%s166 + $0x74] sm:$0xf]
      %v205 = vld [vmem:[%s166 + $0x78] sm:$0xf]
      %v206 = vld [vmem:[%s166 + $0x7c] sm:$0xf]
      %v207 = vld [vmem:[%s1] sm:$0xf]
      %v208 = vld [vmem:[%s1 + $0x4] sm:$0xf]
      %v209 = vld [vmem:[%s1 + $0x8] sm:$0xf]
      %v210 = vld [vmem:[%s1 + $0xc] sm:$0xf]
      %v211 = vld [vmem:[%s1 + $0x10] sm:$0xf]
      %v212 = vld [vmem:[%s1 + $0x14] sm:$0xf]
      %v213 = vld [vmem:[%s1 + $0x18] sm:$0xf]
      %v214 = vld [vmem:[%s1 + $0x1c] sm:$0xf]
      %v215 = vld [vmem:[%s1 + $0x20] sm:$0xf]
      %v216 = vld [vmem:[%s1 + $0x24] sm:$0xf]
      %v217 = vld [vmem:[%s1 + $0x28] sm:$0xf]
      %v218 = vld [vmem:[%s1 + $0x2c] sm:$0xf]
      %v219 = vld [vmem:[%s1 + $0x30] sm:$0xf]
      %v220 = vld [vmem:[%s1 + $0x34] sm:$0xf]
      %v221 = vld [vmem:[%s1 + $0x38] sm:$0xf]
      %v222 = vld [vmem:[%s1 + $0x3c] sm:$0xf]
      %v223 = vld [vmem:[%s2] sm:$0x1]
      %v225 = vlaneseq
      %v226 = vshrl.u32 %v225, 7
      %v227 = vsub.s32 0, %v226
      %v228 = vrot.slane %v223, %v227
      %v262 = vunpack.c.l.b16 %v175
      %v263 = vunpack.c.l.b16 %v176
      %v264 = vunpack.c.l.b16 %v177
      %v265 = vunpack.c.l.b16 %v178
      %v266 = vunpack.c.l.b16 %v179
      %v267 = vunpack.c.l.b16 %v180
      %v268 = vunpack.c.l.b16 %v181
      %v269 = vunpack.c.l.b16 %v182
      %v270 = vunpack.c.l.b16 %v183
      %v271 = vunpack.c.l.b16 %v184
      %v272 = vunpack.c.l.b16 %v185
      %v273 = vunpack.c.l.b16 %v186
      %v274 = vunpack.c.l.b16 %v187
      %v275 = vunpack.c.l.b16 %v188
      %v276 = vunpack.c.l.b16 %v189
      %v277 = vunpack.c.l.b16 %v190
      %v278 = vunpack.c.l.b16 %v191
      %v279 = vunpack.c.l.b16 %v192
      %v280 = vunpack.c.l.b16 %v193
      %v281 = vunpack.c.l.b16 %v194
      %v282 = vunpack.c.l.b16 %v195
      %v283 = vunpack.c.l.b16 %v196
      %v284 = vunpack.c.l.b16 %v197
      %v285 = vunpack.c.l.b16 %v198
      %v286 = vunpack.c.l.b16 %v199
      %v287 = vunpack.c.l.b16 %v200
      %v288 = vunpack.c.l.b16 %v201
      %v289 = vunpack.c.l.b16 %v202
      %v290 = vunpack.c.l.b16 %v203
      %v291 = vunpack.c.l.b16 %v204
      %v292 = vunpack.c.l.b16 %v205
      %v293 = vunpack.c.l.b16 %v206
      %v294 = vpack.c.b16 %v263, %v262
      %v295 = vpack.c.b16 %v265, %v264
      %v296 = vpack.c.b16 %v267, %v266
      %v297 = vpack.c.b16 %v269, %v268
      %v298 = vpack.c.b16 %v271, %v270
      %v299 = vpack.c.b16 %v273, %v272
      %v300 = vpack.c.b16 %v275, %v274
      %v301 = vpack.c.b16 %v277, %v276
      %v302 = vpack.c.b16 %v279, %v278
      %v303 = vpack.c.b16 %v281, %v280
      %v304 = vpack.c.b16 %v283, %v282
      %v305 = vpack.c.b16 %v285, %v284
      %v306 = vpack.c.b16 %v287, %v286
      %v307 = vpack.c.b16 %v289, %v288
      %v308 = vpack.c.b16 %v291, %v290
      %v309 = vpack.c.b16 %v293, %v292
      %v342 = vunpack.c.l.b16 %v207
      %v343 = vunpack.c.l.b16 %v208
      %v344 = vunpack.c.l.b16 %v209
      %v345 = vunpack.c.l.b16 %v210
      %v346 = vunpack.c.l.b16 %v211
      %v347 = vunpack.c.l.b16 %v212
      %v348 = vunpack.c.l.b16 %v213
      %v349 = vunpack.c.l.b16 %v214
      %v350 = vunpack.c.l.b16 %v215
      %v351 = vunpack.c.l.b16 %v216
      %v352 = vunpack.c.l.b16 %v217
      %v353 = vunpack.c.l.b16 %v218
      %v354 = vunpack.c.l.b16 %v219
      %v355 = vunpack.c.l.b16 %v220
      %v356 = vunpack.c.l.b16 %v221
      %v357 = vunpack.c.l.b16 %v222
      %v358 = vpack.c.b16 %v343, %v342
      %v359 = vpack.c.b16 %v345, %v344
      %v360 = vpack.c.b16 %v347, %v346
      %v361 = vpack.c.b16 %v349, %v348
      %v362 = vpack.c.b16 %v351, %v350
      %v363 = vpack.c.b16 %v353, %v352
      %v364 = vpack.c.b16 %v355, %v354
      %v365 = vpack.c.b16 %v357, %v356
      %374 = vmatprep.subr.bf16.mxu0 0
      %375 = vmatpush1.bf16.msra.mxu0 %v365
      %376 = vmatprep.subr.bf16.mxu0 0
      %377 = vmatpush1.bf16.msra.mxu0 %v364
      %378 = vmatprep.subr.bf16.mxu0 0
      %379 = vmatpush1.bf16.msra.mxu0 %v363
      %380 = vmatprep.subr.bf16.mxu0 0
      %381 = vmatpush1.bf16.msra.mxu0 %v362
      %382 = vmatprep.subr.bf16.mxu0 0
      %383 = vmatpush1.bf16.msra.mxu0 %v361
      %384 = vmatprep.subr.bf16.mxu0 0
      %385 = vmatpush1.bf16.msra.mxu0 %v360
      %386 = vmatprep.subr.bf16.mxu0 0
      %387 = vmatpush1.bf16.msra.mxu0 %v359
      %388 = vmatprep.subr.bf16.mxu0 0
      %389 = vmatpush1.bf16.msra.mxu0 %v358
      %390 = vmatprep.subr.bf16.mxu0 0
      %391 = vmatpush2.bf16.msra.mxu0 0
      %392 = vmatprep.subr.bf16.mxu0 0
      %393 = vmatpush2.bf16.msra.mxu0 0
      %394 = vmatprep.subr.bf16.mxu0 0
      %395 = vmatpush2.bf16.msra.mxu0 0
      %396 = vmatprep.subr.bf16.mxu0 0
      %397 = vmatpush2.bf16.msra.mxu0 0
      %398 = vmatprep.subr.bf16.mxu0 0
      %399 = vmatpush2.bf16.msra.mxu0 0
      %400 = vmatprep.subr.bf16.mxu0 0
      %401 = vmatpush2.bf16.msra.mxu0 0
      %402 = vmatprep.subr.bf16.mxu0 0
      %403 = vmatpush2.bf16.msra.mxu0 0
      %404 = vmatprep.subr.bf16.mxu0 0
      %405 = vmatpush2.bf16.msra.mxu0 0
      %406 = vmatprep.mubr.bf16.mxu0 0
      %407 = vmatmul.mubr.bf16.gmra.mxu0 %v294
      %v408 = vpop.f32.mrf.mxu0
      %v409 = vadd.f32 %v228, %v408
      %v410 = vpop.f32.mrf.mxu0
      %v411 = vpop.f32.mrf.mxu0
      %v412 = vadd.f32 %v228, %v411
      %v413 = vpop.f32.mrf.mxu0
      %414 = vmatprep.mubr.bf16.mxu0 0
      %415 = vmatmul.mubr.bf16.gmra.mxu0 %v295
      %v416 = vpop.f32.mrf.mxu0
      %v417 = vadd.f32 %v228, %v416
      %v418 = vpop.f32.mrf.mxu0
      %v419 = vpop.f32.mrf.mxu0
      %v420 = vadd.f32 %v228, %v419
      %v421 = vpop.f32.mrf.mxu0
      %422 = vmatprep.mubr.bf16.mxu0 0
      %423 = vmatmul.mubr.bf16.gmra.mxu0 %v296
      %v424 = vpop.f32.mrf.mxu0
      %v425 = vadd.f32 %v228, %v424
      %v426 = vpop.f32.mrf.mxu0
      %v427 = vpop.f32.mrf.mxu0
      %v428 = vadd.f32 %v228, %v427
      %v429 = vpop.f32.mrf.mxu0
      %430 = vmatprep.mubr.bf16.mxu0 0
      %431 = vmatmul.mubr.bf16.gmra.mxu0 %v297
      %v432 = vpop.f32.mrf.mxu0
      %v433 = vadd.f32 %v228, %v432
      %v434 = vpop.f32.mrf.mxu0
      %v435 = vpop.f32.mrf.mxu0
      %v436 = vadd.f32 %v228, %v435
      %v437 = vpop.f32.mrf.mxu0
      %438 = vmatprep.mubr.bf16.mxu0 0
      %439 = vmatmul.mubr.bf16.gmra.mxu0 %v298
      %v440 = vpop.f32.mrf.mxu0
      %v441 = vadd.f32 %v228, %v440
      %v442 = vpop.f32.mrf.mxu0
      %v443 = vpop.f32.mrf.mxu0
      %v444 = vadd.f32 %v228, %v443
      %v445 = vpop.f32.mrf.mxu0
      %446 = vmatprep.mubr.bf16.mxu0 0
      %447 = vmatmul.mubr.bf16.gmra.mxu0 %v299
      %v448 = vpop.f32.mrf.mxu0
      %v449 = vadd.f32 %v228, %v448
      %v450 = vpop.f32.mrf.mxu0
      %v451 = vpop.f32.mrf.mxu0
      %v452 = vadd.f32 %v228, %v451
      %v453 = vpop.f32.mrf.mxu0
      %454 = vmatprep.mubr.bf16.mxu0 0
      %455 = vmatmul.mubr.bf16.gmra.mxu0 %v300
      %v456 = vpop.f32.mrf.mxu0
      %v457 = vadd.f32 %v228, %v456
      %v458 = vpop.f32.mrf.mxu0
      %v459 = vpop.f32.mrf.mxu0
      %v460 = vadd.f32 %v228, %v459
      %v461 = vpop.f32.mrf.mxu0
      %462 = vmatprep.mubr.bf16.mxu0 0
      %463 = vmatmul.mubr.bf16.gmra.mxu0 %v301
      %v464 = vpop.f32.mrf.mxu0
      %v465 = vadd.f32 %v228, %v464
      %v466 = vpop.f32.mrf.mxu0
      %v467 = vpop.f32.mrf.mxu0
      %v468 = vadd.f32 %v228, %v467
      %v469 = vpop.f32.mrf.mxu0
      %470 = vmatprep.mubr.bf16.mxu0 0
      %471 = vmatmul.mubr.bf16.gmra.mxu0 %v302
      %v472 = vpop.f32.mrf.mxu0
      %v473 = vadd.f32 %v228, %v472
      %v474 = vpop.f32.mrf.mxu0
      %v475 = vpop.f32.mrf.mxu0
      %v476 = vadd.f32 %v228, %v475
      %v477 = vpop.f32.mrf.mxu0
      %478 = vmatprep.mubr.bf16.mxu0 0
      %479 = vmatmul.mubr.bf16.gmra.mxu0 %v303
      %v480 = vpop.f32.mrf.mxu0
      %v481 = vadd.f32 %v228, %v480
      %v482 = vpop.f32.mrf.mxu0
      %v483 = vpop.f32.mrf.mxu0
      %v484 = vadd.f32 %v228, %v483
      %v485 = vpop.f32.mrf.mxu0
      %486 = vmatprep.mubr.bf16.mxu0 0
      %487 = vmatmul.mubr.bf16.gmra.mxu0 %v304
      %v488 = vpop.f32.mrf.mxu0
      %v489 = vadd.f32 %v228, %v488
      %v490 = vpop.f32.mrf.mxu0
      %v491 = vpop.f32.mrf.mxu0
      %v492 = vadd.f32 %v228, %v491
      %v493 = vpop.f32.mrf.mxu0
      %494 = vmatprep.mubr.bf16.mxu0 0
      %495 = vmatmul.mubr.bf16.gmra.mxu0 %v305
      %v496 = vpop.f32.mrf.mxu0
      %v497 = vadd.f32 %v228, %v496
      %v498 = vpop.f32.mrf.mxu0
      %v499 = vpop.f32.mrf.mxu0
      %v500 = vadd.f32 %v228, %v499
      %v501 = vpop.f32.mrf.mxu0
      %502 = vmatprep.mubr.bf16.mxu0 0
      %503 = vmatmul.mubr.bf16.gmra.mxu0 %v306
      %v504 = vpop.f32.mrf.mxu0
      %v505 = vadd.f32 %v228, %v504
      %v506 = vpop.f32.mrf.mxu0
      %v507 = vpop.f32.mrf.mxu0
      %v508 = vadd.f32 %v228, %v507
      %v509 = vpop.f32.mrf.mxu0
      %510 = vmatprep.mubr.bf16.mxu0 0
      %511 = vmatmul.mubr.bf16.gmra.mxu0 %v307
      %v512 = vpop.f32.mrf.mxu0
      %v513 = vadd.f32 %v228, %v512
      %v514 = vpop.f32.mrf.mxu0
      %v515 = vpop.f32.mrf.mxu0
      %v516 = vadd.f32 %v228, %v515
      %v517 = vpop.f32.mrf.mxu0
      %518 = vmatprep.mubr.bf16.mxu0 0
      %519 = vmatmul.mubr.bf16.gmra.mxu0 %v308
      %v520 = vpop.f32.mrf.mxu0
      %v521 = vadd.f32 %v228, %v520
      %v522 = vpop.f32.mrf.mxu0
      %v523 = vpop.f32.mrf.mxu0
      %v524 = vadd.f32 %v228, %v523
      %v525 = vpop.f32.mrf.mxu0
      %526 = vmatprep.mubr.bf16.mxu0 0
      %527 = vmatmul.mubr.bf16.gmra.mxu0 %v309
      %v528 = vpop.f32.mrf.mxu0
      %v529 = vadd.f32 %v228, %v528
      %v530 = vpop.f32.mrf.mxu0
      %v531 = vpop.f32.mrf.mxu0
      %v532 = vadd.f32 %v228, %v531
      %v533 = vpop.f32.mrf.mxu0
      %534 = vdwg.mxu0
      %v535 = vmul.f32 %v409, 0.2
      %v536 = vmul.f32 %v412, 0.2
      %v537 = vmul.f32 %v417, 0.2
      %v538 = vmul.f32 %v420, 0.2
      %v539 = vmul.f32 %v425, 0.2
      %v540 = vmul.f32 %v428, 0.2
      %v541 = vmul.f32 %v433, 0.2
      %v542 = vmul.f32 %v436, 0.2
      %v543 = vmul.f32 %v441, 0.2
      %v544 = vmul.f32 %v444, 0.2
      %v545 = vmul.f32 %v449, 0.2
      %v546 = vmul.f32 %v452, 0.2
      %v547 = vmul.f32 %v457, 0.2
      %v548 = vmul.f32 %v460, 0.2
      %v549 = vmul.f32 %v465, 0.2
      %v550 = vmul.f32 %v468, 0.2
      %v551 = vmul.f32 %v473, 0.2
      %v552 = vmul.f32 %v476, 0.2
      %v553 = vmul.f32 %v481, 0.2
      %v554 = vmul.f32 %v484, 0.2
      %v555 = vmul.f32 %v489, 0.2
      %v556 = vmul.f32 %v492, 0.2
      %v557 = vmul.f32 %v497, 0.2
      %v558 = vmul.f32 %v500, 0.2
      %v559 = vmul.f32 %v505, 0.2
      %v560 = vmul.f32 %v508, 0.2
      %v561 = vmul.f32 %v513, 0.2
      %v562 = vmul.f32 %v516, 0.2
      %v563 = vmul.f32 %v521, 0.2
      %v564 = vmul.f32 %v524, 0.2
      %v565 = vmul.f32 %v529, 0.2
      %v566 = vmul.f32 %v532, 0.2
      %v567 = vmax.f32 %v409, %v535
      %v568 = vmax.f32 %v412, %v536
      %v569 = vmax.f32 %v417, %v537
      %v570 = vmax.f32 %v420, %v538
      %v571 = vmax.f32 %v425, %v539
      %v572 = vmax.f32 %v428, %v540
      %v573 = vmax.f32 %v433, %v541
      %v574 = vmax.f32 %v436, %v542
      %v575 = vmax.f32 %v441, %v543
      %v576 = vmax.f32 %v444, %v544
      %v577 = vmax.f32 %v449, %v545
      %v578 = vmax.f32 %v452, %v546
      %v579 = vmax.f32 %v457, %v547
      %v580 = vmax.f32 %v460, %v548
      %v581 = vmax.f32 %v465, %v549
      %v582 = vmax.f32 %v468, %v550
      %v583 = vmax.f32 %v473, %v551
      %v584 = vmax.f32 %v476, %v552
      %v585 = vmax.f32 %v481, %v553
      %v586 = vmax.f32 %v484, %v554
      %v587 = vmax.f32 %v489, %v555
      %v588 = vmax.f32 %v492, %v556
      %v589 = vmax.f32 %v497, %v557
      %v590 = vmax.f32 %v500, %v558
      %v591 = vmax.f32 %v505, %v559
      %v592 = vmax.f32 %v508, %v560
      %v593 = vmax.f32 %v513, %v561
      %v594 = vmax.f32 %v516, %v562
      %v595 = vmax.f32 %v521, %v563
      %v596 = vmax.f32 %v524, %v564
      %v597 = vmax.f32 %v529, %v565
      %v598 = vmax.f32 %v532, %v566
      %v599 = vpack.c.bf16 %v568, %v567
      %v600 = vpack.c.bf16 %v570, %v569
      %v601 = vpack.c.bf16 %v572, %v571
      %v602 = vpack.c.bf16 %v574, %v573
      %v603 = vpack.c.bf16 %v576, %v575
      %v604 = vpack.c.bf16 %v578, %v577
      %v605 = vpack.c.bf16 %v580, %v579
      %v606 = vpack.c.bf16 %v582, %v581
      %v607 = vpack.c.bf16 %v584, %v583
      %v608 = vpack.c.bf16 %v586, %v585
      %v609 = vpack.c.bf16 %v588, %v587
      %v610 = vpack.c.bf16 %v590, %v589
      %v611 = vpack.c.bf16 %v592, %v591
      %v612 = vpack.c.bf16 %v594, %v593
      %v613 = vpack.c.bf16 %v596, %v595
      %v614 = vpack.c.bf16 %v598, %v597
      %v631 = vunpack.c.l.b16 %v599
      %v632 = vunpack.c.h.b16 %v599
      %v633 = vunpack.c.l.b16 %v600
      %v634 = vunpack.c.h.b16 %v600
      %v635 = vunpack.c.l.b16 %v601
      %v636 = vunpack.c.h.b16 %v601
      %v637 = vunpack.c.l.b16 %v602
      %v638 = vunpack.c.h.b16 %v602
      %v639 = vunpack.c.l.b16 %v603
      %v640 = vunpack.c.h.b16 %v603
      %v641 = vunpack.c.l.b16 %v604
      %v642 = vunpack.c.h.b16 %v604
      %v643 = vunpack.c.l.b16 %v605
      %v644 = vunpack.c.h.b16 %v605
      %v645 = vunpack.c.l.b16 %v606
      %v646 = vunpack.c.h.b16 %v606
      %v647 = vunpack.c.l.b16 %v607
      %v648 = vunpack.c.h.b16 %v607
      %v649 = vunpack.c.l.b16 %v608
      %v650 = vunpack.c.h.b16 %v608
      %v651 = vunpack.c.l.b16 %v609
      %v652 = vunpack.c.h.b16 %v609
      %v653 = vunpack.c.l.b16 %v610
      %v654 = vunpack.c.h.b16 %v610
      %v655 = vunpack.c.l.b16 %v611
      %v656 = vunpack.c.h.b16 %v611
      %v657 = vunpack.c.l.b16 %v612
      %v658 = vunpack.c.h.b16 %v612
      %v659 = vunpack.c.l.b16 %v613
      %v660 = vunpack.c.h.b16 %v613
      %v661 = vunpack.c.l.b16 %v614
      %v662 = vunpack.c.h.b16 %v614
      %v663 = vpack.c.b16 %v631, %v631
      %v664 = vpack.c.b16 %v632, %v632
      %v665 = vpack.c.b16 %v633, %v633
      %v666 = vpack.c.b16 %v634, %v634
      %v667 = vpack.c.b16 %v635, %v635
      %v668 = vpack.c.b16 %v636, %v636
      %v669 = vpack.c.b16 %v637, %v637
      %v670 = vpack.c.b16 %v638, %v638
      %v671 = vpack.c.b16 %v639, %v639
      %v672 = vpack.c.b16 %v640, %v640
      %v673 = vpack.c.b16 %v641, %v641
      %v674 = vpack.c.b16 %v642, %v642
      %v675 = vpack.c.b16 %v643, %v643
      %v676 = vpack.c.b16 %v644, %v644
      %v677 = vpack.c.b16 %v645, %v645
      %v678 = vpack.c.b16 %v646, %v646
      %v679 = vpack.c.b16 %v647, %v647
      %v680 = vpack.c.b16 %v648, %v648
      %v681 = vpack.c.b16 %v649, %v649
      %v682 = vpack.c.b16 %v650, %v650
      %v683 = vpack.c.b16 %v651, %v651
      %v684 = vpack.c.b16 %v652, %v652
      %v685 = vpack.c.b16 %v653, %v653
      %v686 = vpack.c.b16 %v654, %v654
      %v687 = vpack.c.b16 %v655, %v655
      %v688 = vpack.c.b16 %v656, %v656
      %v689 = vpack.c.b16 %v657, %v657
      %v690 = vpack.c.b16 %v658, %v658
      %v691 = vpack.c.b16 %v659, %v659
      %v692 = vpack.c.b16 %v660, %v660
      %v693 = vpack.c.b16 %v661, %v661
      %v694 = vpack.c.b16 %v662, %v662
      %vm727 = vcmask 519168
      %728 = vst.msk [vmem:[%s172] sm:$0xf] %vm727, %v663
      %729 = vst.msk [vmem:[%s172 + $0x4] sm:$0xf] %vm727, %v664
      %730 = vst.msk [vmem:[%s172 + $0x8] sm:$0xf] %vm727, %v665
      %731 = vst.msk [vmem:[%s172 + $0xc] sm:$0xf] %vm727, %v666
      %732 = vst.msk [vmem:[%s172 + $0x10] sm:$0xf] %vm727, %v667
      %733 = vst.msk [vmem:[%s172 + $0x14] sm:$0xf] %vm727, %v668
      %734 = vst.msk [vmem:[%s172 + $0x18] sm:$0xf] %vm727, %v669
      %735 = vst.msk [vmem:[%s172 + $0x1c] sm:$0xf] %vm727, %v670
      %736 = vst.msk [vmem:[%s172 + $0x20] sm:$0xf] %vm727, %v671
      %737 = vst.msk [vmem:[%s172 + $0x24] sm:$0xf] %vm727, %v672
      %738 = vst.msk [vmem:[%s172 + $0x28] sm:$0xf] %vm727, %v673
      %739 = vst.msk [vmem:[%s172 + $0x2c] sm:$0xf] %vm727, %v674
      %740 = vst.msk [vmem:[%s172 + $0x30] sm:$0xf] %vm727, %v675
      %741 = vst.msk [vmem:[%s172 + $0x34] sm:$0xf] %vm727, %v676
      %742 = vst.msk [vmem:[%s172 + $0x38] sm:$0xf] %vm727, %v677
      %743 = vst.msk [vmem:[%s172 + $0x3c] sm:$0xf] %vm727, %v678
      %744 = vst.msk [vmem:[%s172 + $0x40] sm:$0xf] %vm727, %v679
      %745 = vst.msk [vmem:[%s172 + $0x44] sm:$0xf] %vm727, %v680
      %746 = vst.msk [vmem:[%s172 + $0x48] sm:$0xf] %vm727, %v681
      %747 = vst.msk [vmem:[%s172 + $0x4c] sm:$0xf] %vm727, %v682
      %748 = vst.msk [vmem:[%s172 + $0x50] sm:$0xf] %vm727, %v683
      %749 = vst.msk [vmem:[%s172 + $0x54] sm:$0xf] %vm727, %v684
      %750 = vst.msk [vmem:[%s172 + $0x58] sm:$0xf] %vm727, %v685
      %751 = vst.msk [vmem:[%s172 + $0x5c] sm:$0xf] %vm727, %v686
      %752 = vst.msk [vmem:[%s172 + $0x60] sm:$0xf] %vm727, %v687
      %753 = vst.msk [vmem:[%s172 + $0x64] sm:$0xf] %vm727, %v688
      %754 = vst.msk [vmem:[%s172 + $0x68] sm:$0xf] %vm727, %v689
      %755 = vst.msk [vmem:[%s172 + $0x6c] sm:$0xf] %vm727, %v690
      %756 = vst.msk [vmem:[%s172 + $0x70] sm:$0xf] %vm727, %v691
      %757 = vst.msk [vmem:[%s172 + $0x74] sm:$0xf] %vm727, %v692
      %758 = vst.msk [vmem:[%s172 + $0x78] sm:$0xf] %vm727, %v693
      %759 = vst.msk [vmem:[%s172 + $0x7c] sm:$0xf] %vm727, %v694
      %s760 = smul.u32 32, %s14
      %p761 = scmp.lt.s32.totalorder %s760, 63
      %s762 = scalar_select %p761, %s760, 63
      %s763 = smul.addr %s762, 4
      %s764 = scalar_lea.vmem %s3, %s763
      // Predicated region
      $region33: #{discriminator_forward.5} parent=31 // pred_check
        %p765 = pneg %p100
      $region34: #{discriminator_forward.5} parent=31 // pred_check_branch
        %767 = sbr.rel (%p765) target = $region36
      $region35: #{discriminator_forward.5} parent=31 // pred_region
        %s768 = smul.u32 32, %s14
      $region36: #{discriminator_forward.5} parent=31 // pred_fallthru
        _
    $region32: #{discriminator_forward.5} parent=5 // pred_fallthru
      _
    %p769 = scmp.le.s32.totalorder 2, %s9
    // Predicated region
    $region37: #{discriminator_forward.5} parent=5 // pred_check
      %p770 = pneg %p769
    $region38: #{discriminator_forward.5} parent=5 // pred_check_branch
      %772 = sbr.rel (%p770) target = $region40
    $region39: #{discriminator_forward.5} parent=5 // pred_region
      %s773 = ssub.s32 %s9, 2
      // Predicated region
      $region41: #{discriminator_forward.5} parent=39 // pred_check
        %p774 = pneg %p106
      $region42: #{discriminator_forward.5} parent=39 // pred_check_branch
        %776 = sbr.rel (%p774) target = $region44
      $region43: #{discriminator_forward.5} parent=39 // pred_region
        %s777 = smul.u32 32, %s15
        %p778 = scmp.lt.s32.totalorder %s777, 63
        %s779 = scalar_select %p778, %s777, 63
        %s780 = smul.addr %s779, 4
        %s781 = scalar_lea.vmem %s3, %s780
      $region44: #{discriminator_forward.5} parent=39 // pred_fallthru
        _
    $region40: #{discriminator_forward.5} parent=5 // pred_fallthru
      _
  $region6: #{discriminator_forward.5} parent=0 // loop_footer
    %s13 = sadd.s32 1, %s9
  $region7: #{discriminator_forward.5} parent=0 // loop_footer_branch
    %8 = sbr.rel target = $region3
  $region8: #{discriminator_forward.5} parent=0 // loop_exit
    _

// kernel: discriminator_forward.6
$region0: #{discriminator_forward.6}
  #allocation0 [shape = 'u32[]', space=smem, size = 0x4, offset = 0x4, fixed_abs, tag = 'smem constant byte address 0x4 - core index']
  #allocation1 [shape = 'u32[144,128]{1,0:T(1,128)}', space=vmem, size = 0x12000, scoped, tag = 'internal scratch']
  #allocation2 [shape = 'f32[64,128]{1,0:T(8,128)}', space=vmem, size = 0x8000, scoped, tag = 'scratch operand']
  %s0 = inlined_call_operand.vmem [shape: bf16[2,64,1024], index: 0, kind: input, shape index: {}]
  %s1 = inlined_call_operand.vmem [shape: bf16[1024,128], index: 1, kind: input, shape index: {}]
  %s2 = inlined_call_operand.vmem [shape: f32[1,128], index: 2, kind: input, shape index: {}]
  %s3 = inlined_call_operand.vmem [shape: bf16[2,64,128], index: 3, kind: output, shape index: {}]
  %s4 = sld [smem:[#allocation0]]
  $region53: #{discriminator_forward.6} parent=0
    _
  %s6 = ssub.s32 1, %s4
  %s7 = scalar_select 0, %s6, %s4
  loop: start=0, step=1, limit=4
  $region2: #{discriminator_forward.6} parent=0 // loop_pre_header
    _
  $region3: #{discriminator_forward.6} parent=0 // loop_header
    %s9 = sphi 0, %s13
    %p10 = scmp.ge.s32.totalorder %s9, 4
    %s16 = sphi 0, %s35
    %s17 = sphi 0, %s31
    %s18 = sphi 0, %s27
    %s19 = sphi 0, %s16
    %s20 = sphi 0, %s17
    %s21 = sphi 0, %s18
    %s22 = sphi 0, %s19
    %s23 = sphi 0, %s20
    %s24 = sphi 0, %s21
    %s40 = sphi 0, %s42
    %s43 = sphi 0, %s40
    %s44 = sphi 0, %s43
    %s60 = sphi 0, %s44
    %s68 = sphi 0, %s70
    %s71 = sphi 0, %s68
    %s72 = sphi 0, %s71
    %s88 = sphi 0, %s72
    %s94 = sphi 0, %s96
    %s97 = sphi 0, %s94
    %s98 = sphi 0, %s97
    %s114 = sphi 0, %s98
    %s122 = sphi 0, %s124
    %s125 = sphi 0, %s122
    %s126 = sphi 0, %s125
    %s142 = sphi 0, %s126
  $region4: #{discriminator_forward.6} parent=0 // loop_header_branch
    %12 = sbr.rel (%p10) target = $region8
  $region5: #{discriminator_forward.6} parent=0 // loop_body
    %s14 = ssub.s32 %s9, 1
    %s15 = ssub.s32 %s9, 2
    %s25 = sadd.s32 1, %s18
    %p26 = scmp.ge.s32.totalorder %s25, 1
    %s27 = scalar_select %p26, 0, %s25
    %s28 = sadd.s32 1, %s17
    %s29 = scalar_select %p26, %s28, %s17
    %p30 = scmp.ge.s32.totalorder %s29, 1
    %s31 = scalar_select %p30, 0, %s29
    %s32 = sadd.s32 1, %s16
    %s33 = scalar_select %p30, %s32, %s16
    %p34 = scmp.ge.s32.totalorder %s33, 2
    %s35 = scalar_select %p34, 0, %s33
    %s36 = ssub.s32 %s16, %s35
    %s37 = ssub.s32 %s18, %s27
    %s38 = sor.u32 %s36, %s37
    %p39 = scmp.eq.s32.totalorder %s38, 0
    %s41 = sadd.s32 %s40, 1
    %s42 = scalar_select %p39, %s40, %s41
    %p45 = pneg %p39
    %p46 = scmp.eq.s32.totalorder %s9, 1
    %p47 = por %p45, %p46
    %p48 = scmp.ne.s32.totalorder %s40, %s43
    %p49 = scmp.eq.s32.totalorder %s9, 0
    %p50 = por %p48, %p49
    %p51 = scmp.ne.s32.totalorder %s40, %s43
    %p52 = scmp.eq.s32.totalorder %s14, 1
    %p53 = por %p51, %p52
    %p54 = scmp.ne.s32.totalorder %s43, %s44
    %p55 = scmp.eq.s32.totalorder %s14, 0
    %p56 = por %p54, %p55
    %p57 = scmp.ne.s32.totalorder %s43, %s44
    %p58 = scmp.eq.s32.totalorder %s15, 1
    %p59 = por %p57, %p58
    %p61 = scmp.ne.s32.totalorder %s44, %s60
    %p62 = scmp.eq.s32.totalorder %s15, 0
    %p63 = por %p61, %p62
    %s64 = ssub.s32 %s18, %s27
    %s65 = ssub.s32 %s17, %s31
    %s66 = sor.u32 %s64, %s65
    %p67 = scmp.eq.s32.totalorder %s66, 0
    %s69 = sadd.s32 %s68, 1
    %s70 = scalar_select %p67, %s68, %s69
    %p73 = pneg %p67
    %p74 = scmp.eq.s32.totalorder %s9, 1
    %p75 = por %p73, %p74
    %p76 = scmp.ne.s32.totalorder %s68, %s71
    %p77 = scmp.eq.s32.totalorder %s9, 0
    %p78 = por %p76, %p77
    %p79 = scmp.ne.s32.totalorder %s68, %s71
    %p80 = scmp.eq.s32.totalorder %s14, 1
    %p81 = por %p79, %p80
    %p82 = scmp.ne.s32.totalorder %s71, %s72
    %p83 = scmp.eq.s32.totalorder %s14, 0
    %p84 = por %p82, %p83
    %p85 = scmp.ne.s32.totalorder %s71, %s72
    %p86 = scmp.eq.s32.totalorder %s15, 1
    %p87 = por %p85, %p86
    %p89 = scmp.ne.s32.totalorder %s72, %s88
    %p90 = scmp.eq.s32.totalorder %s15, 0
    %p91 = por %p89, %p90
    %s92 = ssub.s32 %s17, %s31
    %p93 = scmp.eq.s32.totalorder %s92, 0
    %s95 = sadd.s32 %s94, 1
    %s96 = scalar_select %p93, %s94, %s95
    %p99 = pneg %p93
    %p100 = scmp.eq.s32.totalorder %s9, 1
    %p101 = por %p99, %p100
    %p102 = scmp.ne.s32.totalorder %s94, %s97
    %p103 = scmp.eq.s32.totalorder %s9, 0
    %p104 = por %p102, %p103
    %p105 = scmp.ne.s32.totalorder %s94, %s97
    %p106 = scmp.eq.s32.totalorder %s14, 1
    %p107 = por %p105, %p106
    %p108 = scmp.ne.s32.totalorder %s97, %s98
    %p109 = scmp.eq.s32.totalorder %s14, 0
    %p110 = por %p108, %p109
    %p111 = scmp.ne.s32.totalorder %s97, %s98
    %p112 = scmp.eq.s32.totalorder %s15, 1
    %p113 = por %p111, %p112
    %p115 = scmp.ne.s32.totalorder %s98, %s114
    %p116 = scmp.eq.s32.totalorder %s15, 0
    %p117 = por %p115, %p116
    %s118 = ssub.s32 %s16, %s35
    %s119 = ssub.s32 %s17, %s31
    %s120 = sor.u32 %s118, %s119
    %p121 = scmp.eq.s32.totalorder %s120, 0
    %s123 = sadd.s32 %s122, 1
    %s124 = scalar_select %p121, %s122, %s123
    %p127 = pneg %p121
    %p128 = scmp.eq.s32.totalorder %s9, 1
    %p129 = por %p127, %p128
    %p130 = scmp.ne.s32.totalorder %s122, %s125
    %p131 = scmp.eq.s32.totalorder %s9, 0
    %p132 = por %p130, %p131
    %p133 = scmp.ne.s32.totalorder %s122, %s125
    %p134 = scmp.eq.s32.totalorder %s14, 1
    %p135 = por %p133, %p134
    %p136 = scmp.ne.s32.totalorder %s125, %s126
    %p137 = scmp.eq.s32.totalorder %s14, 0
    %p138 = por %p136, %p137
    %p139 = scmp.ne.s32.totalorder %s125, %s126
    %p140 = scmp.eq.s32.totalorder %s15, 1
    %p141 = por %p139, %p140
    %p143 = scmp.ne.s32.totalorder %s126, %s142
    %p144 = scmp.eq.s32.totalorder %s15, 0
    %p145 = por %p143, %p144
    %p146 = scmp.le.s32.totalorder 1, %s9
    %p147 = scmp.lt.s32.totalorder %s9, 3
    %p148 = pnand %p146, %p147
    %p149 = pneg %p148
    // Predicated region
    $region9: #{discriminator_forward.6} parent=5 // pred_check
      _
    $region10: #{discriminator_forward.6} parent=5 // pred_check_branch
      %151 = sbr.rel (%p148) target = $region12
    $region11: #{discriminator_forward.6} parent=5 // pred_region
      %s152 = ssub.s32 %s9, 1
      // Predicated region
      $region13: #{discriminator_forward.6} parent=11 // pred_check
        %p153 = pneg %p84
      $region14: #{discriminator_forward.6} parent=11 // pred_check_branch
        %155 = sbr.rel (%p153) target = $region16
      $region15: #{discriminator_forward.6} parent=11 // pred_region
        %s156 = smul.u32 128, %s21
        %p157 = scmp.lt.s32.totalorder %s156, 127
        %s158 = scalar_select %p157, %s156, 127
        %p159 = scmp.lt.s32.totalorder %s20, 0
        %s160 = scalar_select %p159, %s20, 0
        %s161 = sadd.s32 %s160, %s158
        %s162 = smul.addr %s161, 4
        %s163 = scalar_lea.vmem %s1, %s162
        %s164 = smul.u32 128, %s21
      $region16: #{discriminator_forward.6} parent=11 // pred_fallthru
        _
      // Predicated region
      $region17: #{discriminator_forward.6} parent=11 // pred_check
        %p165 = pneg %p110
      $region18: #{discriminator_forward.6} parent=11 // pred_check_branch
        %167 = sbr.rel (%p165) target = $region20
      $region19: #{discriminator_forward.6} parent=11 // pred_region
        %p168 = scmp.lt.s32.totalorder %s20, 0
        %s169 = scalar_select %p168, %s20, 0
        %s170 = scalar_lea.vmem %s2, %s169
      $region20: #{discriminator_forward.6} parent=11 // pred_fallthru
        _
    $region12: #{discriminator_forward.6} parent=5 // pred_fallthru
      _
    %p171 = scmp.lt.s32.totalorder %s9, 2
    // Predicated region
    $region21: #{discriminator_forward.6} parent=5 // pred_check
      %p172 = pneg %p171
    $region22: #{discriminator_forward.6} parent=5 // pred_check_branch
      %174 = sbr.rel (%p172) target = $region24
    $region23: #{discriminator_forward.6} parent=5 // pred_region
      // Predicated region
      $region25: #{discriminator_forward.6} parent=23 // pred_check
        %p175 = pneg %p50
      $region26: #{discriminator_forward.6} parent=23 // pred_check_branch
        %177 = sbr.rel (%p175) target = $region28
      $region27: #{discriminator_forward.6} parent=23 // pred_region
        %s178 = smul.u32 8, %s18
        %p179 = scmp.lt.s32.totalorder %s16, 1
        %s180 = scalar_select %p179, %s16, 1
        %p181 = scmp.lt.s32.totalorder %s178, 7
        %s182 = scalar_select %p181, %s178, 7
        %s183 = smul.addr %s180, 64
        %s184 = sadd.s32 %s182, %s183
        %s185 = smul.addr %s184, 4
        %s186 = scalar_lea.vmem %s0, %s185
        %s187 = smul.u32 8, %s18
      $region28: #{discriminator_forward.6} parent=23 // pred_fallthru
        _
    $region24: #{discriminator_forward.6} parent=5 // pred_fallthru
      _
    %p188 = scmp.le.s32.totalorder 1, %s9
    %p189 = scmp.lt.s32.totalorder %s9, 3
    %p190 = pnand %p188, %p189
    %p191 = pneg %p190
    // Predicated region
    $region29: #{discriminator_forward.6} parent=5 // pred_check
      _
    $region30: #{discriminator_forward.6} parent=5 // pred_check_branch
      %193 = sbr.rel (%p190) target = $region32
    $region31: #{discriminator_forward.6} parent=5 // pred_region
      %s194 = ssub.s32 %s9, 1
      %s195 = smul.u32 8, %s21
      %p196 = scmp.lt.s32.totalorder %s19, 1
      %s197 = scalar_select %p196, %s19, 1
      %p198 = scmp.lt.s32.totalorder %s195, 7
      %s199 = scalar_select %p198, %s195, 7
      %s200 = smul.addr %s197, 64
      %s201 = sadd.s32 %s199, %s200
      %s202 = smul.addr %s201, 4
      %s203 = scalar_lea.vmem %s0, %s202
      %p204 = pneg %p56
      %p205 = pneg %p53
      %s206 = smul.u32 128, %s21
      %p207 = scmp.lt.s32.totalorder %s206, 127
      %s208 = scalar_select %p207, %s206, 127
      %p209 = scmp.lt.s32.totalorder %s20, 0
      %s210 = scalar_select %p209, %s20, 0
      %s211 = sadd.s32 %s210, %s208
      %s212 = smul.addr %s211, 4
      %s213 = scalar_lea.vmem %s1, %s212
      %p214 = pneg %p84
      %p215 = pneg %p81
      %p216 = scmp.lt.s32.totalorder %s20, 0
      %s217 = scalar_select %p216, %s20, 0
      %s218 = scalar_lea.vmem %s2, %s217
      %p219 = pneg %p110
      %p220 = pneg %p107
      %p221 = pneg %p138
      %p222 = pneg %p135
      %p223 = scmp.lt.s32.totalorder %s19, 1
      %s224 = scalar_select %p223, %s19, 1
      %p225 = scmp.lt.s32.totalorder %s20, 0
      %s226 = scalar_select %p225, %s20, 0
      %s227 = smul.addr %s224, 8
      %s228 = sadd.s32 %s226, %s227
      %s229 = smul.addr %s228, 4
      %s230 = scalar_lea.vmem %s3, %s229
      %s231 = smul.u32 8, %s21
      %p232 = scmp.lt.s32.totalorder %s19, 1
      %s233 = scalar_select %p232, %s19, 1
      %p234 = scmp.lt.s32.totalorder %s231, 7
      %s235 = scalar_select %p234, %s231, 7
      %s236 = smul.addr %s233, 64
      %s237 = sadd.s32 %s235, %s236
      %s238 = smul.addr %s237, 4
      %s239 = scalar_lea.vmem %s0, %s238
      %s240 = smul.u32 8, %s21
      %s241 = smul.u32 128, %s21
      %p242 = scmp.lt.s32.totalorder %s241, 127
      %s243 = scalar_select %p242, %s241, 127
      %p244 = scmp.lt.s32.totalorder %s20, 0
      %s245 = scalar_select %p244, %s20, 0
      %s246 = sadd.s32 %s245, %s243
      %s247 = smul.addr %s246, 4
      %s248 = scalar_lea.vmem %s1, %s247
      %s249 = smul.u32 128, %s21
      %p250 = scmp.lt.s32.totalorder %s20, 0
      %s251 = scalar_select %p250, %s20, 0
      %s252 = scalar_lea.vmem %s2, %s251
      %p253 = scmp.lt.s32.totalorder %s19, 1
      %s254 = scalar_select %p253, %s19, 1
      %p255 = scmp.lt.s32.totalorder %s20, 0
      %s256 = scalar_select %p255, %s20, 0
      %s257 = smul.addr %s254, 8
      %s258 = sadd.s32 %s256, %s257
      %s259 = smul.addr %s258, 4
      %s260 = scalar_lea.vmem %s3, %s259
      %p262 = scmp.eq.s32.totalorder %s21, 0
      // Predicated region
      $region33: #{discriminator_forward.6} parent=31 // pred_check
        %p263 = pneg %p262
      $region34: #{discriminator_forward.6} parent=31 // pred_check_branch
        %265 = sbr.rel (%p263) target = $region36
      $region35: #{discriminator_forward.6} parent=31 // pred_region
        %266 = vst [vmem:[#allocation2] sm:$0xff] 0.0
        %267 = vst [vmem:[#allocation2 + $0x8] sm:$0xff] 0.0
        %268 = vst [vmem:[#allocation2 + $0x10] sm:$0xff] 0.0
        %269 = vst [vmem:[#allocation2 + $0x18] sm:$0xff] 0.0
        %270 = vst [vmem:[#allocation2 + $0x20] sm:$0xff] 0.0
        %271 = vst [vmem:[#allocation2 + $0x28] sm:$0xff] 0.0
        %272 = vst [vmem:[#allocation2 + $0x30] sm:$0xff] 0.0
        %273 = vst [vmem:[#allocation2 + $0x38] sm:$0xff] 0.0
      $region36: #{discriminator_forward.6} parent=31 // pred_fallthru
        _
      %v274 = vld [vmem:[#allocation2] sm:$0xff]
      %v275 = vld [vmem:[#allocation2 + $0x8] sm:$0xff]
      %v276 = vld [vmem:[#allocation2 + $0x10] sm:$0xff]
      %v277 = vld [vmem:[#allocation2 + $0x18] sm:$0xff]
      %v278 = vld [vmem:[#allocation2 + $0x20] sm:$0xff]
      %v279 = vld [vmem:[#allocation2 + $0x28] sm:$0xff]
      %v280 = vld [vmem:[#allocation2 + $0x30] sm:$0xff]
      %v281 = vld [vmem:[#allocation2 + $0x38] sm:$0xff]
      %v282 = vld [vmem:[%s239] sm:$0xff]
      %v283 = vld [vmem:[%s239 + $0x8] sm:$0xff]
      %v284 = vld [vmem:[%s239 + $0x10] sm:$0xff]
      %v285 = vld [vmem:[%s239 + $0x18] sm:$0xff]
      %v286 = vld [vmem:[%s239 + $0x20] sm:$0xff]
      %v287 = vld [vmem:[%s239 + $0x28] sm:$0xff]
      %v288 = vld [vmem:[%s239 + $0x30] sm:$0xff]
      %v289 = vld [vmem:[%s239 + $0x38] sm:$0xff]
      %v290 = vld [vmem:[%s239 + $0x40] sm:$0xff]
      %v291 = vld [vmem:[%s239 + $0x48] sm:$0xff]
      %v292 = vld [vmem:[%s239 + $0x50] sm:$0xff]
      %v293 = vld [vmem:[%s239 + $0x58] sm:$0xff]
      %v294 = vld [vmem:[%s239 + $0x60] sm:$0xff]
      %v295 = vld [vmem:[%s239 + $0x68] sm:$0xff]
      %v296 = vld [vmem:[%s239 + $0x70] sm:$0xff]
      %v297 = vld [vmem:[%s239 + $0x78] sm:$0xff]
      %v298 = vld [vmem:[%s239 + $0x80] sm:$0xff]
      %v299 = vld [vmem:[%s239 + $0x88] sm:$0xff]
      %v300 = vld [vmem:[%s239 + $0x90] sm:$0xff]
      %v301 = vld [vmem:[%s239 + $0x98] sm:$0xff]
      %v302 = vld [vmem:[%s239 + $0xa0] sm:$0xff]
      %v303 = vld [vmem:[%s239 + $0xa8] sm:$0xff]
      %v304 = vld [vmem:[%s239 + $0xb0] sm:$0xff]
      %v305 = vld [vmem:[%s239 + $0xb8] sm:$0xff]
      %v306 = vld [vmem:[%s239 + $0xc0] sm:$0xff]
      %v307 = vld [vmem:[%s239 + $0xc8] sm:$0xff]
      %v308 = vld [vmem:[%s239 + $0xd0] sm:$0xff]
      %v309 = vld [vmem:[%s239 + $0xd8] sm:$0xff]
      %v310 = vld [vmem:[%s239 + $0xe0] sm:$0xff]
      %v311 = vld [vmem:[%s239 + $0xe8] sm:$0xff]
      %v312 = vld [vmem:[%s239 + $0xf0] sm:$0xff]
      %v313 = vld [vmem:[%s239 + $0xf8] sm:$0xff]
      %v314 = vld [vmem:[%s248] sm:$0xf]
      %v315 = vld [vmem:[%s248 + $0x4] sm:$0xf]
      %v316 = vld [vmem:[%s248 + $0x8] sm:$0xf]
      %v317 = vld [vmem:[%s248 + $0xc] sm:$0xf]
      %v318 = vld [vmem:[%s248 + $0x10] sm:$0xf]
      %v319 = vld [vmem:[%s248 + $0x14] sm:$0xf]
      %v320 = vld [vmem:[%s248 + $0x18] sm:$0xf]
      %v321 = vld [vmem:[%s248 + $0x1c] sm:$0xf]
      %v322 = vld [vmem:[%s248 + $0x20] sm:$0xf]
      %v323 = vld [vmem:[%s248 + $0x24] sm:$0xf]
      %v324 = vld [vmem:[%s248 + $0x28] sm:$0xf]
      %v325 = vld [vmem:[%s248 + $0x2c] sm:$0xf]
      %v326 = vld [vmem:[%s248 + $0x30] sm:$0xf]
      %v327 = vld [vmem:[%s248 + $0x34] sm:$0xf]
      %v328 = vld [vmem:[%s248 + $0x38] sm:$0xf]
      %v329 = vld [vmem:[%s248 + $0x3c] sm:$0xf]
      %v330 = vld [vmem:[%s248 + $0x40] sm:$0xf]
      %v331 = vld [vmem:[%s248 + $0x44] sm:$0xf]
      %v332 = vld [vmem:[%s248 + $0x48] sm:$0xf]
      %v333 = vld [vmem:[%s248 + $0x4c] sm:$0xf]
      %v334 = vld [vmem:[%s248 + $0x50] sm:$0xf]
      %v335 = vld [vmem:[%s248 + $0x54] sm:$0xf]
      %v336 = vld [vmem:[%s248 + $0x58] sm:$0xf]
      %v337 = vld [vmem:[%s248 + $0x5c] sm:$0xf]
      %v338 = vld [vmem:[%s248 + $0x60] sm:$0xf]
      %v339 = vld [vmem:[%s248 + $0x64] sm:$0xf]
      %v340 = vld [vmem:[%s248 + $0x68] sm:$0xf]
      %v341 = vld [vmem:[%s248 + $0x6c] sm:$0xf]
      %v342 = vld [vmem:[%s248 + $0x70] sm:$0xf]
      %v343 = vld [vmem:[%s248 + $0x74] sm:$0xf]
      %v344 = vld [vmem:[%s248 + $0x78] sm:$0xf]
      %v345 = vld [vmem:[%s248 + $0x7c] sm:$0xf]
      %v346 = vld [vmem:[%s248 + $0x80] sm:$0xf]
      %v347 = vld [vmem:[%s248 + $0x84] sm:$0xf]
      %v348 = vld [vmem:[%s248 + $0x88] sm:$0xf]
      %v349 = vld [vmem:[%s248 + $0x8c] sm:$0xf]
      %v350 = vld [vmem:[%s248 + $0x90] sm:$0xf]
      %v351 = vld [vmem:[%s248 + $0x94] sm:$0xf]
      %v352 = vld [vmem:[%s248 + $0x98] sm:$0xf]
      %v353 = vld [vmem:[%s248 + $0x9c] sm:$0xf]
      %v354 = vld [vmem:[%s248 + $0xa0] sm:$0xf]
      %v355 = vld [vmem:[%s248 + $0xa4] sm:$0xf]
      %v356 = vld [vmem:[%s248 + $0xa8] sm:$0xf]
      %v357 = vld [vmem:[%s248 + $0xac] sm:$0xf]
      %v358 = vld [vmem:[%s248 + $0xb0] sm:$0xf]
      %v359 = vld [vmem:[%s248 + $0xb4] sm:$0xf]
      %v360 = vld [vmem:[%s248 + $0xb8] sm:$0xf]
      %v361 = vld [vmem:[%s248 + $0xbc] sm:$0xf]
      %v362 = vld [vmem:[%s248 + $0xc0] sm:$0xf]
      %v363 = vld [vmem:[%s248 + $0xc4] sm:$0xf]
      %v364 = vld [vmem:[%s248 + $0xc8] sm:$0xf]
      %v365 = vld [vmem:[%s248 + $0xcc] sm:$0xf]
      %v366 = vld [vmem:[%s248 + $0xd0] sm:$0xf]
      %v367 = vld [vmem:[%s248 + $0xd4] sm:$0xf]
      %v368 = vld [vmem:[%s248 + $0xd8] sm:$0xf]
      %v369 = vld [vmem:[%s248 + $0xdc] sm:$0xf]
      %v370 = vld [vmem:[%s248 + $0xe0] sm:$0xf]
      %v371 = vld [vmem:[%s248 + $0xe4] sm:$0xf]
      %v372 = vld [vmem:[%s248 + $0xe8] sm:$0xf]
      %v373 = vld [vmem:[%s248 + $0xec] sm:$0xf]
      %v374 = vld [vmem:[%s248 + $0xf0] sm:$0xf]
      %v375 = vld [vmem:[%s248 + $0xf4] sm:$0xf]
      %v376 = vld [vmem:[%s248 + $0xf8] sm:$0xf]
      %v377 = vld [vmem:[%s248 + $0xfc] sm:$0xf]
      %v378 = vld [vmem:[%s248 + $0x100] sm:$0xf]
      %v379 = vld [vmem:[%s248 + $0x104] sm:$0xf]
      %v380 = vld [vmem:[%s248 + $0x108] sm:$0xf]
      %v381 = vld [vmem:[%s248 + $0x10c] sm:$0xf]
      %v382 = vld [vmem:[%s248 + $0x110] sm:$0xf]
      %v383 = vld [vmem:[%s248 + $0x114] sm:$0xf]
      %v384 = vld [vmem:[%s248 + $0x118] sm:$0xf]
      %v385 = vld [vmem:[%s248 + $0x11c] sm:$0xf]
      %v386 = vld [vmem:[%s248 + $0x120] sm:$0xf]
      %v387 = vld [vmem:[%s248 + $0x124] sm:$0xf]
      %v388 = vld [vmem:[%s248 + $0x128] sm:$0xf]
      %v389 = vld [vmem:[%s248 + $0x12c] sm:$0xf]
      %v390 = vld [vmem:[%s248 + $0x130] sm:$0xf]
      %v391 = vld [vmem:[%s248 + $0x134] sm:$0xf]
      %v392 = vld [vmem:[%s248 + $0x138] sm:$0xf]
      %v393 = vld [vmem:[%s248 + $0x13c] sm:$0xf]
      %v394 = vld [vmem:[%s248 + $0x140] sm:$0xf]
      %v395 = vld [vmem:[%s248 + $0x144] sm:$0xf]
      %v396 = vld [vmem:[%s248 + $0x148] sm:$0xf]
      %v397 = vld [vmem:[%s248 + $0x14c] sm:$0xf]
      %v398 = vld [vmem:[%s248 + $0x150] sm:$0xf]
      %v399 = vld [vmem:[%s248 + $0x154] sm:$0xf]
      %v400 = vld [vmem:[%s248 + $0x158] sm:$0xf]
      %v401 = vld [vmem:[%s248 + $0x15c] sm:$0xf]
      %v402 = vld [vmem:[%s248 + $0x160] sm:$0xf]
      %v403 = vld [vmem:[%s248 + $0x164] sm:$0xf]
      %v404 = vld [vmem:[%s248 + $0x168] sm:$0xf]
      %v405 = vld [vmem:[%s248 + $0x16c] sm:$0xf]
      %v406 = vld [vmem:[%s248 + $0x170] sm:$0xf]
      %v407 = vld [vmem:[%s248 + $0x174] sm:$0xf]
      %v408 = vld [vmem:[%s248 + $0x178] sm:$0xf]
      %v409 = vld [vmem:[%s248 + $0x17c] sm:$0xf]
      %v410 = vld [vmem:[%s248 + $0x180] sm:$0xf]
      %v411 = vld [vmem:[%s248 + $0x184] sm:$0xf]
      %v412 = vld [vmem:[%s248 + $0x188] sm:$0xf]
      %v413 = vld [vmem:[%s248 + $0x18c] sm:$0xf]
      %v414 = vld [vmem:[%s248 + $0x190] sm:$0xf]
      %v415 = vld [vmem:[%s248 + $0x194] sm:$0xf]
      %v416 = vld [vmem:[%s248 + $0x198] sm:$0xf]
      %v417 = vld [vmem:[%s248 + $0x19c] sm:$0xf]
      %v418 = vld [vmem:[%s248 + $0x1a0] sm:$0xf]
      %v419 = vld [vmem:[%s248 + $0x1a4] sm:$0xf]
      %v420 = vld [vmem:[%s248 + $0x1a8] sm:$0xf]
      %v421 = vld [vmem:[%s248 + $0x1ac] sm:$0xf]
      %v422 = vld [vmem:[%s248 + $0x1b0] sm:$0xf]
      %v423 = vld [vmem:[%s248 + $0x1b4] sm:$0xf]
      %v424 = vld [vmem:[%s248 + $0x1b8] sm:$0xf]
      %v425 = vld [vmem:[%s248 + $0x1bc] sm:$0xf]
      %v426 = vld [vmem:[%s248 + $0x1c0] sm:$0xf]
      %v427 = vld [vmem:[%s248 + $0x1c4] sm:$0xf]
      %v428 = vld [vmem:[%s248 + $0x1c8] sm:$0xf]
      %v429 = vld [vmem:[%s248 + $0x1cc] sm:$0xf]
      %v430 = vld [vmem:[%s248 + $0x1d0] sm:$0xf]
      %v431 = vld [vmem:[%s248 + $0x1d4] sm:$0xf]
      %v432 = vld [vmem:[%s248 + $0x1d8] sm:$0xf]
      %v433 = vld [vmem:[%s248 + $0x1dc] sm:$0xf]
      %v434 = vld [vmem:[%s248 + $0x1e0] sm:$0xf]
      %v435 = vld [vmem:[%s248 + $0x1e4] sm:$0xf]
      %v436 = vld [vmem:[%s248 + $0x1e8] sm:$0xf]
      %v437 = vld [vmem:[%s248 + $0x1ec] sm:$0xf]
      %v438 = vld [vmem:[%s248 + $0x1f0] sm:$0xf]
      %v439 = vld [vmem:[%s248 + $0x1f4] sm:$0xf]
      %v440 = vld [vmem:[%s248 + $0x1f8] sm:$0xf]
      %v441 = vld [vmem:[%s248 + $0x1fc] sm:$0xf]
      %v474 = vunpack.c.l.b16 %v282
      %v475 = vunpack.c.h.b16 %v282
      %v476 = vunpack.c.l.b16 %v283
      %v477 = vunpack.c.h.b16 %v283
      %v478 = vunpack.c.l.b16 %v284
      %v479 = vunpack.c.h.b16 %v284
      %v480 = vunpack.c.l.b16 %v285
      %v481 = vunpack.c.h.b16 %v285
      %v482 = vunpack.c.l.b16 %v286
      %v483 = vunpack.c.h.b16 %v286
      %v484 = vunpack.c.l.b16 %v287
      %v485 = vunpack.c.h.b16 %v287
      %v486 = vunpack.c.l.b16 %v288
      %v487 = vunpack.c.h.b16 %v288
      %v488 = vunpack.c.l.b16 %v289
      %v489 = vunpack.c.h.b16 %v289
      %v490 = vunpack.c.l.b16 %v290
      %v491 = vunpack.c.h.b16 %v290
      %v492 = vunpack.c.l.b16 %v291
      %v493 = vunpack.c.h.b16 %v291
      %v494 = vunpack.c.l.b16 %v292
      %v495 = vunpack.c.h.b16 %v292
      %v496 = vunpack.c.l.b16 %v293
      %v497 = vunpack.c.h.b16 %v293
      %v498 = vunpack.c.l.b16 %v294
      %v499 = vunpack.c.h.b16 %v294
      %v500 = vunpack.c.l.b16 %v295
      %v501 = vunpack.c.h.b16 %v295
      %v502 = vunpack.c.l.b16 %v296
      %v503 = vunpack.c.h.b16 %v296
      %v504 = vunpack.c.l.b16 %v297
      %v505 = vunpack.c.h.b16 %v297
      %v506 = vunpack.c.l.b16 %v298
      %v507 = vunpack.c.h.b16 %v298
      %v508 = vunpack.c.l.b16 %v299
      %v509 = vunpack.c.h.b16 %v299
      %v510 = vunpack.c.l.b16 %v300
      %v511 = vunpack.c.h.b16 %v300
      %v512 = vunpack.c.l.b16 %v301
      %v513 = vunpack.c.h.b16 %v301
      %v514 = vunpack.c.l.b16 %v302
      %v515 = vunpack.c.h.b16 %v302
      %v516 = vunpack.c.l.b16 %v303
      %v517 = vunpack.c.h.b16 %v303
      %v518 = vunpack.c.l.b16 %v304
      %v519 = vunpack.c.h.b16 %v304
      %v520 = vunpack.c.l.b16 %v305
      %v521 = vunpack.c.h.b16 %v305
      %v522 = vunpack.c.l.b16 %v306
      %v523 = vunpack.c.h.b16 %v306
      %v524 = vunpack.c.l.b16 %v307
      %v525 = vunpack.c.h.b16 %v307
      %v526 = vunpack.c.l.b16 %v308
      %v527 = vunpack.c.h.b16 %v308
      %v528 = vunpack.c.l.b16 %v309
      %v529 = vunpack.c.h.b16 %v309
      %v530 = vunpack.c.l.b16 %v310
      %v531 = vunpack.c.h.b16 %v310
      %v532 = vunpack.c.l.b16 %v311
      %v533 = vunpack.c.h.b16 %v311
      %v534 = vunpack.c.l.b16 %v312
      %v535 = vunpack.c.h.b16 %v312
      %v536 = vunpack.c.l.b16 %v313
      %v537 = vunpack.c.h.b16 %v313
      %v538 = vpack.c.b16 %v482, %v474
      %v539 = vpack.c.b16 %v483, %v475
      %v540 = vpack.c.b16 %v484, %v476
      %v541 = vpack.c.b16 %v485, %v477
      %v542 = vpack.c.b16 %v486, %v478
      %v543 = vpack.c.b16 %v487, %v479
      %v544 = vpack.c.b16 %v488, %v480
      %v545 = vpack.c.b16 %v489, %v481
      %v546 = vpack.c.b16 %v498, %v490
      %v547 = vpack.c.b16 %v499, %v491
      %v548 = vpack.c.b16 %v500, %v492
      %v549 = vpack.c.b16 %v501, %v493
      %v550 = vpack.c.b16 %v502, %v494
      %v551 = vpack.c.b16 %v503, %v495
      %v552 = vpack.c.b16 %v504, %v496
      %v553 = vpack.c.b16 %v505, %v497
      %v554 = vpack.c.b16 %v514, %v506
      %v555 = vpack.c.b16 %v515, %v507
      %v556 = vpack.c.b16 %v516, %v508
      %v557 = vpack.c.b16 %v517, %v509
      %v558 = vpack.c.b16 %v518, %v510
      %v559 = vpack.c.b16 %v519, %v511
      %v560 = vpack.c.b16 %v520, %v512
      %v561 = vpack.c.b16 %v521, %v513
      %v562 = vpack.c.b16 %v530, %v522
      %v563 = vpack.c.b16 %v531, %v523
      %v564 = vpack.c.b16 %v532, %v524
      %v565 = vpack.c.b16 %v533, %v525
      %v566 = vpack.c.b16 %v534, %v526
      %v567 = vpack.c.b16 %v535, %v527
      %v568 = vpack.c.b16 %v536, %v528
      %v569 = vpack.c.b16 %v537, %v529
      %v730 = vunpack.c.l.b16 %v314
      %v731 = vunpack.c.l.b16 %v315
      %v732 = vunpack.c.l.b16 %v316
      %v733 = vunpack.c.l.b16 %v317
      %v734 = vunpack.c.l.b16 %v318
      %v735 = vunpack.c.l.b16 %v319
      %v736 = vunpack.c.l.b16 %v320
      %v737 = vunpack.c.l.b16 %v321
      %v738 = vunpack.c.l.b16 %v322
      %v739 = vunpack.c.l.b16 %v323
      %v740 = vunpack.c.l.b16 %v324
      %v741 = vunpack.c.l.b16 %v325
      %v742 = vunpack.c.l.b16 %v326
      %v743 = vunpack.c.l.b16 %v327
      %v744 = vunpack.c.l.b16 %v328
      %v745 = vunpack.c.l.b16 %v329
      %v746 = vunpack.c.l.b16 %v330
      %v747 = vunpack.c.l.b16 %v331
      %v748 = vunpack.c.l.b16 %v332
      %v749 = vunpack.c.l.b16 %v333
      %v750 = vunpack.c.l.b16 %v334
      %v751 = vunpack.c.l.b16 %v335
      %v752 = vunpack.c.l.b16 %v336
      %v753 = vunpack.c.l.b16 %v337
      %v754 = vunpack.c.l.b16 %v338
      %v755 = vunpack.c.l.b16 %v339
      %v756 = vunpack.c.l.b16 %v340
      %v757 = vunpack.c.l.b16 %v341
      %v758 = vunpack.c.l.b16 %v342
      %v759 = vunpack.c.l.b16 %v343
      %v760 = vunpack.c.l.b16 %v344
      %v761 = vunpack.c.l.b16 %v345
      %v762 = vunpack.c.l.b16 %v346
      %v763 = vunpack.c.l.b16 %v347
      %v764 = vunpack.c.l.b16 %v348
      %v765 = vunpack.c.l.b16 %v349
      %v766 = vunpack.c.l.b16 %v350
      %v767 = vunpack.c.l.b16 %v351
      %v768 = vunpack.c.l.b16 %v352
      %v769 = vunpack.c.l.b16 %v353
      %v770 = vunpack.c.l.b16 %v354
      %v771 = vunpack.c.l.b16 %v355
      %v772 = vunpack.c.l.b16 %v356
      %v773 = vunpack.c.l.b16 %v357
      %v774 = vunpack.c.l.b16 %v358
      %v775 = vunpack.c.l.b16 %v359
      %v776 = vunpack.c.l.b16 %v360
      %v777 = vunpack.c.l.b16 %v361
      %v778 = vunpack.c.l.b16 %v362
      %v779 = vunpack.c.l.b16 %v363
      %v780 = vunpack.c.l.b16 %v364
      %v781 = vunpack.c.l.b16 %v365
      %v782 = vunpack.c.l.b16 %v366
      %v783 = vunpack.c.l.b16 %v367
      %v784 = vunpack.c.l.b16 %v368
      %v785 = vunpack.c.l.b16 %v369
      %v786 = vunpack.c.l.b16 %v370
      %v787 = vunpack.c.l.b16 %v371
      %v788 = vunpack.c.l.b16 %v372
      %v789 = vunpack.c.l.b16 %v373
      %v790 = vunpack.c.l.b16 %v374
      %v791 = vunpack.c.l.b16 %v375
      %v792 = vunpack.c.l.b16 %v376
      %v793 = vunpack.c.l.b16 %v377
      %v794 = vunpack.c.l.b16 %v378
      %v795 = vunpack.c.l.b16 %v379
      %v796 = vunpack.c.l.b16 %v380
      %v797 = vunpack.c.l.b16 %v381
      %v798 = vunpack.c.l.b16 %v382
      %v799 = vunpack.c.l.b16 %v383
      %v800 = vunpack.c.l.b16 %v384
      %v801 = vunpack.c.l.b16 %v385
      %v802 = vunpack.c.l.b16 %v386
      %v803 = vunpack.c.l.b16 %v387
      %v804 = vunpack.c.l.b16 %v388
      %v805 = vunpack.c.l.b16 %v389
      %v806 = vunpack.c.l.b16 %v390
      %v807 = vunpack.c.l.b16 %v391
      %v808 = vunpack.c.l.b16 %v392
      %v809 = vunpack.c.l.b16 %v393
      %v810 = vunpack.c.l.b16 %v394
      %v811 = vunpack.c.l.b16 %v395
      %v812 = vunpack.c.l.b16 %v396
      %v813 = vunpack.c.l.b16 %v397
      %v814 = vunpack.c.l.b16 %v398
      %v815 = vunpack.c.l.b16 %v399
      %v816 = vunpack.c.l.b16 %v400
      %v817 = vunpack.c.l.b16 %v401
      %v818 = vunpack.c.l.b16 %v402
      %v819 = vunpack.c.l.b16 %v403
      %v820 = vunpack.c.l.b16 %v404
      %v821 = vunpack.c.l.b16 %v405
      %v822 = vunpack.c.l.b16 %v406
      %v823 = vunpack.c.l.b16 %v407
      %v824 = vunpack.c.l.b16 %v408
      %v825 = vunpack.c.l.b16 %v409
      %v826 = vunpack.c.l.b16 %v410
      %v827 = vunpack.c.l.b16 %v411
      %v828 = vunpack.c.l.b16 %v412
      %v829 = vunpack.c.l.b16 %v413
      %v830 = vunpack.c.l.b16 %v414
      %v831 = vunpack.c.l.b16 %v415
      %v832 = vunpack.c.l.b16 %v416
      %v833 = vunpack.c.l.b16 %v417
      %v834 = vunpack.c.l.b16 %v418
      %v835 = vunpack.c.l.b16 %v419
      %v836 = vunpack.c.l.b16 %v420
      %v837 = vunpack.c.l.b16 %v421
      %v838 = vunpack.c.l.b16 %v422
      %v839 = vunpack.c.l.b16 %v423
      %v840 = vunpack.c.l.b16 %v424
      %v841 = vunpack.c.l.b16 %v425
      %v842 = vunpack.c.l.b16 %v426
      %v843 = vunpack.c.l.b16 %v427
      %v844 = vunpack.c.l.b16 %v428
      %v845 = vunpack.c.l.b16 %v429
      %v846 = vunpack.c.l.b16 %v430
      %v847 = vunpack.c.l.b16 %v431
      %v848 = vunpack.c.l.b16 %v432
      %v849 = vunpack.c.l.b16 %v433
      %v850 = vunpack.c.l.b16 %v434
      %v851 = vunpack.c.l.b16 %v435
      %v852 = vunpack.c.l.b16 %v436
      %v853 = vunpack.c.l.b16 %v437
      %v854 = vunpack.c.l.b16 %v438
      %v855 = vunpack.c.l.b16 %v439
      %v856 = vunpack.c.l.b16 %v440
      %v857 = vunpack.c.l.b16 %v441
      %v858 = vpack.c.b16 %v731, %v730
      %v859 = vpack.c.b16 %v733, %v732
      %v860 = vpack.c.b16 %v735, %v734
      %v861 = vpack.c.b16 %v737, %v736
      %v862 = vpack.c.b16 %v739, %v738
      %v863 = vpack.c.b16 %v741, %v740
      %v864 = vpack.c.b16 %v743, %v742
      %v865 = vpack.c.b16 %v745, %v744
      %v866 = vpack.c.b16 %v747, %v746
      %v867 = vpack.c.b16 %v749, %v748
      %v868 = vpack.c.b16 %v751, %v750
      %v869 = vpack.c.b16 %v753, %v752
      %v870 = vpack.c.b16 %v755, %v754
      %v871 = vpack.c.b16 %v757, %v756
      %v872 = vpack.c.b16 %v759, %v758
      %v873 = vpack.c.b16 %v761, %v760
      %v874 = vpack.c.b16 %v763, %v762
      %v875 = vpack.c.b16 %v765, %v764
      %v876 = vpack.c.b16 %v767, %v766
      %v877 = vpack.c.b16 %v769, %v768
      %v878 = vpack.c.b16 %v771, %v770
      %v879 = vpack.c.b16 %v773, %v772
      %v880 = vpack.c.b16 %v775, %v774
      %v881 = vpack.c.b16 %v777, %v776
      %v882 = vpack.c.b16 %v779, %v778
      %v883 = vpack.c.b16 %v781, %v780
      %v884 = vpack.c.b16 %v783, %v782
      %v885 = vpack.c.b16 %v785, %v784
      %v886 = vpack.c.b16 %v787, %v786
      %v887 = vpack.c.b16 %v789, %v788
      %v888 = vpack.c.b16 %v791, %v790
      %v889 = vpack.c.b16 %v793, %v792
      %v890 = vpack.c.b16 %v795, %v794
      %v891 = vpack.c.b16 %v797, %v796
      %v892 = vpack.c.b16 %v799, %v798
      %v893 = vpack.c.b16 %v801, %v800
      %v894 = vpack.c.b16 %v803, %v802
      %v895 = vpack.c.b16 %v805, %v804
      %v896 = vpack.c.b16 %v807, %v806
      %v897 = vpack.c.b16 %v809, %v808
      %v898 = vpack.c.b16 %v811, %v810
      %v899 = vpack.c.b16 %v813, %v812
      %v900 = vpack.c.b16 %v815, %v814
      %v901 = vpack.c.b16 %v817, %v816
      %v902 = vpack.c.b16 %v819, %v818
      %v903 = vpack.c.b16 %v821, %v820
      %v904 = vpack.c.b16 %v823, %v822
      %v905 = vpack.c.b16 %v825, %v824
      %v906 = vpack.c.b16 %v827, %v826
      %v907 = vpack.c.b16 %v829, %v828
      %v908 = vpack.c.b16 %v831, %v830
      %v909 = vpack.c.b16 %v833, %v832
      %v910 = vpack.c.b16 %v835, %v834
      %v911 = vpack.c.b16 %v837, %v836
      %v912 = vpack.c.b16 %v839, %v838
      %v913 = vpack.c.b16 %v841, %v840
      %v914 = vpack.c.b16 %v843, %v842
      %v915 = vpack.c.b16 %v845, %v844
      %v916 = vpack.c.b16 %v847, %v846
      %v917 = vpack.c.b16 %v849, %v848
      %v918 = vpack.c.b16 %v851, %v850
      %v919 = vpack.c.b16 %v853, %v852
      %v920 = vpack.c.b16 %v855, %v854
      %v921 = vpack.c.b16 %v857, %v856
      %986 = vmatprep.subr.bf16.mxu0 0
      %987 = vmatpush1.bf16.msra.mxu0 %v865
      %988 = vmatprep.subr.bf16.mxu0 0
      %989 = vmatpush1.bf16.msra.mxu0 %v864
      %990 = vmatprep.subr.bf16.mxu0 0
      %991 = vmatpush1.bf16.msra.mxu0 %v863
      %992 = vmatprep.subr.bf16.mxu0 0
      %993 = vmatpush1.bf16.msra.mxu0 %v862
      %994 = vmatprep.subr.bf16.mxu0 0
      %995 = vmatpush1.bf16.msra.mxu0 %v861
      %996 = vmatprep.subr.bf16.mxu0 0
      %997 = vmatpush1.bf16.msra.mxu0 %v860
      %998 = vmatprep.subr.bf16.mxu0 0
      %999 = vmatpush1.bf16.msra.mxu0 %v859
      %1000 = vmatprep.subr.bf16.mxu0 0
      %1001 = vmatpush1.bf16.msra.mxu0 %v858
      %1002 = vmatprep.subr.bf16.mxu0 0
      %1003 = vmatpush2.bf16.msra.mxu0 %v873
      %1004 = vmatprep.subr.bf16.mxu0 0
      %1005 = vmatpush2.bf16.msra.mxu0 %v872
      %1006 = vmatprep.subr.bf16.mxu0 0
      %1007 = vmatpush2.bf16.msra.mxu0 %v871
      %1008 = vmatprep.subr.bf16.mxu0 0
      %1009 = vmatpush2.bf16.msra.mxu0 %v870
      %1010 = vmatprep.subr.bf16.mxu0 0
      %1011 = vmatpush2.bf16.msra.mxu0 %v869
      %1012 = vmatprep.subr.bf16.mxu0 0
      %1013 = vmatpush2.bf16.msra.mxu0 %v868
      %1014 = vmatprep.subr.bf16.mxu0 0
      %1015 = vmatpush2.bf16.msra.mxu0 %v867
      %1016 = vmatprep.subr.bf16.mxu0 0
      %1017 = vmatpush2.bf16.msra.mxu0 %v866
      %1018 = vmatprep.mubr.bf16.mxu0 %v539
      %1019 = vmatmul.mubr.bf16.gmra.mxu0 %v538
      %v1020 = vpop.f32.mrf.mxu0
      %v1021 = vadd.f32 0.0, %v1020
      %v1022 = vpop.f32.mrf.mxu0
      %v1023 = vpop.f32.mrf.mxu0
      %v1024 = vadd.f32 0.0, %v1023
      %v1025 = vpop.f32.mrf.mxu0
      %1026 = vmatprep.mubr.bf16.mxu0 %v547
      %1027 = vmatmul.mubr.bf16.gmra.mxu0 %v546
      %v1028 = vpop.f32.mrf.mxu0
      %v1029 = vadd.f32 0.0, %v1028
      %v1030 = vpop.f32.mrf.mxu0
      %v1031 = vpop.f32.mrf.mxu0
      %v1032 = vadd.f32 0.0, %v1031
      %v1033 = vpop.f32.mrf.mxu0
      %1034 = vmatprep.mubr.bf16.mxu0 %v555
      %1035 = vmatmul.mubr.bf16.gmra.mxu0 %v554
      %v1036 = vpop.f32.mrf.mxu0
      %v1037 = vadd.f32 0.0, %v1036
      %v1038 = vpop.f32.mrf.mxu0
      %v1039 = vpop.f32.mrf.mxu0
      %v1040 = vadd.f32 0.0, %v1039
      %v1041 = vpop.f32.mrf.mxu0
      %1042 = vmatprep.mubr.bf16.mxu0 %v563
      %1043 = vmatmul.mubr.bf16.gmra.mxu0 %v562
      %v1044 = vpop.f32.mrf.mxu0
      %v1045 = vadd.f32 0.0, %v1044
      %v1046 = vpop.f32.mrf.mxu0
      %v1047 = vpop.f32.mrf.mxu0
      %v1048 = vadd.f32 0.0, %v1047
      %v1049 = vpop.f32.mrf.mxu0
      %1050 = vdwg.mxu0
      %1051 = vmatprep.subr.bf16.mxu0 0
      %1052 = vmatpush1.bf16.msra.mxu0 %v881
      %1053 = vmatprep.subr.bf16.mxu0 0
      %1054 = vmatpush1.bf16.msra.mxu0 %v880
      %1055 = vmatprep.subr.bf16.mxu0 0
      %1056 = vmatpush1.bf16.msra.mxu0 %v879
      %1057 = vmatprep.subr.bf16.mxu0 0
      %1058 = vmatpush1.bf16.msra.mxu0 %v878
      %1059 = vmatprep.subr.bf16.mxu0 0
      %1060 = vmatpush1.bf16.msra.mxu0 %v877
      %1061 = vmatprep.subr.bf16.mxu0 0
      %1062 = vmatpush1.bf16.msra.mxu0 %v876
      %1063 = vmatprep.subr.bf16.mxu0 0
      %1064 = vmatpush1.bf16.msra.mxu0 %v875
      %1065 = vmatprep.subr.bf16.mxu0 0
      %1066 = vmatpush1.bf16.msra.mxu0 %v874
      %1067 = vmatprep.subr.bf16.mxu0 0
      %1068 = vmatpush2.bf16.msra.mxu0 %v889
      %1069 = vmatprep.subr.bf16.mxu0 0
      %1070 = vmatpush2.bf16.msra.mxu0 %v888
      %1071 = vmatprep.subr.bf16.mxu0 0
      %1072 = vmatpush2.bf16.msra.mxu0 %v887
      %1073 = vmatprep.subr.bf16.mxu0 0
      %1074 = vmatpush2.bf16.msra.mxu0 %v886
      %1075 = vmatprep.subr.bf16.mxu0 0
      %1076 = vmatpush2.bf16.msra.mxu0 %v885
      %1077 = vmatprep.subr.bf16.mxu0 0
      %1078 = vmatpush2.bf16.msra.mxu0 %v884
      %1079 = vmatprep.subr.bf16.mxu0 0
      %1080 = vmatpush2.bf16.msra.mxu0 %v883
      %1081 = vmatprep.subr.bf16.mxu0 0
      %1082 = vmatpush2.bf16.msra.mxu0 %v882
      %1083 = vmatprep.mubr.bf16.mxu0 %v541
      %1084 = vmatmul.mubr.bf16.gmra.mxu0 %v540
      %v1085 = vpop.f32.mrf.mxu0
      %v1086 = vadd.f32 %v1021, %v1085
      %v1087 = vpop.f32.mrf.mxu0
      %v1088 = vpop.f32.mrf.mxu0
      %v1089 = vadd.f32 %v1024, %v1088
      %v1090 = vpop.f32.mrf.mxu0
      %1091 = vmatprep.mubr.bf16.mxu0 %v549
      %1092 = vmatmul.mubr.bf16.gmra.mxu0 %v548
      %v1093 = vpop.f32.mrf.mxu0
      %v1094 = vadd.f32 %v1029, %v1093
      %v1095 = vpop.f32.mrf.mxu0
      %v1096 = vpop.f32.mrf.mxu0
      %v1097 = vadd.f32 %v1032, %v1096
      %v1098 = vpop.f32.mrf.mxu0
      %1099 = vmatprep.mubr.bf16.mxu0 %v557
      %1100 = vmatmul.mubr.bf16.gmra.mxu0 %v556
      %v1101 = vpop.f32.mrf.mxu0
      %v1102 = vadd.f32 %v1037, %v1101
      %v1103 = vpop.f32.mrf.mxu0
      %v1104 = vpop.f32.mrf.mxu0
      %v1105 = vadd.f32 %v1040, %v1104
      %v1106 = vpop.f32.mrf.mxu0
      %1107 = vmatprep.mubr.bf16.mxu0 %v565
      %1108 = vmatmul.mubr.bf16.gmra.mxu0 %v564
      %v1109 = vpop.f32.mrf.mxu0
      %v1110 = vadd.f32 %v1045, %v1109
      %v1111 = vpop.f32.mrf.mxu0
      %v1112 = vpop.f32.mrf.mxu0
      %v1113 = vadd.f32 %v1048, %v1112
      %v1114 = vpop.f32.mrf.mxu0
      %1115 = vdwg.mxu0
      %1116 = vmatprep.subr.bf16.mxu0 0
      %1117 = vmatpush1.bf16.msra.mxu0 %v897
      %1118 = vmatprep.subr.bf16.mxu0 0
      %1119 = vmatpush1.bf16.msra.mxu0 %v896
      %1120 = vmatprep.subr.bf16.mxu0 0
      %1121 = vmatpush1.bf16.msra.mxu0 %v895
      %1122 = vmatprep.subr.bf16.mxu0 0
      %1123 = vmatpush1.bf16.msra.mxu0 %v894
      %1124 = vmatprep.subr.bf16.mxu0 0
      %1125 = vmatpush1.bf16.msra.mxu0 %v893
      %1126 = vmatprep.subr.bf16.mxu0 0
      %1127 = vmatpush1.bf16.msra.mxu0 %v892
      %1128 = vmatprep.subr.bf16.mxu0 0
      %1129 = vmatpush1.bf16.msra.mxu0 %v891
      %1130 = vmatprep.subr.bf16.mxu0 0
      %1131 = vmatpush1.bf16.msra.mxu0 %v890
      %1132 = vmatprep.subr.bf16.mxu0 0
      %1133 = vmatpush2.bf16.msra.mxu0 %v905
      %1134 = vmatprep.subr.bf16.mxu0 0
      %1135 = vmatpush2.bf16.msra.mxu0 %v904
      %1136 = vmatprep.subr.bf16.mxu0 0
      %1137 = vmatpush2.bf16.msra.mxu0 %v903
      %1138 = vmatprep.subr.bf16.mxu0 0
      %1139 = vmatpush2.bf16.msra.mxu0 %v902
      %1140 = vmatprep.subr.bf16.mxu0 0
      %1141 = vmatpush2.bf16.msra.mxu0 %v901
      %1142 = vmatprep.subr.bf16.mxu0 0
      %1143 = vmatpush2.bf16.msra.mxu0 %v900
      %1144 = vmatprep.subr.bf16.mxu0 0
      %1145 = vmatpush2.bf16.msra.mxu0 %v899
      %1146 = vmatprep.subr.bf16.mxu0 0
      %1147 = vmatpush2.bf16.msra.mxu0 %v898
      %1148 = vmatprep.mubr.bf16.mxu0 %v543
      %1149 = vmatmul.mubr.bf16.gmra.mxu0 %v542
      %v1150 = vpop.f32.mrf.mxu0
      %v1151 = vadd.f32 %v1086, %v1150
      %v1152 = vpop.f32.mrf.mxu0
      %v1153 = vpop.f32.mrf.mxu0
      %v1154 = vadd.f32 %v1089, %v1153
      %v1155 = vpop.f32.mrf.mxu0
      %1156 = vmatprep.mubr.bf16.mxu0 %v551
      %1157 = vmatmul.mubr.bf16.gmra.mxu0 %v550
      %v1158 = vpop.f32.mrf.mxu0
      %v1159 = vadd.f32 %v1094, %v1158
      %v1160 = vpop.f32.mrf.mxu0
      %v1161 = vpop.f32.mrf.mxu0
      %v1162 = vadd.f32 %v1097, %v1161
      %v1163 = vpop.f32.mrf.mxu0
      %1164 = vmatprep.mubr.bf16.mxu0 %v559
      %1165 = vmatmul.mubr.bf16.gmra.mxu0 %v558
      %v1166 = vpop.f32.mrf.mxu0
      %v1167 = vadd.f32 %v1102, %v1166
      %v1168 = vpop.f32.mrf.mxu0
      %v1169 = vpop.f32.mrf.mxu0
      %v1170 = vadd.f32 %v1105, %v1169
      %v1171 = vpop.f32.mrf.mxu0
      %1172 = vmatprep.mubr.bf16.mxu0 %v567
      %1173 = vmatmul.mubr.bf16.gmra.mxu0 %v566
      %v1174 = vpop.f32.mrf.mxu0
      %v1175 = vadd.f32 %v1110, %v1174
      %v1176 = vpop.f32.mrf.mxu0
      %v1177 = vpop.f32.mrf.mxu0
      %v1178 = vadd.f32 %v1113, %v1177
      %v1179 = vpop.f32.mrf.mxu0
      %1180 = vdwg.mxu0
      %1181 = vmatprep.subr.bf16.mxu0 0
      %1182 = vmatpush1.bf16.msra.mxu0 %v913
      %1183 = vmatprep.subr.bf16.mxu0 0
      %1184 = vmatpush1.bf16.msra.mxu0 %v912
      %1185 = vmatprep.subr.bf16.mxu0 0
      %1186 = vmatpush1.bf16.msra.mxu0 %v911
      %1187 = vmatprep.subr.bf16.mxu0 0
      %1188 = vmatpush1.bf16.msra.mxu0 %v910
      %1189 = vmatprep.subr.bf16.mxu0 0
      %1190 = vmatpush1.bf16.msra.mxu0 %v909
      %1191 = vmatprep.subr.bf16.mxu0 0
      %1192 = vmatpush1.bf16.msra.mxu0 %v908
      %1193 = vmatprep.subr.bf16.mxu0 0
      %1194 = vmatpush1.bf16.msra.mxu0 %v907
      %1195 = vmatprep.subr.bf16.mxu0 0
      %1196 = vmatpush1.bf16.msra.mxu0 %v906
      %1197 = vmatprep.subr.bf16.mxu0 0
      %1198 = vmatpush2.bf16.msra.mxu0 %v921
      %1199 = vmatprep.subr.bf16.mxu0 0
      %1200 = vmatpush2.bf16.msra.mxu0 %v920
      %1201 = vmatprep.subr.bf16.mxu0 0
      %1202 = vmatpush2.bf16.msra.mxu0 %v919
      %1203 = vmatprep.subr.bf16.mxu0 0
      %1204 = vmatpush2.bf16.msra.mxu0 %v918
      %1205 = vmatprep.subr.bf16.mxu0 0
      %1206 = vmatpush2.bf16.msra.mxu0 %v917
      %1207 = vmatprep.subr.bf16.mxu0 0
      %1208 = vmatpush2.bf16.msra.mxu0 %v916
      %1209 = vmatprep.subr.bf16.mxu0 0
      %1210 = vmatpush2.bf16.msra.mxu0 %v915
      %1211 = vmatprep.subr.bf16.mxu0 0
      %1212 = vmatpush2.bf16.msra.mxu0 %v914
      %1213 = vmatprep.mubr.bf16.mxu0 %v545
      %1214 = vmatmul.mubr.bf16.gmra.mxu0 %v544
      %v1215 = vpop.f32.mrf.mxu0
      %v1216 = vadd.f32 %v1151, %v1215
      %v1217 = vpop.f32.mrf.mxu0
      %v1218 = vpop.f32.mrf.mxu0
      %v1219 = vadd.f32 %v1154, %v1218
      %v1220 = vpop.f32.mrf.mxu0
      %1221 = vmatprep.mubr.bf16.mxu0 %v553
      %1222 = vmatmul.mubr.bf16.gmra.mxu0 %v552
      %v1223 = vpop.f32.mrf.mxu0
      %v1224 = vadd.f32 %v1159, %v1223
      %v1225 = vpop.f32.mrf.mxu0
      %v1226 = vpop.f32.mrf.mxu0
      %v1227 = vadd.f32 %v1162, %v1226
      %v1228 = vpop.f32.mrf.mxu0
      %1229 = vmatprep.mubr.bf16.mxu0 %v561
      %1230 = vmatmul.mubr.bf16.gmra.mxu0 %v560
      %v1231 = vpop.f32.mrf.mxu0
      %v1232 = vadd.f32 %v1167, %v1231
      %v1233 = vpop.f32.mrf.mxu0
      %v1234 = vpop.f32.mrf.mxu0
      %v1235 = vadd.f32 %v1170, %v1234
      %v1236 = vpop.f32.mrf.mxu0
      %1237 = vmatprep.mubr.bf16.mxu0 %v569
      %1238 = vmatmul.mubr.bf16.gmra.mxu0 %v568
      %v1239 = vpop.f32.mrf.mxu0
      %v1240 = vadd.f32 %v1175, %v1239
      %v1241 = vpop.f32.mrf.mxu0
      %v1242 = vpop.f32.mrf.mxu0
      %v1243 = vadd.f32 %v1178, %v1242
      %v1244 = vpop.f32.mrf.mxu0
      %1245 = vdwg.mxu0
      %v1246 = vadd.f32 %v274, %v1216
      %v1247 = vadd.f32 %v275, %v1219
      %v1248 = vadd.f32 %v276, %v1224
      %v1249 = vadd.f32 %v277, %v1227
      %v1250 = vadd.f32 %v278, %v1232
      %v1251 = vadd.f32 %v279, %v1235
      %v1252 = vadd.f32 %v280, %v1240
      %v1253 = vadd.f32 %v281, %v1243
      %1254 = vst [vmem:[#allocation2] sm:$0xff] %v1246
      %1255 = vst [vmem:[#allocation2 + $0x8] sm:$0xff] %v1247
      %1256 = vst [vmem:[#allocation2 + $0x10] sm:$0xff] %v1248
      %1257 = vst [vmem:[#allocation2 + $0x18] sm:$0xff] %v1249
      %1258 = vst [vmem:[#allocation2 + $0x20] sm:$0xff] %v1250
      %1259 = vst [vmem:[#allocation2 + $0x28] sm:$0xff] %v1251
      %1260 = vst [vmem:[#allocation2 + $0x30] sm:$0xff] %v1252
      %1261 = vst [vmem:[#allocation2 + $0x38] sm:$0xff] %v1253
      // Predicated region
      $region37: #{discriminator_forward.6} parent=31 // pred_check
        %p1262 = pneg %p262
      $region38: #{discriminator_forward.6} parent=31 // pred_check_branch
        %1264 = sbr.rel (%p1262) target = $region40
      $region39: #{discriminator_forward.6} parent=31 // pred_region
        %v1265 = vld [vmem:[#allocation2] sm:$0xff]
        %v1266 = vld [vmem:[#allocation2 + $0x8] sm:$0xff]
        %v1267 = vld [vmem:[#allocation2 + $0x10] sm:$0xff]
        %v1268 = vld [vmem:[#allocation2 + $0x18] sm:$0xff]
        %v1269 = vld [vmem:[#allocation2 + $0x20] sm:$0xff]
        %v1270 = vld [vmem:[#allocation2 + $0x28] sm:$0xff]
        %v1271 = vld [vmem:[#allocation2 + $0x30] sm:$0xff]
        %v1272 = vld [vmem:[#allocation2 + $0x38] sm:$0xff]
        %v1273 = vld [vmem:[%s252] sm:$0x1]
        %v1275 = vlaneseq
        %v1276 = vshrl.u32 %v1275, 7
        %v1277 = vsub.s32 0, %v1276
        %v1278 = vrot.slane %v1273, %v1277
        %v1280 = vadd.f32 %v1265, %v1278
        %v1281 = vadd.f32 %v1266, %v1278
        %v1282 = vadd.f32 %v1267, %v1278
        %v1283 = vadd.f32 %v1268, %v1278
        %v1284 = vadd.f32 %v1269, %v1278
        %v1285 = vadd.f32 %v1270, %v1278
        %v1286 = vadd.f32 %v1271, %v1278
        %v1287 = vadd.f32 %v1272, %v1278
        %v1288 = vadd.f32 %v1280, %v1281
        %v1289 = vadd.f32 %v1288, %v1282
        %v1290 = vadd.f32 %v1289, %v1283
        %v1291 = vadd.f32 %v1290, %v1284
        %v1292 = vadd.f32 %v1291, %v1285
        %v1293 = vadd.f32 %v1292, %v1286
        %v1294 = vadd.f32 %v1293, %v1287
        %v1295 = vrot.slane %v1294, 4
        %v1296 = vadd.f32 %v1294, %v1295
        %v1297 = vrot.slane %v1296, 2
        %v1298 = vadd.f32 %v1296, %v1297
        %v1299 = vrot.slane %v1298, 1
        %v1300 = vadd.f32 %v1298, %v1299
        %v1301 = vrcp.pop 64.0
        %v1302 = vmul.f32 %v1300, %v1301
        %v1303 = vsub.f32 %v1280, %v1302
        %v1304 = vsub.f32 %v1281, %v1302
        %v1305 = vsub.f32 %v1282, %v1302
        %v1306 = vsub.f32 %v1283, %v1302
        %v1307 = vsub.f32 %v1284, %v1302
        %v1308 = vsub.f32 %v1285, %v1302
        %v1309 = vsub.f32 %v1286, %v1302
        %v1310 = vsub.f32 %v1287, %v1302
        %v1311 = vmul.f32 %v1303, %v1303
        %v1312 = vmul.f32 %v1304, %v1304
        %v1313 = vmul.f32 %v1305, %v1305
        %v1314 = vmul.f32 %v1306, %v1306
        %v1315 = vmul.f32 %v1307, %v1307
        %v1316 = vmul.f32 %v1308, %v1308
        %v1317 = vmul.f32 %v1309, %v1309
        %v1318 = vmul.f32 %v1310, %v1310
        %v1319 = vadd.f32 %v1311, %v1312
        %v1320 = vadd.f32 %v1319, %v1313
        %v1321 = vadd.f32 %v1320, %v1314
        %v1322 = vadd.f32 %v1321, %v1315
        %v1323 = vadd.f32 %v1322, %v1316
        %v1324 = vadd.f32 %v1323, %v1317
        %v1325 = vadd.f32 %v1324, %v1318
        %v1326 = vrot.slane %v1325, 4
        %v1327 = vadd.f32 %v1325, %v1326
        %v1328 = vrot.slane %v1327, 2
        %v1329 = vadd.f32 %v1327, %v1328
        %v1330 = vrot.slane %v1329, 1
        %v1331 = vadd.f32 %v1329, %v1330
        %v1332 = vmul.f32 %v1331, %v1301
        %v1333 = vadd.f32 %v1332, 1e-05
        %v1334 = vrsqrt.pop %v1333
        %v1335 = vmul.f32 %v1303, %v1334
        %v1336 = vmul.f32 %v1304, %v1334
        %v1337 = vmul.f32 %v1305, %v1334
        %v1338 = vmul.f32 %v1306, %v1334
        %v1339 = vmul.f32 %v1307, %v1334
        %v1340 = vmul.f32 %v1308, %v1334
        %v1341 = vmul.f32 %v1309, %v1334
        %v1342 = vmul.f32 %v1310, %v1334
        %v1343 = vmul.f32 %v1335, 0.2
        %v1344 = vmul.f32 %v1336, 0.2
        %v1345 = vmul.f32 %v1337, 0.2
        %v1346 = vmul.f32 %v1338, 0.2
        %v1347 = vmul.f32 %v1339, 0.2
        %v1348 = vmul.f32 %v1340, 0.2
        %v1349 = vmul.f32 %v1341, 0.2
        %v1350 = vmul.f32 %v1342, 0.2
        %v1351 = vmax.f32 %v1335, %v1343
        %v1352 = vmax.f32 %v1336, %v1344
        %v1353 = vmax.f32 %v1337, %v1345
        %v1354 = vmax.f32 %v1338, %v1346
        %v1355 = vmax.f32 %v1339, %v1347
        %v1356 = vmax.f32 %v1340, %v1348
        %v1357 = vmax.f32 %v1341, %v1349
        %v1358 = vmax.f32 %v1342, %v1350
        %v1359 = vpack.c.bf16 %v1352, %v1351
        %v1360 = vpack.c.bf16 %v1354, %v1353
        %v1361 = vpack.c.bf16 %v1356, %v1355
        %v1362 = vpack.c.bf16 %v1358, %v1357
        %v1367 = vunpack.c.l.b16 %v1359
        %v1368 = vunpack.c.h.b16 %v1359
        %v1369 = vunpack.c.l.b16 %v1360
        %v1370 = vunpack.c.h.b16 %v1360
        %v1371 = vunpack.c.l.b16 %v1361
        %v1372 = vunpack.c.h.b16 %v1361
        %v1373 = vunpack.c.l.b16 %v1362
        %v1374 = vunpack.c.h.b16 %v1362
        %v1375 = vpack.c.b16 %v1367, %v1367
        %v1376 = vpack.c.b16 %v1368, %v1368
        %v1377 = vpack.c.b16 %v1369, %v1369
        %v1378 = vpack.c.b16 %v1370, %v1370
        %v1379 = vpack.c.b16 %v1371, %v1371
        %v1380 = vpack.c.b16 %v1372, %v1372
        %v1381 = vpack.c.b16 %v1373, %v1373
        %v1382 = vpack.c.b16 %v1374, %v1374
        %1391 = vst [vmem:[%s260] sm:$0xf] %v1375
        %1392 = vst [vmem:[%s260 + $0x4] sm:$0xf] %v1376
        %1393 = vst [vmem:[%s260 + $0x8] sm:$0xf] %v1377
        %1394 = vst [vmem:[%s260 + $0xc] sm:$0xf] %v1378
        %1395 = vst [vmem:[%s260 + $0x10] sm:$0xf] %v1379
        %1396 = vst [vmem:[%s260 + $0x14] sm:$0xf] %v1380
        %1397 = vst [vmem:[%s260 + $0x18] sm:$0xf] %v1381
        %1398 = vst [vmem:[%s260 + $0x1c] sm:$0xf] %v1382
      $region40: #{discriminator_forward.6} parent=31 // pred_fallthru
        _
      %p1399 = scmp.lt.s32.totalorder %s19, 1
      %s1400 = scalar_select %p1399, %s19, 1
      %p1401 = scmp.lt.s32.totalorder %s20, 0
      %s1402 = scalar_select %p1401, %s20, 0
      %s1403 = smul.addr %s1400, 8
      %s1404 = sadd.s32 %s1402, %s1403
      %s1405 = smul.addr %s1404, 4
      %s1406 = scalar_lea.vmem %s3, %s1405
      // Predicated region
      $region41: #{discriminator_forward.6} parent=31 // pred_check
        %p1407 = pneg %p135
      $region42: #{discriminator_forward.6} parent=31 // pred_check_branch
        %1409 = sbr.rel (%p1407) target = $region44
      $region43: #{discriminator_forward.6} parent=31 // pred_region
        _
      $region44: #{discriminator_forward.6} parent=31 // pred_fallthru
        _
    $region32: #{discriminator_forward.6} parent=5 // pred_fallthru
      _
    %p1410 = scmp.le.s32.totalorder 2, %s9
    // Predicated region
    $region45: #{discriminator_forward.6} parent=5 // pred_check
      %p1411 = pneg %p1410
    $region46: #{discriminator_forward.6} parent=5 // pred_check_branch
      %1413 = sbr.rel (%p1411) target = $region48
    $region47: #{discriminator_forward.6} parent=5 // pred_region
      %s1414 = ssub.s32 %s9, 2
      // Predicated region
      $region49: #{discriminator_forward.6} parent=47 // pred_check
        %p1415 = pneg %p141
      $region50: #{discriminator_forward.6} parent=47 // pred_check_branch
        %1417 = sbr.rel (%p1415) target = $region52
      $region51: #{discriminator_forward.6} parent=47 // pred_region
        %p1418 = scmp.lt.s32.totalorder %s22, 1
        %s1419 = scalar_select %p1418, %s22, 1
        %p1420 = scmp.lt.s32.totalorder %s23, 0
        %s1421 = scalar_select %p1420, %s23, 0
        %s1422 = smul.addr %s1419, 8
        %s1423 = sadd.s32 %s1421, %s1422
        %s1424 = smul.addr %s1423, 4
        %s1425 = scalar_lea.vmem %s3, %s1424
      $region52: #{discriminator_forward.6} parent=47 // pred_fallthru
        _
    $region48: #{discriminator_forward.6} parent=5 // pred_fallthru
      _
  $region6: #{discriminator_forward.6} parent=0 // loop_footer
    %s13 = sadd.s32 1, %s9
  $region7: #{discriminator_forward.6} parent=0 // loop_footer_branch
    %8 = sbr.rel target = $region3
  $region8: #{discriminator_forward.6} parent=0 // loop_exit
    _

// kernel: discriminator_forward.7
$region0: #{discriminator_forward.7}
  #allocation0 [shape = 'u32[]', space=smem, size = 0x4, offset = 0x4, fixed_abs, tag = 'smem constant byte address 0x4 - core index']
  #allocation1 [shape = 'u32[144,128]{1,0:T(1,128)}', space=vmem, size = 0x12000, scoped, tag = 'internal scratch']
  #allocation2 [shape = 'f32[16,256]{1,0:T(8,128)}', space=vmem, size = 0x4000, scoped, tag = 'scratch operand']
  %s0 = inlined_call_operand.vmem [shape: bf16[2,16,2048], index: 0, kind: input, shape index: {}]
  %s1 = inlined_call_operand.vmem [shape: bf16[2048,256], index: 1, kind: input, shape index: {}]
  %s2 = inlined_call_operand.vmem [shape: f32[1,256], index: 2, kind: input, shape index: {}]
  %s3 = inlined_call_operand.vmem [shape: bf16[2,16,256], index: 3, kind: output, shape index: {}]
  %s4 = sld [smem:[#allocation0]]
  $region53: #{discriminator_forward.7} parent=0
    _
  %s6 = ssub.s32 1, %s4
  %s7 = scalar_select 0, %s6, %s4
  loop: start=0, step=1, limit=4
  $region2: #{discriminator_forward.7} parent=0 // loop_pre_header
    _
  $region3: #{discriminator_forward.7} parent=0 // loop_header
    %s9 = sphi 0, %s13
    %p10 = scmp.ge.s32.totalorder %s9, 4
    %s16 = sphi 0, %s35
    %s17 = sphi 0, %s31
    %s18 = sphi 0, %s27
    %s19 = sphi 0, %s16
    %s20 = sphi 0, %s17
    %s21 = sphi 0, %s18
    %s22 = sphi 0, %s19
    %s23 = sphi 0, %s20
    %s24 = sphi 0, %s21
    %s40 = sphi 0, %s42
    %s43 = sphi 0, %s40
    %s44 = sphi 0, %s43
    %s60 = sphi 0, %s44
    %s68 = sphi 0, %s70
    %s71 = sphi 0, %s68
    %s72 = sphi 0, %s71
    %s88 = sphi 0, %s72
    %s94 = sphi 0, %s96
    %s97 = sphi 0, %s94
    %s98 = sphi 0, %s97
    %s114 = sphi 0, %s98
    %s122 = sphi 0, %s124
    %s125 = sphi 0, %s122
    %s126 = sphi 0, %s125
    %s142 = sphi 0, %s126
  $region4: #{discriminator_forward.7} parent=0 // loop_header_branch
    %12 = sbr.rel (%p10) target = $region8
  $region5: #{discriminator_forward.7} parent=0 // loop_body
    %s14 = ssub.s32 %s9, 1
    %s15 = ssub.s32 %s9, 2
    %s25 = sadd.s32 1, %s18
    %p26 = scmp.ge.s32.totalorder %s25, 1
    %s27 = scalar_select %p26, 0, %s25
    %s28 = sadd.s32 1, %s17
    %s29 = scalar_select %p26, %s28, %s17
    %p30 = scmp.ge.s32.totalorder %s29, 1
    %s31 = scalar_select %p30, 0, %s29
    %s32 = sadd.s32 1, %s16
    %s33 = scalar_select %p30, %s32, %s16
    %p34 = scmp.ge.s32.totalorder %s33, 2
    %s35 = scalar_select %p34, 0, %s33
    %s36 = ssub.s32 %s16, %s35
    %s37 = ssub.s32 %s18, %s27
    %s38 = sor.u32 %s36, %s37
    %p39 = scmp.eq.s32.totalorder %s38, 0
    %s41 = sadd.s32 %s40, 1
    %s42 = scalar_select %p39, %s40, %s41
    %p45 = pneg %p39
    %p46 = scmp.eq.s32.totalorder %s9, 1
    %p47 = por %p45, %p46
    %p48 = scmp.ne.s32.totalorder %s40, %s43
    %p49 = scmp.eq.s32.totalorder %s9, 0
    %p50 = por %p48, %p49
    %p51 = scmp.ne.s32.totalorder %s40, %s43
    %p52 = scmp.eq.s32.totalorder %s14, 1
    %p53 = por %p51, %p52
    %p54 = scmp.ne.s32.totalorder %s43, %s44
    %p55 = scmp.eq.s32.totalorder %s14, 0
    %p56 = por %p54, %p55
    %p57 = scmp.ne.s32.totalorder %s43, %s44
    %p58 = scmp.eq.s32.totalorder %s15, 1
    %p59 = por %p57, %p58
    %p61 = scmp.ne.s32.totalorder %s44, %s60
    %p62 = scmp.eq.s32.totalorder %s15, 0
    %p63 = por %p61, %p62
    %s64 = ssub.s32 %s18, %s27
    %s65 = ssub.s32 %s17, %s31
    %s66 = sor.u32 %s64, %s65
    %p67 = scmp.eq.s32.totalorder %s66, 0
    %s69 = sadd.s32 %s68, 1
    %s70 = scalar_select %p67, %s68, %s69
    %p73 = pneg %p67
    %p74 = scmp.eq.s32.totalorder %s9, 1
    %p75 = por %p73, %p74
    %p76 = scmp.ne.s32.totalorder %s68, %s71
    %p77 = scmp.eq.s32.totalorder %s9, 0
    %p78 = por %p76, %p77
    %p79 = scmp.ne.s32.totalorder %s68, %s71
    %p80 = scmp.eq.s32.totalorder %s14, 1
    %p81 = por %p79, %p80
    %p82 = scmp.ne.s32.totalorder %s71, %s72
    %p83 = scmp.eq.s32.totalorder %s14, 0
    %p84 = por %p82, %p83
    %p85 = scmp.ne.s32.totalorder %s71, %s72
    %p86 = scmp.eq.s32.totalorder %s15, 1
    %p87 = por %p85, %p86
    %p89 = scmp.ne.s32.totalorder %s72, %s88
    %p90 = scmp.eq.s32.totalorder %s15, 0
    %p91 = por %p89, %p90
    %s92 = ssub.s32 %s17, %s31
    %p93 = scmp.eq.s32.totalorder %s92, 0
    %s95 = sadd.s32 %s94, 1
    %s96 = scalar_select %p93, %s94, %s95
    %p99 = pneg %p93
    %p100 = scmp.eq.s32.totalorder %s9, 1
    %p101 = por %p99, %p100
    %p102 = scmp.ne.s32.totalorder %s94, %s97
    %p103 = scmp.eq.s32.totalorder %s9, 0
    %p104 = por %p102, %p103
    %p105 = scmp.ne.s32.totalorder %s94, %s97
    %p106 = scmp.eq.s32.totalorder %s14, 1
    %p107 = por %p105, %p106
    %p108 = scmp.ne.s32.totalorder %s97, %s98
    %p109 = scmp.eq.s32.totalorder %s14, 0
    %p110 = por %p108, %p109
    %p111 = scmp.ne.s32.totalorder %s97, %s98
    %p112 = scmp.eq.s32.totalorder %s15, 1
    %p113 = por %p111, %p112
    %p115 = scmp.ne.s32.totalorder %s98, %s114
    %p116 = scmp.eq.s32.totalorder %s15, 0
    %p117 = por %p115, %p116
    %s118 = ssub.s32 %s16, %s35
    %s119 = ssub.s32 %s17, %s31
    %s120 = sor.u32 %s118, %s119
    %p121 = scmp.eq.s32.totalorder %s120, 0
    %s123 = sadd.s32 %s122, 1
    %s124 = scalar_select %p121, %s122, %s123
    %p127 = pneg %p121
    %p128 = scmp.eq.s32.totalorder %s9, 1
    %p129 = por %p127, %p128
    %p130 = scmp.ne.s32.totalorder %s122, %s125
    %p131 = scmp.eq.s32.totalorder %s9, 0
    %p132 = por %p130, %p131
    %p133 = scmp.ne.s32.totalorder %s122, %s125
    %p134 = scmp.eq.s32.totalorder %s14, 1
    %p135 = por %p133, %p134
    %p136 = scmp.ne.s32.totalorder %s125, %s126
    %p137 = scmp.eq.s32.totalorder %s14, 0
    %p138 = por %p136, %p137
    %p139 = scmp.ne.s32.totalorder %s125, %s126
    %p140 = scmp.eq.s32.totalorder %s15, 1
    %p141 = por %p139, %p140
    %p143 = scmp.ne.s32.totalorder %s126, %s142
    %p144 = scmp.eq.s32.totalorder %s15, 0
    %p145 = por %p143, %p144
    %p146 = scmp.le.s32.totalorder 1, %s9
    %p147 = scmp.lt.s32.totalorder %s9, 3
    %p148 = pnand %p146, %p147
    %p149 = pneg %p148
    // Predicated region
    $region9: #{discriminator_forward.7} parent=5 // pred_check
      _
    $region10: #{discriminator_forward.7} parent=5 // pred_check_branch
      %151 = sbr.rel (%p148) target = $region12
    $region11: #{discriminator_forward.7} parent=5 // pred_region
      %s152 = ssub.s32 %s9, 1
      // Predicated region
      $region13: #{discriminator_forward.7} parent=11 // pred_check
        %p153 = pneg %p84
      $region14: #{discriminator_forward.7} parent=11 // pred_check_branch
        %155 = sbr.rel (%p153) target = $region16
      $region15: #{discriminator_forward.7} parent=11 // pred_region
        %s156 = smul.u32 256, %s21
        %s157 = smul.u32 2, %s20
        %p158 = scmp.lt.s32.totalorder %s156, 255
        %s159 = scalar_select %p158, %s156, 255
        %p160 = scmp.lt.s32.totalorder %s157, 1
        %s161 = scalar_select %p160, %s157, 1
        %s162 = smul.addr %s159, 2
        %s163 = sadd.s32 %s161, %s162
        %s164 = smul.addr %s163, 4
        %s165 = scalar_lea.vmem %s1, %s164
        %s166 = smul.u32 256, %s21
        %s167 = smul.u32 2, %s20
      $region16: #{discriminator_forward.7} parent=11 // pred_fallthru
        _
      // Predicated region
      $region17: #{discriminator_forward.7} parent=11 // pred_check
        %p168 = pneg %p110
      $region18: #{discriminator_forward.7} parent=11 // pred_check_branch
        %170 = sbr.rel (%p168) target = $region20
      $region19: #{discriminator_forward.7} parent=11 // pred_region
        %s171 = smul.u32 2, %s20
        %p172 = scmp.lt.s32.totalorder %s171, 1
        %s173 = scalar_select %p172, %s171, 1
        %s174 = scalar_lea.vmem %s2, %s173
        %s175 = smul.u32 2, %s20
      $region20: #{discriminator_forward.7} parent=11 // pred_fallthru
        _
    $region12: #{discriminator_forward.7} parent=5 // pred_fallthru
      _
    %p176 = scmp.lt.s32.totalorder %s9, 2
    // Predicated region
    $region21: #{discriminator_forward.7} parent=5 // pred_check
      %p177 = pneg %p176
    $region22: #{discriminator_forward.7} parent=5 // pred_check_branch
      %179 = sbr.rel (%p177) target = $region24
    $region23: #{discriminator_forward.7} parent=5 // pred_region
      // Predicated region
      $region25: #{discriminator_forward.7} parent=23 // pred_check
        %p180 = pneg %p50
      $region26: #{discriminator_forward.7} parent=23 // pred_check_branch
        %182 = sbr.rel (%p180) target = $region28
      $region27: #{discriminator_forward.7} parent=23 // pred_region
        %s183 = smul.u32 16, %s18
        %p184 = scmp.lt.s32.totalorder %s16, 1
        %s185 = scalar_select %p184, %s16, 1
        %p186 = scmp.lt.s32.totalorder %s183, 15
        %s187 = scalar_select %p186, %s183, 15
        %s188 = smul.addr %s185, 32
        %s189 = sadd.s32 %s187, %s188
        %s190 = smul.addr %s189, 4
        %s191 = scalar_lea.vmem %s0, %s190
        %s192 = smul.u32 16, %s18
      $region28: #{discriminator_forward.7} parent=23 // pred_fallthru
        _
    $region24: #{discriminator_forward.7} parent=5 // pred_fallthru
      _
    %p193 = scmp.le.s32.totalorder 1, %s9
    %p194 = scmp.lt.s32.totalorder %s9, 3
    %p195 = pnand %p193, %p194
    %p196 = pneg %p195
    // Predicated region
    $region29: #{discriminator_forward.7} parent=5 // pred_check
      _
    $region30: #{discriminator_forward.7} parent=5 // pred_check_branch
      %198 = sbr.rel (%p195) target = $region32
    $region31: #{discriminator_forward.7} parent=5 // pred_region
      %s199 = ssub.s32 %s9, 1
      %s200 = smul.u32 16, %s21
      %p201 = scmp.lt.s32.totalorder %s19, 1
      %s202 = scalar_select %p201, %s19, 1
      %p203 = scmp.lt.s32.totalorder %s200, 15
      %s204 = scalar_select %p203, %s200, 15
      %s205 = smul.addr %s202, 32
      %s206 = sadd.s32 %s204, %s205
      %s207 = smul.addr %s206, 4
      %s208 = scalar_lea.vmem %s0, %s207
      %p209 = pneg %p56
      %p210 = pneg %p53
      %s211 = smul.u32 256, %s21
      %s212 = smul.u32 2, %s20
      %p213 = scmp.lt.s32.totalorder %s211, 255
      %s214 = scalar_select %p213, %s211, 255
      %p215 = scmp.lt.s32.totalorder %s212, 1
      %s216 = scalar_select %p215, %s212, 1
      %s217 = smul.addr %s214, 2
      %s218 = sadd.s32 %s216, %s217
      %s219 = smul.addr %s218, 4
      %s220 = scalar_lea.vmem %s1, %s219
      %p221 = pneg %p84
      %p222 = pneg %p81
      %s223 = smul.u32 2, %s20
      %p224 = scmp.lt.s32.totalorder %s223, 1
      %s225 = scalar_select %p224, %s223, 1
      %s226 = scalar_lea.vmem %s2, %s225
      %p227 = pneg %p110
      %p228 = pneg %p107
      %p229 = pneg %p138
      %p230 = pneg %p135
      %s231 = smul.u32 2, %s20
      %p232 = scmp.lt.s32.totalorder %s19, 1
      %s233 = scalar_select %p232, %s19, 1
      %p234 = scmp.lt.s32.totalorder %s231, 1
      %s235 = scalar_select %p234, %s231, 1
      %s236 = smul.addr %s233, 4
      %s237 = sadd.s32 %s235, %s236
      %s238 = smul.addr %s237, 4
      %s239 = scalar_lea.vmem %s3, %s238
      %s240 = smul.u32 16, %s21
      %p241 = scmp.lt.s32.totalorder %s19, 1
      %s242 = scalar_select %p241, %s19, 1
      %p243 = scmp.lt.s32.totalorder %s240, 15
      %s244 = scalar_select %p243, %s240, 15
      %s245 = smul.addr %s242, 32
      %s246 = sadd.s32 %s244, %s245
      %s247 = smul.addr %s246, 4
      %s248 = scalar_lea.vmem %s0, %s247
      %s249 = smul.u32 16, %s21
      %s250 = smul.u32 256, %s21
      %s251 = smul.u32 2, %s20
      %p252 = scmp.lt.s32.totalorder %s250, 255
      %s253 = scalar_select %p252, %s250, 255
      %p254 = scmp.lt.s32.totalorder %s251, 1
      %s255 = scalar_select %p254, %s251, 1
      %s256 = smul.addr %s253, 2
      %s257 = sadd.s32 %s255, %s256
      %s258 = smul.addr %s257, 4
      %s259 = scalar_lea.vmem %s1, %s258
      %s260 = smul.u32 256, %s21
      %s261 = smul.u32 2, %s20
      %s262 = smul.u32 2, %s20
      %p263 = scmp.lt.s32.totalorder %s262, 1
      %s264 = scalar_select %p263, %s262, 1
      %s265 = scalar_lea.vmem %s2, %s264
      %s266 = smul.u32 2, %s20
      %s267 = smul.u32 2, %s20
      %p268 = scmp.lt.s32.totalorder %s19, 1
      %s269 = scalar_select %p268, %s19, 1
      %p270 = scmp.lt.s32.totalorder %s267, 1
      %s271 = scalar_select %p270, %s267, 1
      %s272 = smul.addr %s269, 4
      %s273 = sadd.s32 %s271, %s272
      %s274 = smul.addr %s273, 4
      %s275 = scalar_lea.vmem %s3, %s274
      %s276 = smul.u32 2, %s20
      %p277 = scmp.eq.s32.totalorder %s21, 0
      // Predicated region
      $region33: #{discriminator_forward.7} parent=31 // pred_check
        %p278 = pneg %p277
      $region34: #{discriminator_forward.7} parent=31 // pred_check_branch
        %280 = sbr.rel (%p278) target = $region36
      $region35: #{discriminator_forward.7} parent=31 // pred_region
        %281 = vst [vmem:[#allocation2] sm:$0xff] 0.0
        %282 = vst [vmem:[#allocation2 + $0x8] sm:$0xff] 0.0
        %283 = vst [vmem:[#allocation2 + $0x10] sm:$0xff] 0.0
        %284 = vst [vmem:[#allocation2 + $0x18] sm:$0xff] 0.0
      $region36: #{discriminator_forward.7} parent=31 // pred_fallthru
        _
      %v285 = vld [vmem:[#allocation2] sm:$0xff]
      %v286 = vld [vmem:[#allocation2 + $0x8] sm:$0xff]
      %v287 = vld [vmem:[#allocation2 + $0x10] sm:$0xff]
      %v288 = vld [vmem:[#allocation2 + $0x18] sm:$0xff]
      %v289 = vld [vmem:[%s248] sm:$0xff]
      %v290 = vld [vmem:[%s248 + $0x8] sm:$0xff]
      %v291 = vld [vmem:[%s248 + $0x10] sm:$0xff]
      %v292 = vld [vmem:[%s248 + $0x18] sm:$0xff]
      %v293 = vld [vmem:[%s248 + $0x20] sm:$0xff]
      %v294 = vld [vmem:[%s248 + $0x28] sm:$0xff]
      %v295 = vld [vmem:[%s248 + $0x30] sm:$0xff]
      %v296 = vld [vmem:[%s248 + $0x38] sm:$0xff]
      %v297 = vld [vmem:[%s248 + $0x40] sm:$0xff]
      %v298 = vld [vmem:[%s248 + $0x48] sm:$0xff]
      %v299 = vld [vmem:[%s248 + $0x50] sm:$0xff]
      %v300 = vld [vmem:[%s248 + $0x58] sm:$0xff]
      %v301 = vld [vmem:[%s248 + $0x60] sm:$0xff]
      %v302 = vld [vmem:[%s248 + $0x68] sm:$0xff]
      %v303 = vld [vmem:[%s248 + $0x70] sm:$0xff]
      %v304 = vld [vmem:[%s248 + $0x78] sm:$0xff]
      %v305 = vld [vmem:[%s259] sm:$0xff]
      %v306 = vld [vmem:[%s259 + $0x8] sm:$0xff]
      %v307 = vld [vmem:[%s259 + $0x10] sm:$0xff]
      %v308 = vld [vmem:[%s259 + $0x18] sm:$0xff]
      %v309 = vld [vmem:[%s259 + $0x20] sm:$0xff]
      %v310 = vld [vmem:[%s259 + $0x28] sm:$0xff]
      %v311 = vld [vmem:[%s259 + $0x30] sm:$0xff]
      %v312 = vld [vmem:[%s259 + $0x38] sm:$0xff]
      %v313 = vld [vmem:[%s259 + $0x40] sm:$0xff]
      %v314 = vld [vmem:[%s259 + $0x48] sm:$0xff]
      %v315 = vld [vmem:[%s259 + $0x50] sm:$0xff]
      %v316 = vld [vmem:[%s259 + $0x58] sm:$0xff]
      %v317 = vld [vmem:[%s259 + $0x60] sm:$0xff]
      %v318 = vld [vmem:[%s259 + $0x68] sm:$0xff]
      %v319 = vld [vmem:[%s259 + $0x70] sm:$0xff]
      %v320 = vld [vmem:[%s259 + $0x78] sm:$0xff]
      %v321 = vld [vmem:[%s259 + $0x80] sm:$0xff]
      %v322 = vld [vmem:[%s259 + $0x88] sm:$0xff]
      %v323 = vld [vmem:[%s259 + $0x90] sm:$0xff]
      %v324 = vld [vmem:[%s259 + $0x98] sm:$0xff]
      %v325 = vld [vmem:[%s259 + $0xa0] sm:$0xff]
      %v326 = vld [vmem:[%s259 + $0xa8] sm:$0xff]
      %v327 = vld [vmem:[%s259 + $0xb0] sm:$0xff]
      %v328 = vld [vmem:[%s259 + $0xb8] sm:$0xff]
      %v329 = vld [vmem:[%s259 + $0xc0] sm:$0xff]
      %v330 = vld [vmem:[%s259 + $0xc8] sm:$0xff]
      %v331 = vld [vmem:[%s259 + $0xd0] sm:$0xff]
      %v332 = vld [vmem:[%s259 + $0xd8] sm:$0xff]
      %v333 = vld [vmem:[%s259 + $0xe0] sm:$0xff]
      %v334 = vld [vmem:[%s259 + $0xe8] sm:$0xff]
      %v335 = vld [vmem:[%s259 + $0xf0] sm:$0xff]
      %v336 = vld [vmem:[%s259 + $0xf8] sm:$0xff]
      %v337 = vld [vmem:[%s259 + $0x100] sm:$0xff]
      %v338 = vld [vmem:[%s259 + $0x108] sm:$0xff]
      %v339 = vld [vmem:[%s259 + $0x110] sm:$0xff]
      %v340 = vld [vmem:[%s259 + $0x118] sm:$0xff]
      %v341 = vld [vmem:[%s259 + $0x120] sm:$0xff]
      %v342 = vld [vmem:[%s259 + $0x128] sm:$0xff]
      %v343 = vld [vmem:[%s259 + $0x130] sm:$0xff]
      %v344 = vld [vmem:[%s259 + $0x138] sm:$0xff]
      %v345 = vld [vmem:[%s259 + $0x140] sm:$0xff]
      %v346 = vld [vmem:[%s259 + $0x148] sm:$0xff]
      %v347 = vld [vmem:[%s259 + $0x150] sm:$0xff]
      %v348 = vld [vmem:[%s259 + $0x158] sm:$0xff]
      %v349 = vld [vmem:[%s259 + $0x160] sm:$0xff]
      %v350 = vld [vmem:[%s259 + $0x168] sm:$0xff]
      %v351 = vld [vmem:[%s259 + $0x170] sm:$0xff]
      %v352 = vld [vmem:[%s259 + $0x178] sm:$0xff]
      %v353 = vld [vmem:[%s259 + $0x180] sm:$0xff]
      %v354 = vld [vmem:[%s259 + $0x188] sm:$0xff]
      %v355 = vld [vmem:[%s259 + $0x190] sm:$0xff]
      %v356 = vld [vmem:[%s259 + $0x198] sm:$0xff]
      %v357 = vld [vmem:[%s259 + $0x1a0] sm:$0xff]
      %v358 = vld [vmem:[%s259 + $0x1a8] sm:$0xff]
      %v359 = vld [vmem:[%s259 + $0x1b0] sm:$0xff]
      %v360 = vld [vmem:[%s259 + $0x1b8] sm:$0xff]
      %v361 = vld [vmem:[%s259 + $0x1c0] sm:$0xff]
      %v362 = vld [vmem:[%s259 + $0x1c8] sm:$0xff]
      %v363 = vld [vmem:[%s259 + $0x1d0] sm:$0xff]
      %v364 = vld [vmem:[%s259 + $0x1d8] sm:$0xff]
      %v365 = vld [vmem:[%s259 + $0x1e0] sm:$0xff]
      %v366 = vld [vmem:[%s259 + $0x1e8] sm:$0xff]
      %v367 = vld [vmem:[%s259 + $0x1f0] sm:$0xff]
      %v368 = vld [vmem:[%s259 + $0x1f8] sm:$0xff]
      %v369 = vld [vmem:[%s259 + $0x200] sm:$0xff]
      %v370 = vld [vmem:[%s259 + $0x208] sm:$0xff]
      %v371 = vld [vmem:[%s259 + $0x210] sm:$0xff]
      %v372 = vld [vmem:[%s259 + $0x218] sm:$0xff]
      %v373 = vld [vmem:[%s259 + $0x220] sm:$0xff]
      %v374 = vld [vmem:[%s259 + $0x228] sm:$0xff]
      %v375 = vld [vmem:[%s259 + $0x230] sm:$0xff]
      %v376 = vld [vmem:[%s259 + $0x238] sm:$0xff]
      %v377 = vld [vmem:[%s259 + $0x240] sm:$0xff]
      %v378 = vld [vmem:[%s259 + $0x248] sm:$0xff]
      %v379 = vld [vmem:[%s259 + $0x250] sm:$0xff]
      %v380 = vld [vmem:[%s259 + $0x258] sm:$0xff]
      %v381 = vld [vmem:[%s259 + $0x260] sm:$0xff]
      %v382 = vld [vmem:[%s259 + $0x268] sm:$0xff]
      %v383 = vld [vmem:[%s259 + $0x270] sm:$0xff]
      %v384 = vld [vmem:[%s259 + $0x278] sm:$0xff]
      %v385 = vld [vmem:[%s259 + $0x280] sm:$0xff]
      %v386 = vld [vmem:[%s259 + $0x288] sm:$0xff]
      %v387 = vld [vmem:[%s259 + $0x290] sm:$0xff]
      %v388 = vld [vmem:[%s259 + $0x298] sm:$0xff]
      %v389 = vld [vmem:[%s259 + $0x2a0] sm:$0xff]
      %v390 = vld [vmem:[%s259 + $0x2a8] sm:$0xff]
      %v391 = vld [vmem:[%s259 + $0x2b0] sm:$0xff]
      %v392 = vld [vmem:[%s259 + $0x2b8] sm:$0xff]
      %v393 = vld [vmem:[%s259 + $0x2c0] sm:$0xff]
      %v394 = vld [vmem:[%s259 + $0x2c8] sm:$0xff]
      %v395 = vld [vmem:[%s259 + $0x2d0] sm:$0xff]
      %v396 = vld [vmem:[%s259 + $0x2d8] sm:$0xff]
      %v397 = vld [vmem:[%s259 + $0x2e0] sm:$0xff]
      %v398 = vld [vmem:[%s259 + $0x2e8] sm:$0xff]
      %v399 = vld [vmem:[%s259 + $0x2f0] sm:$0xff]
      %v400 = vld [vmem:[%s259 + $0x2f8] sm:$0xff]
      %v401 = vld [vmem:[%s259 + $0x300] sm:$0xff]
      %v402 = vld [vmem:[%s259 + $0x308] sm:$0xff]
      %v403 = vld [vmem:[%s259 + $0x310] sm:$0xff]
      %v404 = vld [vmem:[%s259 + $0x318] sm:$0xff]
      %v405 = vld [vmem:[%s259 + $0x320] sm:$0xff]
      %v406 = vld [vmem:[%s259 + $0x328] sm:$0xff]
      %v407 = vld [vmem:[%s259 + $0x330] sm:$0xff]
      %v408 = vld [vmem:[%s259 + $0x338] sm:$0xff]
      %v409 = vld [vmem:[%s259 + $0x340] sm:$0xff]
      %v410 = vld [vmem:[%s259 + $0x348] sm:$0xff]
      %v411 = vld [vmem:[%s259 + $0x350] sm:$0xff]
      %v412 = vld [vmem:[%s259 + $0x358] sm:$0xff]
      %v413 = vld [vmem:[%s259 + $0x360] sm:$0xff]
      %v414 = vld [vmem:[%s259 + $0x368] sm:$0xff]
      %v415 = vld [vmem:[%s259 + $0x370] sm:$0xff]
      %v416 = vld [vmem:[%s259 + $0x378] sm:$0xff]
      %v417 = vld [vmem:[%s259 + $0x380] sm:$0xff]
      %v418 = vld [vmem:[%s259 + $0x388] sm:$0xff]
      %v419 = vld [vmem:[%s259 + $0x390] sm:$0xff]
      %v420 = vld [vmem:[%s259 + $0x398] sm:$0xff]
      %v421 = vld [vmem:[%s259 + $0x3a0] sm:$0xff]
      %v422 = vld [vmem:[%s259 + $0x3a8] sm:$0xff]
      %v423 = vld [vmem:[%s259 + $0x3b0] sm:$0xff]
      %v424 = vld [vmem:[%s259 + $0x3b8] sm:$0xff]
      %v425 = vld [vmem:[%s259 + $0x3c0] sm:$0xff]
      %v426 = vld [vmem:[%s259 + $0x3c8] sm:$0xff]
      %v427 = vld [vmem:[%s259 + $0x3d0] sm:$0xff]
      %v428 = vld [vmem:[%s259 + $0x3d8] sm:$0xff]
      %v429 = vld [vmem:[%s259 + $0x3e0] sm:$0xff]
      %v430 = vld [vmem:[%s259 + $0x3e8] sm:$0xff]
      %v431 = vld [vmem:[%s259 + $0x3f0] sm:$0xff]
      %v432 = vld [vmem:[%s259 + $0x3f8] sm:$0xff]
      %v433 = vld [vmem:[%s259 + $0x400] sm:$0xff]
      %v434 = vld [vmem:[%s259 + $0x408] sm:$0xff]
      %v435 = vld [vmem:[%s259 + $0x410] sm:$0xff]
      %v436 = vld [vmem:[%s259 + $0x418] sm:$0xff]
      %v437 = vld [vmem:[%s259 + $0x420] sm:$0xff]
      %v438 = vld [vmem:[%s259 + $0x428] sm:$0xff]
      %v439 = vld [vmem:[%s259 + $0x430] sm:$0xff]
      %v440 = vld [vmem:[%s259 + $0x438] sm:$0xff]
      %v441 = vld [vmem:[%s259 + $0x440] sm:$0xff]
      %v442 = vld [vmem:[%s259 + $0x448] sm:$0xff]
      %v443 = vld [vmem:[%s259 + $0x450] sm:$0xff]
      %v444 = vld [vmem:[%s259 + $0x458] sm:$0xff]
      %v445 = vld [vmem:[%s259 + $0x460] sm:$0xff]
      %v446 = vld [vmem:[%s259 + $0x468] sm:$0xff]
      %v447 = vld [vmem:[%s259 + $0x470] sm:$0xff]
      %v448 = vld [vmem:[%s259 + $0x478] sm:$0xff]
      %v449 = vld [vmem:[%s259 + $0x480] sm:$0xff]
      %v450 = vld [vmem:[%s259 + $0x488] sm:$0xff]
      %v451 = vld [vmem:[%s259 + $0x490] sm:$0xff]
      %v452 = vld [vmem:[%s259 + $0x498] sm:$0xff]
      %v453 = vld [vmem:[%s259 + $0x4a0] sm:$0xff]
      %v454 = vld [vmem:[%s259 + $0x4a8] sm:$0xff]
      %v455 = vld [vmem:[%s259 + $0x4b0] sm:$0xff]
      %v456 = vld [vmem:[%s259 + $0x4b8] sm:$0xff]
      %v457 = vld [vmem:[%s259 + $0x4c0] sm:$0xff]
      %v458 = vld [vmem:[%s259 + $0x4c8] sm:$0xff]
      %v459 = vld [vmem:[%s259 + $0x4d0] sm:$0xff]
      %v460 = vld [vmem:[%s259 + $0x4d8] sm:$0xff]
      %v461 = vld [vmem:[%s259 + $0x4e0] sm:$0xff]
      %v462 = vld [vmem:[%s259 + $0x4e8] sm:$0xff]
      %v463 = vld [vmem:[%s259 + $0x4f0] sm:$0xff]
      %v464 = vld [vmem:[%s259 + $0x4f8] sm:$0xff]
      %v465 = vld [vmem:[%s259 + $0x500] sm:$0xff]
      %v466 = vld [vmem:[%s259 + $0x508] sm:$0xff]
      %v467 = vld [vmem:[%s259 + $0x510] sm:$0xff]
      %v468 = vld [vmem:[%s259 + $0x518] sm:$0xff]
      %v469 = vld [vmem:[%s259 + $0x520] sm:$0xff]
      %v470 = vld [vmem:[%s259 + $0x528] sm:$0xff]
      %v471 = vld [vmem:[%s259 + $0x530] sm:$0xff]
      %v472 = vld [vmem:[%s259 + $0x538] sm:$0xff]
      %v473 = vld [vmem:[%s259 + $0x540] sm:$0xff]
      %v474 = vld [vmem:[%s259 + $0x548] sm:$0xff]
      %v475 = vld [vmem:[%s259 + $0x550] sm:$0xff]
      %v476 = vld [vmem:[%s259 + $0x558] sm:$0xff]
      %v477 = vld [vmem:[%s259 + $0x560] sm:$0xff]
      %v478 = vld [vmem:[%s259 + $0x568] sm:$0xff]
      %v479 = vld [vmem:[%s259 + $0x570] sm:$0xff]
      %v480 = vld [vmem:[%s259 + $0x578] sm:$0xff]
      %v481 = vld [vmem:[%s259 + $0x580] sm:$0xff]
      %v482 = vld [vmem:[%s259 + $0x588] sm:$0xff]
      %v483 = vld [vmem:[%s259 + $0x590] sm:$0xff]
      %v484 = vld [vmem:[%s259 + $0x598] sm:$0xff]
      %v485 = vld [vmem:[%s259 + $0x5a0] sm:$0xff]
      %v486 = vld [vmem:[%s259 + $0x5a8] sm:$0xff]
      %v487 = vld [vmem:[%s259 + $0x5b0] sm:$0xff]
      %v488 = vld [vmem:[%s259 + $0x5b8] sm:$0xff]
      %v489 = vld [vmem:[%s259 + $0x5c0] sm:$0xff]
      %v490 = vld [vmem:[%s259 + $0x5c8] sm:$0xff]
      %v491 = vld [vmem:[%s259 + $0x5d0] sm:$0xff]
      %v492 = vld [vmem:[%s259 + $0x5d8] sm:$0xff]
      %v493 = vld [vmem:[%s259 + $0x5e0] sm:$0xff]
      %v494 = vld [vmem:[%s259 + $0x5e8] sm:$0xff]
      %v495 = vld [vmem:[%s259 + $0x5f0] sm:$0xff]
      %v496 = vld [vmem:[%s259 + $0x5f8] sm:$0xff]
      %v497 = vld [vmem:[%s259 + $0x600] sm:$0xff]
      %v498 = vld [vmem:[%s259 + $0x608] sm:$0xff]
      %v499 = vld [vmem:[%s259 + $0x610] sm:$0xff]
      %v500 = vld [vmem:[%s259 + $0x618] sm:$0xff]
      %v501 = vld [vmem:[%s259 + $0x620] sm:$0xff]
      %v502 = vld [vmem:[%s259 + $0x628] sm:$0xff]
      %v503 = vld [vmem:[%s259 + $0x630] sm:$0xff]
      %v504 = vld [vmem:[%s259 + $0x638] sm:$0xff]
      %v505 = vld [vmem:[%s259 + $0x640] sm:$0xff]
      %v506 = vld [vmem:[%s259 + $0x648] sm:$0xff]
      %v507 = vld [vmem:[%s259 + $0x650] sm:$0xff]
      %v508 = vld [vmem:[%s259 + $0x658] sm:$0xff]
      %v509 = vld [vmem:[%s259 + $0x660] sm:$0xff]
      %v510 = vld [vmem:[%s259 + $0x668] sm:$0xff]
      %v511 = vld [vmem:[%s259 + $0x670] sm:$0xff]
      %v512 = vld [vmem:[%s259 + $0x678] sm:$0xff]
      %v513 = vld [vmem:[%s259 + $0x680] sm:$0xff]
      %v514 = vld [vmem:[%s259 + $0x688] sm:$0xff]
      %v515 = vld [vmem:[%s259 + $0x690] sm:$0xff]
      %v516 = vld [vmem:[%s259 + $0x698] sm:$0xff]
      %v517 = vld [vmem:[%s259 + $0x6a0] sm:$0xff]
      %v518 = vld [vmem:[%s259 + $0x6a8] sm:$0xff]
      %v519 = vld [vmem:[%s259 + $0x6b0] sm:$0xff]
      %v520 = vld [vmem:[%s259 + $0x6b8] sm:$0xff]
      %v521 = vld [vmem:[%s259 + $0x6c0] sm:$0xff]
      %v522 = vld [vmem:[%s259 + $0x6c8] sm:$0xff]
      %v523 = vld [vmem:[%s259 + $0x6d0] sm:$0xff]
      %v524 = vld [vmem:[%s259 + $0x6d8] sm:$0xff]
      %v525 = vld [vmem:[%s259 + $0x6e0] sm:$0xff]
      %v526 = vld [vmem:[%s259 + $0x6e8] sm:$0xff]
      %v527 = vld [vmem:[%s259 + $0x6f0] sm:$0xff]
      %v528 = vld [vmem:[%s259 + $0x6f8] sm:$0xff]
      %v529 = vld [vmem:[%s259 + $0x700] sm:$0xff]
      %v530 = vld [vmem:[%s259 + $0x708] sm:$0xff]
      %v531 = vld [vmem:[%s259 + $0x710] sm:$0xff]
      %v532 = vld [vmem:[%s259 + $0x718] sm:$0xff]
      %v533 = vld [vmem:[%s259 + $0x720] sm:$0xff]
      %v534 = vld [vmem:[%s259 + $0x728] sm:$0xff]
      %v535 = vld [vmem:[%s259 + $0x730] sm:$0xff]
      %v536 = vld [vmem:[%s259 + $0x738] sm:$0xff]
      %v537 = vld [vmem:[%s259 + $0x740] sm:$0xff]
      %v538 = vld [vmem:[%s259 + $0x748] sm:$0xff]
      %v539 = vld [vmem:[%s259 + $0x750] sm:$0xff]
      %v540 = vld [vmem:[%s259 + $0x758] sm:$0xff]
      %v541 = vld [vmem:[%s259 + $0x760] sm:$0xff]
      %v542 = vld [vmem:[%s259 + $0x768] sm:$0xff]
      %v543 = vld [vmem:[%s259 + $0x770] sm:$0xff]
      %v544 = vld [vmem:[%s259 + $0x778] sm:$0xff]
      %v545 = vld [vmem:[%s259 + $0x780] sm:$0xff]
      %v546 = vld [vmem:[%s259 + $0x788] sm:$0xff]
      %v547 = vld [vmem:[%s259 + $0x790] sm:$0xff]
      %v548 = vld [vmem:[%s259 + $0x798] sm:$0xff]
      %v549 = vld [vmem:[%s259 + $0x7a0] sm:$0xff]
      %v550 = vld [vmem:[%s259 + $0x7a8] sm:$0xff]
      %v551 = vld [vmem:[%s259 + $0x7b0] sm:$0xff]
      %v552 = vld [vmem:[%s259 + $0x7b8] sm:$0xff]
      %v553 = vld [vmem:[%s259 + $0x7c0] sm:$0xff]
      %v554 = vld [vmem:[%s259 + $0x7c8] sm:$0xff]
      %v555 = vld [vmem:[%s259 + $0x7d0] sm:$0xff]
      %v556 = vld [vmem:[%s259 + $0x7d8] sm:$0xff]
      %v557 = vld [vmem:[%s259 + $0x7e0] sm:$0xff]
      %v558 = vld [vmem:[%s259 + $0x7e8] sm:$0xff]
      %v559 = vld [vmem:[%s259 + $0x7f0] sm:$0xff]
      %v560 = vld [vmem:[%s259 + $0x7f8] sm:$0xff]
      %v577 = vunpack.c.l.b16 %v289
      %v578 = vunpack.c.h.b16 %v289
      %v579 = vunpack.c.l.b16 %v290
      %v580 = vunpack.c.h.b16 %v290
      %v581 = vunpack.c.l.b16 %v291
      %v582 = vunpack.c.h.b16 %v291
      %v583 = vunpack.c.l.b16 %v292
      %v584 = vunpack.c.h.b16 %v292
      %v585 = vunpack.c.l.b16 %v293
      %v586 = vunpack.c.h.b16 %v293
      %v587 = vunpack.c.l.b16 %v294
      %v588 = vunpack.c.h.b16 %v294
      %v589 = vunpack.c.l.b16 %v295
      %v590 = vunpack.c.h.b16 %v295
      %v591 = vunpack.c.l.b16 %v296
      %v592 = vunpack.c.h.b16 %v296
      %v593 = vunpack.c.l.b16 %v297
      %v594 = vunpack.c.h.b16 %v297
      %v595 = vunpack.c.l.b16 %v298
      %v596 = vunpack.c.h.b16 %v298
      %v597 = vunpack.c.l.b16 %v299
      %v598 = vunpack.c.h.b16 %v299
      %v599 = vunpack.c.l.b16 %v300
      %v600 = vunpack.c.h.b16 %v300
      %v601 = vunpack.c.l.b16 %v301
      %v602 = vunpack.c.h.b16 %v301
      %v603 = vunpack.c.l.b16 %v302
      %v604 = vunpack.c.h.b16 %v302
      %v605 = vunpack.c.l.b16 %v303
      %v606 = vunpack.c.h.b16 %v303
      %v607 = vunpack.c.l.b16 %v304
      %v608 = vunpack.c.h.b16 %v304
      %v609 = vpack.c.b16 %v593, %v577
      %v610 = vpack.c.b16 %v594, %v578
      %v611 = vpack.c.b16 %v595, %v579
      %v612 = vpack.c.b16 %v596, %v580
      %v613 = vpack.c.b16 %v597, %v581
      %v614 = vpack.c.b16 %v598, %v582
      %v615 = vpack.c.b16 %v599, %v583
      %v616 = vpack.c.b16 %v600, %v584
      %v617 = vpack.c.b16 %v601, %v585
      %v618 = vpack.c.b16 %v602, %v586
      %v619 = vpack.c.b16 %v603, %v587
      %v620 = vpack.c.b16 %v604, %v588
      %v621 = vpack.c.b16 %v605, %v589
      %v622 = vpack.c.b16 %v606, %v590
      %v623 = vpack.c.b16 %v607, %v591
      %v624 = vpack.c.b16 %v608, %v592
      %v897 = vunpack.c.l.b16 %v305
      %v898 = vunpack.c.h.b16 %v305
      %v899 = vunpack.c.l.b16 %v306
      %v900 = vunpack.c.h.b16 %v306
      %v901 = vunpack.c.l.b16 %v307
      %v902 = vunpack.c.h.b16 %v307
      %v903 = vunpack.c.l.b16 %v308
      %v904 = vunpack.c.h.b16 %v308
      %v905 = vunpack.c.l.b16 %v309
      %v906 = vunpack.c.h.b16 %v309
      %v907 = vunpack.c.l.b16 %v310
      %v908 = vunpack.c.h.b16 %v310
      %v909 = vunpack.c.l.b16 %v311
      %v910 = vunpack.c.h.b16 %v311
      %v911 = vunpack.c.l.b16 %v312
      %v912 = vunpack.c.h.b16 %v312
      %v913 = vunpack.c.l.b16 %v313
      %v914 = vunpack.c.h.b16 %v313
      %v915 = vunpack.c.l.b16 %v314
      %v916 = vunpack.c.h.b16 %v314
      %v917 = vunpack.c.l.b16 %v315
      %v918 = vunpack.c.h.b16 %v315
      %v919 = vunpack.c.l.b16 %v316
      %v920 = vunpack.c.h.b16 %v316
      %v921 = vunpack.c.l.b16 %v317
      %v922 = vunpack.c.h.b16 %v317
      %v923 = vunpack.c.l.b16 %v318
      %v924 = vunpack.c.h.b16 %v318
      %v925 = vunpack.c.l.b16 %v319
      %v926 = vunpack.c.h.b16 %v319
      %v927 = vunpack.c.l.b16 %v320
      %v928 = vunpack.c.h.b16 %v320
      %v929 = vunpack.c.l.b16 %v321
      %v930 = vunpack.c.h.b16 %v321
      %v931 = vunpack.c.l.b16 %v322
      %v932 = vunpack.c.h.b16 %v322
      %v933 = vunpack.c.l.b16 %v323
      %v934 = vunpack.c.h.b16 %v323
      %v935 = vunpack.c.l.b16 %v324
      %v936 = vunpack.c.h.b16 %v324
      %v937 = vunpack.c.l.b16 %v325
      %v938 = vunpack.c.h.b16 %v325
      %v939 = vunpack.c.l.b16 %v326
      %v940 = vunpack.c.h.b16 %v326
      %v941 = vunpack.c.l.b16 %v327
      %v942 = vunpack.c.h.b16 %v327
      %v943 = vunpack.c.l.b16 %v328
      %v944 = vunpack.c.h.b16 %v328
      %v945 = vunpack.c.l.b16 %v329
      %v946 = vunpack.c.h.b16 %v329
      %v947 = vunpack.c.l.b16 %v330
      %v948 = vunpack.c.h.b16 %v330
      %v949 = vunpack.c.l.b16 %v331
      %v950 = vunpack.c.h.b16 %v331
      %v951 = vunpack.c.l.b16 %v332
      %v952 = vunpack.c.h.b16 %v332
      %v953 = vunpack.c.l.b16 %v333
      %v954 = vunpack.c.h.b16 %v333
      %v955 = vunpack.c.l.b16 %v334
      %v956 = vunpack.c.h.b16 %v334
      %v957 = vunpack.c.l.b16 %v335
      %v958 = vunpack.c.h.b16 %v335
      %v959 = vunpack.c.l.b16 %v336
      %v960 = vunpack.c.h.b16 %v336
      %v961 = vunpack.c.l.b16 %v337
      %v962 = vunpack.c.h.b16 %v337
      %v963 = vunpack.c.l.b16 %v338
      %v964 = vunpack.c.h.b16 %v338
      %v965 = vunpack.c.l.b16 %v339
      %v966 = vunpack.c.h.b16 %v339
      %v967 = vunpack.c.l.b16 %v340
      %v968 = vunpack.c.h.b16 %v340
      %v969 = vunpack.c.l.b16 %v341
      %v970 = vunpack.c.h.b16 %v341
      %v971 = vunpack.c.l.b16 %v342
      %v972 = vunpack.c.h.b16 %v342
      %v973 = vunpack.c.l.b16 %v343
      %v974 = vunpack.c.h.b16 %v343
      %v975 = vunpack.c.l.b16 %v344
      %v976 = vunpack.c.h.b16 %v344
      %v977 = vunpack.c.l.b16 %v345
      %v978 = vunpack.c.h.b16 %v345
      %v979 = vunpack.c.l.b16 %v346
      %v980 = vunpack.c.h.b16 %v346
      %v981 = vunpack.c.l.b16 %v347
      %v982 = vunpack.c.h.b16 %v347
      %v983 = vunpack.c.l.b16 %v348
      %v984 = vunpack.c.h.b16 %v348
      %v985 = vunpack.c.l.b16 %v349
      %v986 = vunpack.c.h.b16 %v349
      %v987 = vunpack.c.l.b16 %v350
      %v988 = vunpack.c.h.b16 %v350
      %v989 = vunpack.c.l.b16 %v351
      %v990 = vunpack.c.h.b16 %v351
      %v991 = vunpack.c.l.b16 %v352
      %v992 = vunpack.c.h.b16 %v352
      %v993 = vunpack.c.l.b16 %v353
      %v994 = vunpack.c.h.b16 %v353
      %v995 = vunpack.c.l.b16 %v354
      %v996 = vunpack.c.h.b16 %v354
      %v997 = vunpack.c.l.b16 %v355
      %v998 = vunpack.c.h.b16 %v355
      %v999 = vunpack.c.l.b16 %v356
      %v1000 = vunpack.c.h.b16 %v356
      %v1001 = vunpack.c.l.b16 %v357
      %v1002 = vunpack.c.h.b16 %v357
      %v1003 = vunpack.c.l.b16 %v358
      %v1004 = vunpack.c.h.b16 %v358
      %v1005 = vunpack.c.l.b16 %v359
      %v1006 = vunpack.c.h.b16 %v359
      %v1007 = vunpack.c.l.b16 %v360
      %v1008 = vunpack.c.h.b16 %v360
      %v1009 = vunpack.c.l.b16 %v361
      %v1010 = vunpack.c.h.b16 %v361
      %v1011 = vunpack.c.l.b16 %v362
      %v1012 = vunpack.c.h.b16 %v362
      %v1013 = vunpack.c.l.b16 %v363
      %v1014 = vunpack.c.h.b16 %v363
      %v1015 = vunpack.c.l.b16 %v364
      %v1016 = vunpack.c.h.b16 %v364
      %v1017 = vunpack.c.l.b16 %v365
      %v1018 = vunpack.c.h.b16 %v365
      %v1019 = vunpack.c.l.b16 %v366
      %v1020 = vunpack.c.h.b16 %v366
      %v1021 = vunpack.c.l.b16 %v367
      %v1022 = vunpack.c.h.b16 %v367
      %v1023 = vunpack.c.l.b16 %v368
      %v1024 = vunpack.c.h.b16 %v368
      %v1025 = vunpack.c.l.b16 %v369
      %v1026 = vunpack.c.h.b16 %v369
      %v1027 = vunpack.c.l.b16 %v370
      %v1028 = vunpack.c.h.b16 %v370
      %v1029 = vunpack.c.l.b16 %v371
      %v1030 = vunpack.c.h.b16 %v371
      %v1031 = vunpack.c.l.b16 %v372
      %v1032 = vunpack.c.h.b16 %v372
      %v1033 = vunpack.c.l.b16 %v373
      %v1034 = vunpack.c.h.b16 %v373
      %v1035 = vunpack.c.l.b16 %v374
      %v1036 = vunpack.c.h.b16 %v374
      %v1037 = vunpack.c.l.b16 %v375
      %v1038 = vunpack.c.h.b16 %v375
      %v1039 = vunpack.c.l.b16 %v376
      %v1040 = vunpack.c.h.b16 %v376
      %v1041 = vunpack.c.l.b16 %v377
      %v1042 = vunpack.c.h.b16 %v377
      %v1043 = vunpack.c.l.b16 %v378
      %v1044 = vunpack.c.h.b16 %v378
      %v1045 = vunpack.c.l.b16 %v379
      %v1046 = vunpack.c.h.b16 %v379
      %v1047 = vunpack.c.l.b16 %v380
      %v1048 = vunpack.c.h.b16 %v380
      %v1049 = vunpack.c.l.b16 %v381
      %v1050 = vunpack.c.h.b16 %v381
      %v1051 = vunpack.c.l.b16 %v382
      %v1052 = vunpack.c.h.b16 %v382
      %v1053 = vunpack.c.l.b16 %v383
      %v1054 = vunpack.c.h.b16 %v383
      %v1055 = vunpack.c.l.b16 %v384
      %v1056 = vunpack.c.h.b16 %v384
      %v1057 = vunpack.c.l.b16 %v385
      %v1058 = vunpack.c.h.b16 %v385
      %v1059 = vunpack.c.l.b16 %v386
      %v1060 = vunpack.c.h.b16 %v386
      %v1061 = vunpack.c.l.b16 %v387
      %v1062 = vunpack.c.h.b16 %v387
      %v1063 = vunpack.c.l.b16 %v388
      %v1064 = vunpack.c.h.b16 %v388
      %v1065 = vunpack.c.l.b16 %v389
      %v1066 = vunpack.c.h.b16 %v389
      %v1067 = vunpack.c.l.b16 %v390
      %v1068 = vunpack.c.h.b16 %v390
      %v1069 = vunpack.c.l.b16 %v391
      %v1070 = vunpack.c.h.b16 %v391
      %v1071 = vunpack.c.l.b16 %v392
      %v1072 = vunpack.c.h.b16 %v392
      %v1073 = vunpack.c.l.b16 %v393
      %v1074 = vunpack.c.h.b16 %v393
      %v1075 = vunpack.c.l.b16 %v394
      %v1076 = vunpack.c.h.b16 %v394
      %v1077 = vunpack.c.l.b16 %v395
      %v1078 = vunpack.c.h.b16 %v395
      %v1079 = vunpack.c.l.b16 %v396
      %v1080 = vunpack.c.h.b16 %v396
      %v1081 = vunpack.c.l.b16 %v397
      %v1082 = vunpack.c.h.b16 %v397
      %v1083 = vunpack.c.l.b16 %v398
      %v1084 = vunpack.c.h.b16 %v398
      %v1085 = vunpack.c.l.b16 %v399
      %v1086 = vunpack.c.h.b16 %v399
      %v1087 = vunpack.c.l.b16 %v400
      %v1088 = vunpack.c.h.b16 %v400
      %v1089 = vunpack.c.l.b16 %v401
      %v1090 = vunpack.c.h.b16 %v401
      %v1091 = vunpack.c.l.b16 %v402
      %v1092 = vunpack.c.h.b16 %v402
      %v1093 = vunpack.c.l.b16 %v403
      %v1094 = vunpack.c.h.b16 %v403
      %v1095 = vunpack.c.l.b16 %v404
      %v1096 = vunpack.c.h.b16 %v404
      %v1097 = vunpack.c.l.b16 %v405
      %v1098 = vunpack.c.h.b16 %v405
      %v1099 = vunpack.c.l.b16 %v406
      %v1100 = vunpack.c.h.b16 %v406
      %v1101 = vunpack.c.l.b16 %v407
      %v1102 = vunpack.c.h.b16 %v407
      %v1103 = vunpack.c.l.b16 %v408
      %v1104 = vunpack.c.h.b16 %v408
      %v1105 = vunpack.c.l.b16 %v409
      %v1106 = vunpack.c.h.b16 %v409
      %v1107 = vunpack.c.l.b16 %v410
      %v1108 = vunpack.c.h.b16 %v410
      %v1109 = vunpack.c.l.b16 %v411
      %v1110 = vunpack.c.h.b16 %v411
      %v1111 = vunpack.c.l.b16 %v412
      %v1112 = vunpack.c.h.b16 %v412
      %v1113 = vunpack.c.l.b16 %v413
      %v1114 = vunpack.c.h.b16 %v413
      %v1115 = vunpack.c.l.b16 %v414
      %v1116 = vunpack.c.h.b16 %v414
      %v1117 = vunpack.c.l.b16 %v415
      %v1118 = vunpack.c.h.b16 %v415
      %v1119 = vunpack.c.l.b16 %v416
      %v1120 = vunpack.c.h.b16 %v416
      %v1121 = vunpack.c.l.b16 %v417
      %v1122 = vunpack.c.h.b16 %v417
      %v1123 = vunpack.c.l.b16 %v418
      %v1124 = vunpack.c.h.b16 %v418
      %v1125 = vunpack.c.l.b16 %v419
      %v1126 = vunpack.c.h.b16 %v419
      %v1127 = vunpack.c.l.b16 %v420
      %v1128 = vunpack.c.h.b16 %v420
      %v1129 = vunpack.c.l.b16 %v421
      %v1130 = vunpack.c.h.b16 %v421
      %v1131 = vunpack.c.l.b16 %v422
      %v1132 = vunpack.c.h.b16 %v422
      %v1133 = vunpack.c.l.b16 %v423
      %v1134 = vunpack.c.h.b16 %v423
      %v1135 = vunpack.c.l.b16 %v424
      %v1136 = vunpack.c.h.b16 %v424
      %v1137 = vunpack.c.l.b16 %v425
      %v1138 = vunpack.c.h.b16 %v425
      %v1139 = vunpack.c.l.b16 %v426
      %v1140 = vunpack.c.h.b16 %v426
      %v1141 = vunpack.c.l.b16 %v427
      %v1142 = vunpack.c.h.b16 %v427
      %v1143 = vunpack.c.l.b16 %v428
      %v1144 = vunpack.c.h.b16 %v428
      %v1145 = vunpack.c.l.b16 %v429
      %v1146 = vunpack.c.h.b16 %v429
      %v1147 = vunpack.c.l.b16 %v430
      %v1148 = vunpack.c.h.b16 %v430
      %v1149 = vunpack.c.l.b16 %v431
      %v1150 = vunpack.c.h.b16 %v431
      %v1151 = vunpack.c.l.b16 %v432
      %v1152 = vunpack.c.h.b16 %v432
      %v1153 = vunpack.c.l.b16 %v433
      %v1154 = vunpack.c.h.b16 %v433
      %v1155 = vunpack.c.l.b16 %v434
      %v1156 = vunpack.c.h.b16 %v434
      %v1157 = vunpack.c.l.b16 %v435
      %v1158 = vunpack.c.h.b16 %v435
      %v1159 = vunpack.c.l.b16 %v436
      %v1160 = vunpack.c.h.b16 %v436
      %v1161 = vunpack.c.l.b16 %v437
      %v1162 = vunpack.c.h.b16 %v437
      %v1163 = vunpack.c.l.b16 %v438
      %v1164 = vunpack.c.h.b16 %v438
      %v1165 = vunpack.c.l.b16 %v439
      %v1166 = vunpack.c.h.b16 %v439
      %v1167 = vunpack.c.l.b16 %v440
      %v1168 = vunpack.c.h.b16 %v440
      %v1169 = vunpack.c.l.b16 %v441
      %v1170 = vunpack.c.h.b16 %v441
      %v1171 = vunpack.c.l.b16 %v442
      %v1172 = vunpack.c.h.b16 %v442
      %v1173 = vunpack.c.l.b16 %v443
      %v1174 = vunpack.c.h.b16 %v443
      %v1175 = vunpack.c.l.b16 %v444
      %v1176 = vunpack.c.h.b16 %v444
      %v1177 = vunpack.c.l.b16 %v445
      %v1178 = vunpack.c.h.b16 %v445
      %v1179 = vunpack.c.l.b16 %v446
      %v1180 = vunpack.c.h.b16 %v446
      %v1181 = vunpack.c.l.b16 %v447
      %v1182 = vunpack.c.h.b16 %v447
      %v1183 = vunpack.c.l.b16 %v448
      %v1184 = vunpack.c.h.b16 %v448
      %v1185 = vunpack.c.l.b16 %v449
      %v1186 = vunpack.c.h.b16 %v449
      %v1187 = vunpack.c.l.b16 %v450
      %v1188 = vunpack.c.h.b16 %v450
      %v1189 = vunpack.c.l.b16 %v451
      %v1190 = vunpack.c.h.b16 %v451
      %v1191 = vunpack.c.l.b16 %v452
      %v1192 = vunpack.c.h.b16 %v452
      %v1193 = vunpack.c.l.b16 %v453
      %v1194 = vunpack.c.h.b16 %v453
      %v1195 = vunpack.c.l.b16 %v454
      %v1196 = vunpack.c.h.b16 %v454
      %v1197 = vunpack.c.l.b16 %v455
      %v1198 = vunpack.c.h.b16 %v455
      %v1199 = vunpack.c.l.b16 %v456
      %v1200 = vunpack.c.h.b16 %v456
      %v1201 = vunpack.c.l.b16 %v457
      %v1202 = vunpack.c.h.b16 %v457
      %v1203 = vunpack.c.l.b16 %v458
      %v1204 = vunpack.c.h.b16 %v458
      %v1205 = vunpack.c.l.b16 %v459
      %v1206 = vunpack.c.h.b16 %v459
      %v1207 = vunpack.c.l.b16 %v460
      %v1208 = vunpack.c.h.b16 %v460
      %v1209 = vunpack.c.l.b16 %v461
      %v1210 = vunpack.c.h.b16 %v461
      %v1211 = vunpack.c.l.b16 %v462
      %v1212 = vunpack.c.h.b16 %v462
      %v1213 = vunpack.c.l.b16 %v463
      %v1214 = vunpack.c.h.b16 %v463
      %v1215 = vunpack.c.l.b16 %v464
      %v1216 = vunpack.c.h.b16 %v464
      %v1217 = vunpack.c.l.b16 %v465
      %v1218 = vunpack.c.h.b16 %v465
      %v1219 = vunpack.c.l.b16 %v466
      %v1220 = vunpack.c.h.b16 %v466
      %v1221 = vunpack.c.l.b16 %v467
      %v1222 = vunpack.c.h.b16 %v467
      %v1223 = vunpack.c.l.b16 %v468
      %v1224 = vunpack.c.h.b16 %v468
      %v1225 = vunpack.c.l.b16 %v469
      %v1226 = vunpack.c.h.b16 %v469
      %v1227 = vunpack.c.l.b16 %v470
      %v1228 = vunpack.c.h.b16 %v470
      %v1229 = vunpack.c.l.b16 %v471
      %v1230 = vunpack.c.h.b16 %v471
      %v1231 = vunpack.c.l.b16 %v472
      %v1232 = vunpack.c.h.b16 %v472
      %v1233 = vunpack.c.l.b16 %v473
      %v1234 = vunpack.c.h.b16 %v473
      %v1235 = vunpack.c.l.b16 %v474
      %v1236 = vunpack.c.h.b16 %v474
      %v1237 = vunpack.c.l.b16 %v475
      %v1238 = vunpack.c.h.b16 %v475
      %v1239 = vunpack.c.l.b16 %v476
      %v1240 = vunpack.c.h.b16 %v476
      %v1241 = vunpack.c.l.b16 %v477
      %v1242 = vunpack.c.h.b16 %v477
      %v1243 = vunpack.c.l.b16 %v478
      %v1244 = vunpack.c.h.b16 %v478
      %v1245 = vunpack.c.l.b16 %v479
      %v1246 = vunpack.c.h.b16 %v479
      %v1247 = vunpack.c.l.b16 %v480
      %v1248 = vunpack.c.h.b16 %v480
      %v1249 = vunpack.c.l.b16 %v481
      %v1250 = vunpack.c.h.b16 %v481
      %v1251 = vunpack.c.l.b16 %v482
      %v1252 = vunpack.c.h.b16 %v482
      %v1253 = vunpack.c.l.b16 %v483
      %v1254 = vunpack.c.h.b16 %v483
      %v1255 = vunpack.c.l.b16 %v484
      %v1256 = vunpack.c.h.b16 %v484
      %v1257 = vunpack.c.l.b16 %v485
      %v1258 = vunpack.c.h.b16 %v485
      %v1259 = vunpack.c.l.b16 %v486
      %v1260 = vunpack.c.h.b16 %v486
      %v1261 = vunpack.c.l.b16 %v487
      %v1262 = vunpack.c.h.b16 %v487
      %v1263 = vunpack.c.l.b16 %v488
      %v1264 = vunpack.c.h.b16 %v488
      %v1265 = vunpack.c.l.b16 %v489
      %v1266 = vunpack.c.h.b16 %v489
      %v1267 = vunpack.c.l.b16 %v490
      %v1268 = vunpack.c.h.b16 %v490
      %v1269 = vunpack.c.l.b16 %v491
      %v1270 = vunpack.c.h.b16 %v491
      %v1271 = vunpack.c.l.b16 %v492
      %v1272 = vunpack.c.h.b16 %v492
      %v1273 = vunpack.c.l.b16 %v493
      %v1274 = vunpack.c.h.b16 %v493
      %v1275 = vunpack.c.l.b16 %v494
      %v1276 = vunpack.c.h.b16 %v494
      %v1277 = vunpack.c.l.b16 %v495
      %v1278 = vunpack.c.h.b16 %v495
      %v1279 = vunpack.c.l.b16 %v496
      %v1280 = vunpack.c.h.b16 %v496
      %v1281 = vunpack.c.l.b16 %v497
      %v1282 = vunpack.c.h.b16 %v497
      %v1283 = vunpack.c.l.b16 %v498
      %v1284 = vunpack.c.h.b16 %v498
      %v1285 = vunpack.c.l.b16 %v499
      %v1286 = vunpack.c.h.b16 %v499
      %v1287 = vunpack.c.l.b16 %v500
      %v1288 = vunpack.c.h.b16 %v500
      %v1289 = vunpack.c.l.b16 %v501
      %v1290 = vunpack.c.h.b16 %v501
      %v1291 = vunpack.c.l.b16 %v502
      %v1292 = vunpack.c.h.b16 %v502
      %v1293 = vunpack.c.l.b16 %v503
      %v1294 = vunpack.c.h.b16 %v503
      %v1295 = vunpack.c.l.b16 %v504
      %v1296 = vunpack.c.h.b16 %v504
      %v1297 = vunpack.c.l.b16 %v505
      %v1298 = vunpack.c.h.b16 %v505
      %v1299 = vunpack.c.l.b16 %v506
      %v1300 = vunpack.c.h.b16 %v506
      %v1301 = vunpack.c.l.b16 %v507
      %v1302 = vunpack.c.h.b16 %v507
      %v1303 = vunpack.c.l.b16 %v508
      %v1304 = vunpack.c.h.b16 %v508
      %v1305 = vunpack.c.l.b16 %v509
      %v1306 = vunpack.c.h.b16 %v509
      %v1307 = vunpack.c.l.b16 %v510
      %v1308 = vunpack.c.h.b16 %v510
      %v1309 = vunpack.c.l.b16 %v511
      %v1310 = vunpack.c.h.b16 %v511
      %v1311 = vunpack.c.l.b16 %v512
      %v1312 = vunpack.c.h.b16 %v512
      %v1313 = vunpack.c.l.b16 %v513
      %v1314 = vunpack.c.h.b16 %v513
      %v1315 = vunpack.c.l.b16 %v514
      %v1316 = vunpack.c.h.b16 %v514
      %v1317 = vunpack.c.l.b16 %v515
      %v1318 = vunpack.c.h.b16 %v515
      %v1319 = vunpack.c.l.b16 %v516
      %v1320 = vunpack.c.h.b16 %v516
      %v1321 = vunpack.c.l.b16 %v517
      %v1322 = vunpack.c.h.b16 %v517
      %v1323 = vunpack.c.l.b16 %v518
      %v1324 = vunpack.c.h.b16 %v518
      %v1325 = vunpack.c.l.b16 %v519
      %v1326 = vunpack.c.h.b16 %v519
      %v1327 = vunpack.c.l.b16 %v520
      %v1328 = vunpack.c.h.b16 %v520
      %v1329 = vunpack.c.l.b16 %v521
      %v1330 = vunpack.c.h.b16 %v521
      %v1331 = vunpack.c.l.b16 %v522
      %v1332 = vunpack.c.h.b16 %v522
      %v1333 = vunpack.c.l.b16 %v523
      %v1334 = vunpack.c.h.b16 %v523
      %v1335 = vunpack.c.l.b16 %v524
      %v1336 = vunpack.c.h.b16 %v524
      %v1337 = vunpack.c.l.b16 %v525
      %v1338 = vunpack.c.h.b16 %v525
      %v1339 = vunpack.c.l.b16 %v526
      %v1340 = vunpack.c.h.b16 %v526
      %v1341 = vunpack.c.l.b16 %v527
      %v1342 = vunpack.c.h.b16 %v527
      %v1343 = vunpack.c.l.b16 %v528
      %v1344 = vunpack.c.h.b16 %v528
      %v1345 = vunpack.c.l.b16 %v529
      %v1346 = vunpack.c.h.b16 %v529
      %v1347 = vunpack.c.l.b16 %v530
      %v1348 = vunpack.c.h.b16 %v530
      %v1349 = vunpack.c.l.b16 %v531
      %v1350 = vunpack.c.h.b16 %v531
      %v1351 = vunpack.c.l.b16 %v532
      %v1352 = vunpack.c.h.b16 %v532
      %v1353 = vunpack.c.l.b16 %v533
      %v1354 = vunpack.c.h.b16 %v533
      %v1355 = vunpack.c.l.b16 %v534
      %v1356 = vunpack.c.h.b16 %v534
      %v1357 = vunpack.c.l.b16 %v535
      %v1358 = vunpack.c.h.b16 %v535
      %v1359 = vunpack.c.l.b16 %v536
      %v1360 = vunpack.c.h.b16 %v536
      %v1361 = vunpack.c.l.b16 %v537
      %v1362 = vunpack.c.h.b16 %v537
      %v1363 = vunpack.c.l.b16 %v538
      %v1364 = vunpack.c.h.b16 %v538
      %v1365 = vunpack.c.l.b16 %v539
      %v1366 = vunpack.c.h.b16 %v539
      %v1367 = vunpack.c.l.b16 %v540
      %v1368 = vunpack.c.h.b16 %v540
      %v1369 = vunpack.c.l.b16 %v541
      %v1370 = vunpack.c.h.b16 %v541
      %v1371 = vunpack.c.l.b16 %v542
      %v1372 = vunpack.c.h.b16 %v542
      %v1373 = vunpack.c.l.b16 %v543
      %v1374 = vunpack.c.h.b16 %v543
      %v1375 = vunpack.c.l.b16 %v544
      %v1376 = vunpack.c.h.b16 %v544
      %v1377 = vunpack.c.l.b16 %v545
      %v1378 = vunpack.c.h.b16 %v545
      %v1379 = vunpack.c.l.b16 %v546
      %v1380 = vunpack.c.h.b16 %v546
      %v1381 = vunpack.c.l.b16 %v547
      %v1382 = vunpack.c.h.b16 %v547
      %v1383 = vunpack.c.l.b16 %v548
      %v1384 = vunpack.c.h.b16 %v548
      %v1385 = vunpack.c.l.b16 %v549
      %v1386 = vunpack.c.h.b16 %v549
      %v1387 = vunpack.c.l.b16 %v550
      %v1388 = vunpack.c.h.b16 %v550
      %v1389 = vunpack.c.l.b16 %v551
      %v1390 = vunpack.c.h.b16 %v551
      %v1391 = vunpack.c.l.b16 %v552
      %v1392 = vunpack.c.h.b16 %v552
      %v1393 = vunpack.c.l.b16 %v553
      %v1394 = vunpack.c.h.b16 %v553
      %v1395 = vunpack.c.l.b16 %v554
      %v1396 = vunpack.c.h.b16 %v554
      %v1397 = vunpack.c.l.b16 %v555
      %v1398 = vunpack.c.h.b16 %v555
      %v1399 = vunpack.c.l.b16 %v556
      %v1400 = vunpack.c.h.b16 %v556
      %v1401 = vunpack.c.l.b16 %v557
      %v1402 = vunpack.c.h.b16 %v557
      %v1403 = vunpack.c.l.b16 %v558
      %v1404 = vunpack.c.h.b16 %v558
      %v1405 = vunpack.c.l.b16 %v559
      %v1406 = vunpack.c.h.b16 %v559
      %v1407 = vunpack.c.l.b16 %v560
      %v1408 = vunpack.c.h.b16 %v560
      %v1409 = vpack.c.b16 %v899, %v897
      %v1410 = vpack.c.b16 %v900, %v898
      %v1411 = vpack.c.b16 %v903, %v901
      %v1412 = vpack.c.b16 %v904, %v902
      %v1413 = vpack.c.b16 %v907, %v905
      %v1414 = vpack.c.b16 %v908, %v906
      %v1415 = vpack.c.b16 %v911, %v909
      %v1416 = vpack.c.b16 %v912, %v910
      %v1417 = vpack.c.b16 %v915, %v913
      %v1418 = vpack.c.b16 %v916, %v914
      %v1419 = vpack.c.b16 %v919, %v917
      %v1420 = vpack.c.b16 %v920, %v918
      %v1421 = vpack.c.b16 %v923, %v921
      %v1422 = vpack.c.b16 %v924, %v922
      %v1423 = vpack.c.b16 %v927, %v925
      %v1424 = vpack.c.b16 %v928, %v926
      %v1425 = vpack.c.b16 %v931, %v929
      %v1426 = vpack.c.b16 %v932, %v930
      %v1427 = vpack.c.b16 %v935, %v933
      %v1428 = vpack.c.b16 %v936, %v934
      %v1429 = vpack.c.b16 %v939, %v937
      %v1430 = vpack.c.b16 %v940, %v938
      %v1431 = vpack.c.b16 %v943, %v941
      %v1432 = vpack.c.b16 %v944, %v942
      %v1433 = vpack.c.b16 %v947, %v945
      %v1434 = vpack.c.b16 %v948, %v946
      %v1435 = vpack.c.b16 %v951, %v949
      %v1436 = vpack.c.b16 %v952, %v950
      %v1437 = vpack.c.b16 %v955, %v953
      %v1438 = vpack.c.b16 %v956, %v954
      %v1439 = vpack.c.b16 %v959, %v957
      %v1440 = vpack.c.b16 %v960, %v958
      %v1441 = vpack.c.b16 %v963, %v961
      %v1442 = vpack.c.b16 %v964, %v962
      %v1443 = vpack.c.b16 %v967, %v965
      %v1444 = vpack.c.b16 %v968, %v966
      %v1445 = vpack.c.b16 %v971, %v969
      %v1446 = vpack.c.b16 %v972, %v970
      %v1447 = vpack.c.b16 %v975, %v973
      %v1448 = vpack.c.b16 %v976, %v974
      %v1449 = vpack.c.b16 %v979, %v977
      %v1450 = vpack.c.b16 %v980, %v978
      %v1451 = vpack.c.b16 %v983, %v981
      %v1452 = vpack.c.b16 %v984, %v982
      %v1453 = vpack.c.b16 %v987, %v985
      %v1454 = vpack.c.b16 %v988, %v986
      %v1455 = vpack.c.b16 %v991, %v989
      %v1456 = vpack.c.b16 %v992, %v990
      %v1457 = vpack.c.b16 %v995, %v993
      %v1458 = vpack.c.b16 %v996, %v994
      %v1459 = vpack.c.b16 %v999, %v997
      %v1460 = vpack.c.b16 %v1000, %v998
      %v1461 = vpack.c.b16 %v1003, %v1001
      %v1462 = vpack.c.b16 %v1004, %v1002
      %v1463 = vpack.c.b16 %v1007, %v1005
      %v1464 = vpack.c.b16 %v1008, %v1006
      %v1465 = vpack.c.b16 %v1011, %v1009
      %v1466 = vpack.c.b16 %v1012, %v1010
      %v1467 = vpack.c.b16 %v1015, %v1013
      %v1468 = vpack.c.b16 %v1016, %v1014
      %v1469 = vpack.c.b16 %v1019, %v1017
      %v1470 = vpack.c.b16 %v1020, %v1018
      %v1471 = vpack.c.b16 %v1023, %v1021
      %v1472 = vpack.c.b16 %v1024, %v1022
      %v1473 = vpack.c.b16 %v1027, %v1025
      %v1474 = vpack.c.b16 %v1028, %v1026
      %v1475 = vpack.c.b16 %v1031, %v1029
      %v1476 = vpack.c.b16 %v1032, %v1030
      %v1477 = vpack.c.b16 %v1035, %v1033
      %v1478 = vpack.c.b16 %v1036, %v1034
      %v1479 = vpack.c.b16 %v1039, %v1037
      %v1480 = vpack.c.b16 %v1040, %v1038
      %v1481 = vpack.c.b16 %v1043, %v1041
      %v1482 = vpack.c.b16 %v1044, %v1042
      %v1483 = vpack.c.b16 %v1047, %v1045
      %v1484 = vpack.c.b16 %v1048, %v1046
      %v1485 = vpack.c.b16 %v1051, %v1049
      %v1486 = vpack.c.b16 %v1052, %v1050
      %v1487 = vpack.c.b16 %v1055, %v1053
      %v1488 = vpack.c.b16 %v1056, %v1054
      %v1489 = vpack.c.b16 %v1059, %v1057
      %v1490 = vpack.c.b16 %v1060, %v1058
      %v1491 = vpack.c.b16 %v1063, %v1061
      %v1492 = vpack.c.b16 %v1064, %v1062
      %v1493 = vpack.c.b16 %v1067, %v1065
      %v1494 = vpack.c.b16 %v1068, %v1066
      %v1495 = vpack.c.b16 %v1071, %v1069
      %v1496 = vpack.c.b16 %v1072, %v1070
      %v1497 = vpack.c.b16 %v1075, %v1073
      %v1498 = vpack.c.b16 %v1076, %v1074
      %v1499 = vpack.c.b16 %v1079, %v1077
      %v1500 = vpack.c.b16 %v1080, %v1078
      %v1501 = vpack.c.b16 %v1083, %v1081
      %v1502 = vpack.c.b16 %v1084, %v1082
      %v1503 = vpack.c.b16 %v1087, %v1085
      %v1504 = vpack.c.b16 %v1088, %v1086
      %v1505 = vpack.c.b16 %v1091, %v1089
      %v1506 = vpack.c.b16 %v1092, %v1090
      %v1507 = vpack.c.b16 %v1095, %v1093
      %v1508 = vpack.c.b16 %v1096, %v1094
      %v1509 = vpack.c.b16 %v1099, %v1097
      %v1510 = vpack.c.b16 %v1100, %v1098
      %v1511 = vpack.c.b16 %v1103, %v1101
      %v1512 = vpack.c.b16 %v1104, %v1102
      %v1513 = vpack.c.b16 %v1107, %v1105
      %v1514 = vpack.c.b16 %v1108, %v1106
      %v1515 = vpack.c.b16 %v1111, %v1109
      %v1516 = vpack.c.b16 %v1112, %v1110
      %v1517 = vpack.c.b16 %v1115, %v1113
      %v1518 = vpack.c.b16 %v1116, %v1114
      %v1519 = vpack.c.b16 %v1119, %v1117
      %v1520 = vpack.c.b16 %v1120, %v1118
      %v1521 = vpack.c.b16 %v1123, %v1121
      %v1522 = vpack.c.b16 %v1124, %v1122
      %v1523 = vpack.c.b16 %v1127, %v1125
      %v1524 = vpack.c.b16 %v1128, %v1126
      %v1525 = vpack.c.b16 %v1131, %v1129
      %v1526 = vpack.c.b16 %v1132, %v1130
      %v1527 = vpack.c.b16 %v1135, %v1133
      %v1528 = vpack.c.b16 %v1136, %v1134
      %v1529 = vpack.c.b16 %v1139, %v1137
      %v1530 = vpack.c.b16 %v1140, %v1138
      %v1531 = vpack.c.b16 %v1143, %v1141
      %v1532 = vpack.c.b16 %v1144, %v1142
      %v1533 = vpack.c.b16 %v1147, %v1145
      %v1534 = vpack.c.b16 %v1148, %v1146
      %v1535 = vpack.c.b16 %v1151, %v1149
      %v1536 = vpack.c.b16 %v1152, %v1150
      %v1537 = vpack.c.b16 %v1155, %v1153
      %v1538 = vpack.c.b16 %v1156, %v1154
      %v1539 = vpack.c.b16 %v1159, %v1157
      %v1540 = vpack.c.b16 %v1160, %v1158
      %v1541 = vpack.c.b16 %v1163, %v1161
      %v1542 = vpack.c.b16 %v1164, %v1162
      %v1543 = vpack.c.b16 %v1167, %v1165
      %v1544 = vpack.c.b16 %v1168, %v1166
      %v1545 = vpack.c.b16 %v1171, %v1169
      %v1546 = vpack.c.b16 %v1172, %v1170
      %v1547 = vpack.c.b16 %v1175, %v1173
      %v1548 = vpack.c.b16 %v1176, %v1174
      %v1549 = vpack.c.b16 %v1179, %v1177
      %v1550 = vpack.c.b16 %v1180, %v1178
      %v1551 = vpack.c.b16 %v1183, %v1181
      %v1552 = vpack.c.b16 %v1184, %v1182
      %v1553 = vpack.c.b16 %v1187, %v1185
      %v1554 = vpack.c.b16 %v1188, %v1186
      %v1555 = vpack.c.b16 %v1191, %v1189
      %v1556 = vpack.c.b16 %v1192, %v1190
      %v1557 = vpack.c.b16 %v1195, %v1193
      %v1558 = vpack.c.b16 %v1196, %v1194
      %v1559 = vpack.c.b16 %v1199, %v1197
      %v1560 = vpack.c.b16 %v1200, %v1198
      %v1561 = vpack.c.b16 %v1203, %v1201
      %v1562 = vpack.c.b16 %v1204, %v1202
      %v1563 = vpack.c.b16 %v1207, %v1205
      %v1564 = vpack.c.b16 %v1208, %v1206
      %v1565 = vpack.c.b16 %v1211, %v1209
      %v1566 = vpack.c.b16 %v1212, %v1210
      %v1567 = vpack.c.b16 %v1215, %v1213
      %v1568 = vpack.c.b16 %v1216, %v1214
      %v1569 = vpack.c.b16 %v1219, %v1217
      %v1570 = vpack.c.b16 %v1220, %v1218
      %v1571 = vpack.c.b16 %v1223, %v1221
      %v1572 = vpack.c.b16 %v1224, %v1222
      %v1573 = vpack.c.b16 %v1227, %v1225
      %v1574 = vpack.c.b16 %v1228, %v1226
      %v1575 = vpack.c.b16 %v1231, %v1229
      %v1576 = vpack.c.b16 %v1232, %v1230
      %v1577 = vpack.c.b16 %v1235, %v1233
      %v1578 = vpack.c.b16 %v1236, %v1234
      %v1579 = vpack.c.b16 %v1239, %v1237
      %v1580 = vpack.c.b16 %v1240, %v1238
      %v1581 = vpack.c.b16 %v1243, %v1241
      %v1582 = vpack.c.b16 %v1244, %v1242
      %v1583 = vpack.c.b16 %v1247, %v1245
      %v1584 = vpack.c.b16 %v1248, %v1246
      %v1585 = vpack.c.b16 %v1251, %v1249
      %v1586 = vpack.c.b16 %v1252, %v1250
      %v1587 = vpack.c.b16 %v1255, %v1253
      %v1588 = vpack.c.b16 %v1256, %v1254
      %v1589 = vpack.c.b16 %v1259, %v1257
      %v1590 = vpack.c.b16 %v1260, %v1258
      %v1591 = vpack.c.b16 %v1263, %v1261
      %v1592 = vpack.c.b16 %v1264, %v1262
      %v1593 = vpack.c.b16 %v1267, %v1265
      %v1594 = vpack.c.b16 %v1268, %v1266
      %v1595 = vpack.c.b16 %v1271, %v1269
      %v1596 = vpack.c.b16 %v1272, %v1270
      %v1597 = vpack.c.b16 %v1275, %v1273
      %v1598 = vpack.c.b16 %v1276, %v1274
      %v1599 = vpack.c.b16 %v1279, %v1277
      %v1600 = vpack.c.b16 %v1280, %v1278
      %v1601 = vpack.c.b16 %v1283, %v1281
      %v1602 = vpack.c.b16 %v1284, %v1282
      %v1603 = vpack.c.b16 %v1287, %v1285
      %v1604 = vpack.c.b16 %v1288, %v1286
      %v1605 = vpack.c.b16 %v1291, %v1289
      %v1606 = vpack.c.b16 %v1292, %v1290
      %v1607 = vpack.c.b16 %v1295, %v1293
      %v1608 = vpack.c.b16 %v1296, %v1294
      %v1609 = vpack.c.b16 %v1299, %v1297
      %v1610 = vpack.c.b16 %v1300, %v1298
      %v1611 = vpack.c.b16 %v1303, %v1301
      %v1612 = vpack.c.b16 %v1304, %v1302
      %v1613 = vpack.c.b16 %v1307, %v1305
      %v1614 = vpack.c.b16 %v1308, %v1306
      %v1615 = vpack.c.b16 %v1311, %v1309
      %v1616 = vpack.c.b16 %v1312, %v1310
      %v1617 = vpack.c.b16 %v1315, %v1313
      %v1618 = vpack.c.b16 %v1316, %v1314
      %v1619 = vpack.c.b16 %v1319, %v1317
      %v1620 = vpack.c.b16 %v1320, %v1318
      %v1621 = vpack.c.b16 %v1323, %v1321
      %v1622 = vpack.c.b16 %v1324, %v1322
      %v1623 = vpack.c.b16 %v1327, %v1325
      %v1624 = vpack.c.b16 %v1328, %v1326
      %v1625 = vpack.c.b16 %v1331, %v1329
      %v1626 = vpack.c.b16 %v1332, %v1330
      %v1627 = vpack.c.b16 %v1335, %v1333
      %v1628 = vpack.c.b16 %v1336, %v1334
      %v1629 = vpack.c.b16 %v1339, %v1337
      %v1630 = vpack.c.b16 %v1340, %v1338
      %v1631 = vpack.c.b16 %v1343, %v1341
      %v1632 = vpack.c.b16 %v1344, %v1342
      %v1633 = vpack.c.b16 %v1347, %v1345
      %v1634 = vpack.c.b16 %v1348, %v1346
      %v1635 = vpack.c.b16 %v1351, %v1349
      %v1636 = vpack.c.b16 %v1352, %v1350
      %v1637 = vpack.c.b16 %v1355, %v1353
      %v1638 = vpack.c.b16 %v1356, %v1354
      %v1639 = vpack.c.b16 %v1359, %v1357
      %v1640 = vpack.c.b16 %v1360, %v1358
      %v1641 = vpack.c.b16 %v1363, %v1361
      %v1642 = vpack.c.b16 %v1364, %v1362
      %v1643 = vpack.c.b16 %v1367, %v1365
      %v1644 = vpack.c.b16 %v1368, %v1366
      %v1645 = vpack.c.b16 %v1371, %v1369
      %v1646 = vpack.c.b16 %v1372, %v1370
      %v1647 = vpack.c.b16 %v1375, %v1373
      %v1648 = vpack.c.b16 %v1376, %v1374
      %v1649 = vpack.c.b16 %v1379, %v1377
      %v1650 = vpack.c.b16 %v1380, %v1378
      %v1651 = vpack.c.b16 %v1383, %v1381
      %v1652 = vpack.c.b16 %v1384, %v1382
      %v1653 = vpack.c.b16 %v1387, %v1385
      %v1654 = vpack.c.b16 %v1388, %v1386
      %v1655 = vpack.c.b16 %v1391, %v1389
      %v1656 = vpack.c.b16 %v1392, %v1390
      %v1657 = vpack.c.b16 %v1395, %v1393
      %v1658 = vpack.c.b16 %v1396, %v1394
      %v1659 = vpack.c.b16 %v1399, %v1397
      %v1660 = vpack.c.b16 %v1400, %v1398
      %v1661 = vpack.c.b16 %v1403, %v1401
      %v1662 = vpack.c.b16 %v1404, %v1402
      %v1663 = vpack.c.b16 %v1407, %v1405
      %v1664 = vpack.c.b16 %v1408, %v1406
      %1921 = vmatprep.subr.bf16.mxu0 %v1424
      %1922 = vmatpush1.bf16.msra.mxu0 %v1423
      %1923 = vmatprep.subr.bf16.mxu0 %v1422
      %1924 = vmatpush1.bf16.msra.mxu0 %v1421
      %1925 = vmatprep.subr.bf16.mxu0 %v1420
      %1926 = vmatpush1.bf16.msra.mxu0 %v1419
      %1927 = vmatprep.subr.bf16.mxu0 %v1418
      %1928 = vmatpush1.bf16.msra.mxu0 %v1417
      %1929 = vmatprep.subr.bf16.mxu0 %v1416
      %1930 = vmatpush1.bf16.msra.mxu0 %v1415
      %1931 = vmatprep.subr.bf16.mxu0 %v1414
      %1932 = vmatpush1.bf16.msra.mxu0 %v1413
      %1933 = vmatprep.subr.bf16.mxu0 %v1412
      %1934 = vmatpush1.bf16.msra.mxu0 %v1411
      %1935 = vmatprep.subr.bf16.mxu0 %v1410
      %1936 = vmatpush1.bf16.msra.mxu0 %v1409
      %1937 = vmatprep.subr.bf16.mxu0 %v1440
      %1938 = vmatpush2.bf16.msra.mxu0 %v1439
      %1939 = vmatprep.subr.bf16.mxu0 %v1438
      %1940 = vmatpush2.bf16.msra.mxu0 %v1437
      %1941 = vmatprep.subr.bf16.mxu0 %v1436
      %1942 = vmatpush2.bf16.msra.mxu0 %v1435
      %1943 = vmatprep.subr.bf16.mxu0 %v1434
      %1944 = vmatpush2.bf16.msra.mxu0 %v1433
      %1945 = vmatprep.subr.bf16.mxu0 %v1432
      %1946 = vmatpush2.bf16.msra.mxu0 %v1431
      %1947 = vmatprep.subr.bf16.mxu0 %v1430
      %1948 = vmatpush2.bf16.msra.mxu0 %v1429
      %1949 = vmatprep.subr.bf16.mxu0 %v1428
      %1950 = vmatpush2.bf16.msra.mxu0 %v1427
      %1951 = vmatprep.subr.bf16.mxu0 %v1426
      %1952 = vmatpush2.bf16.msra.mxu0 %v1425
      %1953 = vmatprep.mubr.bf16.mxu0 %v610
      %1954 = vmatmul.mubr.bf16.gmra.mxu0 %v609
      %v1955 = vpop.f32.mrf.mxu0
      %v1956 = vadd.f32 0.0, %v1955
      %v1957 = vpop.f32.mrf.mxu0
      %v1958 = vadd.f32 0.0, %v1957
      %v1959 = vpop.f32.mrf.mxu0
      %v1960 = vadd.f32 0.0, %v1959
      %v1961 = vpop.f32.mrf.mxu0
      %v1962 = vadd.f32 0.0, %v1961
      %1963 = vdwg.mxu0
      %1964 = vmatprep.subr.bf16.mxu0 %v1456
      %1965 = vmatpush1.bf16.msra.mxu0 %v1455
      %1966 = vmatprep.subr.bf16.mxu0 %v1454
      %1967 = vmatpush1.bf16.msra.mxu0 %v1453
      %1968 = vmatprep.subr.bf16.mxu0 %v1452
      %1969 = vmatpush1.bf16.msra.mxu0 %v1451
      %1970 = vmatprep.subr.bf16.mxu0 %v1450
      %1971 = vmatpush1.bf16.msra.mxu0 %v1449
      %1972 = vmatprep.subr.bf16.mxu0 %v1448
      %1973 = vmatpush1.bf16.msra.mxu0 %v1447
      %1974 = vmatprep.subr.bf16.mxu0 %v1446
      %1975 = vmatpush1.bf16.msra.mxu0 %v1445
      %1976 = vmatprep.subr.bf16.mxu0 %v1444
      %1977 = vmatpush1.bf16.msra.mxu0 %v1443
      %1978 = vmatprep.subr.bf16.mxu0 %v1442
      %1979 = vmatpush1.bf16.msra.mxu0 %v1441
      %1980 = vmatprep.subr.bf16.mxu0 %v1472
      %1981 = vmatpush2.bf16.msra.mxu0 %v1471
      %1982 = vmatprep.subr.bf16.mxu0 %v1470
      %1983 = vmatpush2.bf16.msra.mxu0 %v1469
      %1984 = vmatprep.subr.bf16.mxu0 %v1468
      %1985 = vmatpush2.bf16.msra.mxu0 %v1467
      %1986 = vmatprep.subr.bf16.mxu0 %v1466
      %1987 = vmatpush2.bf16.msra.mxu0 %v1465
      %1988 = vmatprep.subr.bf16.mxu0 %v1464
      %1989 = vmatpush2.bf16.msra.mxu0 %v1463
      %1990 = vmatprep.subr.bf16.mxu0 %v1462
      %1991 = vmatpush2.bf16.msra.mxu0 %v1461
      %1992 = vmatprep.subr.bf16.mxu0 %v1460
      %1993 = vmatpush2.bf16.msra.mxu0 %v1459
      %1994 = vmatprep.subr.bf16.mxu0 %v1458
      %1995 = vmatpush2.bf16.msra.mxu0 %v1457
      %1996 = vmatprep.mubr.bf16.mxu0 %v612
      %1997 = vmatmul.mubr.bf16.gmra.mxu0 %v611
      %v1998 = vpop.f32.mrf.mxu0
      %v1999 = vadd.f32 %v1956, %v1998
      %v2000 = vpop.f32.mrf.mxu0
      %v2001 = vadd.f32 %v1958, %v2000
      %v2002 = vpop.f32.mrf.mxu0
      %v2003 = vadd.f32 %v1960, %v2002
      %v2004 = vpop.f32.mrf.mxu0
      %v2005 = vadd.f32 %v1962, %v2004
      %2006 = vdwg.mxu0
      %2007 = vmatprep.subr.bf16.mxu0 %v1488
      %2008 = vmatpush1.bf16.msra.mxu0 %v1487
      %2009 = vmatprep.subr.bf16.mxu0 %v1486
      %2010 = vmatpush1.bf16.msra.mxu0 %v1485
      %2011 = vmatprep.subr.bf16.mxu0 %v1484
      %2012 = vmatpush1.bf16.msra.mxu0 %v1483
      %2013 = vmatprep.subr.bf16.mxu0 %v1482
      %2014 = vmatpush1.bf16.msra.mxu0 %v1481
      %2015 = vmatprep.subr.bf16.mxu0 %v1480
      %2016 = vmatpush1.bf16.msra.mxu0 %v1479
      %2017 = vmatprep.subr.bf16.mxu0 %v1478
      %2018 = vmatpush1.bf16.msra.mxu0 %v1477
      %2019 = vmatprep.subr.bf16.mxu0 %v1476
      %2020 = vmatpush1.bf16.msra.mxu0 %v1475
      %2021 = vmatprep.subr.bf16.mxu0 %v1474
      %2022 = vmatpush1.bf16.msra.mxu0 %v1473
      %2023 = vmatprep.subr.bf16.mxu0 %v1504
      %2024 = vmatpush2.bf16.msra.mxu0 %v1503
      %2025 = vmatprep.subr.bf16.mxu0 %v1502
      %2026 = vmatpush2.bf16.msra.mxu0 %v1501
      %2027 = vmatprep.subr.bf16.mxu0 %v1500
      %2028 = vmatpush2.bf16.msra.mxu0 %v1499
      %2029 = vmatprep.subr.bf16.mxu0 %v1498
      %2030 = vmatpush2.bf16.msra.mxu0 %v1497
      %2031 = vmatprep.subr.bf16.mxu0 %v1496
      %2032 = vmatpush2.bf16.msra.mxu0 %v1495
      %2033 = vmatprep.subr.bf16.mxu0 %v1494
      %2034 = vmatpush2.bf16.msra.mxu0 %v1493
      %2035 = vmatprep.subr.bf16.mxu0 %v1492
      %2036 = vmatpush2.bf16.msra.mxu0 %v1491
      %2037 = vmatprep.subr.bf16.mxu0 %v1490
      %2038 = vmatpush2.bf16.msra.mxu0 %v1489
      %2039 = vmatprep.mubr.bf16.mxu0 %v614
      %2040 = vmatmul.mubr.bf16.gmra.mxu0 %v613
      %v2041 = vpop.f32.mrf.mxu0
      %v2042 = vadd.f32 %v1999, %v2041
      %v2043 = vpop.f32.mrf.mxu0
      %v2044 = vadd.f32 %v2001, %v2043
      %v2045 = vpop.f32.mrf.mxu0
      %v2046 = vadd.f32 %v2003, %v2045
      %v2047 = vpop.f32.mrf.mxu0
      %v2048 = vadd.f32 %v2005, %v2047
      %2049 = vdwg.mxu0
      %2050 = vmatprep.subr.bf16.mxu0 %v1520
      %2051 = vmatpush1.bf16.msra.mxu0 %v1519
      %2052 = vmatprep.subr.bf16.mxu0 %v1518
      %2053 = vmatpush1.bf16.msra.mxu0 %v1517
      %2054 = vmatprep.subr.bf16.mxu0 %v1516
      %2055 = vmatpush1.bf16.msra.mxu0 %v1515
      %2056 = vmatprep.subr.bf16.mxu0 %v1514
      %2057 = vmatpush1.bf16.msra.mxu0 %v1513
      %2058 = vmatprep.subr.bf16.mxu0 %v1512
      %2059 = vmatpush1.bf16.msra.mxu0 %v1511
      %2060 = vmatprep.subr.bf16.mxu0 %v1510
      %2061 = vmatpush1.bf16.msra.mxu0 %v1509
      %2062 = vmatprep.subr.bf16.mxu0 %v1508
      %2063 = vmatpush1.bf16.msra.mxu0 %v1507
      %2064 = vmatprep.subr.bf16.mxu0 %v1506
      %2065 = vmatpush1.bf16.msra.mxu0 %v1505
      %2066 = vmatprep.subr.bf16.mxu0 %v1536
      %2067 = vmatpush2.bf16.msra.mxu0 %v1535
      %2068 = vmatprep.subr.bf16.mxu0 %v1534
      %2069 = vmatpush2.bf16.msra.mxu0 %v1533
      %2070 = vmatprep.subr.bf16.mxu0 %v1532
      %2071 = vmatpush2.bf16.msra.mxu0 %v1531
      %2072 = vmatprep.subr.bf16.mxu0 %v1530
      %2073 = vmatpush2.bf16.msra.mxu0 %v1529
      %2074 = vmatprep.subr.bf16.mxu0 %v1528
      %2075 = vmatpush2.bf16.msra.mxu0 %v1527
      %2076 = vmatprep.subr.bf16.mxu0 %v1526
      %2077 = vmatpush2.bf16.msra.mxu0 %v1525
      %2078 = vmatprep.subr.bf16.mxu0 %v1524
      %2079 = vmatpush2.bf16.msra.mxu0 %v1523
      %2080 = vmatprep.subr.bf16.mxu0 %v1522
      %2081 = vmatpush2.bf16.msra.mxu0 %v1521
      %2082 = vmatprep.mubr.bf16.mxu0 %v616
      %2083 = vmatmul.mubr.bf16.gmra.mxu0 %v615
      %v2084 = vpop.f32.mrf.mxu0
      %v2085 = vadd.f32 %v2042, %v2084
      %v2086 = vpop.f32.mrf.mxu0
      %v2087 = vadd.f32 %v2044, %v2086
      %v2088 = vpop.f32.mrf.mxu0
      %v2089 = vadd.f32 %v2046, %v2088
      %v2090 = vpop.f32.mrf.mxu0
      %v2091 = vadd.f32 %v2048, %v2090
      %2092 = vdwg.mxu0
      %2093 = vmatprep.subr.bf16.mxu0 %v1552
      %2094 = vmatpush1.bf16.msra.mxu0 %v1551
      %2095 = vmatprep.subr.bf16.mxu0 %v1550
      %2096 = vmatpush1.bf16.msra.mxu0 %v1549
      %2097 = vmatprep.subr.bf16.mxu0 %v1548
      %2098 = vmatpush1.bf16.msra.mxu0 %v1547
      %2099 = vmatprep.subr.bf16.mxu0 %v1546
      %2100 = vmatpush1.bf16.msra.mxu0 %v1545
      %2101 = vmatprep.subr.bf16.mxu0 %v1544
      %2102 = vmatpush1.bf16.msra.mxu0 %v1543
      %2103 = vmatprep.subr.bf16.mxu0 %v1542
      %2104 = vmatpush1.bf16.msra.mxu0 %v1541
      %2105 = vmatprep.subr.bf16.mxu0 %v1540
      %2106 = vmatpush1.bf16.msra.mxu0 %v1539
      %2107 = vmatprep.subr.bf16.mxu0 %v1538
      %2108 = vmatpush1.bf16.msra.mxu0 %v1537
      %2109 = vmatprep.subr.bf16.mxu0 %v1568
      %2110 = vmatpush2.bf16.msra.mxu0 %v1567
      %2111 = vmatprep.subr.bf16.mxu0 %v1566
      %2112 = vmatpush2.bf16.msra.mxu0 %v1565
      %2113 = vmatprep.subr.bf16.mxu0 %v1564
      %2114 = vmatpush2.bf16.msra.mxu0 %v1563
      %2115 = vmatprep.subr.bf16.mxu0 %v1562
      %2116 = vmatpush2.bf16.msra.mxu0 %v1561
      %2117 = vmatprep.subr.bf16.mxu0 %v1560
      %2118 = vmatpush2.bf16.msra.mxu0 %v1559
      %2119 = vmatprep.subr.bf16.mxu0 %v1558
      %2120 = vmatpush2.bf16.msra.mxu0 %v1557
      %2121 = vmatprep.subr.bf16.mxu0 %v1556
      %2122 = vmatpush2.bf16.msra.mxu0 %v1555
      %2123 = vmatprep.subr.bf16.mxu0 %v1554
      %2124 = vmatpush2.bf16.msra.mxu0 %v1553
      %2125 = vmatprep.mubr.bf16.mxu0 %v618
      %2126 = vmatmul.mubr.bf16.gmra.mxu0 %v617
      %v2127 = vpop.f32.mrf.mxu0
      %v2128 = vadd.f32 %v2085, %v2127
      %v2129 = vpop.f32.mrf.mxu0
      %v2130 = vadd.f32 %v2087, %v2129
      %v2131 = vpop.f32.mrf.mxu0
      %v2132 = vadd.f32 %v2089, %v2131
      %v2133 = vpop.f32.mrf.mxu0
      %v2134 = vadd.f32 %v2091, %v2133
      %2135 = vdwg.mxu0
      %2136 = vmatprep.subr.bf16.mxu0 %v1584
      %2137 = vmatpush1.bf16.msra.mxu0 %v1583
      %2138 = vmatprep.subr.bf16.mxu0 %v1582
      %2139 = vmatpush1.bf16.msra.mxu0 %v1581
      %2140 = vmatprep.subr.bf16.mxu0 %v1580
      %2141 = vmatpush1.bf16.msra.mxu0 %v1579
      %2142 = vmatprep.subr.bf16.mxu0 %v1578
      %2143 = vmatpush1.bf16.msra.mxu0 %v1577
      %2144 = vmatprep.subr.bf16.mxu0 %v1576
      %2145 = vmatpush1.bf16.msra.mxu0 %v1575
      %2146 = vmatprep.subr.bf16.mxu0 %v1574
      %2147 = vmatpush1.bf16.msra.mxu0 %v1573
      %2148 = vmatprep.subr.bf16.mxu0 %v1572
      %2149 = vmatpush1.bf16.msra.mxu0 %v1571
      %2150 = vmatprep.subr.bf16.mxu0 %v1570
      %2151 = vmatpush1.bf16.msra.mxu0 %v1569
      %2152 = vmatprep.subr.bf16.mxu0 %v1600
      %2153 = vmatpush2.bf16.msra.mxu0 %v1599
      %2154 = vmatprep.subr.bf16.mxu0 %v1598
      %2155 = vmatpush2.bf16.msra.mxu0 %v1597
      %2156 = vmatprep.subr.bf16.mxu0 %v1596
      %2157 = vmatpush2.bf16.msra.mxu0 %v1595
      %2158 = vmatprep.subr.bf16.mxu0 %v1594
      %2159 = vmatpush2.bf16.msra.mxu0 %v1593
      %2160 = vmatprep.subr.bf16.mxu0 %v1592
      %2161 = vmatpush2.bf16.msra.mxu0 %v1591
      %2162 = vmatprep.subr.bf16.mxu0 %v1590
      %2163 = vmatpush2.bf16.msra.mxu0 %v1589
      %2164 = vmatprep.subr.bf16.mxu0 %v1588
      %2165 = vmatpush2.bf16.msra.mxu0 %v1587
      %2166 = vmatprep.subr.bf16.mxu0 %v1586
      %2167 = vmatpush2.bf16.msra.mxu0 %v1585
      %2168 = vmatprep.mubr.bf16.mxu0 %v620
      %2169 = vmatmul.mubr.bf16.gmra.mxu0 %v619
      %v2170 = vpop.f32.mrf.mxu0
      %v2171 = vadd.f32 %v2128, %v2170
      %v2172 = vpop.f32.mrf.mxu0
      %v2173 = vadd.f32 %v2130, %v2172
      %v2174 = vpop.f32.mrf.mxu0
      %v2175 = vadd.f32 %v2132, %v2174
      %v2176 = vpop.f32.mrf.mxu0
      %v2177 = vadd.f32 %v2134, %v2176
      %2178 = vdwg.mxu0
      %2179 = vmatprep.subr.bf16.mxu0 %v1616
      %2180 = vmatpush1.bf16.msra.mxu0 %v1615
      %2181 = vmatprep.subr.bf16.mxu0 %v1614
      %2182 = vmatpush1.bf16.msra.mxu0 %v1613
      %2183 = vmatprep.subr.bf16.mxu0 %v1612
      %2184 = vmatpush1.bf16.msra.mxu0 %v1611
      %2185 = vmatprep.subr.bf16.mxu0 %v1610
      %2186 = vmatpush1.bf16.msra.mxu0 %v1609
      %2187 = vmatprep.subr.bf16.mxu0 %v1608
      %2188 = vmatpush1.bf16.msra.mxu0 %v1607
      %2189 = vmatprep.subr.bf16.mxu0 %v1606
      %2190 = vmatpush1.bf16.msra.mxu0 %v1605
      %2191 = vmatprep.subr.bf16.mxu0 %v1604
      %2192 = vmatpush1.bf16.msra.mxu0 %v1603
      %2193 = vmatprep.subr.bf16.mxu0 %v1602
      %2194 = vmatpush1.bf16.msra.mxu0 %v1601
      %2195 = vmatprep.subr.bf16.mxu0 %v1632
      %2196 = vmatpush2.bf16.msra.mxu0 %v1631
      %2197 = vmatprep.subr.bf16.mxu0 %v1630
      %2198 = vmatpush2.bf16.msra.mxu0 %v1629
      %2199 = vmatprep.subr.bf16.mxu0 %v1628
      %2200 = vmatpush2.bf16.msra.mxu0 %v1627
      %2201 = vmatprep.subr.bf16.mxu0 %v1626
      %2202 = vmatpush2.bf16.msra.mxu0 %v1625
      %2203 = vmatprep.subr.bf16.mxu0 %v1624
      %2204 = vmatpush2.bf16.msra.mxu0 %v1623
      %2205 = vmatprep.subr.bf16.mxu0 %v1622
      %2206 = vmatpush2.bf16.msra.mxu0 %v1621
      %2207 = vmatprep.subr.bf16.mxu0 %v1620
      %2208 = vmatpush2.bf16.msra.mxu0 %v1619
      %2209 = vmatprep.subr.bf16.mxu0 %v1618
      %2210 = vmatpush2.bf16.msra.mxu0 %v1617
      %2211 = vmatprep.mubr.bf16.mxu0 %v622
      %2212 = vmatmul.mubr.bf16.gmra.mxu0 %v621
      %v2213 = vpop.f32.mrf.mxu0
      %v2214 = vadd.f32 %v2171, %v2213
      %v2215 = vpop.f32.mrf.mxu0
      %v2216 = vadd.f32 %v2173, %v2215
      %v2217 = vpop.f32.mrf.mxu0
      %v2218 = vadd.f32 %v2175, %v2217
      %v2219 = vpop.f32.mrf.mxu0
      %v2220 = vadd.f32 %v2177, %v2219
      %2221 = vdwg.mxu0
      %2222 = vmatprep.subr.bf16.mxu0 %v1648
      %2223 = vmatpush1.bf16.msra.mxu0 %v1647
      %2224 = vmatprep.subr.bf16.mxu0 %v1646
      %2225 = vmatpush1.bf16.msra.mxu0 %v1645
      %2226 = vmatprep.subr.bf16.mxu0 %v1644
      %2227 = vmatpush1.bf16.msra.mxu0 %v1643
      %2228 = vmatprep.subr.bf16.mxu0 %v1642
      %2229 = vmatpush1.bf16.msra.mxu0 %v1641
      %2230 = vmatprep.subr.bf16.mxu0 %v1640
      %2231 = vmatpush1.bf16.msra.mxu0 %v1639
      %2232 = vmatprep.subr.bf16.mxu0 %v1638
      %2233 = vmatpush1.bf16.msra.mxu0 %v1637
      %2234 = vmatprep.subr.bf16.mxu0 %v1636
      %2235 = vmatpush1.bf16.msra.mxu0 %v1635
      %2236 = vmatprep.subr.bf16.mxu0 %v1634
      %2237 = vmatpush1.bf16.msra.mxu0 %v1633
      %2238 = vmatprep.subr.bf16.mxu0 %v1664
      %2239 = vmatpush2.bf16.msra.mxu0 %v1663
      %2240 = vmatprep.subr.bf16.mxu0 %v1662
      %2241 = vmatpush2.bf16.msra.mxu0 %v1661
      %2242 = vmatprep.subr.bf16.mxu0 %v1660
      %2243 = vmatpush2.bf16.msra.mxu0 %v1659
      %2244 = vmatprep.subr.bf16.mxu0 %v1658
      %2245 = vmatpush2.bf16.msra.mxu0 %v1657
      %2246 = vmatprep.subr.bf16.mxu0 %v1656
      %2247 = vmatpush2.bf16.msra.mxu0 %v1655
      %2248 = vmatprep.subr.bf16.mxu0 %v1654
      %2249 = vmatpush2.bf16.msra.mxu0 %v1653
      %2250 = vmatprep.subr.bf16.mxu0 %v1652
      %2251 = vmatpush2.bf16.msra.mxu0 %v1651
      %2252 = vmatprep.subr.bf16.mxu0 %v1650
      %2253 = vmatpush2.bf16.msra.mxu0 %v1649
      %2254 = vmatprep.mubr.bf16.mxu0 %v624
      %2255 = vmatmul.mubr.bf16.gmra.mxu0 %v623
      %v2256 = vpop.f32.mrf.mxu0
      %v2257 = vadd.f32 %v2214, %v2256
      %v2258 = vpop.f32.mrf.mxu0
      %v2259 = vadd.f32 %v2216, %v2258
      %v2260 = vpop.f32.mrf.mxu0
      %v2261 = vadd.f32 %v2218, %v2260
      %v2262 = vpop.f32.mrf.mxu0
      %v2263 = vadd.f32 %v2220, %v2262
      %2264 = vdwg.mxu0
      %v2265 = vadd.f32 %v285, %v2257
      %v2266 = vadd.f32 %v286, %v2259
      %v2267 = vadd.f32 %v287, %v2261
      %v2268 = vadd.f32 %v288, %v2263
      %2269 = vst [vmem:[#allocation2] sm:$0xff] %v2265
      %2270 = vst [vmem:[#allocation2 + $0x8] sm:$0xff] %v2266
      %2271 = vst [vmem:[#allocation2 + $0x10] sm:$0xff] %v2267
      %2272 = vst [vmem:[#allocation2 + $0x18] sm:$0xff] %v2268
      // Predicated region
      $region37: #{discriminator_forward.7} parent=31 // pred_check
        %p2273 = pneg %p277
      $region38: #{discriminator_forward.7} parent=31 // pred_check_branch
        %2275 = sbr.rel (%p2273) target = $region40
      $region39: #{discriminator_forward.7} parent=31 // pred_region
        %v2276 = vld [vmem:[#allocation2] sm:$0xff]
        %v2277 = vld [vmem:[#allocation2 + $0x8] sm:$0xff]
        %v2278 = vld [vmem:[#allocation2 + $0x10] sm:$0xff]
        %v2279 = vld [vmem:[#allocation2 + $0x18] sm:$0xff]
        %v2280 = vld [vmem:[%s265] sm:$0x3]
        %v2282 = vlaneseq
        %v2283 = vshrl.u32 %v2282, 7
        %v2284 = vsub.s32 0, %v2283
        %v2285 = vrot.slane %v2280, %v2284
        %v2286 = vlaneseq
        %v2287 = vshrl.u32 %v2286, 7
        %v2288 = vsub.s32 1, %v2287
        %v2289 = vrot.slane %v2280, %v2288
        %v2292 = vadd.f32 %v2276, %v2285
        %v2293 = vadd.f32 %v2277, %v2289
        %v2294 = vadd.f32 %v2278, %v2285
        %v2295 = vadd.f32 %v2279, %v2289
        %v2296 = vadd.f32 %v2292, %v2294
        %v2297 = vrot.slane %v2296, 4
        %v2298 = vadd.f32 %v2296, %v2297
        %v2299 = vrot.slane %v2298, 2
        %v2300 = vadd.f32 %v2298, %v2299
        %v2301 = vrot.slane %v2300, 1
        %v2302 = vadd.f32 %v2300, %v2301
        %v2303 = vadd.f32 %v2293, %v2295
        %v2304 = vrot.slane %v2303, 4
        %v2305 = vadd.f32 %v2303, %v2304
        %v2306 = vrot.slane %v2305, 2
        %v2307 = vadd.f32 %v2305, %v2306
        %v2308 = vrot.slane %v2307, 1
        %v2309 = vadd.f32 %v2307, %v2308
        %v2310 = vrcp.pop 16.0
        %v2311 = vmul.f32 %v2302, %v2310
        %v2312 = vmul.f32 %v2309, %v2310
        %v2313 = vsub.f32 %v2292, %v2311
        %v2314 = vsub.f32 %v2293, %v2312
        %v2315 = vsub.f32 %v2294, %v2311
        %v2316 = vsub.f32 %v2295, %v2312
        %v2317 = vmul.f32 %v2313, %v2313
        %v2318 = vmul.f32 %v2314, %v2314
        %v2319 = vmul.f32 %v2315, %v2315
        %v2320 = vmul.f32 %v2316, %v2316
        %v2321 = vadd.f32 %v2317, %v2319
        %v2322 = vrot.slane %v2321, 4
        %v2323 = vadd.f32 %v2321, %v2322
        %v2324 = vrot.slane %v2323, 2
        %v2325 = vadd.f32 %v2323, %v2324
        %v2326 = vrot.slane %v2325, 1
        %v2327 = vadd.f32 %v2325, %v2326
        %v2328 = vadd.f32 %v2318, %v2320
        %v2329 = vrot.slane %v2328, 4
        %v2330 = vadd.f32 %v2328, %v2329
        %v2331 = vrot.slane %v2330, 2
        %v2332 = vadd.f32 %v2330, %v2331
        %v2333 = vrot.slane %v2332, 1
        %v2334 = vadd.f32 %v2332, %v2333
        %v2335 = vmul.f32 %v2327, %v2310
        %v2336 = vmul.f32 %v2334, %v2310
        %v2337 = vadd.f32 %v2335, 1e-05
        %v2338 = vadd.f32 %v2336, 1e-05
        %v2339 = vrsqrt.pop %v2337
        %v2340 = vrsqrt.pop %v2338
        %v2341 = vmul.f32 %v2313, %v2339
        %v2342 = vmul.f32 %v2314, %v2340
        %v2343 = vmul.f32 %v2315, %v2339
        %v2344 = vmul.f32 %v2316, %v2340
        %v2345 = vmul.f32 %v2341, 0.2
        %v2346 = vmul.f32 %v2342, 0.2
        %v2347 = vmul.f32 %v2343, 0.2
        %v2348 = vmul.f32 %v2344, 0.2
        %v2349 = vmax.f32 %v2341, %v2345
        %v2350 = vmax.f32 %v2342, %v2346
        %v2351 = vmax.f32 %v2343, %v2347
        %v2352 = vmax.f32 %v2344, %v2348
        %v2353 = vpack.c.bf16 %v2351, %v2349
        %v2354 = vpack.c.bf16 %v2352, %v2350
        %v2357 = vunpack.c.l.b16 %v2353
        %v2358 = vunpack.c.l.b16 %v2354
        %v2359 = vunpack.c.h.b16 %v2353
        %v2360 = vunpack.c.h.b16 %v2354
        %v2361 = vpack.c.b16 %v2358, %v2357
        %v2362 = vpack.c.b16 %v2360, %v2359
        %2365 = vst [vmem:[%s275] sm:$0xff] %v2361
        %2366 = vst [vmem:[%s275 + $0x8] sm:$0xff] %v2362
      $region40: #{discriminator_forward.7} parent=31 // pred_fallthru
        _
      %s2367 = smul.u32 2, %s20
      %p2368 = scmp.lt.s32.totalorder %s19, 1
      %s2369 = scalar_select %p2368, %s19, 1
      %p2370 = scmp.lt.s32.totalorder %s2367, 1
      %s2371 = scalar_select %p2370, %s2367, 1
      %s2372 = smul.addr %s2369, 4
      %s2373 = sadd.s32 %s2371, %s2372
      %s2374 = smul.addr %s2373, 4
      %s2375 = scalar_lea.vmem %s3, %s2374
      // Predicated region
      $region41: #{discriminator_forward.7} parent=31 // pred_check
        %p2376 = pneg %p135
      $region42: #{discriminator_forward.7} parent=31 // pred_check_branch
        %2378 = sbr.rel (%p2376) target = $region44
      $region43: #{discriminator_forward.7} parent=31 // pred_region
        %s2379 = smul.u32 2, %s20
      $region44: #{discriminator_forward.7} parent=31 // pred_fallthru
        _
    $region32: #{discriminator_forward.7} parent=5 // pred_fallthru
      _
    %p2380 = scmp.le.s32.totalorder 2, %s9
    // Predicated region
    $region45: #{discriminator_forward.7} parent=5 // pred_check
      %p2381 = pneg %p2380
    $region46: #{discriminator_forward.7} parent=5 // pred_check_branch
      %2383 = sbr.rel (%p2381) target = $region48
    $region47: #{discriminator_forward.7} parent=5 // pred_region
      %s2384 = ssub.s32 %s9, 2
      // Predicated region
      $region49: #{discriminator_forward.7} parent=47 // pred_check
        %p2385 = pneg %p141
      $region50: #{discriminator_forward.7} parent=47 // pred_check_branch
        %2387 = sbr.rel (%p2385) target = $region52
      $region51: #{discriminator_forward.7} parent=47 // pred_region
        %s2388 = smul.u32 2, %s23
        %p2389 = scmp.lt.s32.totalorder %s22, 1
        %s2390 = scalar_select %p2389, %s22, 1
        %p2391 = scmp.lt.s32.totalorder %s2388, 1
        %s2392 = scalar_select %p2391, %s2388, 1
        %s2393 = smul.addr %s2390, 4
        %s2394 = sadd.s32 %s2392, %s2393
        %s2395 = smul.addr %s2394, 4
        %s2396 = scalar_lea.vmem %s3, %s2395
      $region52: #{discriminator_forward.7} parent=47 // pred_fallthru
        _
    $region48: #{discriminator_forward.7} parent=5 // pred_fallthru
      _
  $region6: #{discriminator_forward.7} parent=0 // loop_footer
    %s13 = sadd.s32 1, %s9
  $region7: #{discriminator_forward.7} parent=0 // loop_footer_branch
    %8 = sbr.rel target = $region3
  $region8: #{discriminator_forward.7} parent=0 // loop_exit
    _

// kernel: discriminator_forward.8
$region0: #{discriminator_forward.8}
  #allocation0 [shape = 'u32[]', space=smem, size = 0x4, offset = 0x4, fixed_abs, tag = 'smem constant byte address 0x4 - core index']
  #allocation1 [shape = 'u32[144,128]{1,0:T(1,128)}', space=vmem, size = 0x12000, scoped, tag = 'internal scratch']
  #allocation2 [shape = 'f32[4,256]{1,0:T(4,128)}', space=vmem, size = 0x1000, scoped, tag = 'scratch operand']
  %s0 = inlined_call_operand.vmem [shape: bf16[2,4,4096], index: 0, kind: input, shape index: {}]
  %s1 = inlined_call_operand.vmem [shape: bf16[4096,512], index: 1, kind: input, shape index: {}]
  %s2 = inlined_call_operand.vmem [shape: f32[1,512], index: 2, kind: input, shape index: {}]
  %s3 = inlined_call_operand.vmem [shape: bf16[2,4,512], index: 3, kind: output, shape index: {}]
  %s4 = sld [smem:[#allocation0]]
  $region91: #{discriminator_forward.8} parent=0
    _
  %s6 = ssub.s32 1, %s4
  %s7 = scalar_select 0, %s6, %s4
  $region1: #{discriminator_forward.8} parent=0
    #allocation3 [shape = 'u8[2097152]{0}', space=vmem, size = 0x200000, scoped, tag = 'input window, operand 1']
    loop: start=0, step=1, limit=10
    $region2: #{discriminator_forward.8} parent=1 // loop_pre_header
      _
    $region3: #{discriminator_forward.8} parent=1 // loop_header
      %s9 = sphi 0, %s13
      %p10 = scmp.ge.s32.totalorder %s9, 10
      %s16 = sphi 0, %s35
      %s17 = sphi 0, %s31
      %s18 = sphi 0, %s27
      %s19 = sphi 0, %s16
      %s20 = sphi 0, %s17
      %s21 = sphi 0, %s18
      %s22 = sphi 0, %s19
      %s23 = sphi 0, %s20
      %s24 = sphi 0, %s21
      %s40 = sphi 0, %s42
      %s43 = sphi 0, %s40
      %s44 = sphi 0, %s43
      %s60 = sphi 0, %s44
      %s68 = sphi 0, %s70
      %s71 = sphi 0, %s68
      %s72 = sphi 0, %s71
      %s88 = sphi 0, %s72
      %s94 = sphi 0, %s96
      %s97 = sphi 0, %s94
      %s98 = sphi 0, %s97
      %s114 = sphi 0, %s98
      %s122 = sphi 0, %s124
      %s125 = sphi 0, %s122
      %s126 = sphi 0, %s125
      %s142 = sphi 0, %s126
    $region4: #{discriminator_forward.8} parent=1 // loop_header_branch
      %12 = sbr.rel (%p10) target = $region8
    $region5: #{discriminator_forward.8} parent=1 // loop_body
      %s14 = ssub.s32 %s9, 1
      %s15 = ssub.s32 %s9, 2
      %s25 = sadd.s32 1, %s18
      %p26 = scmp.ge.s32.totalorder %s25, 2
      %s27 = scalar_select %p26, 0, %s25
      %s28 = sadd.s32 1, %s17
      %s29 = scalar_select %p26, %s28, %s17
      %p30 = scmp.ge.s32.totalorder %s29, 2
      %s31 = scalar_select %p30, 0, %s29
      %s32 = sadd.s32 1, %s16
      %s33 = scalar_select %p30, %s32, %s16
      %p34 = scmp.ge.s32.totalorder %s33, 2
      %s35 = scalar_select %p34, 0, %s33
      %s36 = ssub.s32 %s16, %s35
      %s37 = ssub.s32 %s18, %s27
      %s38 = sor.u32 %s36, %s37
      %p39 = scmp.eq.s32.totalorder %s38, 0
      %s41 = sadd.s32 %s40, 1
      %s42 = scalar_select %p39, %s40, %s41
      %p45 = pneg %p39
      %p46 = scmp.eq.s32.totalorder %s9, 7
      %p47 = por %p45, %p46
      %p48 = scmp.ne.s32.totalorder %s40, %s43
      %p49 = scmp.eq.s32.totalorder %s9, 0
      %p50 = por %p48, %p49
      %p51 = scmp.ne.s32.totalorder %s40, %s43
      %p52 = scmp.eq.s32.totalorder %s14, 7
      %p53 = por %p51, %p52
      %p54 = scmp.ne.s32.totalorder %s43, %s44
      %p55 = scmp.eq.s32.totalorder %s14, 0
      %p56 = por %p54, %p55
      %p57 = scmp.ne.s32.totalorder %s43, %s44
      %p58 = scmp.eq.s32.totalorder %s15, 7
      %p59 = por %p57, %p58
      %p61 = scmp.ne.s32.totalorder %s44, %s60
      %p62 = scmp.eq.s32.totalorder %s15, 0
      %p63 = por %p61, %p62
      %s64 = ssub.s32 %s18, %s27
      %s65 = ssub.s32 %s17, %s31
      %s66 = sor.u32 %s64, %s65
      %p67 = scmp.eq.s32.totalorder %s66, 0
      %s69 = sadd.s32 %s68, 1
      %s70 = scalar_select %p67, %s68, %s69
      %p73 = pneg %p67
      %p74 = scmp.eq.s32.totalorder %s9, 7
      %p75 = por %p73, %p74
      %p76 = scmp.ne.s32.totalorder %s68, %s71
      %p77 = scmp.eq.s32.totalorder %s9, 0
      %p78 = por %p76, %p77
      %p79 = scmp.ne.s32.totalorder %s68, %s71
      %p80 = scmp.eq.s32.totalorder %s14, 7
      %p81 = por %p79, %p80
      %p82 = scmp.ne.s32.totalorder %s71, %s72
      %p83 = scmp.eq.s32.totalorder %s14, 0
      %p84 = por %p82, %p83
      %p85 = scmp.ne.s32.totalorder %s71, %s72
      %p86 = scmp.eq.s32.totalorder %s15, 7
      %p87 = por %p85, %p86
      %p89 = scmp.ne.s32.totalorder %s72, %s88
      %p90 = scmp.eq.s32.totalorder %s15, 0
      %p91 = por %p89, %p90
      %s92 = ssub.s32 %s17, %s31
      %p93 = scmp.eq.s32.totalorder %s92, 0
      %s95 = sadd.s32 %s94, 1
      %s96 = scalar_select %p93, %s94, %s95
      %p99 = pneg %p93
      %p100 = scmp.eq.s32.totalorder %s9, 7
      %p101 = por %p99, %p100
      %p102 = scmp.ne.s32.totalorder %s94, %s97
      %p103 = scmp.eq.s32.totalorder %s9, 0
      %p104 = por %p102, %p103
      %p105 = scmp.ne.s32.totalorder %s94, %s97
      %p106 = scmp.eq.s32.totalorder %s14, 7
      %p107 = por %p105, %p106
      %p108 = scmp.ne.s32.totalorder %s97, %s98
      %p109 = scmp.eq.s32.totalorder %s14, 0
      %p110 = por %p108, %p109
      %p111 = scmp.ne.s32.totalorder %s97, %s98
      %p112 = scmp.eq.s32.totalorder %s15, 7
      %p113 = por %p111, %p112
      %p115 = scmp.ne.s32.totalorder %s98, %s114
      %p116 = scmp.eq.s32.totalorder %s15, 0
      %p117 = por %p115, %p116
      %s118 = ssub.s32 %s16, %s35
      %s119 = ssub.s32 %s17, %s31
      %s120 = sor.u32 %s118, %s119
      %p121 = scmp.eq.s32.totalorder %s120, 0
      %s123 = sadd.s32 %s122, 1
      %s124 = scalar_select %p121, %s122, %s123
      %p127 = pneg %p121
      %p128 = scmp.eq.s32.totalorder %s9, 7
      %p129 = por %p127, %p128
      %p130 = scmp.ne.s32.totalorder %s122, %s125
      %p131 = scmp.eq.s32.totalorder %s9, 0
      %p132 = por %p130, %p131
      %p133 = scmp.ne.s32.totalorder %s122, %s125
      %p134 = scmp.eq.s32.totalorder %s14, 7
      %p135 = por %p133, %p134
      %p136 = scmp.ne.s32.totalorder %s125, %s126
      %p137 = scmp.eq.s32.totalorder %s14, 0
      %p138 = por %p136, %p137
      %p139 = scmp.ne.s32.totalorder %s125, %s126
      %p140 = scmp.eq.s32.totalorder %s15, 7
      %p141 = por %p139, %p140
      %p143 = scmp.ne.s32.totalorder %s126, %s142
      %p144 = scmp.eq.s32.totalorder %s15, 0
      %p145 = por %p143, %p144
      %p146 = scmp.le.s32.totalorder 1, %s9
      %p147 = scmp.lt.s32.totalorder %s9, 9
      %p148 = pnand %p146, %p147
      %p149 = pneg %p148
      // Predicated region
      $region9: #{discriminator_forward.8} parent=5 // pred_check
        _
      $region10: #{discriminator_forward.8} parent=5 // pred_check_branch
        %151 = sbr.rel (%p148) target = $region12
      $region11: #{discriminator_forward.8} parent=5 // pred_region
        %s152 = ssub.s32 %s9, 1
      $region12: #{discriminator_forward.8} parent=5 // pred_fallthru
        _
      %p153 = scmp.lt.s32.totalorder %s9, 8
      // Predicated region
      $region13: #{discriminator_forward.8} parent=5 // pred_check
        %p154 = pneg %p153
      $region14: #{discriminator_forward.8} parent=5 // pred_check_branch
        %156 = sbr.rel (%p154) target = $region16
      $region15: #{discriminator_forward.8} parent=5 // pred_region
        // Predicated region
        $region17: #{discriminator_forward.8} parent=15 // pred_check
          %p157 = pneg %p50
        $region18: #{discriminator_forward.8} parent=15 // pred_check_branch
          %159 = sbr.rel (%p157) target = $region20
        $region19: #{discriminator_forward.8} parent=15 // pred_region
          %s160 = smul.u32 16, %s18
          %p161 = scmp.lt.s32.totalorder %s16, 1
          %s162 = scalar_select %p161, %s16, 1
          %p163 = scmp.lt.s32.totalorder %s160, 31
          %s164 = scalar_select %p163, %s160, 31
          %s165 = smul.addr %s162, 32
          %s166 = sadd.s32 %s164, %s165
          %s167 = smul.addr %s166, 2
          %s168 = scalar_lea.vmem %s0, %s167
          %s169 = smul.u32 16, %s18
        $region20: #{discriminator_forward.8} parent=15 // pred_fallthru
          _
        // Predicated region
        $region21: #{discriminator_forward.8} parent=15 // pred_check
          %p170 = pneg %p78
        $region22: #{discriminator_forward.8} parent=15 // pred_check_branch
          %172 = sbr.rel (%p170) target = $region24
        $region23: #{discriminator_forward.8} parent=15 // pred_region
          %s173 = sand.u32 %s68, 1
          %s174 = sand.u32 %s68, 1
          %s175 = smul.addr %s174, 2048
          %s176 = scalar_lea.vmem [#allocation3], %s175
          %s177 = smul.u32 256, %s18
          %s178 = smul.u32 2, %s17
          %s179 = smul.addr %s177, 4
          %s180 = sadd.s32 %s178, %s179
          %s181 = smul.addr %s180, 4
          %s182 = scalar_lea.vmem %s1, %s181
          // Predicated region
          $region25: #{discriminator_forward.8} parent=23 // pred_check
            _
          $region26: #{discriminator_forward.8} parent=23 // pred_check_branch
            %184 = sbr.rel (0) target = $region28
          $region27: #{discriminator_forward.8} parent=23 // pred_region
            // Predicated region
            $region29: #{discriminator_forward.8} parent=27 // pred_check
              _
            $region30: #{discriminator_forward.8} parent=27 // pred_check_branch
              %186 = sbr.rel (0) target = $region32
            $region31: #{discriminator_forward.8} parent=27 // pred_region
              // Predicated region
              $region44: #{discriminator_forward.8} parent=31 // pred_check
                _
              $region45: #{discriminator_forward.8} parent=31 // pred_check_branch
                %712 = sbr.rel (0) target = $region47
              $region46: #{discriminator_forward.8} parent=31 // pred_region
                loop: start=0, step=1, limit=1
                $region48: #{discriminator_forward.8} parent=46 // loop_pre_header
                  _
                $region49: #{discriminator_forward.8} parent=46 // loop_header
                  %s714 = sphi 0, %s718
                  %p715 = scmp.ge.s32.totalorder %s714, 1
                  %s719 = sphi %s182, %s182
                  %s720 = sphi %s176, %s176
                $region50: #{discriminator_forward.8} parent=46 // loop_header_branch
                  %717 = sbr.rel (%p715) target = $region54
                $region51: #{discriminator_forward.8} parent=46 // loop_body
                  %v721 = vld [vmem:[%s719] sm:$0xff]
                  %722 = vst [vmem:[%s720] sm:$0xff] %v721
                  %v723 = vld [vmem:[%s719 + $0x10] sm:$0xff]
                  %724 = vst [vmem:[%s720 + $0x8] sm:$0xff] %v723
                  %v725 = vld [vmem:[%s719 + $0x20] sm:$0xff]
                  %726 = vst [vmem:[%s720 + $0x10] sm:$0xff] %v725
                  %v727 = vld [vmem:[%s719 + $0x30] sm:$0xff]
                  %728 = vst [vmem:[%s720 + $0x18] sm:$0xff] %v727
                  %v729 = vld [vmem:[%s719 + $0x40] sm:$0xff]
                  %730 = vst [vmem:[%s720 + $0x20] sm:$0xff] %v729
                  %v731 = vld [vmem:[%s719 + $0x50] sm:$0xff]
                  %732 = vst [vmem:[%s720 + $0x28] sm:$0xff] %v731
                  %v733 = vld [vmem:[%s719 + $0x60] sm:$0xff]
                  %734 = vst [vmem:[%s720 + $0x30] sm:$0xff] %v733
                  %v735 = vld [vmem:[%s719 + $0x70] sm:$0xff]
                  %736 = vst [vmem:[%s720 + $0x38] sm:$0xff] %v735
                  %v737 = vld [vmem:[%s719 + $0x80] sm:$0xff]
                  %738 = vst [vmem:[%s720 + $0x40] sm:$0xff] %v737
                  %v739 = vld [vmem:[%s719 + $0x90] sm:$0xff]
                  %740 = vst [vmem:[%s720 + $0x48] sm:$0xff] %v739
                  %v741 = vld [vmem:[%s719 + $0xa0] sm:$0xff]
                  %742 = vst [vmem:[%s720 + $0x50] sm:$0xff] %v741
                  %v743 = vld [vmem:[%s719 + $0xb0] sm:$0xff]
                  %744 = vst [vmem:[%s720 + $0x58] sm:$0xff] %v743
                  %v745 = vld [vmem:[%s719 + $0xc0] sm:$0xff]
                  %746 = vst [vmem:[%s720 + $0x60] sm:$0xff] %v745
                  %v747 = vld [vmem:[%s719 + $0xd0] sm:$0xff]
                  %748 = vst [vmem:[%s720 + $0x68] sm:$0xff] %v747
                  %v749 = vld [vmem:[%s719 + $0xe0] sm:$0xff]
                  %750 = vst [vmem:[%s720 + $0x70] sm:$0xff] %v749
                  %v751 = vld [vmem:[%s719 + $0xf0] sm:$0xff]
                  %752 = vst [vmem:[%s720 + $0x78] sm:$0xff] %v751
                  %v753 = vld [vmem:[%s719 + $0x100] sm:$0xff]
                  %754 = vst [vmem:[%s720 + $0x80] sm:$0xff] %v753
                  %v755 = vld [vmem:[%s719 + $0x110] sm:$0xff]
                  %756 = vst [vmem:[%s720 + $0x88] sm:$0xff] %v755
                  %v757 = vld [vmem:[%s719 + $0x120] sm:$0xff]
                  %758 = vst [vmem:[%s720 + $0x90] sm:$0xff] %v757
                  %v759 = vld [vmem:[%s719 + $0x130] sm:$0xff]
                  %760 = vst [vmem:[%s720 + $0x98] sm:$0xff] %v759
                  %v761 = vld [vmem:[%s719 + $0x140] sm:$0xff]
                  %762 = vst [vmem:[%s720 + $0xa0] sm:$0xff] %v761
                  %v763 = vld [vmem:[%s719 + $0x150] sm:$0xff]
                  %764 = vst [vmem:[%s720 + $0xa8] sm:$0xff] %v763
                  %v765 = vld [vmem:[%s719 + $0x160] sm:$0xff]
                  %766 = vst [vmem:[%s720 + $0xb0] sm:$0xff] %v765
                  %v767 = vld [vmem:[%s719 + $0x170] sm:$0xff]
                  %768 = vst [vmem:[%s720 + $0xb8] sm:$0xff] %v767
                  %v769 = vld [vmem:[%s719 + $0x180] sm:$0xff]
                  %770 = vst [vmem:[%s720 + $0xc0] sm:$0xff] %v769
                  %v771 = vld [vmem:[%s719 + $0x190] sm:$0xff]
                  %772 = vst [vmem:[%s720 + $0xc8] sm:$0xff] %v771
                  %v773 = vld [vmem:[%s719 + $0x1a0] sm:$0xff]
                  %774 = vst [vmem:[%s720 + $0xd0] sm:$0xff] %v773
                  %v775 = vld [vmem:[%s719 + $0x1b0] sm:$0xff]
                  %776 = vst [vmem:[%s720 + $0xd8] sm:$0xff] %v775
                  %v777 = vld [vmem:[%s719 + $0x1c0] sm:$0xff]
                  %778 = vst [vmem:[%s720 + $0xe0] sm:$0xff] %v777
                  %v779 = vld [vmem:[%s719 + $0x1d0] sm:$0xff]
                  %780 = vst [vmem:[%s720 + $0xe8] sm:$0xff] %v779
                  %v781 = vld [vmem:[%s719 + $0x1e0] sm:$0xff]
                  %782 = vst [vmem:[%s720 + $0xf0] sm:$0xff] %v781
                  %v783 = vld [vmem:[%s719 + $0x1f0] sm:$0xff]
                  %784 = vst [vmem:[%s720 + $0xf8] sm:$0xff] %v783
                  %v785 = vld [vmem:[%s719 + $0x200] sm:$0xff]
                  %786 = vst [vmem:[%s720 + $0x100] sm:$0xff] %v785
                  %v787 = vld [vmem:[%s719 + $0x210] sm:$0xff]
                  %788 = vst [vmem:[%s720 + $0x108] sm:$0xff] %v787
                  %v789 = vld [vmem:[%s719 + $0x220] sm:$0xff]
                  %790 = vst [vmem:[%s720 + $0x110] sm:$0xff] %v789
                  %v791 = vld [vmem:[%s719 + $0x230] sm:$0xff]
                  %792 = vst [vmem:[%s720 + $0x118] sm:$0xff] %v791
                  %v793 = vld [vmem:[%s719 + $0x240] sm:$0xff]
                  %794 = vst [vmem:[%s720 + $0x120] sm:$0xff] %v793
                  %v795 = vld [vmem:[%s719 + $0x250] sm:$0xff]
                  %796 = vst [vmem:[%s720 + $0x128] sm:$0xff] %v795
                  %v797 = vld [vmem:[%s719 + $0x260] sm:$0xff]
                  %798 = vst [vmem:[%s720 + $0x130] sm:$0xff] %v797
                  %v799 = vld [vmem:[%s719 + $0x270] sm:$0xff]
                  %800 = vst [vmem:[%s720 + $0x138] sm:$0xff] %v799
                  %v801 = vld [vmem:[%s719 + $0x280] sm:$0xff]
                  %802 = vst [vmem:[%s720 + $0x140] sm:$0xff] %v801
                  %v803 = vld [vmem:[%s719 + $0x290] sm:$0xff]
                  %804 = vst [vmem:[%s720 + $0x148] sm:$0xff] %v803
                  %v805 = vld [vmem:[%s719 + $0x2a0] sm:$0xff]
                  %806 = vst [vmem:[%s720 + $0x150] sm:$0xff] %v805
                  %v807 = vld [vmem:[%s719 + $0x2b0] sm:$0xff]
                  %808 = vst [vmem:[%s720 + $0x158] sm:$0xff] %v807
                  %v809 = vld [vmem:[%s719 + $0x2c0] sm:$0xff]
                  %810 = vst [vmem:[%s720 + $0x160] sm:$0xff] %v809
                  %v811 = vld [vmem:[%s719 + $0x2d0] sm:$0xff]
                  %812 = vst [vmem:[%s720 + $0x168] sm:$0xff] %v811
                  %v813 = vld [vmem:[%s719 + $0x2e0] sm:$0xff]
                  %814 = vst [vmem:[%s720 + $0x170] sm:$0xff] %v813
                  %v815 = vld [vmem:[%s719 + $0x2f0] sm:$0xff]
                  %816 = vst [vmem:[%s720 + $0x178] sm:$0xff] %v815
                  %v817 = vld [vmem:[%s719 + $0x300] sm:$0xff]
                  %818 = vst [vmem:[%s720 + $0x180] sm:$0xff] %v817
                  %v819 = vld [vmem:[%s719 + $0x310] sm:$0xff]
                  %820 = vst [vmem:[%s720 + $0x188] sm:$0xff] %v819
                  %v821 = vld [vmem:[%s719 + $0x320] sm:$0xff]
                  %822 = vst [vmem:[%s720 + $0x190] sm:$0xff] %v821
                  %v823 = vld [vmem:[%s719 + $0x330] sm:$0xff]
                  %824 = vst [vmem:[%s720 + $0x198] sm:$0xff] %v823
                  %v825 = vld [vmem:[%s719 + $0x340] sm:$0xff]
                  %826 = vst [vmem:[%s720 + $0x1a0] sm:$0xff] %v825
                  %v827 = vld [vmem:[%s719 + $0x350] sm:$0xff]
                  %828 = vst [vmem:[%s720 + $0x1a8] sm:$0xff] %v827
                  %v829 = vld [vmem:[%s719 + $0x360] sm:$0xff]
                  %830 = vst [vmem:[%s720 + $0x1b0] sm:$0xff] %v829
                  %v831 = vld [vmem:[%s719 + $0x370] sm:$0xff]
                  %832 = vst [vmem:[%s720 + $0x1b8] sm:$0xff] %v831
                  %v833 = vld [vmem:[%s719 + $0x380] sm:$0xff]
                  %834 = vst [vmem:[%s720 + $0x1c0] sm:$0xff] %v833
                  %v835 = vld [vmem:[%s719 + $0x390] sm:$0xff]
                  %836 = vst [vmem:[%s720 + $0x1c8] sm:$0xff] %v835
                  %v837 = vld [vmem:[%s719 + $0x3a0] sm:$0xff]
                  %838 = vst [vmem:[%s720 + $0x1d0] sm:$0xff] %v837
                  %v839 = vld [vmem:[%s719 + $0x3b0] sm:$0xff]
                  %840 = vst [vmem:[%s720 + $0x1d8] sm:$0xff] %v839
                  %v841 = vld [vmem:[%s719 + $0x3c0] sm:$0xff]
                  %842 = vst [vmem:[%s720 + $0x1e0] sm:$0xff] %v841
                  %v843 = vld [vmem:[%s719 + $0x3d0] sm:$0xff]
                  %844 = vst [vmem:[%s720 + $0x1e8] sm:$0xff] %v843
                  %v845 = vld [vmem:[%s719 + $0x3e0] sm:$0xff]
                  %846 = vst [vmem:[%s720 + $0x1f0] sm:$0xff] %v845
                  %v847 = vld [vmem:[%s719 + $0x3f0] sm:$0xff]
                  %848 = vst [vmem:[%s720 + $0x1f8] sm:$0xff] %v847
                  %v849 = vld [vmem:[%s719 + $0x400] sm:$0xff]
                  %850 = vst [vmem:[%s720 + $0x200] sm:$0xff] %v849
                  %v851 = vld [vmem:[%s719 + $0x410] sm:$0xff]
                  %852 = vst [vmem:[%s720 + $0x208] sm:$0xff] %v851
                  %v853 = vld [vmem:[%s719 + $0x420] sm:$0xff]
                  %854 = vst [vmem:[%s720 + $0x210] sm:$0xff] %v853
                  %v855 = vld [vmem:[%s719 + $0x430] sm:$0xff]
                  %856 = vst [vmem:[%s720 + $0x218] sm:$0xff] %v855
                  %v857 = vld [vmem:[%s719 + $0x440] sm:$0xff]
                  %858 = vst [vmem:[%s720 + $0x220] sm:$0xff] %v857
                  %v859 = vld [vmem:[%s719 + $0x450] sm:$0xff]
                  %860 = vst [vmem:[%s720 + $0x228] sm:$0xff] %v859
                  %v861 = vld [vmem:[%s719 + $0x460] sm:$0xff]
                  %862 = vst [vmem:[%s720 + $0x230] sm:$0xff] %v861
                  %v863 = vld [vmem:[%s719 + $0x470] sm:$0xff]
                  %864 = vst [vmem:[%s720 + $0x238] sm:$0xff] %v863
                  %v865 = vld [vmem:[%s719 + $0x480] sm:$0xff]
                  %866 = vst [vmem:[%s720 + $0x240] sm:$0xff] %v865
                  %v867 = vld [vmem:[%s719 + $0x490] sm:$0xff]
                  %868 = vst [vmem:[%s720 + $0x248] sm:$0xff] %v867
                  %v869 = vld [vmem:[%s719 + $0x4a0] sm:$0xff]
                  %870 = vst [vmem:[%s720 + $0x250] sm:$0xff] %v869
                  %v871 = vld [vmem:[%s719 + $0x4b0] sm:$0xff]
                  %872 = vst [vmem:[%s720 + $0x258] sm:$0xff] %v871
                  %v873 = vld [vmem:[%s719 + $0x4c0] sm:$0xff]
                  %874 = vst [vmem:[%s720 + $0x260] sm:$0xff] %v873
                  %v875 = vld [vmem:[%s719 + $0x4d0] sm:$0xff]
                  %876 = vst [vmem:[%s720 + $0x268] sm:$0xff] %v875
                  %v877 = vld [vmem:[%s719 + $0x4e0] sm:$0xff]
                  %878 = vst [vmem:[%s720 + $0x270] sm:$0xff] %v877
                  %v879 = vld [vmem:[%s719 + $0x4f0] sm:$0xff]
                  %880 = vst [vmem:[%s720 + $0x278] sm:$0xff] %v879
                  %v881 = vld [vmem:[%s719 + $0x500] sm:$0xff]
                  %882 = vst [vmem:[%s720 + $0x280] sm:$0xff] %v881
                  %v883 = vld [vmem:[%s719 + $0x510] sm:$0xff]
                  %884 = vst [vmem:[%s720 + $0x288] sm:$0xff] %v883
                  %v885 = vld [vmem:[%s719 + $0x520] sm:$0xff]
                  %886 = vst [vmem:[%s720 + $0x290] sm:$0xff] %v885
                  %v887 = vld [vmem:[%s719 + $0x530] sm:$0xff]
                  %888 = vst [vmem:[%s720 + $0x298] sm:$0xff] %v887
                  %v889 = vld [vmem:[%s719 + $0x540] sm:$0xff]
                  %890 = vst [vmem:[%s720 + $0x2a0] sm:$0xff] %v889
                  %v891 = vld [vmem:[%s719 + $0x550] sm:$0xff]
                  %892 = vst [vmem:[%s720 + $0x2a8] sm:$0xff] %v891
                  %v893 = vld [vmem:[%s719 + $0x560] sm:$0xff]
                  %894 = vst [vmem:[%s720 + $0x2b0] sm:$0xff] %v893
                  %v895 = vld [vmem:[%s719 + $0x570] sm:$0xff]
                  %896 = vst [vmem:[%s720 + $0x2b8] sm:$0xff] %v895
                  %v897 = vld [vmem:[%s719 + $0x580] sm:$0xff]
                  %898 = vst [vmem:[%s720 + $0x2c0] sm:$0xff] %v897
                  %v899 = vld [vmem:[%s719 + $0x590] sm:$0xff]
                  %900 = vst [vmem:[%s720 + $0x2c8] sm:$0xff] %v899
                  %v901 = vld [vmem:[%s719 + $0x5a0] sm:$0xff]
                  %902 = vst [vmem:[%s720 + $0x2d0] sm:$0xff] %v901
                  %v903 = vld [vmem:[%s719 + $0x5b0] sm:$0xff]
                  %904 = vst [vmem:[%s720 + $0x2d8] sm:$0xff] %v903
                  %v905 = vld [vmem:[%s719 + $0x5c0] sm:$0xff]
                  %906 = vst [vmem:[%s720 + $0x2e0] sm:$0xff] %v905
                  %v907 = vld [vmem:[%s719 + $0x5d0] sm:$0xff]
                  %908 = vst [vmem:[%s720 + $0x2e8] sm:$0xff] %v907
                  %v909 = vld [vmem:[%s719 + $0x5e0] sm:$0xff]
                  %910 = vst [vmem:[%s720 + $0x2f0] sm:$0xff] %v909
                  %v911 = vld [vmem:[%s719 + $0x5f0] sm:$0xff]
                  %912 = vst [vmem:[%s720 + $0x2f8] sm:$0xff] %v911
                  %v913 = vld [vmem:[%s719 + $0x600] sm:$0xff]
                  %914 = vst [vmem:[%s720 + $0x300] sm:$0xff] %v913
                  %v915 = vld [vmem:[%s719 + $0x610] sm:$0xff]
                  %916 = vst [vmem:[%s720 + $0x308] sm:$0xff] %v915
                  %v917 = vld [vmem:[%s719 + $0x620] sm:$0xff]
                  %918 = vst [vmem:[%s720 + $0x310] sm:$0xff] %v917
                  %v919 = vld [vmem:[%s719 + $0x630] sm:$0xff]
                  %920 = vst [vmem:[%s720 + $0x318] sm:$0xff] %v919
                  %v921 = vld [vmem:[%s719 + $0x640] sm:$0xff]
                  %922 = vst [vmem:[%s720 + $0x320] sm:$0xff] %v921
                  %v923 = vld [vmem:[%s719 + $0x650] sm:$0xff]
                  %924 = vst [vmem:[%s720 + $0x328] sm:$0xff] %v923
                  %v925 = vld [vmem:[%s719 + $0x660] sm:$0xff]
                  %926 = vst [vmem:[%s720 + $0x330] sm:$0xff] %v925
                  %v927 = vld [vmem:[%s719 + $0x670] sm:$0xff]
                  %928 = vst [vmem:[%s720 + $0x338] sm:$0xff] %v927
                  %v929 = vld [vmem:[%s719 + $0x680] sm:$0xff]
                  %930 = vst [vmem:[%s720 + $0x340] sm:$0xff] %v929
                  %v931 = vld [vmem:[%s719 + $0x690] sm:$0xff]
                  %932 = vst [vmem:[%s720 + $0x348] sm:$0xff] %v931
                  %v933 = vld [vmem:[%s719 + $0x6a0] sm:$0xff]
                  %934 = vst [vmem:[%s720 + $0x350] sm:$0xff] %v933
                  %v935 = vld [vmem:[%s719 + $0x6b0] sm:$0xff]
                  %936 = vst [vmem:[%s720 + $0x358] sm:$0xff] %v935
                  %v937 = vld [vmem:[%s719 + $0x6c0] sm:$0xff]
                  %938 = vst [vmem:[%s720 + $0x360] sm:$0xff] %v937
                  %v939 = vld [vmem:[%s719 + $0x6d0] sm:$0xff]
                  %940 = vst [vmem:[%s720 + $0x368] sm:$0xff] %v939
                  %v941 = vld [vmem:[%s719 + $0x6e0] sm:$0xff]
                  %942 = vst [vmem:[%s720 + $0x370] sm:$0xff] %v941
                  %v943 = vld [vmem:[%s719 + $0x6f0] sm:$0xff]
                  %944 = vst [vmem:[%s720 + $0x378] sm:$0xff] %v943
                  %v945 = vld [vmem:[%s719 + $0x700] sm:$0xff]
                  %946 = vst [vmem:[%s720 + $0x380] sm:$0xff] %v945
                  %v947 = vld [vmem:[%s719 + $0x710] sm:$0xff]
                  %948 = vst [vmem:[%s720 + $0x388] sm:$0xff] %v947
                  %v949 = vld [vmem:[%s719 + $0x720] sm:$0xff]
                  %950 = vst [vmem:[%s720 + $0x390] sm:$0xff] %v949
                  %v951 = vld [vmem:[%s719 + $0x730] sm:$0xff]
                  %952 = vst [vmem:[%s720 + $0x398] sm:$0xff] %v951
                  %v953 = vld [vmem:[%s719 + $0x740] sm:$0xff]
                  %954 = vst [vmem:[%s720 + $0x3a0] sm:$0xff] %v953
                  %v955 = vld [vmem:[%s719 + $0x750] sm:$0xff]
                  %956 = vst [vmem:[%s720 + $0x3a8] sm:$0xff] %v955
                  %v957 = vld [vmem:[%s719 + $0x760] sm:$0xff]
                  %958 = vst [vmem:[%s720 + $0x3b0] sm:$0xff] %v957
                  %v959 = vld [vmem:[%s719 + $0x770] sm:$0xff]
                  %960 = vst [vmem:[%s720 + $0x3b8] sm:$0xff] %v959
                  %v961 = vld [vmem:[%s719 + $0x780] sm:$0xff]
                  %962 = vst [vmem:[%s720 + $0x3c0] sm:$0xff] %v961
                  %v963 = vld [vmem:[%s719 + $0x790] sm:$0xff]
                  %964 = vst [vmem:[%s720 + $0x3c8] sm:$0xff] %v963
                  %v965 = vld [vmem:[%s719 + $0x7a0] sm:$0xff]
                  %966 = vst [vmem:[%s720 + $0x3d0] sm:$0xff] %v965
                  %v967 = vld [vmem:[%s719 + $0x7b0] sm:$0xff]
                  %968 = vst [vmem:[%s720 + $0x3d8] sm:$0xff] %v967
                  %v969 = vld [vmem:[%s719 + $0x7c0] sm:$0xff]
                  %970 = vst [vmem:[%s720 + $0x3e0] sm:$0xff] %v969
                  %v971 = vld [vmem:[%s719 + $0x7d0] sm:$0xff]
                  %972 = vst [vmem:[%s720 + $0x3e8] sm:$0xff] %v971
                  %v973 = vld [vmem:[%s719 + $0x7e0] sm:$0xff]
                  %974 = vst [vmem:[%s720 + $0x3f0] sm:$0xff] %v973
                  %v975 = vld [vmem:[%s719 + $0x7f0] sm:$0xff]
                  %976 = vst [vmem:[%s720 + $0x3f8] sm:$0xff] %v975
                  %v977 = vld [vmem:[%s719 + $0x800] sm:$0xff]
                  %978 = vst [vmem:[%s720 + $0x400] sm:$0xff] %v977
                  %v979 = vld [vmem:[%s719 + $0x810] sm:$0xff]
                  %980 = vst [vmem:[%s720 + $0x408] sm:$0xff] %v979
                  %v981 = vld [vmem:[%s719 + $0x820] sm:$0xff]
                  %982 = vst [vmem:[%s720 + $0x410] sm:$0xff] %v981
                  %v983 = vld [vmem:[%s719 + $0x830] sm:$0xff]
                  %984 = vst [vmem:[%s720 + $0x418] sm:$0xff] %v983
                  %v985 = vld [vmem:[%s719 + $0x840] sm:$0xff]
                  %986 = vst [vmem:[%s720 + $0x420] sm:$0xff] %v985
                  %v987 = vld [vmem:[%s719 + $0x850] sm:$0xff]
                  %988 = vst [vmem:[%s720 + $0x428] sm:$0xff] %v987
                  %v989 = vld [vmem:[%s719 + $0x860] sm:$0xff]
                  %990 = vst [vmem:[%s720 + $0x430] sm:$0xff] %v989
                  %v991 = vld [vmem:[%s719 + $0x870] sm:$0xff]
                  %992 = vst [vmem:[%s720 + $0x438] sm:$0xff] %v991
                  %v993 = vld [vmem:[%s719 + $0x880] sm:$0xff]
                  %994 = vst [vmem:[%s720 + $0x440] sm:$0xff] %v993
                  %v995 = vld [vmem:[%s719 + $0x890] sm:$0xff]
                  %996 = vst [vmem:[%s720 + $0x448] sm:$0xff] %v995
                  %v997 = vld [vmem:[%s719 + $0x8a0] sm:$0xff]
                  %998 = vst [vmem:[%s720 + $0x450] sm:$0xff] %v997
                  %v999 = vld [vmem:[%s719 + $0x8b0] sm:$0xff]
                  %1000 = vst [vmem:[%s720 + $0x458] sm:$0xff] %v999
                  %v1001 = vld [vmem:[%s719 + $0x8c0] sm:$0xff]
                  %1002 = vst [vmem:[%s720 + $0x460] sm:$0xff] %v1001
                  %v1003 = vld [vmem:[%s719 + $0x8d0] sm:$0xff]
                  %1004 = vst [vmem:[%s720 + $0x468] sm:$0xff] %v1003
                  %v1005 = vld [vmem:[%s719 + $0x8e0] sm:$0xff]
                  %1006 = vst [vmem:[%s720 + $0x470] sm:$0xff] %v1005
                  %v1007 = vld [vmem:[%s719 + $0x8f0] sm:$0xff]
                  %1008 = vst [vmem:[%s720 + $0x478] sm:$0xff] %v1007
                  %v1009 = vld [vmem:[%s719 + $0x900] sm:$0xff]
                  %1010 = vst [vmem:[%s720 + $0x480] sm:$0xff] %v1009
                  %v1011 = vld [vmem:[%s719 + $0x910] sm:$0xff]
                  %1012 = vst [vmem:[%s720 + $0x488] sm:$0xff] %v1011
                  %v1013 = vld [vmem:[%s719 + $0x920] sm:$0xff]
                  %1014 = vst [vmem:[%s720 + $0x490] sm:$0xff] %v1013
                  %v1015 = vld [vmem:[%s719 + $0x930] sm:$0xff]
                  %1016 = vst [vmem:[%s720 + $0x498] sm:$0xff] %v1015
                  %v1017 = vld [vmem:[%s719 + $0x940] sm:$0xff]
                  %1018 = vst [vmem:[%s720 + $0x4a0] sm:$0xff] %v1017
                  %v1019 = vld [vmem:[%s719 + $0x950] sm:$0xff]
                  %1020 = vst [vmem:[%s720 + $0x4a8] sm:$0xff] %v1019
                  %v1021 = vld [vmem:[%s719 + $0x960] sm:$0xff]
                  %1022 = vst [vmem:[%s720 + $0x4b0] sm:$0xff] %v1021
                  %v1023 = vld [vmem:[%s719 + $0x970] sm:$0xff]
                  %1024 = vst [vmem:[%s720 + $0x4b8] sm:$0xff] %v1023
                  %v1025 = vld [vmem:[%s719 + $0x980] sm:$0xff]
                  %1026 = vst [vmem:[%s720 + $0x4c0] sm:$0xff] %v1025
                  %v1027 = vld [vmem:[%s719 + $0x990] sm:$0xff]
                  %1028 = vst [vmem:[%s720 + $0x4c8] sm:$0xff] %v1027
                  %v1029 = vld [vmem:[%s719 + $0x9a0] sm:$0xff]
                  %1030 = vst [vmem:[%s720 + $0x4d0] sm:$0xff] %v1029
                  %v1031 = vld [vmem:[%s719 + $0x9b0] sm:$0xff]
                  %1032 = vst [vmem:[%s720 + $0x4d8] sm:$0xff] %v1031
                  %v1033 = vld [vmem:[%s719 + $0x9c0] sm:$0xff]
                  %1034 = vst [vmem:[%s720 + $0x4e0] sm:$0xff] %v1033
                  %v1035 = vld [vmem:[%s719 + $0x9d0] sm:$0xff]
                  %1036 = vst [vmem:[%s720 + $0x4e8] sm:$0xff] %v1035
                  %v1037 = vld [vmem:[%s719 + $0x9e0] sm:$0xff]
                  %1038 = vst [vmem:[%s720 + $0x4f0] sm:$0xff] %v1037
                  %v1039 = vld [vmem:[%s719 + $0x9f0] sm:$0xff]
                  %1040 = vst [vmem:[%s720 + $0x4f8] sm:$0xff] %v1039
                  %v1041 = vld [vmem:[%s719 + $0xa00] sm:$0xff]
                  %1042 = vst [vmem:[%s720 + $0x500] sm:$0xff] %v1041
                  %v1043 = vld [vmem:[%s719 + $0xa10] sm:$0xff]
                  %1044 = vst [vmem:[%s720 + $0x508] sm:$0xff] %v1043
                  %v1045 = vld [vmem:[%s719 + $0xa20] sm:$0xff]
                  %1046 = vst [vmem:[%s720 + $0x510] sm:$0xff] %v1045
                  %v1047 = vld [vmem:[%s719 + $0xa30] sm:$0xff]
                  %1048 = vst [vmem:[%s720 + $0x518] sm:$0xff] %v1047
                  %v1049 = vld [vmem:[%s719 + $0xa40] sm:$0xff]
                  %1050 = vst [vmem:[%s720 + $0x520] sm:$0xff] %v1049
                  %v1051 = vld [vmem:[%s719 + $0xa50] sm:$0xff]
                  %1052 = vst [vmem:[%s720 + $0x528] sm:$0xff] %v1051
                  %v1053 = vld [vmem:[%s719 + $0xa60] sm:$0xff]
                  %1054 = vst [vmem:[%s720 + $0x530] sm:$0xff] %v1053
                  %v1055 = vld [vmem:[%s719 + $0xa70] sm:$0xff]
                  %1056 = vst [vmem:[%s720 + $0x538] sm:$0xff] %v1055
                  %v1057 = vld [vmem:[%s719 + $0xa80] sm:$0xff]
                  %1058 = vst [vmem:[%s720 + $0x540] sm:$0xff] %v1057
                  %v1059 = vld [vmem:[%s719 + $0xa90] sm:$0xff]
                  %1060 = vst [vmem:[%s720 + $0x548] sm:$0xff] %v1059
                  %v1061 = vld [vmem:[%s719 + $0xaa0] sm:$0xff]
                  %1062 = vst [vmem:[%s720 + $0x550] sm:$0xff] %v1061
                  %v1063 = vld [vmem:[%s719 + $0xab0] sm:$0xff]
                  %1064 = vst [vmem:[%s720 + $0x558] sm:$0xff] %v1063
                  %v1065 = vld [vmem:[%s719 + $0xac0] sm:$0xff]
                  %1066 = vst [vmem:[%s720 + $0x560] sm:$0xff] %v1065
                  %v1067 = vld [vmem:[%s719 + $0xad0] sm:$0xff]
                  %1068 = vst [vmem:[%s720 + $0x568] sm:$0xff] %v1067
                  %v1069 = vld [vmem:[%s719 + $0xae0] sm:$0xff]
                  %1070 = vst [vmem:[%s720 + $0x570] sm:$0xff] %v1069
                  %v1071 = vld [vmem:[%s719 + $0xaf0] sm:$0xff]
                  %1072 = vst [vmem:[%s720 + $0x578] sm:$0xff] %v1071
                  %v1073 = vld [vmem:[%s719 + $0xb00] sm:$0xff]
                  %1074 = vst [vmem:[%s720 + $0x580] sm:$0xff] %v1073
                  %v1075 = vld [vmem:[%s719 + $0xb10] sm:$0xff]
                  %1076 = vst [vmem:[%s720 + $0x588] sm:$0xff] %v1075
                  %v1077 = vld [vmem:[%s719 + $0xb20] sm:$0xff]
                  %1078 = vst [vmem:[%s720 + $0x590] sm:$0xff] %v1077
                  %v1079 = vld [vmem:[%s719 + $0xb30] sm:$0xff]
                  %1080 = vst [vmem:[%s720 + $0x598] sm:$0xff] %v1079
                  %v1081 = vld [vmem:[%s719 + $0xb40] sm:$0xff]
                  %1082 = vst [vmem:[%s720 + $0x5a0] sm:$0xff] %v1081
                  %v1083 = vld [vmem:[%s719 + $0xb50] sm:$0xff]
                  %1084 = vst [vmem:[%s720 + $0x5a8] sm:$0xff] %v1083
                  %v1085 = vld [vmem:[%s719 + $0xb60] sm:$0xff]
                  %1086 = vst [vmem:[%s720 + $0x5b0] sm:$0xff] %v1085
                  %v1087 = vld [vmem:[%s719 + $0xb70] sm:$0xff]
                  %1088 = vst [vmem:[%s720 + $0x5b8] sm:$0xff] %v1087
                  %v1089 = vld [vmem:[%s719 + $0xb80] sm:$0xff]
                  %1090 = vst [vmem:[%s720 + $0x5c0] sm:$0xff] %v1089
                  %v1091 = vld [vmem:[%s719 + $0xb90] sm:$0xff]
                  %1092 = vst [vmem:[%s720 + $0x5c8] sm:$0xff] %v1091
                  %v1093 = vld [vmem:[%s719 + $0xba0] sm:$0xff]
                  %1094 = vst [vmem:[%s720 + $0x5d0] sm:$0xff] %v1093
                  %v1095 = vld [vmem:[%s719 + $0xbb0] sm:$0xff]
                  %1096 = vst [vmem:[%s720 + $0x5d8] sm:$0xff] %v1095
                  %v1097 = vld [vmem:[%s719 + $0xbc0] sm:$0xff]
                  %1098 = vst [vmem:[%s720 + $0x5e0] sm:$0xff] %v1097
                  %v1099 = vld [vmem:[%s719 + $0xbd0] sm:$0xff]
                  %1100 = vst [vmem:[%s720 + $0x5e8] sm:$0xff] %v1099
                  %v1101 = vld [vmem:[%s719 + $0xbe0] sm:$0xff]
                  %1102 = vst [vmem:[%s720 + $0x5f0] sm:$0xff] %v1101
                  %v1103 = vld [vmem:[%s719 + $0xbf0] sm:$0xff]
                  %1104 = vst [vmem:[%s720 + $0x5f8] sm:$0xff] %v1103
                  %v1105 = vld [vmem:[%s719 + $0xc00] sm:$0xff]
                  %1106 = vst [vmem:[%s720 + $0x600] sm:$0xff] %v1105
                  %v1107 = vld [vmem:[%s719 + $0xc10] sm:$0xff]
                  %1108 = vst [vmem:[%s720 + $0x608] sm:$0xff] %v1107
                  %v1109 = vld [vmem:[%s719 + $0xc20] sm:$0xff]
                  %1110 = vst [vmem:[%s720 + $0x610] sm:$0xff] %v1109
                  %v1111 = vld [vmem:[%s719 + $0xc30] sm:$0xff]
                  %1112 = vst [vmem:[%s720 + $0x618] sm:$0xff] %v1111
                  %v1113 = vld [vmem:[%s719 + $0xc40] sm:$0xff]
                  %1114 = vst [vmem:[%s720 + $0x620] sm:$0xff] %v1113
                  %v1115 = vld [vmem:[%s719 + $0xc50] sm:$0xff]
                  %1116 = vst [vmem:[%s720 + $0x628] sm:$0xff] %v1115
                  %v1117 = vld [vmem:[%s719 + $0xc60] sm:$0xff]
                  %1118 = vst [vmem:[%s720 + $0x630] sm:$0xff] %v1117
                  %v1119 = vld [vmem:[%s719 + $0xc70] sm:$0xff]
                  %1120 = vst [vmem:[%s720 + $0x638] sm:$0xff] %v1119
                  %v1121 = vld [vmem:[%s719 + $0xc80] sm:$0xff]
                  %1122 = vst [vmem:[%s720 + $0x640] sm:$0xff] %v1121
                  %v1123 = vld [vmem:[%s719 + $0xc90] sm:$0xff]
                  %1124 = vst [vmem:[%s720 + $0x648] sm:$0xff] %v1123
                  %v1125 = vld [vmem:[%s719 + $0xca0] sm:$0xff]
                  %1126 = vst [vmem:[%s720 + $0x650] sm:$0xff] %v1125
                  %v1127 = vld [vmem:[%s719 + $0xcb0] sm:$0xff]
                  %1128 = vst [vmem:[%s720 + $0x658] sm:$0xff] %v1127
                  %v1129 = vld [vmem:[%s719 + $0xcc0] sm:$0xff]
                  %1130 = vst [vmem:[%s720 + $0x660] sm:$0xff] %v1129
                  %v1131 = vld [vmem:[%s719 + $0xcd0] sm:$0xff]
                  %1132 = vst [vmem:[%s720 + $0x668] sm:$0xff] %v1131
                  %v1133 = vld [vmem:[%s719 + $0xce0] sm:$0xff]
                  %1134 = vst [vmem:[%s720 + $0x670] sm:$0xff] %v1133
                  %v1135 = vld [vmem:[%s719 + $0xcf0] sm:$0xff]
                  %1136 = vst [vmem:[%s720 + $0x678] sm:$0xff] %v1135
                  %v1137 = vld [vmem:[%s719 + $0xd00] sm:$0xff]
                  %1138 = vst [vmem:[%s720 + $0x680] sm:$0xff] %v1137
                  %v1139 = vld [vmem:[%s719 + $0xd10] sm:$0xff]
                  %1140 = vst [vmem:[%s720 + $0x688] sm:$0xff] %v1139
                  %v1141 = vld [vmem:[%s719 + $0xd20] sm:$0xff]
                  %1142 = vst [vmem:[%s720 + $0x690] sm:$0xff] %v1141
                  %v1143 = vld [vmem:[%s719 + $0xd30] sm:$0xff]
                  %1144 = vst [vmem:[%s720 + $0x698] sm:$0xff] %v1143
                  %v1145 = vld [vmem:[%s719 + $0xd40] sm:$0xff]
                  %1146 = vst [vmem:[%s720 + $0x6a0] sm:$0xff] %v1145
                  %v1147 = vld [vmem:[%s719 + $0xd50] sm:$0xff]
                  %1148 = vst [vmem:[%s720 + $0x6a8] sm:$0xff] %v1147
                  %v1149 = vld [vmem:[%s719 + $0xd60] sm:$0xff]
                  %1150 = vst [vmem:[%s720 + $0x6b0] sm:$0xff] %v1149
                  %v1151 = vld [vmem:[%s719 + $0xd70] sm:$0xff]
                  %1152 = vst [vmem:[%s720 + $0x6b8] sm:$0xff] %v1151
                  %v1153 = vld [vmem:[%s719 + $0xd80] sm:$0xff]
                  %1154 = vst [vmem:[%s720 + $0x6c0] sm:$0xff] %v1153
                  %v1155 = vld [vmem:[%s719 + $0xd90] sm:$0xff]
                  %1156 = vst [vmem:[%s720 + $0x6c8] sm:$0xff] %v1155
                  %v1157 = vld [vmem:[%s719 + $0xda0] sm:$0xff]
                  %1158 = vst [vmem:[%s720 + $0x6d0] sm:$0xff] %v1157
                  %v1159 = vld [vmem:[%s719 + $0xdb0] sm:$0xff]
                  %1160 = vst [vmem:[%s720 + $0x6d8] sm:$0xff] %v1159
                  %v1161 = vld [vmem:[%s719 + $0xdc0] sm:$0xff]
                  %1162 = vst [vmem:[%s720 + $0x6e0] sm:$0xff] %v1161
                  %v1163 = vld [vmem:[%s719 + $0xdd0] sm:$0xff]
                  %1164 = vst [vmem:[%s720 + $0x6e8] sm:$0xff] %v1163
                  %v1165 = vld [vmem:[%s719 + $0xde0] sm:$0xff]
                  %1166 = vst [vmem:[%s720 + $0x6f0] sm:$0xff] %v1165
                  %v1167 = vld [vmem:[%s719 + $0xdf0] sm:$0xff]
                  %1168 = vst [vmem:[%s720 + $0x6f8] sm:$0xff] %v1167
                  %v1169 = vld [vmem:[%s719 + $0xe00] sm:$0xff]
                  %1170 = vst [vmem:[%s720 + $0x700] sm:$0xff] %v1169
                  %v1171 = vld [vmem:[%s719 + $0xe10] sm:$0xff]
                  %1172 = vst [vmem:[%s720 + $0x708] sm:$0xff] %v1171
                  %v1173 = vld [vmem:[%s719 + $0xe20] sm:$0xff]
                  %1174 = vst [vmem:[%s720 + $0x710] sm:$0xff] %v1173
                  %v1175 = vld [vmem:[%s719 + $0xe30] sm:$0xff]
                  %1176 = vst [vmem:[%s720 + $0x718] sm:$0xff] %v1175
                  %v1177 = vld [vmem:[%s719 + $0xe40] sm:$0xff]
                  %1178 = vst [vmem:[%s720 + $0x720] sm:$0xff] %v1177
                  %v1179 = vld [vmem:[%s719 + $0xe50] sm:$0xff]
                  %1180 = vst [vmem:[%s720 + $0x728] sm:$0xff] %v1179
                  %v1181 = vld [vmem:[%s719 + $0xe60] sm:$0xff]
                  %1182 = vst [vmem:[%s720 + $0x730] sm:$0xff] %v1181
                  %v1183 = vld [vmem:[%s719 + $0xe70] sm:$0xff]
                  %1184 = vst [vmem:[%s720 + $0x738] sm:$0xff] %v1183
                  %v1185 = vld [vmem:[%s719 + $0xe80] sm:$0xff]
                  %1186 = vst [vmem:[%s720 + $0x740] sm:$0xff] %v1185
                  %v1187 = vld [vmem:[%s719 + $0xe90] sm:$0xff]
                  %1188 = vst [vmem:[%s720 + $0x748] sm:$0xff] %v1187
                  %v1189 = vld [vmem:[%s719 + $0xea0] sm:$0xff]
                  %1190 = vst [vmem:[%s720 + $0x750] sm:$0xff] %v1189
                  %v1191 = vld [vmem:[%s719 + $0xeb0] sm:$0xff]
                  %1192 = vst [vmem:[%s720 + $0x758] sm:$0xff] %v1191
                  %v1193 = vld [vmem:[%s719 + $0xec0] sm:$0xff]
                  %1194 = vst [vmem:[%s720 + $0x760] sm:$0xff] %v1193
                  %v1195 = vld [vmem:[%s719 + $0xed0] sm:$0xff]
                  %1196 = vst [vmem:[%s720 + $0x768] sm:$0xff] %v1195
                  %v1197 = vld [vmem:[%s719 + $0xee0] sm:$0xff]
                  %1198 = vst [vmem:[%s720 + $0x770] sm:$0xff] %v1197
                  %v1199 = vld [vmem:[%s719 + $0xef0] sm:$0xff]
                  %1200 = vst [vmem:[%s720 + $0x778] sm:$0xff] %v1199
                  %v1201 = vld [vmem:[%s719 + $0xf00] sm:$0xff]
                  %1202 = vst [vmem:[%s720 + $0x780] sm:$0xff] %v1201
                  %v1203 = vld [vmem:[%s719 + $0xf10] sm:$0xff]
                  %1204 = vst [vmem:[%s720 + $0x788] sm:$0xff] %v1203
                  %v1205 = vld [vmem:[%s719 + $0xf20] sm:$0xff]
                  %1206 = vst [vmem:[%s720 + $0x790] sm:$0xff] %v1205
                  %v1207 = vld [vmem:[%s719 + $0xf30] sm:$0xff]
                  %1208 = vst [vmem:[%s720 + $0x798] sm:$0xff] %v1207
                  %v1209 = vld [vmem:[%s719 + $0xf40] sm:$0xff]
                  %1210 = vst [vmem:[%s720 + $0x7a0] sm:$0xff] %v1209
                  %v1211 = vld [vmem:[%s719 + $0xf50] sm:$0xff]
                  %1212 = vst [vmem:[%s720 + $0x7a8] sm:$0xff] %v1211
                  %v1213 = vld [vmem:[%s719 + $0xf60] sm:$0xff]
                  %1214 = vst [vmem:[%s720 + $0x7b0] sm:$0xff] %v1213
                  %v1215 = vld [vmem:[%s719 + $0xf70] sm:$0xff]
                  %1216 = vst [vmem:[%s720 + $0x7b8] sm:$0xff] %v1215
                  %v1217 = vld [vmem:[%s719 + $0xf80] sm:$0xff]
                  %1218 = vst [vmem:[%s720 + $0x7c0] sm:$0xff] %v1217
                  %v1219 = vld [vmem:[%s719 + $0xf90] sm:$0xff]
                  %1220 = vst [vmem:[%s720 + $0x7c8] sm:$0xff] %v1219
                  %v1221 = vld [vmem:[%s719 + $0xfa0] sm:$0xff]
                  %1222 = vst [vmem:[%s720 + $0x7d0] sm:$0xff] %v1221
                  %v1223 = vld [vmem:[%s719 + $0xfb0] sm:$0xff]
                  %1224 = vst [vmem:[%s720 + $0x7d8] sm:$0xff] %v1223
                  %v1225 = vld [vmem:[%s719 + $0xfc0] sm:$0xff]
                  %1226 = vst [vmem:[%s720 + $0x7e0] sm:$0xff] %v1225
                  %v1227 = vld [vmem:[%s719 + $0xfd0] sm:$0xff]
                  %1228 = vst [vmem:[%s720 + $0x7e8] sm:$0xff] %v1227
                  %v1229 = vld [vmem:[%s719 + $0xfe0] sm:$0xff]
                  %1230 = vst [vmem:[%s720 + $0x7f0] sm:$0xff] %v1229
                  %v1231 = vld [vmem:[%s719 + $0xff0] sm:$0xff]
                  %1232 = vst [vmem:[%s720 + $0x7f8] sm:$0xff] %v1231
                $region52: #{discriminator_forward.8} parent=46 // loop_footer
                  %s718 = sadd.s32 1, %s714
                $region53: #{discriminator_forward.8} parent=46 // loop_footer_branch
                  %713 = sbr.rel target = $region49
                $region54: #{discriminator_forward.8} parent=46 // loop_exit
                  _
              $region47: #{discriminator_forward.8} parent=31 // pred_fallthru
                _
              // Predicated region
              $region55: #{discriminator_forward.8} parent=31 // pred_check
                _
              $region56: #{discriminator_forward.8} parent=31 // pred_check_branch
                %1234 = sbr.rel target = $region58
              $region57: #{discriminator_forward.8} parent=31 // pred_region
                _
              $region58: #{discriminator_forward.8} parent=31 // pred_fallthru
                _
            $region32: #{discriminator_forward.8} parent=27 // pred_fallthru
              _
            // Predicated region
            $region33: #{discriminator_forward.8} parent=27 // pred_check
              _
            $region34: #{discriminator_forward.8} parent=27 // pred_check_branch
              %188 = sbr.rel target = $region36
            $region35: #{discriminator_forward.8} parent=27 // pred_region
              %s190 = ssub.s32 256, 1
              loop: start=0, step=1, limit=1
              $region37: #{discriminator_forward.8} parent=35 // loop_pre_header
                _
              $region38: #{discriminator_forward.8} parent=35 // loop_header
                %s192 = sphi 0, %s196
                %p193 = scmp.ge.s32.totalorder %s192, 1
                %s197 = sphi %s182, %s182
                %s198 = sphi %s176, %s176
              $region39: #{discriminator_forward.8} parent=35 // loop_header_branch
                %195 = sbr.rel (%p193) target = $region43
              $region40: #{discriminator_forward.8} parent=35 // loop_body
                %v199 = vld [vmem:[%s197] sm:%s190]
                %200 = vst [vmem:[%s198] sm:%s190] %v199
                %v201 = vld [vmem:[%s197 + $0x10] sm:%s190]
                %202 = vst [vmem:[%s198 + $0x8] sm:%s190] %v201
                %v203 = vld [vmem:[%s197 + $0x20] sm:%s190]
                %204 = vst [vmem:[%s198 + $0x10] sm:%s190] %v203
                %v205 = vld [vmem:[%s197 + $0x30] sm:%s190]
                %206 = vst [vmem:[%s198 + $0x18] sm:%s190] %v205
                %v207 = vld [vmem:[%s197 + $0x40] sm:%s190]
                %208 = vst [vmem:[%s198 + $0x20] sm:%s190] %v207
                %v209 = vld [vmem:[%s197 + $0x50] sm:%s190]
                %210 = vst [vmem:[%s198 + $0x28] sm:%s190] %v209
                %v211 = vld [vmem:[%s197 + $0x60] sm:%s190]
                %212 = vst [vmem:[%s198 + $0x30] sm:%s190] %v211
                %v213 = vld [vmem:[%s197 + $0x70] sm:%s190]
                %214 = vst [vmem:[%s198 + $0x38] sm:%s190] %v213
                %v215 = vld [vmem:[%s197 + $0x80] sm:%s190]
                %216 = vst [vmem:[%s198 + $0x40] sm:%s190] %v215
                %v217 = vld [vmem:[%s197 + $0x90] sm:%s190]
                %218 = vst [vmem:[%s198 + $0x48] sm:%s190] %v217
                %v219 = vld [vmem:[%s197 + $0xa0] sm:%s190]
                %220 = vst [vmem:[%s198 + $0x50] sm:%s190] %v219
                %v221 = vld [vmem:[%s197 + $0xb0] sm:%s190]
                %222 = vst [vmem:[%s198 + $0x58] sm:%s190] %v221
                %v223 = vld [vmem:[%s197 + $0xc0] sm:%s190]
                %224 = vst [vmem:[%s198 + $0x60] sm:%s190] %v223
                %v225 = vld [vmem:[%s197 + $0xd0] sm:%s190]
                %226 = vst [vmem:[%s198 + $0x68] sm:%s190] %v225
                %v227 = vld [vmem:[%s197 + $0xe0] sm:%s190]
                %228 = vst [vmem:[%s198 + $0x70] sm:%s190] %v227
                %v229 = vld [vmem:[%s197 + $0xf0] sm:%s190]
                %230 = vst [vmem:[%s198 + $0x78] sm:%s190] %v229
                %v231 = vld [vmem:[%s197 + $0x100] sm:%s190]
                %232 = vst [vmem:[%s198 + $0x80] sm:%s190] %v231
                %v233 = vld [vmem:[%s197 + $0x110] sm:%s190]
                %234 = vst [vmem:[%s198 + $0x88] sm:%s190] %v233
                %v235 = vld [vmem:[%s197 + $0x120] sm:%s190]
                %236 = vst [vmem:[%s198 + $0x90] sm:%s190] %v235
                %v237 = vld [vmem:[%s197 + $0x130] sm:%s190]
                %238 = vst [vmem:[%s198 + $0x98] sm:%s190] %v237
                %v239 = vld [vmem:[%s197 + $0x140] sm:%s190]
                %240 = vst [vmem:[%s198 + $0xa0] sm:%s190] %v239
                %v241 = vld [vmem:[%s197 + $0x150] sm:%s190]
                %242 = vst [vmem:[%s198 + $0xa8] sm:%s190] %v241
                %v243 = vld [vmem:[%s197 + $0x160] sm:%s190]
                %244 = vst [vmem:[%s198 + $0xb0] sm:%s190] %v243
                %v245 = vld [vmem:[%s197 + $0x170] sm:%s190]
                %246 = vst [vmem:[%s198 + $0xb8] sm:%s190] %v245
                %v247 = vld [vmem:[%s197 + $0x180] sm:%s190]
                %248 = vst [vmem:[%s198 + $0xc0] sm:%s190] %v247
                %v249 = vld [vmem:[%s197 + $0x190] sm:%s190]
                %250 = vst [vmem:[%s198 + $0xc8] sm:%s190] %v249
                %v251 = vld [vmem:[%s197 + $0x1a0] sm:%s190]
                %252 = vst [vmem:[%s198 + $0xd0] sm:%s190] %v251
                %v253 = vld [vmem:[%s197 + $0x1b0] sm:%s190]
                %254 = vst [vmem:[%s198 + $0xd8] sm:%s190] %v253
                %v255 = vld [vmem:[%s197 + $0x1c0] sm:%s190]
                %256 = vst [vmem:[%s198 + $0xe0] sm:%s190] %v255
                %v257 = vld [vmem:[%s197 + $0x1d0] sm:%s190]
                %258 = vst [vmem:[%s198 + $0xe8] sm:%s190] %v257
                %v259 = vld [vmem:[%s197 + $0x1e0] sm:%s190]
                %260 = vst [vmem:[%s198 + $0xf0] sm:%s190] %v259
                %v261 = vld [vmem:[%s197 + $0x1f0] sm:%s190]
                %262 = vst [vmem:[%s198 + $0xf8] sm:%s190] %v261
                %v263 = vld [vmem:[%s197 + $0x200] sm:%s190]
                %264 = vst [vmem:[%s198 + $0x100] sm:%s190] %v263
                %v265 = vld [vmem:[%s197 + $0x210] sm:%s190]
                %266 = vst [vmem:[%s198 + $0x108] sm:%s190] %v265
                %v267 = vld [vmem:[%s197 + $0x220] sm:%s190]
                %268 = vst [vmem:[%s198 + $0x110] sm:%s190] %v267
                %v269 = vld [vmem:[%s197 + $0x230] sm:%s190]
                %270 = vst [vmem:[%s198 + $0x118] sm:%s190] %v269
                %v271 = vld [vmem:[%s197 + $0x240] sm:%s190]
                %272 = vst [vmem:[%s198 + $0x120] sm:%s190] %v271
                %v273 = vld [vmem:[%s197 + $0x250] sm:%s190]
                %274 = vst [vmem:[%s198 + $0x128] sm:%s190] %v273
                %v275 = vld [vmem:[%s197 + $0x260] sm:%s190]
                %276 = vst [vmem:[%s198 + $0x130] sm:%s190] %v275
                %v277 = vld [vmem:[%s197 + $0x270] sm:%s190]
                %278 = vst [vmem:[%s198 + $0x138] sm:%s190] %v277
                %v279 = vld [vmem:[%s197 + $0x280] sm:%s190]
                %280 = vst [vmem:[%s198 + $0x140] sm:%s190] %v279
                %v281 = vld [vmem:[%s197 + $0x290] sm:%s190]
                %282 = vst [vmem:[%s198 + $0x148] sm:%s190] %v281
                %v283 = vld [vmem:[%s197 + $0x2a0] sm:%s190]
                %284 = vst [vmem:[%s198 + $0x150] sm:%s190] %v283
                %v285 = vld [vmem:[%s197 + $0x2b0] sm:%s190]
                %286 = vst [vmem:[%s198 + $0x158] sm:%s190] %v285
                %v287 = vld [vmem:[%s197 + $0x2c0] sm:%s190]
                %288 = vst [vmem:[%s198 + $0x160] sm:%s190] %v287
                %v289 = vld [vmem:[%s197 + $0x2d0] sm:%s190]
                %290 = vst [vmem:[%s198 + $0x168] sm:%s190] %v289
                %v291 = vld [vmem:[%s197 + $0x2e0] sm:%s190]
                %292 = vst [vmem:[%s198 + $0x170] sm:%s190] %v291
                %v293 = vld [vmem:[%s197 + $0x2f0] sm:%s190]
                %294 = vst [vmem:[%s198 + $0x178] sm:%s190] %v293
                %v295 = vld [vmem:[%s197 + $0x300] sm:%s190]
                %296 = vst [vmem:[%s198 + $0x180] sm:%s190] %v295
                %v297 = vld [vmem:[%s197 + $0x310] sm:%s190]
                %298 = vst [vmem:[%s198 + $0x188] sm:%s190] %v297
                %v299 = vld [vmem:[%s197 + $0x320] sm:%s190]
                %300 = vst [vmem:[%s198 + $0x190] sm:%s190] %v299
                %v301 = vld [vmem:[%s197 + $0x330] sm:%s190]
                %302 = vst [vmem:[%s198 + $0x198] sm:%s190] %v301
                %v303 = vld [vmem:[%s197 + $0x340] sm:%s190]
                %304 = vst [vmem:[%s198 + $0x1a0] sm:%s190] %v303
                %v305 = vld [vmem:[%s197 + $0x350] sm:%s190]
                %306 = vst [vmem:[%s198 + $0x1a8] sm:%s190] %v305
                %v307 = vld [vmem:[%s197 + $0x360] sm:%s190]
                %308 = vst [vmem:[%s198 + $0x1b0] sm:%s190] %v307
                %v309 = vld [vmem:[%s197 + $0x370] sm:%s190]
                %310 = vst [vmem:[%s198 + $0x1b8] sm:%s190] %v309
                %v311 = vld [vmem:[%s197 + $0x380] sm:%s190]
                %312 = vst [vmem:[%s198 + $0x1c0] sm:%s190] %v311
                %v313 = vld [vmem:[%s197 + $0x390] sm:%s190]
                %314 = vst [vmem:[%s198 + $0x1c8] sm:%s190] %v313
                %v315 = vld [vmem:[%s197 + $0x3a0] sm:%s190]
                %316 = vst [vmem:[%s198 + $0x1d0] sm:%s190] %v315
                %v317 = vld [vmem:[%s197 + $0x3b0] sm:%s190]
                %318 = vst [vmem:[%s198 + $0x1d8] sm:%s190] %v317
                %v319 = vld [vmem:[%s197 + $0x3c0] sm:%s190]
                %320 = vst [vmem:[%s198 + $0x1e0] sm:%s190] %v319
                %v321 = vld [vmem:[%s197 + $0x3d0] sm:%s190]
                %322 = vst [vmem:[%s198 + $0x1e8] sm:%s190] %v321
                %v323 = vld [vmem:[%s197 + $0x3e0] sm:%s190]
                %324 = vst [vmem:[%s198 + $0x1f0] sm:%s190] %v323
                %v325 = vld [vmem:[%s197 + $0x3f0] sm:%s190]
                %326 = vst [vmem:[%s198 + $0x1f8] sm:%s190] %v325
                %v327 = vld [vmem:[%s197 + $0x400] sm:%s190]
                %328 = vst [vmem:[%s198 + $0x200] sm:%s190] %v327
                %v329 = vld [vmem:[%s197 + $0x410] sm:%s190]
                %330 = vst [vmem:[%s198 + $0x208] sm:%s190] %v329
                %v331 = vld [vmem:[%s197 + $0x420] sm:%s190]
                %332 = vst [vmem:[%s198 + $0x210] sm:%s190] %v331
                %v333 = vld [vmem:[%s197 + $0x430] sm:%s190]
                %334 = vst [vmem:[%s198 + $0x218] sm:%s190] %v333
                %v335 = vld [vmem:[%s197 + $0x440] sm:%s190]
                %336 = vst [vmem:[%s198 + $0x220] sm:%s190] %v335
                %v337 = vld [vmem:[%s197 + $0x450] sm:%s190]
                %338 = vst [vmem:[%s198 + $0x228] sm:%s190] %v337
                %v339 = vld [vmem:[%s197 + $0x460] sm:%s190]
                %340 = vst [vmem:[%s198 + $0x230] sm:%s190] %v339
                %v341 = vld [vmem:[%s197 + $0x470] sm:%s190]
                %342 = vst [vmem:[%s198 + $0x238] sm:%s190] %v341
                %v343 = vld [vmem:[%s197 + $0x480] sm:%s190]
                %344 = vst [vmem:[%s198 + $0x240] sm:%s190] %v343
                %v345 = vld [vmem:[%s197 + $0x490] sm:%s190]
                %346 = vst [vmem:[%s198 + $0x248] sm:%s190] %v345
                %v347 = vld [vmem:[%s197 + $0x4a0] sm:%s190]
                %348 = vst [vmem:[%s198 + $0x250] sm:%s190] %v347
                %v349 = vld [vmem:[%s197 + $0x4b0] sm:%s190]
                %350 = vst [vmem:[%s198 + $0x258] sm:%s190] %v349
                %v351 = vld [vmem:[%s197 + $0x4c0] sm:%s190]
                %352 = vst [vmem:[%s198 + $0x260] sm:%s190] %v351
                %v353 = vld [vmem:[%s197 + $0x4d0] sm:%s190]
                %354 = vst [vmem:[%s198 + $0x268] sm:%s190] %v353
                %v355 = vld [vmem:[%s197 + $0x4e0] sm:%s190]
                %356 = vst [vmem:[%s198 + $0x270] sm:%s190] %v355
                %v357 = vld [vmem:[%s197 + $0x4f0] sm:%s190]
                %358 = vst [vmem:[%s198 + $0x278] sm:%s190] %v357
                %v359 = vld [vmem:[%s197 + $0x500] sm:%s190]
                %360 = vst [vmem:[%s198 + $0x280] sm:%s190] %v359
                %v361 = vld [vmem:[%s197 + $0x510] sm:%s190]
                %362 = vst [vmem:[%s198 + $0x288] sm:%s190] %v361
                %v363 = vld [vmem:[%s197 + $0x520] sm:%s190]
                %364 = vst [vmem:[%s198 + $0x290] sm:%s190] %v363
                %v365 = vld [vmem:[%s197 + $0x530] sm:%s190]
                %366 = vst [vmem:[%s198 + $0x298] sm:%s190] %v365
                %v367 = vld [vmem:[%s197 + $0x540] sm:%s190]
                %368 = vst [vmem:[%s198 + $0x2a0] sm:%s190] %v367
                %v369 = vld [vmem:[%s197 + $0x550] sm:%s190]
                %370 = vst [vmem:[%s198 + $0x2a8] sm:%s190] %v369
                %v371 = vld [vmem:[%s197 + $0x560] sm:%s190]
                %372 = vst [vmem:[%s198 + $0x2b0] sm:%s190] %v371
                %v373 = vld [vmem:[%s197 + $0x570] sm:%s190]
                %374 = vst [vmem:[%s198 + $0x2b8] sm:%s190] %v373
                %v375 = vld [vmem:[%s197 + $0x580] sm:%s190]
                %376 = vst [vmem:[%s198 + $0x2c0] sm:%s190] %v375
                %v377 = vld [vmem:[%s197 + $0x590] sm:%s190]
                %378 = vst [vmem:[%s198 + $0x2c8] sm:%s190] %v377
                %v379 = vld [vmem:[%s197 + $0x5a0] sm:%s190]
                %380 = vst [vmem:[%s198 + $0x2d0] sm:%s190] %v379
                %v381 = vld [vmem:[%s197 + $0x5b0] sm:%s190]
                %382 = vst [vmem:[%s198 + $0x2d8] sm:%s190] %v381
                %v383 = vld [vmem:[%s197 + $0x5c0] sm:%s190]
                %384 = vst [vmem:[%s198 + $0x2e0] sm:%s190] %v383
                %v385 = vld [vmem:[%s197 + $0x5d0] sm:%s190]
                %386 = vst [vmem:[%s198 + $0x2e8] sm:%s190] %v385
                %v387 = vld [vmem:[%s197 + $0x5e0] sm:%s190]
                %388 = vst [vmem:[%s198 + $0x2f0] sm:%s190] %v387
                %v389 = vld [vmem:[%s197 + $0x5f0] sm:%s190]
                %390 = vst [vmem:[%s198 + $0x2f8] sm:%s190] %v389
                %v391 = vld [vmem:[%s197 + $0x600] sm:%s190]
                %392 = vst [vmem:[%s198 + $0x300] sm:%s190] %v391
                %v393 = vld [vmem:[%s197 + $0x610] sm:%s190]
                %394 = vst [vmem:[%s198 + $0x308] sm:%s190] %v393
                %v395 = vld [vmem:[%s197 + $0x620] sm:%s190]
                %396 = vst [vmem:[%s198 + $0x310] sm:%s190] %v395
                %v397 = vld [vmem:[%s197 + $0x630] sm:%s190]
                %398 = vst [vmem:[%s198 + $0x318] sm:%s190] %v397
                %v399 = vld [vmem:[%s197 + $0x640] sm:%s190]
                %400 = vst [vmem:[%s198 + $0x320] sm:%s190] %v399
                %v401 = vld [vmem:[%s197 + $0x650] sm:%s190]
                %402 = vst [vmem:[%s198 + $0x328] sm:%s190] %v401
                %v403 = vld [vmem:[%s197 + $0x660] sm:%s190]
                %404 = vst [vmem:[%s198 + $0x330] sm:%s190] %v403
                %v405 = vld [vmem:[%s197 + $0x670] sm:%s190]
                %406 = vst [vmem:[%s198 + $0x338] sm:%s190] %v405
                %v407 = vld [vmem:[%s197 + $0x680] sm:%s190]
                %408 = vst [vmem:[%s198 + $0x340] sm:%s190] %v407
                %v409 = vld [vmem:[%s197 + $0x690] sm:%s190]
                %410 = vst [vmem:[%s198 + $0x348] sm:%s190] %v409
                %v411 = vld [vmem:[%s197 + $0x6a0] sm:%s190]
                %412 = vst [vmem:[%s198 + $0x350] sm:%s190] %v411
                %v413 = vld [vmem:[%s197 + $0x6b0] sm:%s190]
                %414 = vst [vmem:[%s198 + $0x358] sm:%s190] %v413
                %v415 = vld [vmem:[%s197 + $0x6c0] sm:%s190]
                %416 = vst [vmem:[%s198 + $0x360] sm:%s190] %v415
                %v417 = vld [vmem:[%s197 + $0x6d0] sm:%s190]
                %418 = vst [vmem:[%s198 + $0x368] sm:%s190] %v417
                %v419 = vld [vmem:[%s197 + $0x6e0] sm:%s190]
                %420 = vst [vmem:[%s198 + $0x370] sm:%s190] %v419
                %v421 = vld [vmem:[%s197 + $0x6f0] sm:%s190]
                %422 = vst [vmem:[%s198 + $0x378] sm:%s190] %v421
                %v423 = vld [vmem:[%s197 + $0x700] sm:%s190]
                %424 = vst [vmem:[%s198 + $0x380] sm:%s190] %v423
                %v425 = vld [vmem:[%s197 + $0x710] sm:%s190]
                %426 = vst [vmem:[%s198 + $0x388] sm:%s190] %v425
                %v427 = vld [vmem:[%s197 + $0x720] sm:%s190]
                %428 = vst [vmem:[%s198 + $0x390] sm:%s190] %v427
                %v429 = vld [vmem:[%s197 + $0x730] sm:%s190]
                %430 = vst [vmem:[%s198 + $0x398] sm:%s190] %v429
                %v431 = vld [vmem:[%s197 + $0x740] sm:%s190]
                %432 = vst [vmem:[%s198 + $0x3a0] sm:%s190] %v431
                %v433 = vld [vmem:[%s197 + $0x750] sm:%s190]
                %434 = vst [vmem:[%s198 + $0x3a8] sm:%s190] %v433
                %v435 = vld [vmem:[%s197 + $0x760] sm:%s190]
                %436 = vst [vmem:[%s198 + $0x3b0] sm:%s190] %v435
                %v437 = vld [vmem:[%s197 + $0x770] sm:%s190]
                %438 = vst [vmem:[%s198 + $0x3b8] sm:%s190] %v437
                %v439 = vld [vmem:[%s197 + $0x780] sm:%s190]
                %440 = vst [vmem:[%s198 + $0x3c0] sm:%s190] %v439
                %v441 = vld [vmem:[%s197 + $0x790] sm:%s190]
                %442 = vst [vmem:[%s198 + $0x3c8] sm:%s190] %v441
                %v443 = vld [vmem:[%s197 + $0x7a0] sm:%s190]
                %444 = vst [vmem:[%s198 + $0x3d0] sm:%s190] %v443
                %v445 = vld [vmem:[%s197 + $0x7b0] sm:%s190]
                %446 = vst [vmem:[%s198 + $0x3d8] sm:%s190] %v445
                %v447 = vld [vmem:[%s197 + $0x7c0] sm:%s190]
                %448 = vst [vmem:[%s198 + $0x3e0] sm:%s190] %v447
                %v449 = vld [vmem:[%s197 + $0x7d0] sm:%s190]
                %450 = vst [vmem:[%s198 + $0x3e8] sm:%s190] %v449
                %v451 = vld [vmem:[%s197 + $0x7e0] sm:%s190]
                %452 = vst [vmem:[%s198 + $0x3f0] sm:%s190] %v451
                %v453 = vld [vmem:[%s197 + $0x7f0] sm:%s190]
                %454 = vst [vmem:[%s198 + $0x3f8] sm:%s190] %v453
                %v455 = vld [vmem:[%s197 + $0x800] sm:%s190]
                %456 = vst [vmem:[%s198 + $0x400] sm:%s190] %v455
                %v457 = vld [vmem:[%s197 + $0x810] sm:%s190]
                %458 = vst [vmem:[%s198 + $0x408] sm:%s190] %v457
                %v459 = vld [vmem:[%s197 + $0x820] sm:%s190]
                %460 = vst [vmem:[%s198 + $0x410] sm:%s190] %v459
                %v461 = vld [vmem:[%s197 + $0x830] sm:%s190]
                %462 = vst [vmem:[%s198 + $0x418] sm:%s190] %v461
                %v463 = vld [vmem:[%s197 + $0x840] sm:%s190]
                %464 = vst [vmem:[%s198 + $0x420] sm:%s190] %v463
                %v465 = vld [vmem:[%s197 + $0x850] sm:%s190]
                %466 = vst [vmem:[%s198 + $0x428] sm:%s190] %v465
                %v467 = vld [vmem:[%s197 + $0x860] sm:%s190]
                %468 = vst [vmem:[%s198 + $0x430] sm:%s190] %v467
                %v469 = vld [vmem:[%s197 + $0x870] sm:%s190]
                %470 = vst [vmem:[%s198 + $0x438] sm:%s190] %v469
                %v471 = vld [vmem:[%s197 + $0x880] sm:%s190]
                %472 = vst [vmem:[%s198 + $0x440] sm:%s190] %v471
                %v473 = vld [vmem:[%s197 + $0x890] sm:%s190]
                %474 = vst [vmem:[%s198 + $0x448] sm:%s190] %v473
                %v475 = vld [vmem:[%s197 + $0x8a0] sm:%s190]
                %476 = vst [vmem:[%s198 + $0x450] sm:%s190] %v475
                %v477 = vld [vmem:[%s197 + $0x8b0] sm:%s190]
                %478 = vst [vmem:[%s198 + $0x458] sm:%s190] %v477
                %v479 = vld [vmem:[%s197 + $0x8c0] sm:%s190]
                %480 = vst [vmem:[%s198 + $0x460] sm:%s190] %v479
                %v481 = vld [vmem:[%s197 + $0x8d0] sm:%s190]
                %482 = vst [vmem:[%s198 + $0x468] sm:%s190] %v481
                %v483 = vld [vmem:[%s197 + $0x8e0] sm:%s190]
                %484 = vst [vmem:[%s198 + $0x470] sm:%s190] %v483
                %v485 = vld [vmem:[%s197 + $0x8f0] sm:%s190]
                %486 = vst [vmem:[%s198 + $0x478] sm:%s190] %v485
                %v487 = vld [vmem:[%s197 + $0x900] sm:%s190]
                %488 = vst [vmem:[%s198 + $0x480] sm:%s190] %v487
                %v489 = vld [vmem:[%s197 + $0x910] sm:%s190]
                %490 = vst [vmem:[%s198 + $0x488] sm:%s190] %v489
                %v491 = vld [vmem:[%s197 + $0x920] sm:%s190]
                %492 = vst [vmem:[%s198 + $0x490] sm:%s190] %v491
                %v493 = vld [vmem:[%s197 + $0x930] sm:%s190]
                %494 = vst [vmem:[%s198 + $0x498] sm:%s190] %v493
                %v495 = vld [vmem:[%s197 + $0x940] sm:%s190]
                %496 = vst [vmem:[%s198 + $0x4a0] sm:%s190] %v495
                %v497 = vld [vmem:[%s197 + $0x950] sm:%s190]
                %498 = vst [vmem:[%s198 + $0x4a8] sm:%s190] %v497
                %v499 = vld [vmem:[%s197 + $0x960] sm:%s190]
                %500 = vst [vmem:[%s198 + $0x4b0] sm:%s190] %v499
                %v501 = vld [vmem:[%s197 + $0x970] sm:%s190]
                %502 = vst [vmem:[%s198 + $0x4b8] sm:%s190] %v501
                %v503 = vld [vmem:[%s197 + $0x980] sm:%s190]
                %504 = vst [vmem:[%s198 + $0x4c0] sm:%s190] %v503
                %v505 = vld [vmem:[%s197 + $0x990] sm:%s190]
                %506 = vst [vmem:[%s198 + $0x4c8] sm:%s190] %v505
                %v507 = vld [vmem:[%s197 + $0x9a0] sm:%s190]
                %508 = vst [vmem:[%s198 + $0x4d0] sm:%s190] %v507
                %v509 = vld [vmem:[%s197 + $0x9b0] sm:%s190]
                %510 = vst [vmem:[%s198 + $0x4d8] sm:%s190] %v509
                %v511 = vld [vmem:[%s197 + $0x9c0] sm:%s190]
                %512 = vst [vmem:[%s198 + $0x4e0] sm:%s190] %v511
                %v513 = vld [vmem:[%s197 + $0x9d0] sm:%s190]
                %514 = vst [vmem:[%s198 + $0x4e8] sm:%s190] %v513
                %v515 = vld [vmem:[%s197 + $0x9e0] sm:%s190]
                %516 = vst [vmem:[%s198 + $0x4f0] sm:%s190] %v515
                %v517 = vld [vmem:[%s197 + $0x9f0] sm:%s190]
                %518 = vst [vmem:[%s198 + $0x4f8] sm:%s190] %v517
                %v519 = vld [vmem:[%s197 + $0xa00] sm:%s190]
                %520 = vst [vmem:[%s198 + $0x500] sm:%s190] %v519
                %v521 = vld [vmem:[%s197 + $0xa10] sm:%s190]
                %522 = vst [vmem:[%s198 + $0x508] sm:%s190] %v521
                %v523 = vld [vmem:[%s197 + $0xa20] sm:%s190]
                %524 = vst [vmem:[%s198 + $0x510] sm:%s190] %v523
                %v525 = vld [vmem:[%s197 + $0xa30] sm:%s190]
                %526 = vst [vmem:[%s198 + $0x518] sm:%s190] %v525
                %v527 = vld [vmem:[%s197 + $0xa40] sm:%s190]
                %528 = vst [vmem:[%s198 + $0x520] sm:%s190] %v527
                %v529 = vld [vmem:[%s197 + $0xa50] sm:%s190]
                %530 = vst [vmem:[%s198 + $0x528] sm:%s190] %v529
                %v531 = vld [vmem:[%s197 + $0xa60] sm:%s190]
                %532 = vst [vmem:[%s198 + $0x530] sm:%s190] %v531
                %v533 = vld [vmem:[%s197 + $0xa70] sm:%s190]
                %534 = vst [vmem:[%s198 + $0x538] sm:%s190] %v533
                %v535 = vld [vmem:[%s197 + $0xa80] sm:%s190]
                %536 = vst [vmem:[%s198 + $0x540] sm:%s190] %v535
                %v537 = vld [vmem:[%s197 + $0xa90] sm:%s190]
                %538 = vst [vmem:[%s198 + $0x548] sm:%s190] %v537
                %v539 = vld [vmem:[%s197 + $0xaa0] sm:%s190]
                %540 = vst [vmem:[%s198 + $0x550] sm:%s190] %v539
                %v541 = vld [vmem:[%s197 + $0xab0] sm:%s190]
                %542 = vst [vmem:[%s198 + $0x558] sm:%s190] %v541
                %v543 = vld [vmem:[%s197 + $0xac0] sm:%s190]
                %544 = vst [vmem:[%s198 + $0x560] sm:%s190] %v543
                %v545 = vld [vmem:[%s197 + $0xad0] sm:%s190]
                %546 = vst [vmem:[%s198 + $0x568] sm:%s190] %v545
                %v547 = vld [vmem:[%s197 + $0xae0] sm:%s190]
                %548 = vst [vmem:[%s198 + $0x570] sm:%s190] %v547
                %v549 = vld [vmem:[%s197 + $0xaf0] sm:%s190]
                %550 = vst [vmem:[%s198 + $0x578] sm:%s190] %v549
                %v551 = vld [vmem:[%s197 + $0xb00] sm:%s190]
                %552 = vst [vmem:[%s198 + $0x580] sm:%s190] %v551
                %v553 = vld [vmem:[%s197 + $0xb10] sm:%s190]
                %554 = vst [vmem:[%s198 + $0x588] sm:%s190] %v553
                %v555 = vld [vmem:[%s197 + $0xb20] sm:%s190]
                %556 = vst [vmem:[%s198 + $0x590] sm:%s190] %v555
                %v557 = vld [vmem:[%s197 + $0xb30] sm:%s190]
                %558 = vst [vmem:[%s198 + $0x598] sm:%s190] %v557
                %v559 = vld [vmem:[%s197 + $0xb40] sm:%s190]
                %560 = vst [vmem:[%s198 + $0x5a0] sm:%s190] %v559
                %v561 = vld [vmem:[%s197 + $0xb50] sm:%s190]
                %562 = vst [vmem:[%s198 + $0x5a8] sm:%s190] %v561
                %v563 = vld [vmem:[%s197 + $0xb60] sm:%s190]
                %564 = vst [vmem:[%s198 + $0x5b0] sm:%s190] %v563
                %v565 = vld [vmem:[%s197 + $0xb70] sm:%s190]
                %566 = vst [vmem:[%s198 + $0x5b8] sm:%s190] %v565
                %v567 = vld [vmem:[%s197 + $0xb80] sm:%s190]
                %568 = vst [vmem:[%s198 + $0x5c0] sm:%s190] %v567
                %v569 = vld [vmem:[%s197 + $0xb90] sm:%s190]
                %570 = vst [vmem:[%s198 + $0x5c8] sm:%s190] %v569
                %v571 = vld [vmem:[%s197 + $0xba0] sm:%s190]
                %572 = vst [vmem:[%s198 + $0x5d0] sm:%s190] %v571
                %v573 = vld [vmem:[%s197 + $0xbb0] sm:%s190]
                %574 = vst [vmem:[%s198 + $0x5d8] sm:%s190] %v573
                %v575 = vld [vmem:[%s197 + $0xbc0] sm:%s190]
                %576 = vst [vmem:[%s198 + $0x5e0] sm:%s190] %v575
                %v577 = vld [vmem:[%s197 + $0xbd0] sm:%s190]
                %578 = vst [vmem:[%s198 + $0x5e8] sm:%s190] %v577
                %v579 = vld [vmem:[%s197 + $0xbe0] sm:%s190]
                %580 = vst [vmem:[%s198 + $0x5f0] sm:%s190] %v579
                %v581 = vld [vmem:[%s197 + $0xbf0] sm:%s190]
                %582 = vst [vmem:[%s198 + $0x5f8] sm:%s190] %v581
                %v583 = vld [vmem:[%s197 + $0xc00] sm:%s190]
                %584 = vst [vmem:[%s198 + $0x600] sm:%s190] %v583
                %v585 = vld [vmem:[%s197 + $0xc10] sm:%s190]
                %586 = vst [vmem:[%s198 + $0x608] sm:%s190] %v585
                %v587 = vld [vmem:[%s197 + $0xc20] sm:%s190]
                %588 = vst [vmem:[%s198 + $0x610] sm:%s190] %v587
                %v589 = vld [vmem:[%s197 + $0xc30] sm:%s190]
                %590 = vst [vmem:[%s198 + $0x618] sm:%s190] %v589
                %v591 = vld [vmem:[%s197 + $0xc40] sm:%s190]
                %592 = vst [vmem:[%s198 + $0x620] sm:%s190] %v591
                %v593 = vld [vmem:[%s197 + $0xc50] sm:%s190]
                %594 = vst [vmem:[%s198 + $0x628] sm:%s190] %v593
                %v595 = vld [vmem:[%s197 + $0xc60] sm:%s190]
                %596 = vst [vmem:[%s198 + $0x630] sm:%s190] %v595
                %v597 = vld [vmem:[%s197 + $0xc70] sm:%s190]
                %598 = vst [vmem:[%s198 + $0x638] sm:%s190] %v597
                %v599 = vld [vmem:[%s197 + $0xc80] sm:%s190]
                %600 = vst [vmem:[%s198 + $0x640] sm:%s190] %v599
                %v601 = vld [vmem:[%s197 + $0xc90] sm:%s190]
                %602 = vst [vmem:[%s198 + $0x648] sm:%s190] %v601
                %v603 = vld [vmem:[%s197 + $0xca0] sm:%s190]
                %604 = vst [vmem:[%s198 + $0x650] sm:%s190] %v603
                %v605 = vld [vmem:[%s197 + $0xcb0] sm:%s190]
                %606 = vst [vmem:[%s198 + $0x658] sm:%s190] %v605
                %v607 = vld [vmem:[%s197 + $0xcc0] sm:%s190]
                %608 = vst [vmem:[%s198 + $0x660] sm:%s190] %v607
                %v609 = vld [vmem:[%s197 + $0xcd0] sm:%s190]
                %610 = vst [vmem:[%s198 + $0x668] sm:%s190] %v609
                %v611 = vld [vmem:[%s197 + $0xce0] sm:%s190]
                %612 = vst [vmem:[%s198 + $0x670] sm:%s190] %v611
                %v613 = vld [vmem:[%s197 + $0xcf0] sm:%s190]
                %614 = vst [vmem:[%s198 + $0x678] sm:%s190] %v613
                %v615 = vld [vmem:[%s197 + $0xd00] sm:%s190]
                %616 = vst [vmem:[%s198 + $0x680] sm:%s190] %v615
                %v617 = vld [vmem:[%s197 + $0xd10] sm:%s190]
                %618 = vst [vmem:[%s198 + $0x688] sm:%s190] %v617
                %v619 = vld [vmem:[%s197 + $0xd20] sm:%s190]
                %620 = vst [vmem:[%s198 + $0x690] sm:%s190] %v619
                %v621 = vld [vmem:[%s197 + $0xd30] sm:%s190]
                %622 = vst [vmem:[%s198 + $0x698] sm:%s190] %v621
                %v623 = vld [vmem:[%s197 + $0xd40] sm:%s190]
                %624 = vst [vmem:[%s198 + $0x6a0] sm:%s190] %v623
                %v625 = vld [vmem:[%s197 + $0xd50] sm:%s190]
                %626 = vst [vmem:[%s198 + $0x6a8] sm:%s190] %v625
                %v627 = vld [vmem:[%s197 + $0xd60] sm:%s190]
                %628 = vst [vmem:[%s198 + $0x6b0] sm:%s190] %v627
                %v629 = vld [vmem:[%s197 + $0xd70] sm:%s190]
                %630 = vst [vmem:[%s198 + $0x6b8] sm:%s190] %v629
                %v631 = vld [vmem:[%s197 + $0xd80] sm:%s190]
                %632 = vst [vmem:[%s198 + $0x6c0] sm:%s190] %v631
                %v633 = vld [vmem:[%s197 + $0xd90] sm:%s190]
                %634 = vst [vmem:[%s198 + $0x6c8] sm:%s190] %v633
                %v635 = vld [vmem:[%s197 + $0xda0] sm:%s190]
                %636 = vst [vmem:[%s198 + $0x6d0] sm:%s190] %v635
                %v637 = vld [vmem:[%s197 + $0xdb0] sm:%s190]
                %638 = vst [vmem:[%s198 + $0x6d8] sm:%s190] %v637
                %v639 = vld [vmem:[%s197 + $0xdc0] sm:%s190]
                %640 = vst [vmem:[%s198 + $0x6e0] sm:%s190] %v639
                %v641 = vld [vmem:[%s197 + $0xdd0] sm:%s190]
                %642 = vst [vmem:[%s198 + $0x6e8] sm:%s190] %v641
                %v643 = vld [vmem:[%s197 + $0xde0] sm:%s190]
                %644 = vst [vmem:[%s198 + $0x6f0] sm:%s190] %v643
                %v645 = vld [vmem:[%s197 + $0xdf0] sm:%s190]
                %646 = vst [vmem:[%s198 + $0x6f8] sm:%s190] %v645
                %v647 = vld [vmem:[%s197 + $0xe00] sm:%s190]
                %648 = vst [vmem:[%s198 + $0x700] sm:%s190] %v647
                %v649 = vld [vmem:[%s197 + $0xe10] sm:%s190]
                %650 = vst [vmem:[%s198 + $0x708] sm:%s190] %v649
                %v651 = vld [vmem:[%s197 + $0xe20] sm:%s190]
                %652 = vst [vmem:[%s198 + $0x710] sm:%s190] %v651
                %v653 = vld [vmem:[%s197 + $0xe30] sm:%s190]
                %654 = vst [vmem:[%s198 + $0x718] sm:%s190] %v653
                %v655 = vld [vmem:[%s197 + $0xe40] sm:%s190]
                %656 = vst [vmem:[%s198 + $0x720] sm:%s190] %v655
                %v657 = vld [vmem:[%s197 + $0xe50] sm:%s190]
                %658 = vst [vmem:[%s198 + $0x728] sm:%s190] %v657
                %v659 = vld [vmem:[%s197 + $0xe60] sm:%s190]
                %660 = vst [vmem:[%s198 + $0x730] sm:%s190] %v659
                %v661 = vld [vmem:[%s197 + $0xe70] sm:%s190]
                %662 = vst [vmem:[%s198 + $0x738] sm:%s190] %v661
                %v663 = vld [vmem:[%s197 + $0xe80] sm:%s190]
                %664 = vst [vmem:[%s198 + $0x740] sm:%s190] %v663
                %v665 = vld [vmem:[%s197 + $0xe90] sm:%s190]
                %666 = vst [vmem:[%s198 + $0x748] sm:%s190] %v665
                %v667 = vld [vmem:[%s197 + $0xea0] sm:%s190]
                %668 = vst [vmem:[%s198 + $0x750] sm:%s190] %v667
                %v669 = vld [vmem:[%s197 + $0xeb0] sm:%s190]
                %670 = vst [vmem:[%s198 + $0x758] sm:%s190] %v669
                %v671 = vld [vmem:[%s197 + $0xec0] sm:%s190]
                %672 = vst [vmem:[%s198 + $0x760] sm:%s190] %v671
                %v673 = vld [vmem:[%s197 + $0xed0] sm:%s190]
                %674 = vst [vmem:[%s198 + $0x768] sm:%s190] %v673
                %v675 = vld [vmem:[%s197 + $0xee0] sm:%s190]
                %676 = vst [vmem:[%s198 + $0x770] sm:%s190] %v675
                %v677 = vld [vmem:[%s197 + $0xef0] sm:%s190]
                %678 = vst [vmem:[%s198 + $0x778] sm:%s190] %v677
                %v679 = vld [vmem:[%s197 + $0xf00] sm:%s190]
                %680 = vst [vmem:[%s198 + $0x780] sm:%s190] %v679
                %v681 = vld [vmem:[%s197 + $0xf10] sm:%s190]
                %682 = vst [vmem:[%s198 + $0x788] sm:%s190] %v681
                %v683 = vld [vmem:[%s197 + $0xf20] sm:%s190]
                %684 = vst [vmem:[%s198 + $0x790] sm:%s190] %v683
                %v685 = vld [vmem:[%s197 + $0xf30] sm:%s190]
                %686 = vst [vmem:[%s198 + $0x798] sm:%s190] %v685
                %v687 = vld [vmem:[%s197 + $0xf40] sm:%s190]
                %688 = vst [vmem:[%s198 + $0x7a0] sm:%s190] %v687
                %v689 = vld [vmem:[%s197 + $0xf50] sm:%s190]
                %690 = vst [vmem:[%s198 + $0x7a8] sm:%s190] %v689
                %v691 = vld [vmem:[%s197 + $0xf60] sm:%s190]
                %692 = vst [vmem:[%s198 + $0x7b0] sm:%s190] %v691
                %v693 = vld [vmem:[%s197 + $0xf70] sm:%s190]
                %694 = vst [vmem:[%s198 + $0x7b8] sm:%s190] %v693
                %v695 = vld [vmem:[%s197 + $0xf80] sm:%s190]
                %696 = vst [vmem:[%s198 + $0x7c0] sm:%s190] %v695
                %v697 = vld [vmem:[%s197 + $0xf90] sm:%s190]
                %698 = vst [vmem:[%s198 + $0x7c8] sm:%s190] %v697
                %v699 = vld [vmem:[%s197 + $0xfa0] sm:%s190]
                %700 = vst [vmem:[%s198 + $0x7d0] sm:%s190] %v699
                %v701 = vld [vmem:[%s197 + $0xfb0] sm:%s190]
                %702 = vst [vmem:[%s198 + $0x7d8] sm:%s190] %v701
                %v703 = vld [vmem:[%s197 + $0xfc0] sm:%s190]
                %704 = vst [vmem:[%s198 + $0x7e0] sm:%s190] %v703
                %v705 = vld [vmem:[%s197 + $0xfd0] sm:%s190]
                %706 = vst [vmem:[%s198 + $0x7e8] sm:%s190] %v705
                %v707 = vld [vmem:[%s197 + $0xfe0] sm:%s190]
                %708 = vst [vmem:[%s198 + $0x7f0] sm:%s190] %v707
                %v709 = vld [vmem:[%s197 + $0xff0] sm:%s190]
                %710 = vst [vmem:[%s198 + $0x7f8] sm:%s190] %v709
              $region41: #{discriminator_forward.8} parent=35 // loop_footer
                %s196 = sadd.s32 1, %s192
              $region42: #{discriminator_forward.8} parent=35 // loop_footer_branch
                %191 = sbr.rel target = $region38
              $region43: #{discriminator_forward.8} parent=35 // loop_exit
                _
            $region36: #{discriminator_forward.8} parent=27 // pred_fallthru
              _
          $region28: #{discriminator_forward.8} parent=23 // pred_fallthru
            _
          %1235 = vnop
        $region24: #{discriminator_forward.8} parent=15 // pred_fallthru
          _
        // Predicated region
        $region59: #{discriminator_forward.8} parent=15 // pred_check
          %p1236 = pneg %p104
        $region60: #{discriminator_forward.8} parent=15 // pred_check_branch
          %1238 = sbr.rel (%p1236) target = $region62
        $region61: #{discriminator_forward.8} parent=15 // pred_region
          %s1239 = smul.u32 2, %s17
          %p1240 = scmp.lt.s32.totalorder %s1239, 3
          %s1241 = scalar_select %p1240, %s1239, 3
          %s1242 = scalar_lea.vmem %s2, %s1241
          %s1243 = smul.u32 2, %s17
        $region62: #{discriminator_forward.8} parent=15 // pred_fallthru
          _
      $region16: #{discriminator_forward.8} parent=5 // pred_fallthru
        _
      %p1244 = scmp.le.s32.totalorder 1, %s9
      %p1245 = scmp.lt.s32.totalorder %s9, 9
      %p1246 = pnand %p1244, %p1245
      %p1247 = pneg %p1246
      // Predicated region
      $region63: #{discriminator_forward.8} parent=5 // pred_check
        _
      $region64: #{discriminator_forward.8} parent=5 // pred_check_branch
        %1249 = sbr.rel (%p1246) target = $region66
      $region65: #{discriminator_forward.8} parent=5 // pred_region
        %s1250 = ssub.s32 %s9, 1
        %s1251 = sand.u32 %s71, 1
        %s1252 = sand.u32 %s71, 1
        %s1253 = smul.addr %s1252, 2048
        %s1254 = scalar_lea.vmem [#allocation3], %s1253
        // Predicated region
        $region67: #{discriminator_forward.8} parent=65 // pred_check
          %p1255 = pneg %p84
        $region68: #{discriminator_forward.8} parent=65 // pred_check_branch
          %1257 = sbr.rel (%p1255) target = $region70
        $region69: #{discriminator_forward.8} parent=65 // pred_region
          _
        $region70: #{discriminator_forward.8} parent=65 // pred_fallthru
          _
        %s1258 = smul.u32 16, %s21
        %p1259 = scmp.lt.s32.totalorder %s19, 1
        %s1260 = scalar_select %p1259, %s19, 1
        %p1261 = scmp.lt.s32.totalorder %s1258, 31
        %s1262 = scalar_select %p1261, %s1258, 31
        %s1263 = smul.addr %s1260, 32
        %s1264 = sadd.s32 %s1262, %s1263
        %s1265 = smul.addr %s1264, 2
        %s1266 = scalar_lea.vmem %s0, %s1265
        %p1267 = pneg %p56
        %p1268 = pneg %p53
        %s1269 = sand.u32 %s71, 1
        %s1270 = sand.u32 %s71, 1
        %s1271 = smul.addr %s1270, 2048
        %s1272 = scalar_lea.vmem [#allocation3], %s1271
        %p1273 = pneg %p84
        %p1274 = pneg %p81
        %s1275 = smul.u32 2, %s20
        %p1276 = scmp.lt.s32.totalorder %s1275, 3
        %s1277 = scalar_select %p1276, %s1275, 3
        %s1278 = scalar_lea.vmem %s2, %s1277
        %p1279 = pneg %p110
        %p1280 = pneg %p107
        %p1281 = pneg %p138
        %p1282 = pneg %p135
        %s1283 = smul.u32 2, %s20
        %p1284 = scmp.lt.s32.totalorder %s19, 1
        %s1285 = scalar_select %p1284, %s19, 1
        %p1286 = scmp.lt.s32.totalorder %s1283, 3
        %s1287 = scalar_select %p1286, %s1283, 3
        %s1288 = smul.addr %s1285, 4
        %s1289 = sadd.s32 %s1287, %s1288
        %s1290 = smul.addr %s1289, 2
        %s1291 = scalar_lea.vmem %s3, %s1290
        %s1292 = smul.u32 16, %s21
        %p1293 = scmp.lt.s32.totalorder %s19, 1
        %s1294 = scalar_select %p1293, %s19, 1
        %p1295 = scmp.lt.s32.totalorder %s1292, 31
        %s1296 = scalar_select %p1295, %s1292, 31
        %s1297 = smul.addr %s1294, 32
        %s1298 = sadd.s32 %s1296, %s1297
        %s1299 = smul.addr %s1298, 2
        %s1300 = scalar_lea.vmem %s0, %s1299
        %s1301 = smul.u32 16, %s21
        %s1302 = smul.u32 256, %s21
        %s1303 = smul.u32 2, %s20
        %s1304 = smul.u32 2, %s20
        %p1305 = scmp.lt.s32.totalorder %s1304, 3
        %s1306 = scalar_select %p1305, %s1304, 3
        %s1307 = scalar_lea.vmem %s2, %s1306
        %s1308 = smul.u32 2, %s20
        %s1309 = smul.u32 2, %s20
        %p1310 = scmp.lt.s32.totalorder %s19, 1
        %s1311 = scalar_select %p1310, %s19, 1
        %p1312 = scmp.lt.s32.totalorder %s1309, 3
        %s1313 = scalar_select %p1312, %s1309, 3
        %s1314 = smul.addr %s1311, 4
        %s1315 = sadd.s32 %s1313, %s1314
        %s1316 = smul.addr %s1315, 2
        %s1317 = scalar_lea.vmem %s3, %s1316
        %s1318 = smul.u32 2, %s20
        %p1319 = scmp.eq.s32.totalorder %s21, 0
        // Predicated region
        $region71: #{discriminator_forward.8} parent=65 // pred_check
          %p1320 = pneg %p1319
        $region72: #{discriminator_forward.8} parent=65 // pred_check_branch
          %1322 = sbr.rel (%p1320) target = $region74
        $region73: #{discriminator_forward.8} parent=65 // pred_region
          %1323 = vst [vmem:[#allocation2] sm:$0xff] 0.0
        $region74: #{discriminator_forward.8} parent=65 // pred_fallthru
          _
        %v1324 = vld [vmem:[#allocation2] sm:$0xff]
        %v1325 = vld [vmem:[%s1300] sm:$0xff]
        %v1326 = vld [vmem:[%s1300 + $0x8] sm:$0xff]
        %v1327 = vld [vmem:[%s1300 + $0x10] sm:$0xff]
        %v1328 = vld [vmem:[%s1300 + $0x18] sm:$0xff]
        %v1329 = vld [vmem:[%s1254] sm:$0xff]
        %v1330 = vld [vmem:[%s1254 + $0x8] sm:$0xff]
        %v1331 = vld [vmem:[%s1254 + $0x10] sm:$0xff]
        %v1332 = vld [vmem:[%s1254 + $0x18] sm:$0xff]
        %v1333 = vld [vmem:[%s1254 + $0x20] sm:$0xff]
        %v1334 = vld [vmem:[%s1254 + $0x28] sm:$0xff]
        %v1335 = vld [vmem:[%s1254 + $0x30] sm:$0xff]
        %v1336 = vld [vmem:[%s1254 + $0x38] sm:$0xff]
        %v1337 = vld [vmem:[%s1254 + $0x40] sm:$0xff]
        %v1338 = vld [vmem:[%s1254 + $0x48] sm:$0xff]
        %v1339 = vld [vmem:[%s1254 + $0x50] sm:$0xff]
        %v1340 = vld [vmem:[%s1254 + $0x58] sm:$0xff]
        %v1341 = vld [vmem:[%s1254 + $0x60] sm:$0xff]
        %v1342 = vld [vmem:[%s1254 + $0x68] sm:$0xff]
        %v1343 = vld [vmem:[%s1254 + $0x70] sm:$0xff]
        %v1344 = vld [vmem:[%s1254 + $0x78] sm:$0xff]
        %v1345 = vld [vmem:[%s1254 + $0x80] sm:$0xff]
        %v1346 = vld [vmem:[%s1254 + $0x88] sm:$0xff]
        %v1347 = vld [vmem:[%s1254 + $0x90] sm:$0xff]
        %v1348 = vld [vmem:[%s1254 + $0x98] sm:$0xff]
        %v1349 = vld [vmem:[%s1254 + $0xa0] sm:$0xff]
        %v1350 = vld [vmem:[%s1254 + $0xa8] sm:$0xff]
        %v1351 = vld [vmem:[%s1254 + $0xb0] sm:$0xff]
        %v1352 = vld [vmem:[%s1254 + $0xb8] sm:$0xff]
        %v1353 = vld [vmem:[%s1254 + $0xc0] sm:$0xff]
        %v1354 = vld [vmem:[%s1254 + $0xc8] sm:$0xff]
        %v1355 = vld [vmem:[%s1254 + $0xd0] sm:$0xff]
        %v1356 = vld [vmem:[%s1254 + $0xd8] sm:$0xff]
        %v1357 = vld [vmem:[%s1254 + $0xe0] sm:$0xff]
        %v1358 = vld [vmem:[%s1254 + $0xe8] sm:$0xff]
        %v1359 = vld [vmem:[%s1254 + $0xf0] sm:$0xff]
        %v1360 = vld [vmem:[%s1254 + $0xf8] sm:$0xff]
        %v1361 = vld [vmem:[%s1254 + $0x100] sm:$0xff]
        %v1362 = vld [vmem:[%s1254 + $0x108] sm:$0xff]
        %v1363 = vld [vmem:[%s1254 + $0x110] sm:$0xff]
        %v1364 = vld [vmem:[%s1254 + $0x118] sm:$0xff]
        %v1365 = vld [vmem:[%s1254 + $0x120] sm:$0xff]
        %v1366 = vld [vmem:[%s1254 + $0x128] sm:$0xff]
        %v1367 = vld [vmem:[%s1254 + $0x130] sm:$0xff]
        %v1368 = vld [vmem:[%s1254 + $0x138] sm:$0xff]
        %v1369 = vld [vmem:[%s1254 + $0x140] sm:$0xff]
        %v1370 = vld [vmem:[%s1254 + $0x148] sm:$0xff]
        %v1371 = vld [vmem:[%s1254 + $0x150] sm:$0xff]
        %v1372 = vld [vmem:[%s1254 + $0x158] sm:$0xff]
        %v1373 = vld [vmem:[%s1254 + $0x160] sm:$0xff]
        %v1374 = vld [vmem:[%s1254 + $0x168] sm:$0xff]
        %v1375 = vld [vmem:[%s1254 + $0x170] sm:$0xff]
        %v1376 = vld [vmem:[%s1254 + $0x178] sm:$0xff]
        %v1377 = vld [vmem:[%s1254 + $0x180] sm:$0xff]
        %v1378 = vld [vmem:[%s1254 + $0x188] sm:$0xff]
        %v1379 = vld [vmem:[%s1254 + $0x190] sm:$0xff]
        %v1380 = vld [vmem:[%s1254 + $0x198] sm:$0xff]
        %v1381 = vld [vmem:[%s1254 + $0x1a0] sm:$0xff]
        %v1382 = vld [vmem:[%s1254 + $0x1a8] sm:$0xff]
        %v1383 = vld [vmem:[%s1254 + $0x1b0] sm:$0xff]
        %v1384 = vld [vmem:[%s1254 + $0x1b8] sm:$0xff]
        %v1385 = vld [vmem:[%s1254 + $0x1c0] sm:$0xff]
        %v1386 = vld [vmem:[%s1254 + $0x1c8] sm:$0xff]
        %v1387 = vld [vmem:[%s1254 + $0x1d0] sm:$0xff]
        %v1388 = vld [vmem:[%s1254 + $0x1d8] sm:$0xff]
        %v1389 = vld [vmem:[%s1254 + $0x1e0] sm:$0xff]
        %v1390 = vld [vmem:[%s1254 + $0x1e8] sm:$0xff]
        %v1391 = vld [vmem:[%s1254 + $0x1f0] sm:$0xff]
        %v1392 = vld [vmem:[%s1254 + $0x1f8] sm:$0xff]
        %v1393 = vld [vmem:[%s1254 + $0x200] sm:$0xff]
        %v1394 = vld [vmem:[%s1254 + $0x208] sm:$0xff]
        %v1395 = vld [vmem:[%s1254 + $0x210] sm:$0xff]
        %v1396 = vld [vmem:[%s1254 + $0x218] sm:$0xff]
        %v1397 = vld [vmem:[%s1254 + $0x220] sm:$0xff]
        %v1398 = vld [vmem:[%s1254 + $0x228] sm:$0xff]
        %v1399 = vld [vmem:[%s1254 + $0x230] sm:$0xff]
        %v1400 = vld [vmem:[%s1254 + $0x238] sm:$0xff]
        %v1401 = vld [vmem:[%s1254 + $0x240] sm:$0xff]
        %v1402 = vld [vmem:[%s1254 + $0x248] sm:$0xff]
        %v1403 = vld [vmem:[%s1254 + $0x250] sm:$0xff]
        %v1404 = vld [vmem:[%s1254 + $0x258] sm:$0xff]
        %v1405 = vld [vmem:[%s1254 + $0x260] sm:$0xff]
        %v1406 = vld [vmem:[%s1254 + $0x268] sm:$0xff]
        %v1407 = vld [vmem:[%s1254 + $0x270] sm:$0xff]
        %v1408 = vld [vmem:[%s1254 + $0x278] sm:$0xff]
        %v1409 = vld [vmem:[%s1254 + $0x280] sm:$0xff]
        %v1410 = vld [vmem:[%s1254 + $0x288] sm:$0xff]
        %v1411 = vld [vmem:[%s1254 + $0x290] sm:$0xff]
        %v1412 = vld [vmem:[%s1254 + $0x298] sm:$0xff]
        %v1413 = vld [vmem:[%s1254 + $0x2a0] sm:$0xff]
        %v1414 = vld [vmem:[%s1254 + $0x2a8] sm:$0xff]
        %v1415 = vld [vmem:[%s1254 + $0x2b0] sm:$0xff]
        %v1416 = vld [vmem:[%s1254 + $0x2b8] sm:$0xff]
        %v1417 = vld [vmem:[%s1254 + $0x2c0] sm:$0xff]
        %v1418 = vld [vmem:[%s1254 + $0x2c8] sm:$0xff]
        %v1419 = vld [vmem:[%s1254 + $0x2d0] sm:$0xff]
        %v1420 = vld [vmem:[%s1254 + $0x2d8] sm:$0xff]
        %v1421 = vld [vmem:[%s1254 + $0x2e0] sm:$0xff]
        %v1422 = vld [vmem:[%s1254 + $0x2e8] sm:$0xff]
        %v1423 = vld [vmem:[%s1254 + $0x2f0] sm:$0xff]
        %v1424 = vld [vmem:[%s1254 + $0x2f8] sm:$0xff]
        %v1425 = vld [vmem:[%s1254 + $0x300] sm:$0xff]
        %v1426 = vld [vmem:[%s1254 + $0x308] sm:$0xff]
        %v1427 = vld [vmem:[%s1254 + $0x310] sm:$0xff]
        %v1428 = vld [vmem:[%s1254 + $0x318] sm:$0xff]
        %v1429 = vld [vmem:[%s1254 + $0x320] sm:$0xff]
        %v1430 = vld [vmem:[%s1254 + $0x328] sm:$0xff]
        %v1431 = vld [vmem:[%s1254 + $0x330] sm:$0xff]
        %v1432 = vld [vmem:[%s1254 + $0x338] sm:$0xff]
        %v1433 = vld [vmem:[%s1254 + $0x340] sm:$0xff]
        %v1434 = vld [vmem:[%s1254 + $0x348] sm:$0xff]
        %v1435 = vld [vmem:[%s1254 + $0x350] sm:$0xff]
        %v1436 = vld [vmem:[%s1254 + $0x358] sm:$0xff]
        %v1437 = vld [vmem:[%s1254 + $0x360] sm:$0xff]
        %v1438 = vld [vmem:[%s1254 + $0x368] sm:$0xff]
        %v1439 = vld [vmem:[%s1254 + $0x370] sm:$0xff]
        %v1440 = vld [vmem:[%s1254 + $0x378] sm:$0xff]
        %v1441 = vld [vmem:[%s1254 + $0x380] sm:$0xff]
        %v1442 = vld [vmem:[%s1254 + $0x388] sm:$0xff]
        %v1443 = vld [vmem:[%s1254 + $0x390] sm:$0xff]
        %v1444 = vld [vmem:[%s1254 + $0x398] sm:$0xff]
        %v1445 = vld [vmem:[%s1254 + $0x3a0] sm:$0xff]
        %v1446 = vld [vmem:[%s1254 + $0x3a8] sm:$0xff]
        %v1447 = vld [vmem:[%s1254 + $0x3b0] sm:$0xff]
        %v1448 = vld [vmem:[%s1254 + $0x3b8] sm:$0xff]
        %v1449 = vld [vmem:[%s1254 + $0x3c0] sm:$0xff]
        %v1450 = vld [vmem:[%s1254 + $0x3c8] sm:$0xff]
        %v1451 = vld [vmem:[%s1254 + $0x3d0] sm:$0xff]
        %v1452 = vld [vmem:[%s1254 + $0x3d8] sm:$0xff]
        %v1453 = vld [vmem:[%s1254 + $0x3e0] sm:$0xff]
        %v1454 = vld [vmem:[%s1254 + $0x3e8] sm:$0xff]
        %v1455 = vld [vmem:[%s1254 + $0x3f0] sm:$0xff]
        %v1456 = vld [vmem:[%s1254 + $0x3f8] sm:$0xff]
        %v1457 = vld [vmem:[%s1254 + $0x400] sm:$0xff]
        %v1458 = vld [vmem:[%s1254 + $0x408] sm:$0xff]
        %v1459 = vld [vmem:[%s1254 + $0x410] sm:$0xff]
        %v1460 = vld [vmem:[%s1254 + $0x418] sm:$0xff]
        %v1461 = vld [vmem:[%s1254 + $0x420] sm:$0xff]
        %v1462 = vld [vmem:[%s1254 + $0x428] sm:$0xff]
        %v1463 = vld [vmem:[%s1254 + $0x430] sm:$0xff]
        %v1464 = vld [vmem:[%s1254 + $0x438] sm:$0xff]
        %v1465 = vld [vmem:[%s1254 + $0x440] sm:$0xff]
        %v1466 = vld [vmem:[%s1254 + $0x448] sm:$0xff]
        %v1467 = vld [vmem:[%s1254 + $0x450] sm:$0xff]
        %v1468 = vld [vmem:[%s1254 + $0x458] sm:$0xff]
        %v1469 = vld [vmem:[%s1254 + $0x460] sm:$0xff]
        %v1470 = vld [vmem:[%s1254 + $0x468] sm:$0xff]
        %v1471 = vld [vmem:[%s1254 + $0x470] sm:$0xff]
        %v1472 = vld [vmem:[%s1254 + $0x478] sm:$0xff]
        %v1473 = vld [vmem:[%s1254 + $0x480] sm:$0xff]
        %v1474 = vld [vmem:[%s1254 + $0x488] sm:$0xff]
        %v1475 = vld [vmem:[%s1254 + $0x490] sm:$0xff]
        %v1476 = vld [vmem:[%s1254 + $0x498] sm:$0xff]
        %v1477 = vld [vmem:[%s1254 + $0x4a0] sm:$0xff]
        %v1478 = vld [vmem:[%s1254 + $0x4a8] sm:$0xff]
        %v1479 = vld [vmem:[%s1254 + $0x4b0] sm:$0xff]
        %v1480 = vld [vmem:[%s1254 + $0x4b8] sm:$0xff]
        %v1481 = vld [vmem:[%s1254 + $0x4c0] sm:$0xff]
        %v1482 = vld [vmem:[%s1254 + $0x4c8] sm:$0xff]
        %v1483 = vld [vmem:[%s1254 + $0x4d0] sm:$0xff]
        %v1484 = vld [vmem:[%s1254 + $0x4d8] sm:$0xff]
        %v1485 = vld [vmem:[%s1254 + $0x4e0] sm:$0xff]
        %v1486 = vld [vmem:[%s1254 + $0x4e8] sm:$0xff]
        %v1487 = vld [vmem:[%s1254 + $0x4f0] sm:$0xff]
        %v1488 = vld [vmem:[%s1254 + $0x4f8] sm:$0xff]
        %v1489 = vld [vmem:[%s1254 + $0x500] sm:$0xff]
        %v1490 = vld [vmem:[%s1254 + $0x508] sm:$0xff]
        %v1491 = vld [vmem:[%s1254 + $0x510] sm:$0xff]
        %v1492 = vld [vmem:[%s1254 + $0x518] sm:$0xff]
        %v1493 = vld [vmem:[%s1254 + $0x520] sm:$0xff]
        %v1494 = vld [vmem:[%s1254 + $0x528] sm:$0xff]
        %v1495 = vld [vmem:[%s1254 + $0x530] sm:$0xff]
        %v1496 = vld [vmem:[%s1254 + $0x538] sm:$0xff]
        %v1497 = vld [vmem:[%s1254 + $0x540] sm:$0xff]
        %v1498 = vld [vmem:[%s1254 + $0x548] sm:$0xff]
        %v1499 = vld [vmem:[%s1254 + $0x550] sm:$0xff]
        %v1500 = vld [vmem:[%s1254 + $0x558] sm:$0xff]
        %v1501 = vld [vmem:[%s1254 + $0x560] sm:$0xff]
        %v1502 = vld [vmem:[%s1254 + $0x568] sm:$0xff]
        %v1503 = vld [vmem:[%s1254 + $0x570] sm:$0xff]
        %v1504 = vld [vmem:[%s1254 + $0x578] sm:$0xff]
        %v1505 = vld [vmem:[%s1254 + $0x580] sm:$0xff]
        %v1506 = vld [vmem:[%s1254 + $0x588] sm:$0xff]
        %v1507 = vld [vmem:[%s1254 + $0x590] sm:$0xff]
        %v1508 = vld [vmem:[%s1254 + $0x598] sm:$0xff]
        %v1509 = vld [vmem:[%s1254 + $0x5a0] sm:$0xff]
        %v1510 = vld [vmem:[%s1254 + $0x5a8] sm:$0xff]
        %v1511 = vld [vmem:[%s1254 + $0x5b0] sm:$0xff]
        %v1512 = vld [vmem:[%s1254 + $0x5b8] sm:$0xff]
        %v1513 = vld [vmem:[%s1254 + $0x5c0] sm:$0xff]
        %v1514 = vld [vmem:[%s1254 + $0x5c8] sm:$0xff]
        %v1515 = vld [vmem:[%s1254 + $0x5d0] sm:$0xff]
        %v1516 = vld [vmem:[%s1254 + $0x5d8] sm:$0xff]
        %v1517 = vld [vmem:[%s1254 + $0x5e0] sm:$0xff]
        %v1518 = vld [vmem:[%s1254 + $0x5e8] sm:$0xff]
        %v1519 = vld [vmem:[%s1254 + $0x5f0] sm:$0xff]
        %v1520 = vld [vmem:[%s1254 + $0x5f8] sm:$0xff]
        %v1521 = vld [vmem:[%s1254 + $0x600] sm:$0xff]
        %v1522 = vld [vmem:[%s1254 + $0x608] sm:$0xff]
        %v1523 = vld [vmem:[%s1254 + $0x610] sm:$0xff]
        %v1524 = vld [vmem:[%s1254 + $0x618] sm:$0xff]
        %v1525 = vld [vmem:[%s1254 + $0x620] sm:$0xff]
        %v1526 = vld [vmem:[%s1254 + $0x628] sm:$0xff]
        %v1527 = vld [vmem:[%s1254 + $0x630] sm:$0xff]
        %v1528 = vld [vmem:[%s1254 + $0x638] sm:$0xff]
        %v1529 = vld [vmem:[%s1254 + $0x640] sm:$0xff]
        %v1530 = vld [vmem:[%s1254 + $0x648] sm:$0xff]
        %v1531 = vld [vmem:[%s1254 + $0x650] sm:$0xff]
        %v1532 = vld [vmem:[%s1254 + $0x658] sm:$0xff]
        %v1533 = vld [vmem:[%s1254 + $0x660] sm:$0xff]
        %v1534 = vld [vmem:[%s1254 + $0x668] sm:$0xff]
        %v1535 = vld [vmem:[%s1254 + $0x670] sm:$0xff]
        %v1536 = vld [vmem:[%s1254 + $0x678] sm:$0xff]
        %v1537 = vld [vmem:[%s1254 + $0x680] sm:$0xff]
        %v1538 = vld [vmem:[%s1254 + $0x688] sm:$0xff]
        %v1539 = vld [vmem:[%s1254 + $0x690] sm:$0xff]
        %v1540 = vld [vmem:[%s1254 + $0x698] sm:$0xff]
        %v1541 = vld [vmem:[%s1254 + $0x6a0] sm:$0xff]
        %v1542 = vld [vmem:[%s1254 + $0x6a8] sm:$0xff]
        %v1543 = vld [vmem:[%s1254 + $0x6b0] sm:$0xff]
        %v1544 = vld [vmem:[%s1254 + $0x6b8] sm:$0xff]
        %v1545 = vld [vmem:[%s1254 + $0x6c0] sm:$0xff]
        %v1546 = vld [vmem:[%s1254 + $0x6c8] sm:$0xff]
        %v1547 = vld [vmem:[%s1254 + $0x6d0] sm:$0xff]
        %v1548 = vld [vmem:[%s1254 + $0x6d8] sm:$0xff]
        %v1549 = vld [vmem:[%s1254 + $0x6e0] sm:$0xff]
        %v1550 = vld [vmem:[%s1254 + $0x6e8] sm:$0xff]
        %v1551 = vld [vmem:[%s1254 + $0x6f0] sm:$0xff]
        %v1552 = vld [vmem:[%s1254 + $0x6f8] sm:$0xff]
        %v1553 = vld [vmem:[%s1254 + $0x700] sm:$0xff]
        %v1554 = vld [vmem:[%s1254 + $0x708] sm:$0xff]
        %v1555 = vld [vmem:[%s1254 + $0x710] sm:$0xff]
        %v1556 = vld [vmem:[%s1254 + $0x718] sm:$0xff]
        %v1557 = vld [vmem:[%s1254 + $0x720] sm:$0xff]
        %v1558 = vld [vmem:[%s1254 + $0x728] sm:$0xff]
        %v1559 = vld [vmem:[%s1254 + $0x730] sm:$0xff]
        %v1560 = vld [vmem:[%s1254 + $0x738] sm:$0xff]
        %v1561 = vld [vmem:[%s1254 + $0x740] sm:$0xff]
        %v1562 = vld [vmem:[%s1254 + $0x748] sm:$0xff]
        %v1563 = vld [vmem:[%s1254 + $0x750] sm:$0xff]
        %v1564 = vld [vmem:[%s1254 + $0x758] sm:$0xff]
        %v1565 = vld [vmem:[%s1254 + $0x760] sm:$0xff]
        %v1566 = vld [vmem:[%s1254 + $0x768] sm:$0xff]
        %v1567 = vld [vmem:[%s1254 + $0x770] sm:$0xff]
        %v1568 = vld [vmem:[%s1254 + $0x778] sm:$0xff]
        %v1569 = vld [vmem:[%s1254 + $0x780] sm:$0xff]
        %v1570 = vld [vmem:[%s1254 + $0x788] sm:$0xff]
        %v1571 = vld [vmem:[%s1254 + $0x790] sm:$0xff]
        %v1572 = vld [vmem:[%s1254 + $0x798] sm:$0xff]
        %v1573 = vld [vmem:[%s1254 + $0x7a0] sm:$0xff]
        %v1574 = vld [vmem:[%s1254 + $0x7a8] sm:$0xff]
        %v1575 = vld [vmem:[%s1254 + $0x7b0] sm:$0xff]
        %v1576 = vld [vmem:[%s1254 + $0x7b8] sm:$0xff]
        %v1577 = vld [vmem:[%s1254 + $0x7c0] sm:$0xff]
        %v1578 = vld [vmem:[%s1254 + $0x7c8] sm:$0xff]
        %v1579 = vld [vmem:[%s1254 + $0x7d0] sm:$0xff]
        %v1580 = vld [vmem:[%s1254 + $0x7d8] sm:$0xff]
        %v1581 = vld [vmem:[%s1254 + $0x7e0] sm:$0xff]
        %v1582 = vld [vmem:[%s1254 + $0x7e8] sm:$0xff]
        %v1583 = vld [vmem:[%s1254 + $0x7f0] sm:$0xff]
        %v1584 = vld [vmem:[%s1254 + $0x7f8] sm:$0xff]
        %v1589 = vcombine.high %v1325, %v1325
        %v1591 = vunpack.c.l.s4 1983009808
        %v1592 = vunpack.c.0.s8 %v1591
        %v1593 = vlaneseq
        %v1594 = vshrl.u32 %v1593, 7
        %v1595 = vsub.s32 %v1592, %v1594
        %v1596 = vrot.slane %v1325, %v1595
        %v1598 = vunpack.c.l.s4 1983009808
        %v1599 = vunpack.c.0.s8 %v1598
        %v1600 = vlaneseq
        %v1601 = vshrl.u32 %v1600, 7
        %v1602 = vsub.s32 %v1599, %v1601
        %v1603 = vrot.slane %v1589, %v1602
        %v1604 = vcombine.high %v1596, %v1596
        %v1605 = vcombine.high %v1603, %v1603
        %v1606 = vcombine.high %v1326, %v1326
        %v1608 = vunpack.c.l.s4 1983009808
        %v1609 = vunpack.c.0.s8 %v1608
        %v1610 = vlaneseq
        %v1611 = vshrl.u32 %v1610, 7
        %v1612 = vsub.s32 %v1609, %v1611
        %v1613 = vrot.slane %v1326, %v1612
        %v1615 = vunpack.c.l.s4 1983009808
        %v1616 = vunpack.c.0.s8 %v1615
        %v1617 = vlaneseq
        %v1618 = vshrl.u32 %v1617, 7
        %v1619 = vsub.s32 %v1616, %v1618
        %v1620 = vrot.slane %v1606, %v1619
        %v1621 = vcombine.high %v1613, %v1613
        %v1622 = vcombine.high %v1620, %v1620
        %v1623 = vcombine.high %v1327, %v1327
        %v1625 = vunpack.c.l.s4 1983009808
        %v1626 = vunpack.c.0.s8 %v1625
        %v1627 = vlaneseq
        %v1628 = vshrl.u32 %v1627, 7
        %v1629 = vsub.s32 %v1626, %v1628
        %v1630 = vrot.slane %v1327, %v1629
        %v1632 = vunpack.c.l.s4 1983009808
        %v1633 = vunpack.c.0.s8 %v1632
        %v1634 = vlaneseq
        %v1635 = vshrl.u32 %v1634, 7
        %v1636 = vsub.s32 %v1633, %v1635
        %v1637 = vrot.slane %v1623, %v1636
        %v1638 = vcombine.high %v1630, %v1630
        %v1639 = vcombine.high %v1637, %v1637
        %v1640 = vcombine.high %v1328, %v1328
        %v1642 = vunpack.c.l.s4 1983009808
        %v1643 = vunpack.c.0.s8 %v1642
        %v1644 = vlaneseq
        %v1645 = vshrl.u32 %v1644, 7
        %v1646 = vsub.s32 %v1643, %v1645
        %v1647 = vrot.slane %v1328, %v1646
        %v1649 = vunpack.c.l.s4 1983009808
        %v1650 = vunpack.c.0.s8 %v1649
        %v1651 = vlaneseq
        %v1652 = vshrl.u32 %v1651, 7
        %v1653 = vsub.s32 %v1650, %v1652
        %v1654 = vrot.slane %v1640, %v1653
        %v1655 = vcombine.high %v1647, %v1647
        %v1656 = vcombine.high %v1654, %v1654
        %v1929 = vunpack.c.l.b16 %v1329
        %v1930 = vunpack.c.h.b16 %v1329
        %v1931 = vunpack.c.l.b16 %v1330
        %v1932 = vunpack.c.h.b16 %v1330
        %v1933 = vunpack.c.l.b16 %v1331
        %v1934 = vunpack.c.h.b16 %v1331
        %v1935 = vunpack.c.l.b16 %v1332
        %v1936 = vunpack.c.h.b16 %v1332
        %v1937 = vunpack.c.l.b16 %v1333
        %v1938 = vunpack.c.h.b16 %v1333
        %v1939 = vunpack.c.l.b16 %v1334
        %v1940 = vunpack.c.h.b16 %v1334
        %v1941 = vunpack.c.l.b16 %v1335
        %v1942 = vunpack.c.h.b16 %v1335
        %v1943 = vunpack.c.l.b16 %v1336
        %v1944 = vunpack.c.h.b16 %v1336
        %v1945 = vunpack.c.l.b16 %v1337
        %v1946 = vunpack.c.h.b16 %v1337
        %v1947 = vunpack.c.l.b16 %v1338
        %v1948 = vunpack.c.h.b16 %v1338
        %v1949 = vunpack.c.l.b16 %v1339
        %v1950 = vunpack.c.h.b16 %v1339
        %v1951 = vunpack.c.l.b16 %v1340
        %v1952 = vunpack.c.h.b16 %v1340
        %v1953 = vunpack.c.l.b16 %v1341
        %v1954 = vunpack.c.h.b16 %v1341
        %v1955 = vunpack.c.l.b16 %v1342
        %v1956 = vunpack.c.h.b16 %v1342
        %v1957 = vunpack.c.l.b16 %v1343
        %v1958 = vunpack.c.h.b16 %v1343
        %v1959 = vunpack.c.l.b16 %v1344
        %v1960 = vunpack.c.h.b16 %v1344
        %v1961 = vunpack.c.l.b16 %v1345
        %v1962 = vunpack.c.h.b16 %v1345
        %v1963 = vunpack.c.l.b16 %v1346
        %v1964 = vunpack.c.h.b16 %v1346
        %v1965 = vunpack.c.l.b16 %v1347
        %v1966 = vunpack.c.h.b16 %v1347
        %v1967 = vunpack.c.l.b16 %v1348
        %v1968 = vunpack.c.h.b16 %v1348
        %v1969 = vunpack.c.l.b16 %v1349
        %v1970 = vunpack.c.h.b16 %v1349
        %v1971 = vunpack.c.l.b16 %v1350
        %v1972 = vunpack.c.h.b16 %v1350
        %v1973 = vunpack.c.l.b16 %v1351
        %v1974 = vunpack.c.h.b16 %v1351
        %v1975 = vunpack.c.l.b16 %v1352
        %v1976 = vunpack.c.h.b16 %v1352
        %v1977 = vunpack.c.l.b16 %v1353
        %v1978 = vunpack.c.h.b16 %v1353
        %v1979 = vunpack.c.l.b16 %v1354
        %v1980 = vunpack.c.h.b16 %v1354
        %v1981 = vunpack.c.l.b16 %v1355
        %v1982 = vunpack.c.h.b16 %v1355
        %v1983 = vunpack.c.l.b16 %v1356
        %v1984 = vunpack.c.h.b16 %v1356
        %v1985 = vunpack.c.l.b16 %v1357
        %v1986 = vunpack.c.h.b16 %v1357
        %v1987 = vunpack.c.l.b16 %v1358
        %v1988 = vunpack.c.h.b16 %v1358
        %v1989 = vunpack.c.l.b16 %v1359
        %v1990 = vunpack.c.h.b16 %v1359
        %v1991 = vunpack.c.l.b16 %v1360
        %v1992 = vunpack.c.h.b16 %v1360
        %v1993 = vunpack.c.l.b16 %v1361
        %v1994 = vunpack.c.h.b16 %v1361
        %v1995 = vunpack.c.l.b16 %v1362
        %v1996 = vunpack.c.h.b16 %v1362
        %v1997 = vunpack.c.l.b16 %v1363
        %v1998 = vunpack.c.h.b16 %v1363
        %v1999 = vunpack.c.l.b16 %v1364
        %v2000 = vunpack.c.h.b16 %v1364
        %v2001 = vunpack.c.l.b16 %v1365
        %v2002 = vunpack.c.h.b16 %v1365
        %v2003 = vunpack.c.l.b16 %v1366
        %v2004 = vunpack.c.h.b16 %v1366
        %v2005 = vunpack.c.l.b16 %v1367
        %v2006 = vunpack.c.h.b16 %v1367
        %v2007 = vunpack.c.l.b16 %v1368
        %v2008 = vunpack.c.h.b16 %v1368
        %v2009 = vunpack.c.l.b16 %v1369
        %v2010 = vunpack.c.h.b16 %v1369
        %v2011 = vunpack.c.l.b16 %v1370
        %v2012 = vunpack.c.h.b16 %v1370
        %v2013 = vunpack.c.l.b16 %v1371
        %v2014 = vunpack.c.h.b16 %v1371
        %v2015 = vunpack.c.l.b16 %v1372
        %v2016 = vunpack.c.h.b16 %v1372
        %v2017 = vunpack.c.l.b16 %v1373
        %v2018 = vunpack.c.h.b16 %v1373
        %v2019 = vunpack.c.l.b16 %v1374
        %v2020 = vunpack.c.h.b16 %v1374
        %v2021 = vunpack.c.l.b16 %v1375
        %v2022 = vunpack.c.h.b16 %v1375
        %v2023 = vunpack.c.l.b16 %v1376
        %v2024 = vunpack.c.h.b16 %v1376
        %v2025 = vunpack.c.l.b16 %v1377
        %v2026 = vunpack.c.h.b16 %v1377
        %v2027 = vunpack.c.l.b16 %v1378
        %v2028 = vunpack.c.h.b16 %v1378
        %v2029 = vunpack.c.l.b16 %v1379
        %v2030 = vunpack.c.h.b16 %v1379
        %v2031 = vunpack.c.l.b16 %v1380
        %v2032 = vunpack.c.h.b16 %v1380
        %v2033 = vunpack.c.l.b16 %v1381
        %v2034 = vunpack.c.h.b16 %v1381
        %v2035 = vunpack.c.l.b16 %v1382
        %v2036 = vunpack.c.h.b16 %v1382
        %v2037 = vunpack.c.l.b16 %v1383
        %v2038 = vunpack.c.h.b16 %v1383
        %v2039 = vunpack.c.l.b16 %v1384
        %v2040 = vunpack.c.h.b16 %v1384
        %v2041 = vunpack.c.l.b16 %v1385
        %v2042 = vunpack.c.h.b16 %v1385
        %v2043 = vunpack.c.l.b16 %v1386
        %v2044 = vunpack.c.h.b16 %v1386
        %v2045 = vunpack.c.l.b16 %v1387
        %v2046 = vunpack.c.h.b16 %v1387
        %v2047 = vunpack.c.l.b16 %v1388
        %v2048 = vunpack.c.h.b16 %v1388
        %v2049 = vunpack.c.l.b16 %v1389
        %v2050 = vunpack.c.h.b16 %v1389
        %v2051 = vunpack.c.l.b16 %v1390
        %v2052 = vunpack.c.h.b16 %v1390
        %v2053 = vunpack.c.l.b16 %v1391
        %v2054 = vunpack.c.h.b16 %v1391
        %v2055 = vunpack.c.l.b16 %v1392
        %v2056 = vunpack.c.h.b16 %v1392
        %v2057 = vunpack.c.l.b16 %v1393
        %v2058 = vunpack.c.h.b16 %v1393
        %v2059 = vunpack.c.l.b16 %v1394
        %v2060 = vunpack.c.h.b16 %v1394
        %v2061 = vunpack.c.l.b16 %v1395
        %v2062 = vunpack.c.h.b16 %v1395
        %v2063 = vunpack.c.l.b16 %v1396
        %v2064 = vunpack.c.h.b16 %v1396
        %v2065 = vunpack.c.l.b16 %v1397
        %v2066 = vunpack.c.h.b16 %v1397
        %v2067 = vunpack.c.l.b16 %v1398
        %v2068 = vunpack.c.h.b16 %v1398
        %v2069 = vunpack.c.l.b16 %v1399
        %v2070 = vunpack.c.h.b16 %v1399
        %v2071 = vunpack.c.l.b16 %v1400
        %v2072 = vunpack.c.h.b16 %v1400
        %v2073 = vunpack.c.l.b16 %v1401
        %v2074 = vunpack.c.h.b16 %v1401
        %v2075 = vunpack.c.l.b16 %v1402
        %v2076 = vunpack.c.h.b16 %v1402
        %v2077 = vunpack.c.l.b16 %v1403
        %v2078 = vunpack.c.h.b16 %v1403
        %v2079 = vunpack.c.l.b16 %v1404
        %v2080 = vunpack.c.h.b16 %v1404
        %v2081 = vunpack.c.l.b16 %v1405
        %v2082 = vunpack.c.h.b16 %v1405
        %v2083 = vunpack.c.l.b16 %v1406
        %v2084 = vunpack.c.h.b16 %v1406
        %v2085 = vunpack.c.l.b16 %v1407
        %v2086 = vunpack.c.h.b16 %v1407
        %v2087 = vunpack.c.l.b16 %v1408
        %v2088 = vunpack.c.h.b16 %v1408
        %v2089 = vunpack.c.l.b16 %v1409
        %v2090 = vunpack.c.h.b16 %v1409
        %v2091 = vunpack.c.l.b16 %v1410
        %v2092 = vunpack.c.h.b16 %v1410
        %v2093 = vunpack.c.l.b16 %v1411
        %v2094 = vunpack.c.h.b16 %v1411
        %v2095 = vunpack.c.l.b16 %v1412
        %v2096 = vunpack.c.h.b16 %v1412
        %v2097 = vunpack.c.l.b16 %v1413
        %v2098 = vunpack.c.h.b16 %v1413
        %v2099 = vunpack.c.l.b16 %v1414
        %v2100 = vunpack.c.h.b16 %v1414
        %v2101 = vunpack.c.l.b16 %v1415
        %v2102 = vunpack.c.h.b16 %v1415
        %v2103 = vunpack.c.l.b16 %v1416
        %v2104 = vunpack.c.h.b16 %v1416
        %v2105 = vunpack.c.l.b16 %v1417
        %v2106 = vunpack.c.h.b16 %v1417
        %v2107 = vunpack.c.l.b16 %v1418
        %v2108 = vunpack.c.h.b16 %v1418
        %v2109 = vunpack.c.l.b16 %v1419
        %v2110 = vunpack.c.h.b16 %v1419
        %v2111 = vunpack.c.l.b16 %v1420
        %v2112 = vunpack.c.h.b16 %v1420
        %v2113 = vunpack.c.l.b16 %v1421
        %v2114 = vunpack.c.h.b16 %v1421
        %v2115 = vunpack.c.l.b16 %v1422
        %v2116 = vunpack.c.h.b16 %v1422
        %v2117 = vunpack.c.l.b16 %v1423
        %v2118 = vunpack.c.h.b16 %v1423
        %v2119 = vunpack.c.l.b16 %v1424
        %v2120 = vunpack.c.h.b16 %v1424
        %v2121 = vunpack.c.l.b16 %v1425
        %v2122 = vunpack.c.h.b16 %v1425
        %v2123 = vunpack.c.l.b16 %v1426
        %v2124 = vunpack.c.h.b16 %v1426
        %v2125 = vunpack.c.l.b16 %v1427
        %v2126 = vunpack.c.h.b16 %v1427
        %v2127 = vunpack.c.l.b16 %v1428
        %v2128 = vunpack.c.h.b16 %v1428
        %v2129 = vunpack.c.l.b16 %v1429
        %v2130 = vunpack.c.h.b16 %v1429
        %v2131 = vunpack.c.l.b16 %v1430
        %v2132 = vunpack.c.h.b16 %v1430
        %v2133 = vunpack.c.l.b16 %v1431
        %v2134 = vunpack.c.h.b16 %v1431
        %v2135 = vunpack.c.l.b16 %v1432
        %v2136 = vunpack.c.h.b16 %v1432
        %v2137 = vunpack.c.l.b16 %v1433
        %v2138 = vunpack.c.h.b16 %v1433
        %v2139 = vunpack.c.l.b16 %v1434
        %v2140 = vunpack.c.h.b16 %v1434
        %v2141 = vunpack.c.l.b16 %v1435
        %v2142 = vunpack.c.h.b16 %v1435
        %v2143 = vunpack.c.l.b16 %v1436
        %v2144 = vunpack.c.h.b16 %v1436
        %v2145 = vunpack.c.l.b16 %v1437
        %v2146 = vunpack.c.h.b16 %v1437
        %v2147 = vunpack.c.l.b16 %v1438
        %v2148 = vunpack.c.h.b16 %v1438
        %v2149 = vunpack.c.l.b16 %v1439
        %v2150 = vunpack.c.h.b16 %v1439
        %v2151 = vunpack.c.l.b16 %v1440
        %v2152 = vunpack.c.h.b16 %v1440
        %v2153 = vunpack.c.l.b16 %v1441
        %v2154 = vunpack.c.h.b16 %v1441
        %v2155 = vunpack.c.l.b16 %v1442
        %v2156 = vunpack.c.h.b16 %v1442
        %v2157 = vunpack.c.l.b16 %v1443
        %v2158 = vunpack.c.h.b16 %v1443
        %v2159 = vunpack.c.l.b16 %v1444
        %v2160 = vunpack.c.h.b16 %v1444
        %v2161 = vunpack.c.l.b16 %v1445
        %v2162 = vunpack.c.h.b16 %v1445
        %v2163 = vunpack.c.l.b16 %v1446
        %v2164 = vunpack.c.h.b16 %v1446
        %v2165 = vunpack.c.l.b16 %v1447
        %v2166 = vunpack.c.h.b16 %v1447
        %v2167 = vunpack.c.l.b16 %v1448
        %v2168 = vunpack.c.h.b16 %v1448
        %v2169 = vunpack.c.l.b16 %v1449
        %v2170 = vunpack.c.h.b16 %v1449
        %v2171 = vunpack.c.l.b16 %v1450
        %v2172 = vunpack.c.h.b16 %v1450
        %v2173 = vunpack.c.l.b16 %v1451
        %v2174 = vunpack.c.h.b16 %v1451
        %v2175 = vunpack.c.l.b16 %v1452
        %v2176 = vunpack.c.h.b16 %v1452
        %v2177 = vunpack.c.l.b16 %v1453
        %v2178 = vunpack.c.h.b16 %v1453
        %v2179 = vunpack.c.l.b16 %v1454
        %v2180 = vunpack.c.h.b16 %v1454
        %v2181 = vunpack.c.l.b16 %v1455
        %v2182 = vunpack.c.h.b16 %v1455
        %v2183 = vunpack.c.l.b16 %v1456
        %v2184 = vunpack.c.h.b16 %v1456
        %v2185 = vunpack.c.l.b16 %v1457
        %v2186 = vunpack.c.h.b16 %v1457
        %v2187 = vunpack.c.l.b16 %v1458
        %v2188 = vunpack.c.h.b16 %v1458
        %v2189 = vunpack.c.l.b16 %v1459
        %v2190 = vunpack.c.h.b16 %v1459
        %v2191 = vunpack.c.l.b16 %v1460
        %v2192 = vunpack.c.h.b16 %v1460
        %v2193 = vunpack.c.l.b16 %v1461
        %v2194 = vunpack.c.h.b16 %v1461
        %v2195 = vunpack.c.l.b16 %v1462
        %v2196 = vunpack.c.h.b16 %v1462
        %v2197 = vunpack.c.l.b16 %v1463
        %v2198 = vunpack.c.h.b16 %v1463
        %v2199 = vunpack.c.l.b16 %v1464
        %v2200 = vunpack.c.h.b16 %v1464
        %v2201 = vunpack.c.l.b16 %v1465
        %v2202 = vunpack.c.h.b16 %v1465
        %v2203 = vunpack.c.l.b16 %v1466
        %v2204 = vunpack.c.h.b16 %v1466
        %v2205 = vunpack.c.l.b16 %v1467
        %v2206 = vunpack.c.h.b16 %v1467
        %v2207 = vunpack.c.l.b16 %v1468
        %v2208 = vunpack.c.h.b16 %v1468
        %v2209 = vunpack.c.l.b16 %v1469
        %v2210 = vunpack.c.h.b16 %v1469
        %v2211 = vunpack.c.l.b16 %v1470
        %v2212 = vunpack.c.h.b16 %v1470
        %v2213 = vunpack.c.l.b16 %v1471
        %v2214 = vunpack.c.h.b16 %v1471
        %v2215 = vunpack.c.l.b16 %v1472
        %v2216 = vunpack.c.h.b16 %v1472
        %v2217 = vunpack.c.l.b16 %v1473
        %v2218 = vunpack.c.h.b16 %v1473
        %v2219 = vunpack.c.l.b16 %v1474
        %v2220 = vunpack.c.h.b16 %v1474
        %v2221 = vunpack.c.l.b16 %v1475
        %v2222 = vunpack.c.h.b16 %v1475
        %v2223 = vunpack.c.l.b16 %v1476
        %v2224 = vunpack.c.h.b16 %v1476
        %v2225 = vunpack.c.l.b16 %v1477
        %v2226 = vunpack.c.h.b16 %v1477
        %v2227 = vunpack.c.l.b16 %v1478
        %v2228 = vunpack.c.h.b16 %v1478
        %v2229 = vunpack.c.l.b16 %v1479
        %v2230 = vunpack.c.h.b16 %v1479
        %v2231 = vunpack.c.l.b16 %v1480
        %v2232 = vunpack.c.h.b16 %v1480
        %v2233 = vunpack.c.l.b16 %v1481
        %v2234 = vunpack.c.h.b16 %v1481
        %v2235 = vunpack.c.l.b16 %v1482
        %v2236 = vunpack.c.h.b16 %v1482
        %v2237 = vunpack.c.l.b16 %v1483
        %v2238 = vunpack.c.h.b16 %v1483
        %v2239 = vunpack.c.l.b16 %v1484
        %v2240 = vunpack.c.h.b16 %v1484
        %v2241 = vunpack.c.l.b16 %v1485
        %v2242 = vunpack.c.h.b16 %v1485
        %v2243 = vunpack.c.l.b16 %v1486
        %v2244 = vunpack.c.h.b16 %v1486
        %v2245 = vunpack.c.l.b16 %v1487
        %v2246 = vunpack.c.h.b16 %v1487
        %v2247 = vunpack.c.l.b16 %v1488
        %v2248 = vunpack.c.h.b16 %v1488
        %v2249 = vunpack.c.l.b16 %v1489
        %v2250 = vunpack.c.h.b16 %v1489
        %v2251 = vunpack.c.l.b16 %v1490
        %v2252 = vunpack.c.h.b16 %v1490
        %v2253 = vunpack.c.l.b16 %v1491
        %v2254 = vunpack.c.h.b16 %v1491
        %v2255 = vunpack.c.l.b16 %v1492
        %v2256 = vunpack.c.h.b16 %v1492
        %v2257 = vunpack.c.l.b16 %v1493
        %v2258 = vunpack.c.h.b16 %v1493
        %v2259 = vunpack.c.l.b16 %v1494
        %v2260 = vunpack.c.h.b16 %v1494
        %v2261 = vunpack.c.l.b16 %v1495
        %v2262 = vunpack.c.h.b16 %v1495
        %v2263 = vunpack.c.l.b16 %v1496
        %v2264 = vunpack.c.h.b16 %v1496
        %v2265 = vunpack.c.l.b16 %v1497
        %v2266 = vunpack.c.h.b16 %v1497
        %v2267 = vunpack.c.l.b16 %v1498
        %v2268 = vunpack.c.h.b16 %v1498
        %v2269 = vunpack.c.l.b16 %v1499
        %v2270 = vunpack.c.h.b16 %v1499
        %v2271 = vunpack.c.l.b16 %v1500
        %v2272 = vunpack.c.h.b16 %v1500
        %v2273 = vunpack.c.l.b16 %v1501
        %v2274 = vunpack.c.h.b16 %v1501
        %v2275 = vunpack.c.l.b16 %v1502
        %v2276 = vunpack.c.h.b16 %v1502
        %v2277 = vunpack.c.l.b16 %v1503
        %v2278 = vunpack.c.h.b16 %v1503
        %v2279 = vunpack.c.l.b16 %v1504
        %v2280 = vunpack.c.h.b16 %v1504
        %v2281 = vunpack.c.l.b16 %v1505
        %v2282 = vunpack.c.h.b16 %v1505
        %v2283 = vunpack.c.l.b16 %v1506
        %v2284 = vunpack.c.h.b16 %v1506
        %v2285 = vunpack.c.l.b16 %v1507
        %v2286 = vunpack.c.h.b16 %v1507
        %v2287 = vunpack.c.l.b16 %v1508
        %v2288 = vunpack.c.h.b16 %v1508
        %v2289 = vunpack.c.l.b16 %v1509
        %v2290 = vunpack.c.h.b16 %v1509
        %v2291 = vunpack.c.l.b16 %v1510
        %v2292 = vunpack.c.h.b16 %v1510
        %v2293 = vunpack.c.l.b16 %v1511
        %v2294 = vunpack.c.h.b16 %v1511
        %v2295 = vunpack.c.l.b16 %v1512
        %v2296 = vunpack.c.h.b16 %v1512
        %v2297 = vunpack.c.l.b16 %v1513
        %v2298 = vunpack.c.h.b16 %v1513
        %v2299 = vunpack.c.l.b16 %v1514
        %v2300 = vunpack.c.h.b16 %v1514
        %v2301 = vunpack.c.l.b16 %v1515
        %v2302 = vunpack.c.h.b16 %v1515
        %v2303 = vunpack.c.l.b16 %v1516
        %v2304 = vunpack.c.h.b16 %v1516
        %v2305 = vunpack.c.l.b16 %v1517
        %v2306 = vunpack.c.h.b16 %v1517
        %v2307 = vunpack.c.l.b16 %v1518
        %v2308 = vunpack.c.h.b16 %v1518
        %v2309 = vunpack.c.l.b16 %v1519
        %v2310 = vunpack.c.h.b16 %v1519
        %v2311 = vunpack.c.l.b16 %v1520
        %v2312 = vunpack.c.h.b16 %v1520
        %v2313 = vunpack.c.l.b16 %v1521
        %v2314 = vunpack.c.h.b16 %v1521
        %v2315 = vunpack.c.l.b16 %v1522
        %v2316 = vunpack.c.h.b16 %v1522
        %v2317 = vunpack.c.l.b16 %v1523
        %v2318 = vunpack.c.h.b16 %v1523
        %v2319 = vunpack.c.l.b16 %v1524
        %v2320 = vunpack.c.h.b16 %v1524
        %v2321 = vunpack.c.l.b16 %v1525
        %v2322 = vunpack.c.h.b16 %v1525
        %v2323 = vunpack.c.l.b16 %v1526
        %v2324 = vunpack.c.h.b16 %v1526
        %v2325 = vunpack.c.l.b16 %v1527
        %v2326 = vunpack.c.h.b16 %v1527
        %v2327 = vunpack.c.l.b16 %v1528
        %v2328 = vunpack.c.h.b16 %v1528
        %v2329 = vunpack.c.l.b16 %v1529
        %v2330 = vunpack.c.h.b16 %v1529
        %v2331 = vunpack.c.l.b16 %v1530
        %v2332 = vunpack.c.h.b16 %v1530
        %v2333 = vunpack.c.l.b16 %v1531
        %v2334 = vunpack.c.h.b16 %v1531
        %v2335 = vunpack.c.l.b16 %v1532
        %v2336 = vunpack.c.h.b16 %v1532
        %v2337 = vunpack.c.l.b16 %v1533
        %v2338 = vunpack.c.h.b16 %v1533
        %v2339 = vunpack.c.l.b16 %v1534
        %v2340 = vunpack.c.h.b16 %v1534
        %v2341 = vunpack.c.l.b16 %v1535
        %v2342 = vunpack.c.h.b16 %v1535
        %v2343 = vunpack.c.l.b16 %v1536
        %v2344 = vunpack.c.h.b16 %v1536
        %v2345 = vunpack.c.l.b16 %v1537
        %v2346 = vunpack.c.h.b16 %v1537
        %v2347 = vunpack.c.l.b16 %v1538
        %v2348 = vunpack.c.h.b16 %v1538
        %v2349 = vunpack.c.l.b16 %v1539
        %v2350 = vunpack.c.h.b16 %v1539
        %v2351 = vunpack.c.l.b16 %v1540
        %v2352 = vunpack.c.h.b16 %v1540
        %v2353 = vunpack.c.l.b16 %v1541
        %v2354 = vunpack.c.h.b16 %v1541
        %v2355 = vunpack.c.l.b16 %v1542
        %v2356 = vunpack.c.h.b16 %v1542
        %v2357 = vunpack.c.l.b16 %v1543
        %v2358 = vunpack.c.h.b16 %v1543
        %v2359 = vunpack.c.l.b16 %v1544
        %v2360 = vunpack.c.h.b16 %v1544
        %v2361 = vunpack.c.l.b16 %v1545
        %v2362 = vunpack.c.h.b16 %v1545
        %v2363 = vunpack.c.l.b16 %v1546
        %v2364 = vunpack.c.h.b16 %v1546
        %v2365 = vunpack.c.l.b16 %v1547
        %v2366 = vunpack.c.h.b16 %v1547
        %v2367 = vunpack.c.l.b16 %v1548
        %v2368 = vunpack.c.h.b16 %v1548
        %v2369 = vunpack.c.l.b16 %v1549
        %v2370 = vunpack.c.h.b16 %v1549
        %v2371 = vunpack.c.l.b16 %v1550
        %v2372 = vunpack.c.h.b16 %v1550
        %v2373 = vunpack.c.l.b16 %v1551
        %v2374 = vunpack.c.h.b16 %v1551
        %v2375 = vunpack.c.l.b16 %v1552
        %v2376 = vunpack.c.h.b16 %v1552
        %v2377 = vunpack.c.l.b16 %v1553
        %v2378 = vunpack.c.h.b16 %v1553
        %v2379 = vunpack.c.l.b16 %v1554
        %v2380 = vunpack.c.h.b16 %v1554
        %v2381 = vunpack.c.l.b16 %v1555
        %v2382 = vunpack.c.h.b16 %v1555
        %v2383 = vunpack.c.l.b16 %v1556
        %v2384 = vunpack.c.h.b16 %v1556
        %v2385 = vunpack.c.l.b16 %v1557
        %v2386 = vunpack.c.h.b16 %v1557
        %v2387 = vunpack.c.l.b16 %v1558
        %v2388 = vunpack.c.h.b16 %v1558
        %v2389 = vunpack.c.l.b16 %v1559
        %v2390 = vunpack.c.h.b16 %v1559
        %v2391 = vunpack.c.l.b16 %v1560
        %v2392 = vunpack.c.h.b16 %v1560
        %v2393 = vunpack.c.l.b16 %v1561
        %v2394 = vunpack.c.h.b16 %v1561
        %v2395 = vunpack.c.l.b16 %v1562
        %v2396 = vunpack.c.h.b16 %v1562
        %v2397 = vunpack.c.l.b16 %v1563
        %v2398 = vunpack.c.h.b16 %v1563
        %v2399 = vunpack.c.l.b16 %v1564
        %v2400 = vunpack.c.h.b16 %v1564
        %v2401 = vunpack.c.l.b16 %v1565
        %v2402 = vunpack.c.h.b16 %v1565
        %v2403 = vunpack.c.l.b16 %v1566
        %v2404 = vunpack.c.h.b16 %v1566
        %v2405 = vunpack.c.l.b16 %v1567
        %v2406 = vunpack.c.h.b16 %v1567
        %v2407 = vunpack.c.l.b16 %v1568
        %v2408 = vunpack.c.h.b16 %v1568
        %v2409 = vunpack.c.l.b16 %v1569
        %v2410 = vunpack.c.h.b16 %v1569
        %v2411 = vunpack.c.l.b16 %v1570
        %v2412 = vunpack.c.h.b16 %v1570
        %v2413 = vunpack.c.l.b16 %v1571
        %v2414 = vunpack.c.h.b16 %v1571
        %v2415 = vunpack.c.l.b16 %v1572
        %v2416 = vunpack.c.h.b16 %v1572
        %v2417 = vunpack.c.l.b16 %v1573
        %v2418 = vunpack.c.h.b16 %v1573
        %v2419 = vunpack.c.l.b16 %v1574
        %v2420 = vunpack.c.h.b16 %v1574
        %v2421 = vunpack.c.l.b16 %v1575
        %v2422 = vunpack.c.h.b16 %v1575
        %v2423 = vunpack.c.l.b16 %v1576
        %v2424 = vunpack.c.h.b16 %v1576
        %v2425 = vunpack.c.l.b16 %v1577
        %v2426 = vunpack.c.h.b16 %v1577
        %v2427 = vunpack.c.l.b16 %v1578
        %v2428 = vunpack.c.h.b16 %v1578
        %v2429 = vunpack.c.l.b16 %v1579
        %v2430 = vunpack.c.h.b16 %v1579
        %v2431 = vunpack.c.l.b16 %v1580
        %v2432 = vunpack.c.h.b16 %v1580
        %v2433 = vunpack.c.l.b16 %v1581
        %v2434 = vunpack.c.h.b16 %v1581
        %v2435 = vunpack.c.l.b16 %v1582
        %v2436 = vunpack.c.h.b16 %v1582
        %v2437 = vunpack.c.l.b16 %v1583
        %v2438 = vunpack.c.h.b16 %v1583
        %v2439 = vunpack.c.l.b16 %v1584
        %v2440 = vunpack.c.h.b16 %v1584
        %v2441 = vpack.c.b16 %v1931, %v1929
        %v2442 = vpack.c.b16 %v1932, %v1930
        %v2443 = vpack.c.b16 %v1935, %v1933
        %v2444 = vpack.c.b16 %v1936, %v1934
        %v2445 = vpack.c.b16 %v1939, %v1937
        %v2446 = vpack.c.b16 %v1940, %v1938
        %v2447 = vpack.c.b16 %v1943, %v1941
        %v2448 = vpack.c.b16 %v1944, %v1942
        %v2449 = vpack.c.b16 %v1947, %v1945
        %v2450 = vpack.c.b16 %v1948, %v1946
        %v2451 = vpack.c.b16 %v1951, %v1949
        %v2452 = vpack.c.b16 %v1952, %v1950
        %v2453 = vpack.c.b16 %v1955, %v1953
        %v2454 = vpack.c.b16 %v1956, %v1954
        %v2455 = vpack.c.b16 %v1959, %v1957
        %v2456 = vpack.c.b16 %v1960, %v1958
        %v2457 = vpack.c.b16 %v1963, %v1961
        %v2458 = vpack.c.b16 %v1964, %v1962
        %v2459 = vpack.c.b16 %v1967, %v1965
        %v2460 = vpack.c.b16 %v1968, %v1966
        %v2461 = vpack.c.b16 %v1971, %v1969
        %v2462 = vpack.c.b16 %v1972, %v1970
        %v2463 = vpack.c.b16 %v1975, %v1973
        %v2464 = vpack.c.b16 %v1976, %v1974
        %v2465 = vpack.c.b16 %v1979, %v1977
        %v2466 = vpack.c.b16 %v1980, %v1978
        %v2467 = vpack.c.b16 %v1983, %v1981
        %v2468 = vpack.c.b16 %v1984, %v1982
        %v2469 = vpack.c.b16 %v1987, %v1985
        %v2470 = vpack.c.b16 %v1988, %v1986
        %v2471 = vpack.c.b16 %v1991, %v1989
        %v2472 = vpack.c.b16 %v1992, %v1990
        %v2473 = vpack.c.b16 %v1995, %v1993
        %v2474 = vpack.c.b16 %v1996, %v1994
        %v2475 = vpack.c.b16 %v1999, %v1997
        %v2476 = vpack.c.b16 %v2000, %v1998
        %v2477 = vpack.c.b16 %v2003, %v2001
        %v2478 = vpack.c.b16 %v2004, %v2002
        %v2479 = vpack.c.b16 %v2007, %v2005
        %v2480 = vpack.c.b16 %v2008, %v2006
        %v2481 = vpack.c.b16 %v2011, %v2009
        %v2482 = vpack.c.b16 %v2012, %v2010
        %v2483 = vpack.c.b16 %v2015, %v2013
        %v2484 = vpack.c.b16 %v2016, %v2014
        %v2485 = vpack.c.b16 %v2019, %v2017
        %v2486 = vpack.c.b16 %v2020, %v2018
        %v2487 = vpack.c.b16 %v2023, %v2021
        %v2488 = vpack.c.b16 %v2024, %v2022
        %v2489 = vpack.c.b16 %v2027, %v2025
        %v2490 = vpack.c.b16 %v2028, %v2026
        %v2491 = vpack.c.b16 %v2031, %v2029
        %v2492 = vpack.c.b16 %v2032, %v2030
        %v2493 = vpack.c.b16 %v2035, %v2033
        %v2494 = vpack.c.b16 %v2036, %v2034
        %v2495 = vpack.c.b16 %v2039, %v2037
        %v2496 = vpack.c.b16 %v2040, %v2038
        %v2497 = vpack.c.b16 %v2043, %v2041
        %v2498 = vpack.c.b16 %v2044, %v2042
        %v2499 = vpack.c.b16 %v2047, %v2045
        %v2500 = vpack.c.b16 %v2048, %v2046
        %v2501 = vpack.c.b16 %v2051, %v2049
        %v2502 = vpack.c.b16 %v2052, %v2050
        %v2503 = vpack.c.b16 %v2055, %v2053
        %v2504 = vpack.c.b16 %v2056, %v2054
        %v2505 = vpack.c.b16 %v2059, %v2057
        %v2506 = vpack.c.b16 %v2060, %v2058
        %v2507 = vpack.c.b16 %v2063, %v2061
        %v2508 = vpack.c.b16 %v2064, %v2062
        %v2509 = vpack.c.b16 %v2067, %v2065
        %v2510 = vpack.c.b16 %v2068, %v2066
        %v2511 = vpack.c.b16 %v2071, %v2069
        %v2512 = vpack.c.b16 %v2072, %v2070
        %v2513 = vpack.c.b16 %v2075, %v2073
        %v2514 = vpack.c.b16 %v2076, %v2074
        %v2515 = vpack.c.b16 %v2079, %v2077
        %v2516 = vpack.c.b16 %v2080, %v2078
        %v2517 = vpack.c.b16 %v2083, %v2081
        %v2518 = vpack.c.b16 %v2084, %v2082
        %v2519 = vpack.c.b16 %v2087, %v2085
        %v2520 = vpack.c.b16 %v2088, %v2086
        %v2521 = vpack.c.b16 %v2091, %v2089
        %v2522 = vpack.c.b16 %v2092, %v2090
        %v2523 = vpack.c.b16 %v2095, %v2093
        %v2524 = vpack.c.b16 %v2096, %v2094
        %v2525 = vpack.c.b16 %v2099, %v2097
        %v2526 = vpack.c.b16 %v2100, %v2098
        %v2527 = vpack.c.b16 %v2103, %v2101
        %v2528 = vpack.c.b16 %v2104, %v2102
        %v2529 = vpack.c.b16 %v2107, %v2105
        %v2530 = vpack.c.b16 %v2108, %v2106
        %v2531 = vpack.c.b16 %v2111, %v2109
        %v2532 = vpack.c.b16 %v2112, %v2110
        %v2533 = vpack.c.b16 %v2115, %v2113
        %v2534 = vpack.c.b16 %v2116, %v2114
        %v2535 = vpack.c.b16 %v2119, %v2117
        %v2536 = vpack.c.b16 %v2120, %v2118
        %v2537 = vpack.c.b16 %v2123, %v2121
        %v2538 = vpack.c.b16 %v2124, %v2122
        %v2539 = vpack.c.b16 %v2127, %v2125
        %v2540 = vpack.c.b16 %v2128, %v2126
        %v2541 = vpack.c.b16 %v2131, %v2129
        %v2542 = vpack.c.b16 %v2132, %v2130
        %v2543 = vpack.c.b16 %v2135, %v2133
        %v2544 = vpack.c.b16 %v2136, %v2134
        %v2545 = vpack.c.b16 %v2139, %v2137
        %v2546 = vpack.c.b16 %v2140, %v2138
        %v2547 = vpack.c.b16 %v2143, %v2141
        %v2548 = vpack.c.b16 %v2144, %v2142
        %v2549 = vpack.c.b16 %v2147, %v2145
        %v2550 = vpack.c.b16 %v2148, %v2146
        %v2551 = vpack.c.b16 %v2151, %v2149
        %v2552 = vpack.c.b16 %v2152, %v2150
        %v2553 = vpack.c.b16 %v2155, %v2153
        %v2554 = vpack.c.b16 %v2156, %v2154
        %v2555 = vpack.c.b16 %v2159, %v2157
        %v2556 = vpack.c.b16 %v2160, %v2158
        %v2557 = vpack.c.b16 %v2163, %v2161
        %v2558 = vpack.c.b16 %v2164, %v2162
        %v2559 = vpack.c.b16 %v2167, %v2165
        %v2560 = vpack.c.b16 %v2168, %v2166
        %v2561 = vpack.c.b16 %v2171, %v2169
        %v2562 = vpack.c.b16 %v2172, %v2170
        %v2563 = vpack.c.b16 %v2175, %v2173
        %v2564 = vpack.c.b16 %v2176, %v2174
        %v2565 = vpack.c.b16 %v2179, %v2177
        %v2566 = vpack.c.b16 %v2180, %v2178
        %v2567 = vpack.c.b16 %v2183, %v2181
        %v2568 = vpack.c.b16 %v2184, %v2182
        %v2569 = vpack.c.b16 %v2187, %v2185
        %v2570 = vpack.c.b16 %v2188, %v2186
        %v2571 = vpack.c.b16 %v2191, %v2189
        %v2572 = vpack.c.b16 %v2192, %v2190
        %v2573 = vpack.c.b16 %v2195, %v2193
        %v2574 = vpack.c.b16 %v2196, %v2194
        %v2575 = vpack.c.b16 %v2199, %v2197
        %v2576 = vpack.c.b16 %v2200, %v2198
        %v2577 = vpack.c.b16 %v2203, %v2201
        %v2578 = vpack.c.b16 %v2204, %v2202
        %v2579 = vpack.c.b16 %v2207, %v2205
        %v2580 = vpack.c.b16 %v2208, %v2206
        %v2581 = vpack.c.b16 %v2211, %v2209
        %v2582 = vpack.c.b16 %v2212, %v2210
        %v2583 = vpack.c.b16 %v2215, %v2213
        %v2584 = vpack.c.b16 %v2216, %v2214
        %v2585 = vpack.c.b16 %v2219, %v2217
        %v2586 = vpack.c.b16 %v2220, %v2218
        %v2587 = vpack.c.b16 %v2223, %v2221
        %v2588 = vpack.c.b16 %v2224, %v2222
        %v2589 = vpack.c.b16 %v2227, %v2225
        %v2590 = vpack.c.b16 %v2228, %v2226
        %v2591 = vpack.c.b16 %v2231, %v2229
        %v2592 = vpack.c.b16 %v2232, %v2230
        %v2593 = vpack.c.b16 %v2235, %v2233
        %v2594 = vpack.c.b16 %v2236, %v2234
        %v2595 = vpack.c.b16 %v2239, %v2237
        %v2596 = vpack.c.b16 %v2240, %v2238
        %v2597 = vpack.c.b16 %v2243, %v2241
        %v2598 = vpack.c.b16 %v2244, %v2242
        %v2599 = vpack.c.b16 %v2247, %v2245
        %v2600 = vpack.c.b16 %v2248, %v2246
        %v2601 = vpack.c.b16 %v2251, %v2249
        %v2602 = vpack.c.b16 %v2252, %v2250
        %v2603 = vpack.c.b16 %v2255, %v2253
        %v2604 = vpack.c.b16 %v2256, %v2254
        %v2605 = vpack.c.b16 %v2259, %v2257
        %v2606 = vpack.c.b16 %v2260, %v2258
        %v2607 = vpack.c.b16 %v2263, %v2261
        %v2608 = vpack.c.b16 %v2264, %v2262
        %v2609 = vpack.c.b16 %v2267, %v2265
        %v2610 = vpack.c.b16 %v2268, %v2266
        %v2611 = vpack.c.b16 %v2271, %v2269
        %v2612 = vpack.c.b16 %v2272, %v2270
        %v2613 = vpack.c.b16 %v2275, %v2273
        %v2614 = vpack.c.b16 %v2276, %v2274
        %v2615 = vpack.c.b16 %v2279, %v2277
        %v2616 = vpack.c.b16 %v2280, %v2278
        %v2617 = vpack.c.b16 %v2283, %v2281
        %v2618 = vpack.c.b16 %v2284, %v2282
        %v2619 = vpack.c.b16 %v2287, %v2285
        %v2620 = vpack.c.b16 %v2288, %v2286
        %v2621 = vpack.c.b16 %v2291, %v2289
        %v2622 = vpack.c.b16 %v2292, %v2290
        %v2623 = vpack.c.b16 %v2295, %v2293
        %v2624 = vpack.c.b16 %v2296, %v2294
        %v2625 = vpack.c.b16 %v2299, %v2297
        %v2626 = vpack.c.b16 %v2300, %v2298
        %v2627 = vpack.c.b16 %v2303, %v2301
        %v2628 = vpack.c.b16 %v2304, %v2302
        %v2629 = vpack.c.b16 %v2307, %v2305
        %v2630 = vpack.c.b16 %v2308, %v2306
        %v2631 = vpack.c.b16 %v2311, %v2309
        %v2632 = vpack.c.b16 %v2312, %v2310
        %v2633 = vpack.c.b16 %v2315, %v2313
        %v2634 = vpack.c.b16 %v2316, %v2314
        %v2635 = vpack.c.b16 %v2319, %v2317
        %v2636 = vpack.c.b16 %v2320, %v2318
        %v2637 = vpack.c.b16 %v2323, %v2321
        %v2638 = vpack.c.b16 %v2324, %v2322
        %v2639 = vpack.c.b16 %v2327, %v2325
        %v2640 = vpack.c.b16 %v2328, %v2326
        %v2641 = vpack.c.b16 %v2331, %v2329
        %v2642 = vpack.c.b16 %v2332, %v2330
        %v2643 = vpack.c.b16 %v2335, %v2333
        %v2644 = vpack.c.b16 %v2336, %v2334
        %v2645 = vpack.c.b16 %v2339, %v2337
        %v2646 = vpack.c.b16 %v2340, %v2338
        %v2647 = vpack.c.b16 %v2343, %v2341
        %v2648 = vpack.c.b16 %v2344, %v2342
        %v2649 = vpack.c.b16 %v2347, %v2345
        %v2650 = vpack.c.b16 %v2348, %v2346
        %v2651 = vpack.c.b16 %v2351, %v2349
        %v2652 = vpack.c.b16 %v2352, %v2350
        %v2653 = vpack.c.b16 %v2355, %v2353
        %v2654 = vpack.c.b16 %v2356, %v2354
        %v2655 = vpack.c.b16 %v2359, %v2357
        %v2656 = vpack.c.b16 %v2360, %v2358
        %v2657 = vpack.c.b16 %v2363, %v2361
        %v2658 = vpack.c.b16 %v2364, %v2362
        %v2659 = vpack.c.b16 %v2367, %v2365
        %v2660 = vpack.c.b16 %v2368, %v2366
        %v2661 = vpack.c.b16 %v2371, %v2369
        %v2662 = vpack.c.b16 %v2372, %v2370
        %v2663 = vpack.c.b16 %v2375, %v2373
        %v2664 = vpack.c.b16 %v2376, %v2374
        %v2665 = vpack.c.b16 %v2379, %v2377
        %v2666 = vpack.c.b16 %v2380, %v2378
        %v2667 = vpack.c.b16 %v2383, %v2381
        %v2668 = vpack.c.b16 %v2384, %v2382
        %v2669 = vpack.c.b16 %v2387, %v2385
        %v2670 = vpack.c.b16 %v2388, %v2386
        %v2671 = vpack.c.b16 %v2391, %v2389
        %v2672 = vpack.c.b16 %v2392, %v2390
        %v2673 = vpack.c.b16 %v2395, %v2393
        %v2674 = vpack.c.b16 %v2396, %v2394
        %v2675 = vpack.c.b16 %v2399, %v2397
        %v2676 = vpack.c.b16 %v2400, %v2398
        %v2677 = vpack.c.b16 %v2403, %v2401
        %v2678 = vpack.c.b16 %v2404, %v2402
        %v2679 = vpack.c.b16 %v2407, %v2405
        %v2680 = vpack.c.b16 %v2408, %v2406
        %v2681 = vpack.c.b16 %v2411, %v2409
        %v2682 = vpack.c.b16 %v2412, %v2410
        %v2683 = vpack.c.b16 %v2415, %v2413
        %v2684 = vpack.c.b16 %v2416, %v2414
        %v2685 = vpack.c.b16 %v2419, %v2417
        %v2686 = vpack.c.b16 %v2420, %v2418
        %v2687 = vpack.c.b16 %v2423, %v2421
        %v2688 = vpack.c.b16 %v2424, %v2422
        %v2689 = vpack.c.b16 %v2427, %v2425
        %v2690 = vpack.c.b16 %v2428, %v2426
        %v2691 = vpack.c.b16 %v2431, %v2429
        %v2692 = vpack.c.b16 %v2432, %v2430
        %v2693 = vpack.c.b16 %v2435, %v2433
        %v2694 = vpack.c.b16 %v2436, %v2434
        %v2695 = vpack.c.b16 %v2439, %v2437
        %v2696 = vpack.c.b16 %v2440, %v2438
        %2953 = vmatprep.subr.bf16.mxu0 %v2456
        %2954 = vmatpush1.bf16.msra.mxu0 %v2455
        %2955 = vmatprep.subr.bf16.mxu0 %v2454
        %2956 = vmatpush1.bf16.msra.mxu0 %v2453
        %2957 = vmatprep.subr.bf16.mxu0 %v2452
        %2958 = vmatpush1.bf16.msra.mxu0 %v2451
        %2959 = vmatprep.subr.bf16.mxu0 %v2450
        %2960 = vmatpush1.bf16.msra.mxu0 %v2449
        %2961 = vmatprep.subr.bf16.mxu0 %v2448
        %2962 = vmatpush1.bf16.msra.mxu0 %v2447
        %2963 = vmatprep.subr.bf16.mxu0 %v2446
        %2964 = vmatpush1.bf16.msra.mxu0 %v2445
        %2965 = vmatprep.subr.bf16.mxu0 %v2444
        %2966 = vmatpush1.bf16.msra.mxu0 %v2443
        %2967 = vmatprep.subr.bf16.mxu0 %v2442
        %2968 = vmatpush1.bf16.msra.mxu0 %v2441
        %2969 = vmatprep.subr.bf16.mxu0 %v2472
        %2970 = vmatpush2.bf16.msra.mxu0 %v2471
        %2971 = vmatprep.subr.bf16.mxu0 %v2470
        %2972 = vmatpush2.bf16.msra.mxu0 %v2469
        %2973 = vmatprep.subr.bf16.mxu0 %v2468
        %2974 = vmatpush2.bf16.msra.mxu0 %v2467
        %2975 = vmatprep.subr.bf16.mxu0 %v2466
        %2976 = vmatpush2.bf16.msra.mxu0 %v2465
        %2977 = vmatprep.subr.bf16.mxu0 %v2464
        %2978 = vmatpush2.bf16.msra.mxu0 %v2463
        %2979 = vmatprep.subr.bf16.mxu0 %v2462
        %2980 = vmatpush2.bf16.msra.mxu0 %v2461
        %2981 = vmatprep.subr.bf16.mxu0 %v2460
        %2982 = vmatpush2.bf16.msra.mxu0 %v2459
        %2983 = vmatprep.subr.bf16.mxu0 %v2458
        %2984 = vmatpush2.bf16.msra.mxu0 %v2457
        %2985 = vmatprep.mubr.bf16.mxu0 %v1604
        %2986 = vmatmul.mubr.bf16.gmra.mxu0 %v1596
        %v2987 = vpop.f32.mrf.mxu0
        %v2988 = vadd.f32 0.0, %v2987
        %v2989 = vpop.f32.mrf.mxu0
        %v2990 = vadd.f32 0.0, %v2989
        %v2991 = vpop.f32.mrf.mxu0
        %v2992 = vpop.f32.mrf.mxu0
        %2993 = vdwg.mxu0
        %2994 = vmatprep.subr.bf16.mxu0 %v2488
        %2995 = vmatpush1.bf16.msra.mxu0 %v2487
        %2996 = vmatprep.subr.bf16.mxu0 %v2486
        %2997 = vmatpush1.bf16.msra.mxu0 %v2485
        %2998 = vmatprep.subr.bf16.mxu0 %v2484
        %2999 = vmatpush1.bf16.msra.mxu0 %v2483
        %3000 = vmatprep.subr.bf16.mxu0 %v2482
        %3001 = vmatpush1.bf16.msra.mxu0 %v2481
        %3002 = vmatprep.subr.bf16.mxu0 %v2480
        %3003 = vmatpush1.bf16.msra.mxu0 %v2479
        %3004 = vmatprep.subr.bf16.mxu0 %v2478
        %3005 = vmatpush1.bf16.msra.mxu0 %v2477
        %3006 = vmatprep.subr.bf16.mxu0 %v2476
        %3007 = vmatpush1.bf16.msra.mxu0 %v2475
        %3008 = vmatprep.subr.bf16.mxu0 %v2474
        %3009 = vmatpush1.bf16.msra.mxu0 %v2473
        %3010 = vmatprep.subr.bf16.mxu0 %v2504
        %3011 = vmatpush2.bf16.msra.mxu0 %v2503
        %3012 = vmatprep.subr.bf16.mxu0 %v2502
        %3013 = vmatpush2.bf16.msra.mxu0 %v2501
        %3014 = vmatprep.subr.bf16.mxu0 %v2500
        %3015 = vmatpush2.bf16.msra.mxu0 %v2499
        %3016 = vmatprep.subr.bf16.mxu0 %v2498
        %3017 = vmatpush2.bf16.msra.mxu0 %v2497
        %3018 = vmatprep.subr.bf16.mxu0 %v2496
        %3019 = vmatpush2.bf16.msra.mxu0 %v2495
        %3020 = vmatprep.subr.bf16.mxu0 %v2494
        %3021 = vmatpush2.bf16.msra.mxu0 %v2493
        %3022 = vmatprep.subr.bf16.mxu0 %v2492
        %3023 = vmatpush2.bf16.msra.mxu0 %v2491
        %3024 = vmatprep.subr.bf16.mxu0 %v2490
        %3025 = vmatpush2.bf16.msra.mxu0 %v2489
        %3026 = vmatprep.mubr.bf16.mxu0 %v1605
        %3027 = vmatmul.mubr.bf16.gmra.mxu0 %v1603
        %v3028 = vpop.f32.mrf.mxu0
        %v3029 = vadd.f32 %v2988, %v3028
        %v3030 = vpop.f32.mrf.mxu0
        %v3031 = vadd.f32 %v2990, %v3030
        %v3032 = vpop.f32.mrf.mxu0
        %v3033 = vpop.f32.mrf.mxu0
        %3034 = vdwg.mxu0
        %3035 = vmatprep.subr.bf16.mxu0 %v2520
        %3036 = vmatpush1.bf16.msra.mxu0 %v2519
        %3037 = vmatprep.subr.bf16.mxu0 %v2518
        %3038 = vmatpush1.bf16.msra.mxu0 %v2517
        %3039 = vmatprep.subr.bf16.mxu0 %v2516
        %3040 = vmatpush1.bf16.msra.mxu0 %v2515
        %3041 = vmatprep.subr.bf16.mxu0 %v2514
        %3042 = vmatpush1.bf16.msra.mxu0 %v2513
        %3043 = vmatprep.subr.bf16.mxu0 %v2512
        %3044 = vmatpush1.bf16.msra.mxu0 %v2511
        %3045 = vmatprep.subr.bf16.mxu0 %v2510
        %3046 = vmatpush1.bf16.msra.mxu0 %v2509
        %3047 = vmatprep.subr.bf16.mxu0 %v2508
        %3048 = vmatpush1.bf16.msra.mxu0 %v2507
        %3049 = vmatprep.subr.bf16.mxu0 %v2506
        %3050 = vmatpush1.bf16.msra.mxu0 %v2505
        %3051 = vmatprep.subr.bf16.mxu0 %v2536
        %3052 = vmatpush2.bf16.msra.mxu0 %v2535
        %3053 = vmatprep.subr.bf16.mxu0 %v2534
        %3054 = vmatpush2.bf16.msra.mxu0 %v2533
        %3055 = vmatprep.subr.bf16.mxu0 %v2532
        %3056 = vmatpush2.bf16.msra.mxu0 %v2531
        %3057 = vmatprep.subr.bf16.mxu0 %v2530
        %3058 = vmatpush2.bf16.msra.mxu0 %v2529
        %3059 = vmatprep.subr.bf16.mxu0 %v2528
        %3060 = vmatpush2.bf16.msra.mxu0 %v2527
        %3061 = vmatprep.subr.bf16.mxu0 %v2526
        %3062 = vmatpush2.bf16.msra.mxu0 %v2525
        %3063 = vmatprep.subr.bf16.mxu0 %v2524
        %3064 = vmatpush2.bf16.msra.mxu0 %v2523
        %3065 = vmatprep.subr.bf16.mxu0 %v2522
        %3066 = vmatpush2.bf16.msra.mxu0 %v2521
        %3067 = vmatprep.mubr.bf16.mxu0 %v1621
        %3068 = vmatmul.mubr.bf16.gmra.mxu0 %v1613
        %v3069 = vpop.f32.mrf.mxu0
        %v3070 = vadd.f32 %v3029, %v3069
        %v3071 = vpop.f32.mrf.mxu0
        %v3072 = vadd.f32 %v3031, %v3071
        %v3073 = vpop.f32.mrf.mxu0
        %v3074 = vpop.f32.mrf.mxu0
        %3075 = vdwg.mxu0
        %3076 = vmatprep.subr.bf16.mxu0 %v2552
        %3077 = vmatpush1.bf16.msra.mxu0 %v2551
        %3078 = vmatprep.subr.bf16.mxu0 %v2550
        %3079 = vmatpush1.bf16.msra.mxu0 %v2549
        %3080 = vmatprep.subr.bf16.mxu0 %v2548
        %3081 = vmatpush1.bf16.msra.mxu0 %v2547
        %3082 = vmatprep.subr.bf16.mxu0 %v2546
        %3083 = vmatpush1.bf16.msra.mxu0 %v2545
        %3084 = vmatprep.subr.bf16.mxu0 %v2544
        %3085 = vmatpush1.bf16.msra.mxu0 %v2543
        %3086 = vmatprep.subr.bf16.mxu0 %v2542
        %3087 = vmatpush1.bf16.msra.mxu0 %v2541
        %3088 = vmatprep.subr.bf16.mxu0 %v2540
        %3089 = vmatpush1.bf16.msra.mxu0 %v2539
        %3090 = vmatprep.subr.bf16.mxu0 %v2538
        %3091 = vmatpush1.bf16.msra.mxu0 %v2537
        %3092 = vmatprep.subr.bf16.mxu0 %v2568
        %3093 = vmatpush2.bf16.msra.mxu0 %v2567
        %3094 = vmatprep.subr.bf16.mxu0 %v2566
        %3095 = vmatpush2.bf16.msra.mxu0 %v2565
        %3096 = vmatprep.subr.bf16.mxu0 %v2564
        %3097 = vmatpush2.bf16.msra.mxu0 %v2563
        %3098 = vmatprep.subr.bf16.mxu0 %v2562
        %3099 = vmatpush2.bf16.msra.mxu0 %v2561
        %3100 = vmatprep.subr.bf16.mxu0 %v2560
        %3101 = vmatpush2.bf16.msra.mxu0 %v2559
        %3102 = vmatprep.subr.bf16.mxu0 %v2558
        %3103 = vmatpush2.bf16.msra.mxu0 %v2557
        %3104 = vmatprep.subr.bf16.mxu0 %v2556
        %3105 = vmatpush2.bf16.msra.mxu0 %v2555
        %3106 = vmatprep.subr.bf16.mxu0 %v2554
        %3107 = vmatpush2.bf16.msra.mxu0 %v2553
        %3108 = vmatprep.mubr.bf16.mxu0 %v1622
        %3109 = vmatmul.mubr.bf16.gmra.mxu0 %v1620
        %v3110 = vpop.f32.mrf.mxu0
        %v3111 = vadd.f32 %v3070, %v3110
        %v3112 = vpop.f32.mrf.mxu0
        %v3113 = vadd.f32 %v3072, %v3112
        %v3114 = vpop.f32.mrf.mxu0
        %v3115 = vpop.f32.mrf.mxu0
        %3116 = vdwg.mxu0
        %3117 = vmatprep.subr.bf16.mxu0 %v2584
        %3118 = vmatpush1.bf16.msra.mxu0 %v2583
        %3119 = vmatprep.subr.bf16.mxu0 %v2582
        %3120 = vmatpush1.bf16.msra.mxu0 %v2581
        %3121 = vmatprep.subr.bf16.mxu0 %v2580
        %3122 = vmatpush1.bf16.msra.mxu0 %v2579
        %3123 = vmatprep.subr.bf16.mxu0 %v2578
        %3124 = vmatpush1.bf16.msra.mxu0 %v2577
        %3125 = vmatprep.subr.bf16.mxu0 %v2576
        %3126 = vmatpush1.bf16.msra.mxu0 %v2575
        %3127 = vmatprep.subr.bf16.mxu0 %v2574
        %3128 = vmatpush1.bf16.msra.mxu0 %v2573
        %3129 = vmatprep.subr.bf16.mxu0 %v2572
        %3130 = vmatpush1.bf16.msra.mxu0 %v2571
        %3131 = vmatprep.subr.bf16.mxu0 %v2570
        %3132 = vmatpush1.bf16.msra.mxu0 %v2569
        %3133 = vmatprep.subr.bf16.mxu0 %v2600
        %3134 = vmatpush2.bf16.msra.mxu0 %v2599
        %3135 = vmatprep.subr.bf16.mxu0 %v2598
        %3136 = vmatpush2.bf16.msra.mxu0 %v2597
        %3137 = vmatprep.subr.bf16.mxu0 %v2596
        %3138 = vmatpush2.bf16.msra.mxu0 %v2595
        %3139 = vmatprep.subr.bf16.mxu0 %v2594
        %3140 = vmatpush2.bf16.msra.mxu0 %v2593
        %3141 = vmatprep.subr.bf16.mxu0 %v2592
        %3142 = vmatpush2.bf16.msra.mxu0 %v2591
        %3143 = vmatprep.subr.bf16.mxu0 %v2590
        %3144 = vmatpush2.bf16.msra.mxu0 %v2589
        %3145 = vmatprep.subr.bf16.mxu0 %v2588
        %3146 = vmatpush2.bf16.msra.mxu0 %v2587
        %3147 = vmatprep.subr.bf16.mxu0 %v2586
        %3148 = vmatpush2.bf16.msra.mxu0 %v2585
        %3149 = vmatprep.mubr.bf16.mxu0 %v1638
        %3150 = vmatmul.mubr.bf16.gmra.mxu0 %v1630
        %v3151 = vpop.f32.mrf.mxu0
        %v3152 = vadd.f32 %v3111, %v3151
        %v3153 = vpop.f32.mrf.mxu0
        %v3154 = vadd.f32 %v3113, %v3153
        %v3155 = vpop.f32.mrf.mxu0
        %v3156 = vpop.f32.mrf.mxu0
        %3157 = vdwg.mxu0
        %3158 = vmatprep.subr.bf16.mxu0 %v2616
        %3159 = vmatpush1.bf16.msra.mxu0 %v2615
        %3160 = vmatprep.subr.bf16.mxu0 %v2614
        %3161 = vmatpush1.bf16.msra.mxu0 %v2613
        %3162 = vmatprep.subr.bf16.mxu0 %v2612
        %3163 = vmatpush1.bf16.msra.mxu0 %v2611
        %3164 = vmatprep.subr.bf16.mxu0 %v2610
        %3165 = vmatpush1.bf16.msra.mxu0 %v2609
        %3166 = vmatprep.subr.bf16.mxu0 %v2608
        %3167 = vmatpush1.bf16.msra.mxu0 %v2607
        %3168 = vmatprep.subr.bf16.mxu0 %v2606
        %3169 = vmatpush1.bf16.msra.mxu0 %v2605
        %3170 = vmatprep.subr.bf16.mxu0 %v2604
        %3171 = vmatpush1.bf16.msra.mxu0 %v2603
        %3172 = vmatprep.subr.bf16.mxu0 %v2602
        %3173 = vmatpush1.bf16.msra.mxu0 %v2601
        %3174 = vmatprep.subr.bf16.mxu0 %v2632
        %3175 = vmatpush2.bf16.msra.mxu0 %v2631
        %3176 = vmatprep.subr.bf16.mxu0 %v2630
        %3177 = vmatpush2.bf16.msra.mxu0 %v2629
        %3178 = vmatprep.subr.bf16.mxu0 %v2628
        %3179 = vmatpush2.bf16.msra.mxu0 %v2627
        %3180 = vmatprep.subr.bf16.mxu0 %v2626
        %3181 = vmatpush2.bf16.msra.mxu0 %v2625
        %3182 = vmatprep.subr.bf16.mxu0 %v2624
        %3183 = vmatpush2.bf16.msra.mxu0 %v2623
        %3184 = vmatprep.subr.bf16.mxu0 %v2622
        %3185 = vmatpush2.bf16.msra.mxu0 %v2621
        %3186 = vmatprep.subr.bf16.mxu0 %v2620
        %3187 = vmatpush2.bf16.msra.mxu0 %v2619
        %3188 = vmatprep.subr.bf16.mxu0 %v2618
        %3189 = vmatpush2.bf16.msra.mxu0 %v2617
        %3190 = vmatprep.mubr.bf16.mxu0 %v1639
        %3191 = vmatmul.mubr.bf16.gmra.mxu0 %v1637
        %v3192 = vpop.f32.mrf.mxu0
        %v3193 = vadd.f32 %v3152, %v3192
        %v3194 = vpop.f32.mrf.mxu0
        %v3195 = vadd.f32 %v3154, %v3194
        %v3196 = vpop.f32.mrf.mxu0
        %v3197 = vpop.f32.mrf.mxu0
        %3198 = vdwg.mxu0
        %3199 = vmatprep.subr.bf16.mxu0 %v2648
        %3200 = vmatpush1.bf16.msra.mxu0 %v2647
        %3201 = vmatprep.subr.bf16.mxu0 %v2646
        %3202 = vmatpush1.bf16.msra.mxu0 %v2645
        %3203 = vmatprep.subr.bf16.mxu0 %v2644
        %3204 = vmatpush1.bf16.msra.mxu0 %v2643
        %3205 = vmatprep.subr.bf16.mxu0 %v2642
        %3206 = vmatpush1.bf16.msra.mxu0 %v2641
        %3207 = vmatprep.subr.bf16.mxu0 %v2640
        %3208 = vmatpush1.bf16.msra.mxu0 %v2639
        %3209 = vmatprep.subr.bf16.mxu0 %v2638
        %3210 = vmatpush1.bf16.msra.mxu0 %v2637
        %3211 = vmatprep.subr.bf16.mxu0 %v2636
        %3212 = vmatpush1.bf16.msra.mxu0 %v2635
        %3213 = vmatprep.subr.bf16.mxu0 %v2634
        %3214 = vmatpush1.bf16.msra.mxu0 %v2633
        %3215 = vmatprep.subr.bf16.mxu0 %v2664
        %3216 = vmatpush2.bf16.msra.mxu0 %v2663
        %3217 = vmatprep.subr.bf16.mxu0 %v2662
        %3218 = vmatpush2.bf16.msra.mxu0 %v2661
        %3219 = vmatprep.subr.bf16.mxu0 %v2660
        %3220 = vmatpush2.bf16.msra.mxu0 %v2659
        %3221 = vmatprep.subr.bf16.mxu0 %v2658
        %3222 = vmatpush2.bf16.msra.mxu0 %v2657
        %3223 = vmatprep.subr.bf16.mxu0 %v2656
        %3224 = vmatpush2.bf16.msra.mxu0 %v2655
        %3225 = vmatprep.subr.bf16.mxu0 %v2654
        %3226 = vmatpush2.bf16.msra.mxu0 %v2653
        %3227 = vmatprep.subr.bf16.mxu0 %v2652
        %3228 = vmatpush2.bf16.msra.mxu0 %v2651
        %3229 = vmatprep.subr.bf16.mxu0 %v2650
        %3230 = vmatpush2.bf16.msra.mxu0 %v2649
        %3231 = vmatprep.mubr.bf16.mxu0 %v1655
        %3232 = vmatmul.mubr.bf16.gmra.mxu0 %v1647
        %v3233 = vpop.f32.mrf.mxu0
        %v3234 = vadd.f32 %v3193, %v3233
        %v3235 = vpop.f32.mrf.mxu0
        %v3236 = vadd.f32 %v3195, %v3235
        %v3237 = vpop.f32.mrf.mxu0
        %v3238 = vpop.f32.mrf.mxu0
        %3239 = vdwg.mxu0
        %3240 = vmatprep.subr.bf16.mxu0 %v2680
        %3241 = vmatpush1.bf16.msra.mxu0 %v2679
        %3242 = vmatprep.subr.bf16.mxu0 %v2678
        %3243 = vmatpush1.bf16.msra.mxu0 %v2677
        %3244 = vmatprep.subr.bf16.mxu0 %v2676
        %3245 = vmatpush1.bf16.msra.mxu0 %v2675
        %3246 = vmatprep.subr.bf16.mxu0 %v2674
        %3247 = vmatpush1.bf16.msra.mxu0 %v2673
        %3248 = vmatprep.subr.bf16.mxu0 %v2672
        %3249 = vmatpush1.bf16.msra.mxu0 %v2671
        %3250 = vmatprep.subr.bf16.mxu0 %v2670
        %3251 = vmatpush1.bf16.msra.mxu0 %v2669
        %3252 = vmatprep.subr.bf16.mxu0 %v2668
        %3253 = vmatpush1.bf16.msra.mxu0 %v2667
        %3254 = vmatprep.subr.bf16.mxu0 %v2666
        %3255 = vmatpush1.bf16.msra.mxu0 %v2665
        %3256 = vmatprep.subr.bf16.mxu0 %v2696
        %3257 = vmatpush2.bf16.msra.mxu0 %v2695
        %3258 = vmatprep.subr.bf16.mxu0 %v2694
        %3259 = vmatpush2.bf16.msra.mxu0 %v2693
        %3260 = vmatprep.subr.bf16.mxu0 %v2692
        %3261 = vmatpush2.bf16.msra.mxu0 %v2691
        %3262 = vmatprep.subr.bf16.mxu0 %v2690
        %3263 = vmatpush2.bf16.msra.mxu0 %v2689
        %3264 = vmatprep.subr.bf16.mxu0 %v2688
        %3265 = vmatpush2.bf16.msra.mxu0 %v2687
        %3266 = vmatprep.subr.bf16.mxu0 %v2686
        %3267 = vmatpush2.bf16.msra.mxu0 %v2685
        %3268 = vmatprep.subr.bf16.mxu0 %v2684
        %3269 = vmatpush2.bf16.msra.mxu0 %v2683
        %3270 = vmatprep.subr.bf16.mxu0 %v2682
        %3271 = vmatpush2.bf16.msra.mxu0 %v2681
        %3272 = vmatprep.mubr.bf16.mxu0 %v1656
        %3273 = vmatmul.mubr.bf16.gmra.mxu0 %v1654
        %v3274 = vpop.f32.mrf.mxu0
        %v3275 = vadd.f32 %v3234, %v3274
        %v3276 = vpop.f32.mrf.mxu0
        %v3277 = vadd.f32 %v3236, %v3276
        %v3278 = vpop.f32.mrf.mxu0
        %v3279 = vpop.f32.mrf.mxu0
        %3280 = vdwg.mxu0
        %v3283 = vcombine.low %v3275, %v3277
        %v3285 = vadd.f32 %v1324, %v3283
        %3286 = vst [vmem:[#allocation2] sm:$0xff] %v3285
        %p3287 = scmp.eq.s32.totalorder %s21, 1
        // Predicated region
        $region75: #{discriminator_forward.8} parent=65 // pred_check
          %p3288 = pneg %p3287
        $region76: #{discriminator_forward.8} parent=65 // pred_check_branch
          %3290 = sbr.rel (%p3288) target = $region78
        $region77: #{discriminator_forward.8} parent=65 // pred_region
          %v3291 = vld [vmem:[#allocation2] sm:$0xff]
          %v3292 = vld [vmem:[%s1307] sm:$0x3]
          %v3294 = vlaneseq
          %v3295 = vshrl.u32 %v3294, 7
          %v3296 = vsub.s32 0, %v3295
          %v3297 = vrot.slane %v3292, %v3296
          %v3298 = vlaneseq
          %v3299 = vshrl.u32 %v3298, 7
          %v3300 = vsub.s32 1, %v3299
          %v3301 = vrot.slane %v3292, %v3300
          %v3302 = vcombine.low %v3297, %v3301
          %v3304 = vadd.f32 %v3291, %v3302
          %v3306 = vcombine.high %v3304, %v3304
          %vm3308 = vcmask 1043456
          %v3309 = vsel %vm3308, %v3304, 0.0
          %v3310 = vrot.slane %v3309, 4
          %v3311 = vadd.f32 %v3309, %v3310
          %v3312 = vrot.slane %v3311, 2
          %v3313 = vadd.f32 %v3311, %v3312
          %v3314 = vrot.slane %v3313, 1
          %v3315 = vadd.f32 %v3313, %v3314
          %v3316 = vsel %vm3308, %v3306, 0.0
          %v3317 = vrot.slane %v3316, 4
          %v3318 = vadd.f32 %v3316, %v3317
          %v3319 = vrot.slane %v3318, 2
          %v3320 = vadd.f32 %v3318, %v3319
          %v3321 = vrot.slane %v3320, 1
          %v3322 = vadd.f32 %v3320, %v3321
          %v3323 = vrcp.pop 4.0
          %v3324 = vmul.f32 %v3315, %v3323
          %v3325 = vmul.f32 %v3322, %v3323
          %v3328 = vcombine.low %v3324, %v3325
          %v3330 = vsub.f32 %v3304, %v3328
          %v3331 = vmul.f32 %v3330, %v3330
          %v3333 = vcombine.high %v3331, %v3331
          %v3335 = vsel %vm3308, %v3331, 0.0
          %v3336 = vrot.slane %v3335, 4
          %v3337 = vadd.f32 %v3335, %v3336
          %v3338 = vrot.slane %v3337, 2
          %v3339 = vadd.f32 %v3337, %v3338
          %v3340 = vrot.slane %v3339, 1
          %v3341 = vadd.f32 %v3339, %v3340
          %v3342 = vsel %vm3308, %v3333, 0.0
          %v3343 = vrot.slane %v3342, 4
          %v3344 = vadd.f32 %v3342, %v3343
          %v3345 = vrot.slane %v3344, 2
          %v3346 = vadd.f32 %v3344, %v3345
          %v3347 = vrot.slane %v3346, 1
          %v3348 = vadd.f32 %v3346, %v3347
          %v3349 = vmul.f32 %v3341, %v3323
          %v3350 = vmul.f32 %v3348, %v3323
          %v3351 = vadd.f32 %v3349, 1e-05
          %v3352 = vadd.f32 %v3350, 1e-05
          %v3353 = vrsqrt.pop %v3351
          %v3354 = vrsqrt.pop %v3352
          %v3357 = vcombine.low %v3353, %v3354
          %v3359 = vmul.f32 %v3330, %v3357
          %v3360 = vmul.f32 %v3359, 0.2
          %v3361 = vmax.f32 %v3359, %v3360
          %v3363 = vcombine.high %v3361, %v3361
          %v3365 = vpack.c.bf16 %v3361, %v3361
          %v3366 = vpack.c.bf16 %v3363, %v3363
          %v3369 = vcombine.low %v3365, %v3366
          %v3371 = vunpack.c.l.s4 1983009808
          %v3372 = vunpack.c.0.s8 %v3371
          %v3373 = vlaneseq
          %v3374 = vshrl.u32 %v3373, 7
          %v3375 = vsub.s32 %v3372, %v3374
          %v3376 = vrot.slane %v3369, %v3375
          %3378 = vst [vmem:[%s1317] sm:$0xf] %v3376
        $region78: #{discriminator_forward.8} parent=65 // pred_fallthru
          _
        %s3379 = smul.u32 2, %s20
        %p3380 = scmp.lt.s32.totalorder %s19, 1
        %s3381 = scalar_select %p3380, %s19, 1
        %p3382 = scmp.lt.s32.totalorder %s3379, 3
        %s3383 = scalar_select %p3382, %s3379, 3
        %s3384 = smul.addr %s3381, 4
        %s3385 = sadd.s32 %s3383, %s3384
        %s3386 = smul.addr %s3385, 2
        %s3387 = scalar_lea.vmem %s3, %s3386
        // Predicated region
        $region79: #{discriminator_forward.8} parent=65 // pred_check
          %p3388 = pneg %p135
        $region80: #{discriminator_forward.8} parent=65 // pred_check_branch
          %3390 = sbr.rel (%p3388) target = $region82
        $region81: #{discriminator_forward.8} parent=65 // pred_region
          %s3391 = smul.u32 2, %s20
        $region82: #{discriminator_forward.8} parent=65 // pred_fallthru
          _
      $region66: #{discriminator_forward.8} parent=5 // pred_fallthru
        _
      %p3392 = scmp.le.s32.totalorder 2, %s9
      // Predicated region
      $region83: #{discriminator_forward.8} parent=5 // pred_check
        %p3393 = pneg %p3392
      $region84: #{discriminator_forward.8} parent=5 // pred_check_branch
        %3395 = sbr.rel (%p3393) target = $region86
      $region85: #{discriminator_forward.8} parent=5 // pred_region
        %s3396 = ssub.s32 %s9, 2
        // Predicated region
        $region87: #{discriminator_forward.8} parent=85 // pred_check
          %p3397 = pneg %p141
        $region88: #{discriminator_forward.8} parent=85 // pred_check_branch
          %3399 = sbr.rel (%p3397) target = $region90
        $region89: #{discriminator_forward.8} parent=85 // pred_region
          %s3400 = smul.u32 2, %s23
          %p3401 = scmp.lt.s32.totalorder %s22, 1
          %s3402 = scalar_select %p3401, %s22, 1
          %p3403 = scmp.lt.s32.totalorder %s3400, 3
          %s3404 = scalar_select %p3403, %s3400, 3
          %s3405 = smul.addr %s3402, 4
          %s3406 = sadd.s32 %s3404, %s3405
          %s3407 = smul.addr %s3406, 2
          %s3408 = scalar_lea.vmem %s3, %s3407
        $region90: #{discriminator_forward.8} parent=85 // pred_fallthru
          _
      $region86: #{discriminator_forward.8} parent=5 // pred_fallthru
        _
    $region6: #{discriminator_forward.8} parent=1 // loop_footer
      %s13 = sadd.s32 1, %s9
    $region7: #{discriminator_forward.8} parent=1 // loop_footer_branch
      %8 = sbr.rel target = $region3
    $region8: #{discriminator_forward.8} parent=1 // loop_exit
      _

// kernel: discriminator_forward.9
$region0: #{discriminator_forward.9}
  #allocation0 [shape = 'u32[]', space=smem, size = 0x4, offset = 0x4, fixed_abs, tag = 'smem constant byte address 0x4 - core index']
  #allocation1 [shape = 'u32[144,128]{1,0:T(1,128)}', space=vmem, size = 0x12000, scoped, tag = 'internal scratch']
  #allocation2 [shape = 'f32[8,128]{1,0:T(8,128)}', space=vmem, size = 0x1000, scoped, tag = 'scratch operand']
  %s0 = inlined_call_operand.vmem [shape: bf16[8,8192], index: 0, kind: input, shape index: {}]
  %s1 = inlined_call_operand.vmem [shape: bf16[8192,128], index: 1, kind: input, shape index: {}]
  %s2 = inlined_call_operand.vmem [shape: f32[8,128], index: 2, kind: output, shape index: {}]
  %s3 = sld [smem:[#allocation0]]
  $region49: #{discriminator_forward.9} parent=0
    _
  %s5 = ssub.s32 1, %s3
  %s6 = scalar_select 0, %s5, %s3
  loop: start=0, step=1, limit=6
  $region2: #{discriminator_forward.9} parent=0 // loop_pre_header
    _
  $region3: #{discriminator_forward.9} parent=0 // loop_header
    %s8 = sphi 0, %s12
    %p9 = scmp.ge.s32.totalorder %s8, 6
    %s15 = sphi 0, %s27
    %s16 = sphi 0, %s23
    %s17 = sphi 0, %s15
    %s18 = sphi 0, %s16
    %s19 = sphi 0, %s17
    %s20 = sphi 0, %s18
    %s32 = sphi 0, %s34
    %s35 = sphi 0, %s32
    %s36 = sphi 0, %s35
    %s52 = sphi 0, %s36
    %s58 = sphi 0, %s60
    %s61 = sphi 0, %s58
    %s62 = sphi 0, %s61
    %s78 = sphi 0, %s62
    %s84 = sphi 0, %s86
    %s87 = sphi 0, %s84
    %s88 = sphi 0, %s87
    %s104 = sphi 0, %s88
  $region4: #{discriminator_forward.9} parent=0 // loop_header_branch
    %11 = sbr.rel (%p9) target = $region8
  $region5: #{discriminator_forward.9} parent=0 // loop_body
    %s13 = ssub.s32 %s8, 1
    %s14 = ssub.s32 %s8, 2
    %s21 = sadd.s32 1, %s16
    %p22 = scmp.ge.s32.totalorder %s21, 4
    %s23 = scalar_select %p22, 0, %s21
    %s24 = sadd.s32 1, %s15
    %s25 = scalar_select %p22, %s24, %s15
    %p26 = scmp.ge.s32.totalorder %s25, 1
    %s27 = scalar_select %p26, 0, %s25
    %s28 = ssub.s32 %s15, %s27
    %s29 = ssub.s32 %s16, %s23
    %s30 = sor.u32 %s28, %s29
    %p31 = scmp.eq.s32.totalorder %s30, 0
    %s33 = sadd.s32 %s32, 1
    %s34 = scalar_select %p31, %s32, %s33
    %p37 = pneg %p31
    %p38 = scmp.eq.s32.totalorder %s8, 3
    %p39 = por %p37, %p38
    %p40 = scmp.ne.s32.totalorder %s32, %s35
    %p41 = scmp.eq.s32.totalorder %s8, 0
    %p42 = por %p40, %p41
    %p43 = scmp.ne.s32.totalorder %s32, %s35
    %p44 = scmp.eq.s32.totalorder %s13, 3
    %p45 = por %p43, %p44
    %p46 = scmp.ne.s32.totalorder %s35, %s36
    %p47 = scmp.eq.s32.totalorder %s13, 0
    %p48 = por %p46, %p47
    %p49 = scmp.ne.s32.totalorder %s35, %s36
    %p50 = scmp.eq.s32.totalorder %s14, 3
    %p51 = por %p49, %p50
    %p53 = scmp.ne.s32.totalorder %s36, %s52
    %p54 = scmp.eq.s32.totalorder %s14, 0
    %p55 = por %p53, %p54
    %s56 = ssub.s32 %s16, %s23
    %p57 = scmp.eq.s32.totalorder %s56, 0
    %s59 = sadd.s32 %s58, 1
    %s60 = scalar_select %p57, %s58, %s59
    %p63 = pneg %p57
    %p64 = scmp.eq.s32.totalorder %s8, 3
    %p65 = por %p63, %p64
    %p66 = scmp.ne.s32.totalorder %s58, %s61
    %p67 = scmp.eq.s32.totalorder %s8, 0
    %p68 = por %p66, %p67
    %p69 = scmp.ne.s32.totalorder %s58, %s61
    %p70 = scmp.eq.s32.totalorder %s13, 3
    %p71 = por %p69, %p70
    %p72 = scmp.ne.s32.totalorder %s61, %s62
    %p73 = scmp.eq.s32.totalorder %s13, 0
    %p74 = por %p72, %p73
    %p75 = scmp.ne.s32.totalorder %s61, %s62
    %p76 = scmp.eq.s32.totalorder %s14, 3
    %p77 = por %p75, %p76
    %p79 = scmp.ne.s32.totalorder %s62, %s78
    %p80 = scmp.eq.s32.totalorder %s14, 0
    %p81 = por %p79, %p80
    %s82 = ssub.s32 %s15, %s27
    %p83 = scmp.eq.s32.totalorder %s82, 0
    %s85 = sadd.s32 %s84, 1
    %s86 = scalar_select %p83, %s84, %s85
    %p89 = pneg %p83
    %p90 = scmp.eq.s32.totalorder %s8, 3
    %p91 = por %p89, %p90
    %p92 = scmp.ne.s32.totalorder %s84, %s87
    %p93 = scmp.eq.s32.totalorder %s8, 0
    %p94 = por %p92, %p93
    %p95 = scmp.ne.s32.totalorder %s84, %s87
    %p96 = scmp.eq.s32.totalorder %s13, 3
    %p97 = por %p95, %p96
    %p98 = scmp.ne.s32.totalorder %s87, %s88
    %p99 = scmp.eq.s32.totalorder %s13, 0
    %p100 = por %p98, %p99
    %p101 = scmp.ne.s32.totalorder %s87, %s88
    %p102 = scmp.eq.s32.totalorder %s14, 3
    %p103 = por %p101, %p102
    %p105 = scmp.ne.s32.totalorder %s88, %s104
    %p106 = scmp.eq.s32.totalorder %s14, 0
    %p107 = por %p105, %p106
    %p108 = scmp.le.s32.totalorder 1, %s8
    %p109 = scmp.lt.s32.totalorder %s8, 5
    %p110 = pnand %p108, %p109
    %p111 = pneg %p110
    // Predicated region
    $region9: #{discriminator_forward.9} parent=5 // pred_check
      _
    $region10: #{discriminator_forward.9} parent=5 // pred_check_branch
      %113 = sbr.rel (%p110) target = $region12
    $region11: #{discriminator_forward.9} parent=5 // pred_region
      %s114 = ssub.s32 %s8, 1
    $region12: #{discriminator_forward.9} parent=5 // pred_fallthru
      _
    %p115 = scmp.lt.s32.totalorder %s8, 4
    // Predicated region
    $region13: #{discriminator_forward.9} parent=5 // pred_check
      %p116 = pneg %p115
    $region14: #{discriminator_forward.9} parent=5 // pred_check_branch
      %118 = sbr.rel (%p116) target = $region16
    $region15: #{discriminator_forward.9} parent=5 // pred_region
      // Predicated region
      $region17: #{discriminator_forward.9} parent=15 // pred_check
        %p119 = pneg %p42
      $region18: #{discriminator_forward.9} parent=15 // pred_check_branch
        %121 = sbr.rel (%p119) target = $region20
      $region19: #{discriminator_forward.9} parent=15 // pred_region
        %s122 = smul.u32 16, %s16
        %p123 = scmp.lt.s32.totalorder %s15, 0
        %s124 = scalar_select %p123, %s15, 0
        %p125 = scmp.lt.s32.totalorder %s122, 63
        %s126 = scalar_select %p125, %s122, 63
        %s127 = smul.addr %s124, 64
        %s128 = sadd.s32 %s126, %s127
        %s129 = smul.addr %s128, 4
        %s130 = scalar_lea.vmem %s0, %s129
        %s131 = smul.u32 16, %s16
      $region20: #{discriminator_forward.9} parent=15 // pred_fallthru
        _
      // Predicated region
      $region21: #{discriminator_forward.9} parent=15 // pred_check
        %p132 = pneg %p68
      $region22: #{discriminator_forward.9} parent=15 // pred_check_branch
        %134 = sbr.rel (%p132) target = $region24
      $region23: #{discriminator_forward.9} parent=15 // pred_region
        %s135 = smul.u32 256, %s16
        %p136 = scmp.lt.s32.totalorder %s135, 1023
        %s137 = scalar_select %p136, %s135, 1023
        %s138 = smul.addr %s137, 4
        %s139 = scalar_lea.vmem %s1, %s138
        %s140 = smul.u32 256, %s16
      $region24: #{discriminator_forward.9} parent=15 // pred_fallthru
        _
    $region16: #{discriminator_forward.9} parent=5 // pred_fallthru
      _
    %p141 = scmp.le.s32.totalorder 1, %s8
    %p142 = scmp.lt.s32.totalorder %s8, 5
    %p143 = pnand %p141, %p142
    %p144 = pneg %p143
    // Predicated region
    $region25: #{discriminator_forward.9} parent=5 // pred_check
      _
    $region26: #{discriminator_forward.9} parent=5 // pred_check_branch
      %146 = sbr.rel (%p143) target = $region28
    $region27: #{discriminator_forward.9} parent=5 // pred_region
      %s147 = ssub.s32 %s8, 1
      %s148 = smul.u32 16, %s18
      %p149 = scmp.lt.s32.totalorder %s17, 0
      %s150 = scalar_select %p149, %s17, 0
      %p151 = scmp.lt.s32.totalorder %s148, 63
      %s152 = scalar_select %p151, %s148, 63
      %s153 = smul.addr %s150, 64
      %s154 = sadd.s32 %s152, %s153
      %s155 = smul.addr %s154, 4
      %s156 = scalar_lea.vmem %s0, %s155
      %p157 = pneg %p48
      %p158 = pneg %p45
      %s159 = smul.u32 256, %s18
      %p160 = scmp.lt.s32.totalorder %s159, 1023
      %s161 = scalar_select %p160, %s159, 1023
      %s162 = smul.addr %s161, 4
      %s163 = scalar_lea.vmem %s1, %s162
      %p164 = pneg %p74
      %p165 = pneg %p71
      %p166 = pneg %p100
      %p167 = pneg %p97
      %p168 = scmp.lt.s32.totalorder %s17, 0
      %s169 = scalar_select %p168, %s17, 0
      %s170 = smul.addr %s169, 8
      %s171 = scalar_lea.vmem %s2, %s170
      %s172 = smul.u32 16, %s18
      %p173 = scmp.lt.s32.totalorder %s17, 0
      %s174 = scalar_select %p173, %s17, 0
      %p175 = scmp.lt.s32.totalorder %s172, 63
      %s176 = scalar_select %p175, %s172, 63
      %s177 = smul.addr %s174, 64
      %s178 = sadd.s32 %s176, %s177
      %s179 = smul.addr %s178, 4
      %s180 = scalar_lea.vmem %s0, %s179
      %s181 = smul.u32 16, %s18
      %s182 = smul.u32 256, %s18
      %p183 = scmp.lt.s32.totalorder %s182, 1023
      %s184 = scalar_select %p183, %s182, 1023
      %s185 = smul.addr %s184, 4
      %s186 = scalar_lea.vmem %s1, %s185
      %s187 = smul.u32 256, %s18
      %p188 = scmp.lt.s32.totalorder %s17, 0
      %s189 = scalar_select %p188, %s17, 0
      %s190 = smul.addr %s189, 8
      %s191 = scalar_lea.vmem %s2, %s190
      %p193 = scmp.eq.s32.totalorder %s18, 0
      // Predicated region
      $region29: #{discriminator_forward.9} parent=27 // pred_check
        %p194 = pneg %p193
      $region30: #{discriminator_forward.9} parent=27 // pred_check_branch
        %196 = sbr.rel (%p194) target = $region32
      $region31: #{discriminator_forward.9} parent=27 // pred_region
        %197 = vst [vmem:[#allocation2] sm:$0xff] 0.0
      $region32: #{discriminator_forward.9} parent=27 // pred_fallthru
        _
      %v198 = vld [vmem:[#allocation2] sm:$0xff]
      %v199 = vld [vmem:[%s180] sm:$0xff]
      %v200 = vld [vmem:[%s180 + $0x8] sm:$0xff]
      %v201 = vld [vmem:[%s180 + $0x10] sm:$0xff]
      %v202 = vld [vmem:[%s180 + $0x18] sm:$0xff]
      %v203 = vld [vmem:[%s180 + $0x20] sm:$0xff]
      %v204 = vld [vmem:[%s180 + $0x28] sm:$0xff]
      %v205 = vld [vmem:[%s180 + $0x30] sm:$0xff]
      %v206 = vld [vmem:[%s180 + $0x38] sm:$0xff]
      %v207 = vld [vmem:[%s186] sm:$0xf]
      %v208 = vld [vmem:[%s186 + $0x4] sm:$0xf]
      %v209 = vld [vmem:[%s186 + $0x8] sm:$0xf]
      %v210 = vld [vmem:[%s186 + $0xc] sm:$0xf]
      %v211 = vld [vmem:[%s186 + $0x10] sm:$0xf]
      %v212 = vld [vmem:[%s186 + $0x14] sm:$0xf]
      %v213 = vld [vmem:[%s186 + $0x18] sm:$0xf]
      %v214 = vld [vmem:[%s186 + $0x1c] sm:$0xf]
      %v215 = vld [vmem:[%s186 + $0x20] sm:$0xf]
      %v216 = vld [vmem:[%s186 + $0x24] sm:$0xf]
      %v217 = vld [vmem:[%s186 + $0x28] sm:$0xf]
      %v218 = vld [vmem:[%s186 + $0x2c] sm:$0xf]
      %v219 = vld [vmem:[%s186 + $0x30] sm:$0xf]
      %v220 = vld [vmem:[%s186 + $0x34] sm:$0xf]
      %v221 = vld [vmem:[%s186 + $0x38] sm:$0xf]
      %v222 = vld [vmem:[%s186 + $0x3c] sm:$0xf]
      %v223 = vld [vmem:[%s186 + $0x40] sm:$0xf]
      %v224 = vld [vmem:[%s186 + $0x44] sm:$0xf]
      %v225 = vld [vmem:[%s186 + $0x48] sm:$0xf]
      %v226 = vld [vmem:[%s186 + $0x4c] sm:$0xf]
      %v227 = vld [vmem:[%s186 + $0x50] sm:$0xf]
      %v228 = vld [vmem:[%s186 + $0x54] sm:$0xf]
      %v229 = vld [vmem:[%s186 + $0x58] sm:$0xf]
      %v230 = vld [vmem:[%s186 + $0x5c] sm:$0xf]
      %v231 = vld [vmem:[%s186 + $0x60] sm:$0xf]
      %v232 = vld [vmem:[%s186 + $0x64] sm:$0xf]
      %v233 = vld [vmem:[%s186 + $0x68] sm:$0xf]
      %v234 = vld [vmem:[%s186 + $0x6c] sm:$0xf]
      %v235 = vld [vmem:[%s186 + $0x70] sm:$0xf]
      %v236 = vld [vmem:[%s186 + $0x74] sm:$0xf]
      %v237 = vld [vmem:[%s186 + $0x78] sm:$0xf]
      %v238 = vld [vmem:[%s186 + $0x7c] sm:$0xf]
      %v239 = vld [vmem:[%s186 + $0x80] sm:$0xf]
      %v240 = vld [vmem:[%s186 + $0x84] sm:$0xf]
      %v241 = vld [vmem:[%s186 + $0x88] sm:$0xf]
      %v242 = vld [vmem:[%s186 + $0x8c] sm:$0xf]
      %v243 = vld [vmem:[%s186 + $0x90] sm:$0xf]
      %v244 = vld [vmem:[%s186 + $0x94] sm:$0xf]
      %v245 = vld [vmem:[%s186 + $0x98] sm:$0xf]
      %v246 = vld [vmem:[%s186 + $0x9c] sm:$0xf]
      %v247 = vld [vmem:[%s186 + $0xa0] sm:$0xf]
      %v248 = vld [vmem:[%s186 + $0xa4] sm:$0xf]
      %v249 = vld [vmem:[%s186 + $0xa8] sm:$0xf]
      %v250 = vld [vmem:[%s186 + $0xac] sm:$0xf]
      %v251 = vld [vmem:[%s186 + $0xb0] sm:$0xf]
      %v252 = vld [vmem:[%s186 + $0xb4] sm:$0xf]
      %v253 = vld [vmem:[%s186 + $0xb8] sm:$0xf]
      %v254 = vld [vmem:[%s186 + $0xbc] sm:$0xf]
      %v255 = vld [vmem:[%s186 + $0xc0] sm:$0xf]
      %v256 = vld [vmem:[%s186 + $0xc4] sm:$0xf]
      %v257 = vld [vmem:[%s186 + $0xc8] sm:$0xf]
      %v258 = vld [vmem:[%s186 + $0xcc] sm:$0xf]
      %v259 = vld [vmem:[%s186 + $0xd0] sm:$0xf]
      %v260 = vld [vmem:[%s186 + $0xd4] sm:$0xf]
      %v261 = vld [vmem:[%s186 + $0xd8] sm:$0xf]
      %v262 = vld [vmem:[%s186 + $0xdc] sm:$0xf]
      %v263 = vld [vmem:[%s186 + $0xe0] sm:$0xf]
      %v264 = vld [vmem:[%s186 + $0xe4] sm:$0xf]
      %v265 = vld [vmem:[%s186 + $0xe8] sm:$0xf]
      %v266 = vld [vmem:[%s186 + $0xec] sm:$0xf]
      %v267 = vld [vmem:[%s186 + $0xf0] sm:$0xf]
      %v268 = vld [vmem:[%s186 + $0xf4] sm:$0xf]
      %v269 = vld [vmem:[%s186 + $0xf8] sm:$0xf]
      %v270 = vld [vmem:[%s186 + $0xfc] sm:$0xf]
      %v271 = vld [vmem:[%s186 + $0x100] sm:$0xf]
      %v272 = vld [vmem:[%s186 + $0x104] sm:$0xf]
      %v273 = vld [vmem:[%s186 + $0x108] sm:$0xf]
      %v274 = vld [vmem:[%s186 + $0x10c] sm:$0xf]
      %v275 = vld [vmem:[%s186 + $0x110] sm:$0xf]
      %v276 = vld [vmem:[%s186 + $0x114] sm:$0xf]
      %v277 = vld [vmem:[%s186 + $0x118] sm:$0xf]
      %v278 = vld [vmem:[%s186 + $0x11c] sm:$0xf]
      %v279 = vld [vmem:[%s186 + $0x120] sm:$0xf]
      %v280 = vld [vmem:[%s186 + $0x124] sm:$0xf]
      %v281 = vld [vmem:[%s186 + $0x128] sm:$0xf]
      %v282 = vld [vmem:[%s186 + $0x12c] sm:$0xf]
      %v283 = vld [vmem:[%s186 + $0x130] sm:$0xf]
      %v284 = vld [vmem:[%s186 + $0x134] sm:$0xf]
      %v285 = vld [vmem:[%s186 + $0x138] sm:$0xf]
      %v286 = vld [vmem:[%s186 + $0x13c] sm:$0xf]
      %v287 = vld [vmem:[%s186 + $0x140] sm:$0xf]
      %v288 = vld [vmem:[%s186 + $0x144] sm:$0xf]
      %v289 = vld [vmem:[%s186 + $0x148] sm:$0xf]
      %v290 = vld [vmem:[%s186 + $0x14c] sm:$0xf]
      %v291 = vld [vmem:[%s186 + $0x150] sm:$0xf]
      %v292 = vld [vmem:[%s186 + $0x154] sm:$0xf]
      %v293 = vld [vmem:[%s186 + $0x158] sm:$0xf]
      %v294 = vld [vmem:[%s186 + $0x15c] sm:$0xf]
      %v295 = vld [vmem:[%s186 + $0x160] sm:$0xf]
      %v296 = vld [vmem:[%s186 + $0x164] sm:$0xf]
      %v297 = vld [vmem:[%s186 + $0x168] sm:$0xf]
      %v298 = vld [vmem:[%s186 + $0x16c] sm:$0xf]
      %v299 = vld [vmem:[%s186 + $0x170] sm:$0xf]
      %v300 = vld [vmem:[%s186 + $0x174] sm:$0xf]
      %v301 = vld [vmem:[%s186 + $0x178] sm:$0xf]
      %v302 = vld [vmem:[%s186 + $0x17c] sm:$0xf]
      %v303 = vld [vmem:[%s186 + $0x180] sm:$0xf]
      %v304 = vld [vmem:[%s186 + $0x184] sm:$0xf]
      %v305 = vld [vmem:[%s186 + $0x188] sm:$0xf]
      %v306 = vld [vmem:[%s186 + $0x18c] sm:$0xf]
      %v307 = vld [vmem:[%s186 + $0x190] sm:$0xf]
      %v308 = vld [vmem:[%s186 + $0x194] sm:$0xf]
      %v309 = vld [vmem:[%s186 + $0x198] sm:$0xf]
      %v310 = vld [vmem:[%s186 + $0x19c] sm:$0xf]
      %v311 = vld [vmem:[%s186 + $0x1a0] sm:$0xf]
      %v312 = vld [vmem:[%s186 + $0x1a4] sm:$0xf]
      %v313 = vld [vmem:[%s186 + $0x1a8] sm:$0xf]
      %v314 = vld [vmem:[%s186 + $0x1ac] sm:$0xf]
      %v315 = vld [vmem:[%s186 + $0x1b0] sm:$0xf]
      %v316 = vld [vmem:[%s186 + $0x1b4] sm:$0xf]
      %v317 = vld [vmem:[%s186 + $0x1b8] sm:$0xf]
      %v318 = vld [vmem:[%s186 + $0x1bc] sm:$0xf]
      %v319 = vld [vmem:[%s186 + $0x1c0] sm:$0xf]
      %v320 = vld [vmem:[%s186 + $0x1c4] sm:$0xf]
      %v321 = vld [vmem:[%s186 + $0x1c8] sm:$0xf]
      %v322 = vld [vmem:[%s186 + $0x1cc] sm:$0xf]
      %v323 = vld [vmem:[%s186 + $0x1d0] sm:$0xf]
      %v324 = vld [vmem:[%s186 + $0x1d4] sm:$0xf]
      %v325 = vld [vmem:[%s186 + $0x1d8] sm:$0xf]
      %v326 = vld [vmem:[%s186 + $0x1dc] sm:$0xf]
      %v327 = vld [vmem:[%s186 + $0x1e0] sm:$0xf]
      %v328 = vld [vmem:[%s186 + $0x1e4] sm:$0xf]
      %v329 = vld [vmem:[%s186 + $0x1e8] sm:$0xf]
      %v330 = vld [vmem:[%s186 + $0x1ec] sm:$0xf]
      %v331 = vld [vmem:[%s186 + $0x1f0] sm:$0xf]
      %v332 = vld [vmem:[%s186 + $0x1f4] sm:$0xf]
      %v333 = vld [vmem:[%s186 + $0x1f8] sm:$0xf]
      %v334 = vld [vmem:[%s186 + $0x1fc] sm:$0xf]
      %v335 = vld [vmem:[%s186 + $0x200] sm:$0xf]
      %v336 = vld [vmem:[%s186 + $0x204] sm:$0xf]
      %v337 = vld [vmem:[%s186 + $0x208] sm:$0xf]
      %v338 = vld [vmem:[%s186 + $0x20c] sm:$0xf]
      %v339 = vld [vmem:[%s186 + $0x210] sm:$0xf]
      %v340 = vld [vmem:[%s186 + $0x214] sm:$0xf]
      %v341 = vld [vmem:[%s186 + $0x218] sm:$0xf]
      %v342 = vld [vmem:[%s186 + $0x21c] sm:$0xf]
      %v343 = vld [vmem:[%s186 + $0x220] sm:$0xf]
      %v344 = vld [vmem:[%s186 + $0x224] sm:$0xf]
      %v345 = vld [vmem:[%s186 + $0x228] sm:$0xf]
      %v346 = vld [vmem:[%s186 + $0x22c] sm:$0xf]
      %v347 = vld [vmem:[%s186 + $0x230] sm:$0xf]
      %v348 = vld [vmem:[%s186 + $0x234] sm:$0xf]
      %v349 = vld [vmem:[%s186 + $0x238] sm:$0xf]
      %v350 = vld [vmem:[%s186 + $0x23c] sm:$0xf]
      %v351 = vld [vmem:[%s186 + $0x240] sm:$0xf]
      %v352 = vld [vmem:[%s186 + $0x244] sm:$0xf]
      %v353 = vld [vmem:[%s186 + $0x248] sm:$0xf]
      %v354 = vld [vmem:[%s186 + $0x24c] sm:$0xf]
      %v355 = vld [vmem:[%s186 + $0x250] sm:$0xf]
      %v356 = vld [vmem:[%s186 + $0x254] sm:$0xf]
      %v357 = vld [vmem:[%s186 + $0x258] sm:$0xf]
      %v358 = vld [vmem:[%s186 + $0x25c] sm:$0xf]
      %v359 = vld [vmem:[%s186 + $0x260] sm:$0xf]
      %v360 = vld [vmem:[%s186 + $0x264] sm:$0xf]
      %v361 = vld [vmem:[%s186 + $0x268] sm:$0xf]
      %v362 = vld [vmem:[%s186 + $0x26c] sm:$0xf]
      %v363 = vld [vmem:[%s186 + $0x270] sm:$0xf]
      %v364 = vld [vmem:[%s186 + $0x274] sm:$0xf]
      %v365 = vld [vmem:[%s186 + $0x278] sm:$0xf]
      %v366 = vld [vmem:[%s186 + $0x27c] sm:$0xf]
      %v367 = vld [vmem:[%s186 + $0x280] sm:$0xf]
      %v368 = vld [vmem:[%s186 + $0x284] sm:$0xf]
      %v369 = vld [vmem:[%s186 + $0x288] sm:$0xf]
      %v370 = vld [vmem:[%s186 + $0x28c] sm:$0xf]
      %v371 = vld [vmem:[%s186 + $0x290] sm:$0xf]
      %v372 = vld [vmem:[%s186 + $0x294] sm:$0xf]
      %v373 = vld [vmem:[%s186 + $0x298] sm:$0xf]
      %v374 = vld [vmem:[%s186 + $0x29c] sm:$0xf]
      %v375 = vld [vmem:[%s186 + $0x2a0] sm:$0xf]
      %v376 = vld [vmem:[%s186 + $0x2a4] sm:$0xf]
      %v377 = vld [vmem:[%s186 + $0x2a8] sm:$0xf]
      %v378 = vld [vmem:[%s186 + $0x2ac] sm:$0xf]
      %v379 = vld [vmem:[%s186 + $0x2b0] sm:$0xf]
      %v380 = vld [vmem:[%s186 + $0x2b4] sm:$0xf]
      %v381 = vld [vmem:[%s186 + $0x2b8] sm:$0xf]
      %v382 = vld [vmem:[%s186 + $0x2bc] sm:$0xf]
      %v383 = vld [vmem:[%s186 + $0x2c0] sm:$0xf]
      %v384 = vld [vmem:[%s186 + $0x2c4] sm:$0xf]
      %v385 = vld [vmem:[%s186 + $0x2c8] sm:$0xf]
      %v386 = vld [vmem:[%s186 + $0x2cc] sm:$0xf]
      %v387 = vld [vmem:[%s186 + $0x2d0] sm:$0xf]
      %v388 = vld [vmem:[%s186 + $0x2d4] sm:$0xf]
      %v389 = vld [vmem:[%s186 + $0x2d8] sm:$0xf]
      %v390 = vld [vmem:[%s186 + $0x2dc] sm:$0xf]
      %v391 = vld [vmem:[%s186 + $0x2e0] sm:$0xf]
      %v392 = vld [vmem:[%s186 + $0x2e4] sm:$0xf]
      %v393 = vld [vmem:[%s186 + $0x2e8] sm:$0xf]
      %v394 = vld [vmem:[%s186 + $0x2ec] sm:$0xf]
      %v395 = vld [vmem:[%s186 + $0x2f0] sm:$0xf]
      %v396 = vld [vmem:[%s186 + $0x2f4] sm:$0xf]
      %v397 = vld [vmem:[%s186 + $0x2f8] sm:$0xf]
      %v398 = vld [vmem:[%s186 + $0x2fc] sm:$0xf]
      %v399 = vld [vmem:[%s186 + $0x300] sm:$0xf]
      %v400 = vld [vmem:[%s186 + $0x304] sm:$0xf]
      %v401 = vld [vmem:[%s186 + $0x308] sm:$0xf]
      %v402 = vld [vmem:[%s186 + $0x30c] sm:$0xf]
      %v403 = vld [vmem:[%s186 + $0x310] sm:$0xf]
      %v404 = vld [vmem:[%s186 + $0x314] sm:$0xf]
      %v405 = vld [vmem:[%s186 + $0x318] sm:$0xf]
      %v406 = vld [vmem:[%s186 + $0x31c] sm:$0xf]
      %v407 = vld [vmem:[%s186 + $0x320] sm:$0xf]
      %v408 = vld [vmem:[%s186 + $0x324] sm:$0xf]
      %v409 = vld [vmem:[%s186 + $0x328] sm:$0xf]
      %v410 = vld [vmem:[%s186 + $0x32c] sm:$0xf]
      %v411 = vld [vmem:[%s186 + $0x330] sm:$0xf]
      %v412 = vld [vmem:[%s186 + $0x334] sm:$0xf]
      %v413 = vld [vmem:[%s186 + $0x338] sm:$0xf]
      %v414 = vld [vmem:[%s186 + $0x33c] sm:$0xf]
      %v415 = vld [vmem:[%s186 + $0x340] sm:$0xf]
      %v416 = vld [vmem:[%s186 + $0x344] sm:$0xf]
      %v417 = vld [vmem:[%s186 + $0x348] sm:$0xf]
      %v418 = vld [vmem:[%s186 + $0x34c] sm:$0xf]
      %v419 = vld [vmem:[%s186 + $0x350] sm:$0xf]
      %v420 = vld [vmem:[%s186 + $0x354] sm:$0xf]
      %v421 = vld [vmem:[%s186 + $0x358] sm:$0xf]
      %v422 = vld [vmem:[%s186 + $0x35c] sm:$0xf]
      %v423 = vld [vmem:[%s186 + $0x360] sm:$0xf]
      %v424 = vld [vmem:[%s186 + $0x364] sm:$0xf]
      %v425 = vld [vmem:[%s186 + $0x368] sm:$0xf]
      %v426 = vld [vmem:[%s186 + $0x36c] sm:$0xf]
      %v427 = vld [vmem:[%s186 + $0x370] sm:$0xf]
      %v428 = vld [vmem:[%s186 + $0x374] sm:$0xf]
      %v429 = vld [vmem:[%s186 + $0x378] sm:$0xf]
      %v430 = vld [vmem:[%s186 + $0x37c] sm:$0xf]
      %v431 = vld [vmem:[%s186 + $0x380] sm:$0xf]
      %v432 = vld [vmem:[%s186 + $0x384] sm:$0xf]
      %v433 = vld [vmem:[%s186 + $0x388] sm:$0xf]
      %v434 = vld [vmem:[%s186 + $0x38c] sm:$0xf]
      %v435 = vld [vmem:[%s186 + $0x390] sm:$0xf]
      %v436 = vld [vmem:[%s186 + $0x394] sm:$0xf]
      %v437 = vld [vmem:[%s186 + $0x398] sm:$0xf]
      %v438 = vld [vmem:[%s186 + $0x39c] sm:$0xf]
      %v439 = vld [vmem:[%s186 + $0x3a0] sm:$0xf]
      %v440 = vld [vmem:[%s186 + $0x3a4] sm:$0xf]
      %v441 = vld [vmem:[%s186 + $0x3a8] sm:$0xf]
      %v442 = vld [vmem:[%s186 + $0x3ac] sm:$0xf]
      %v443 = vld [vmem:[%s186 + $0x3b0] sm:$0xf]
      %v444 = vld [vmem:[%s186 + $0x3b4] sm:$0xf]
      %v445 = vld [vmem:[%s186 + $0x3b8] sm:$0xf]
      %v446 = vld [vmem:[%s186 + $0x3bc] sm:$0xf]
      %v447 = vld [vmem:[%s186 + $0x3c0] sm:$0xf]
      %v448 = vld [vmem:[%s186 + $0x3c4] sm:$0xf]
      %v449 = vld [vmem:[%s186 + $0x3c8] sm:$0xf]
      %v450 = vld [vmem:[%s186 + $0x3cc] sm:$0xf]
      %v451 = vld [vmem:[%s186 + $0x3d0] sm:$0xf]
      %v452 = vld [vmem:[%s186 + $0x3d4] sm:$0xf]
      %v453 = vld [vmem:[%s186 + $0x3d8] sm:$0xf]
      %v454 = vld [vmem:[%s186 + $0x3dc] sm:$0xf]
      %v455 = vld [vmem:[%s186 + $0x3e0] sm:$0xf]
      %v456 = vld [vmem:[%s186 + $0x3e4] sm:$0xf]
      %v457 = vld [vmem:[%s186 + $0x3e8] sm:$0xf]
      %v458 = vld [vmem:[%s186 + $0x3ec] sm:$0xf]
      %v459 = vld [vmem:[%s186 + $0x3f0] sm:$0xf]
      %v460 = vld [vmem:[%s186 + $0x3f4] sm:$0xf]
      %v461 = vld [vmem:[%s186 + $0x3f8] sm:$0xf]
      %v462 = vld [vmem:[%s186 + $0x3fc] sm:$0xf]
      %v471 = vunpack.c.l.b16 %v199
      %v472 = vunpack.c.h.b16 %v199
      %v473 = vunpack.c.l.b16 %v200
      %v474 = vunpack.c.h.b16 %v200
      %v475 = vunpack.c.l.b16 %v201
      %v476 = vunpack.c.h.b16 %v201
      %v477 = vunpack.c.l.b16 %v202
      %v478 = vunpack.c.h.b16 %v202
      %v479 = vunpack.c.l.b16 %v203
      %v480 = vunpack.c.h.b16 %v203
      %v481 = vunpack.c.l.b16 %v204
      %v482 = vunpack.c.h.b16 %v204
      %v483 = vunpack.c.l.b16 %v205
      %v484 = vunpack.c.h.b16 %v205
      %v485 = vunpack.c.l.b16 %v206
      %v486 = vunpack.c.h.b16 %v206
      %v487 = vpack.c.b16 %v471, %v471
      %v488 = vpack.c.b16 %v472, %v472
      %v489 = vpack.c.b16 %v473, %v473
      %v490 = vpack.c.b16 %v474, %v474
      %v491 = vpack.c.b16 %v475, %v475
      %v492 = vpack.c.b16 %v476, %v476
      %v493 = vpack.c.b16 %v477, %v477
      %v494 = vpack.c.b16 %v478, %v478
      %v495 = vpack.c.b16 %v479, %v479
      %v496 = vpack.c.b16 %v480, %v480
      %v497 = vpack.c.b16 %v481, %v481
      %v498 = vpack.c.b16 %v482, %v482
      %v499 = vpack.c.b16 %v483, %v483
      %v500 = vpack.c.b16 %v484, %v484
      %v501 = vpack.c.b16 %v485, %v485
      %v502 = vpack.c.b16 %v486, %v486
      %v775 = vunpack.c.l.b16 %v207
      %v776 = vunpack.c.l.b16 %v208
      %v777 = vunpack.c.l.b16 %v209
      %v778 = vunpack.c.l.b16 %v210
      %v779 = vunpack.c.l.b16 %v211
      %v780 = vunpack.c.l.b16 %v212
      %v781 = vunpack.c.l.b16 %v213
      %v782 = vunpack.c.l.b16 %v214
      %v783 = vunpack.c.l.b16 %v215
      %v784 = vunpack.c.l.b16 %v216
      %v785 = vunpack.c.l.b16 %v217
      %v786 = vunpack.c.l.b16 %v218
      %v787 = vunpack.c.l.b16 %v219
      %v788 = vunpack.c.l.b16 %v220
      %v789 = vunpack.c.l.b16 %v221
      %v790 = vunpack.c.l.b16 %v222
      %v791 = vunpack.c.l.b16 %v223
      %v792 = vunpack.c.l.b16 %v224
      %v793 = vunpack.c.l.b16 %v225
      %v794 = vunpack.c.l.b16 %v226
      %v795 = vunpack.c.l.b16 %v227
      %v796 = vunpack.c.l.b16 %v228
      %v797 = vunpack.c.l.b16 %v229
      %v798 = vunpack.c.l.b16 %v230
      %v799 = vunpack.c.l.b16 %v231
      %v800 = vunpack.c.l.b16 %v232
      %v801 = vunpack.c.l.b16 %v233
      %v802 = vunpack.c.l.b16 %v234
      %v803 = vunpack.c.l.b16 %v235
      %v804 = vunpack.c.l.b16 %v236
      %v805 = vunpack.c.l.b16 %v237
      %v806 = vunpack.c.l.b16 %v238
      %v807 = vunpack.c.l.b16 %v239
      %v808 = vunpack.c.l.b16 %v240
      %v809 = vunpack.c.l.b16 %v241
      %v810 = vunpack.c.l.b16 %v242
      %v811 = vunpack.c.l.b16 %v243
      %v812 = vunpack.c.l.b16 %v244
      %v813 = vunpack.c.l.b16 %v245
      %v814 = vunpack.c.l.b16 %v246
      %v815 = vunpack.c.l.b16 %v247
      %v816 = vunpack.c.l.b16 %v248
      %v817 = vunpack.c.l.b16 %v249
      %v818 = vunpack.c.l.b16 %v250
      %v819 = vunpack.c.l.b16 %v251
      %v820 = vunpack.c.l.b16 %v252
      %v821 = vunpack.c.l.b16 %v253
      %v822 = vunpack.c.l.b16 %v254
      %v823 = vunpack.c.l.b16 %v255
      %v824 = vunpack.c.l.b16 %v256
      %v825 = vunpack.c.l.b16 %v257
      %v826 = vunpack.c.l.b16 %v258
      %v827 = vunpack.c.l.b16 %v259
      %v828 = vunpack.c.l.b16 %v260
      %v829 = vunpack.c.l.b16 %v261
      %v830 = vunpack.c.l.b16 %v262
      %v831 = vunpack.c.l.b16 %v263
      %v832 = vunpack.c.l.b16 %v264
      %v833 = vunpack.c.l.b16 %v265
      %v834 = vunpack.c.l.b16 %v266
      %v835 = vunpack.c.l.b16 %v267
      %v836 = vunpack.c.l.b16 %v268
      %v837 = vunpack.c.l.b16 %v269
      %v838 = vunpack.c.l.b16 %v270
      %v839 = vunpack.c.l.b16 %v271
      %v840 = vunpack.c.l.b16 %v272
      %v841 = vunpack.c.l.b16 %v273
      %v842 = vunpack.c.l.b16 %v274
      %v843 = vunpack.c.l.b16 %v275
      %v844 = vunpack.c.l.b16 %v276
      %v845 = vunpack.c.l.b16 %v277
      %v846 = vunpack.c.l.b16 %v278
      %v847 = vunpack.c.l.b16 %v279
      %v848 = vunpack.c.l.b16 %v280
      %v849 = vunpack.c.l.b16 %v281
      %v850 = vunpack.c.l.b16 %v282
      %v851 = vunpack.c.l.b16 %v283
      %v852 = vunpack.c.l.b16 %v284
      %v853 = vunpack.c.l.b16 %v285
      %v854 = vunpack.c.l.b16 %v286
      %v855 = vunpack.c.l.b16 %v287
      %v856 = vunpack.c.l.b16 %v288
      %v857 = vunpack.c.l.b16 %v289
      %v858 = vunpack.c.l.b16 %v290
      %v859 = vunpack.c.l.b16 %v291
      %v860 = vunpack.c.l.b16 %v292
      %v861 = vunpack.c.l.b16 %v293
      %v862 = vunpack.c.l.b16 %v294
      %v863 = vunpack.c.l.b16 %v295
      %v864 = vunpack.c.l.b16 %v296
      %v865 = vunpack.c.l.b16 %v297
      %v866 = vunpack.c.l.b16 %v298
      %v867 = vunpack.c.l.b16 %v299
      %v868 = vunpack.c.l.b16 %v300
      %v869 = vunpack.c.l.b16 %v301
      %v870 = vunpack.c.l.b16 %v302
      %v871 = vunpack.c.l.b16 %v303
      %v872 = vunpack.c.l.b16 %v304
      %v873 = vunpack.c.l.b16 %v305
      %v874 = vunpack.c.l.b16 %v306
      %v875 = vunpack.c.l.b16 %v307
      %v876 = vunpack.c.l.b16 %v308
      %v877 = vunpack.c.l.b16 %v309
      %v878 = vunpack.c.l.b16 %v310
      %v879 = vunpack.c.l.b16 %v311
      %v880 = vunpack.c.l.b16 %v312
      %v881 = vunpack.c.l.b16 %v313
      %v882 = vunpack.c.l.b16 %v314
      %v883 = vunpack.c.l.b16 %v315
      %v884 = vunpack.c.l.b16 %v316
      %v885 = vunpack.c.l.b16 %v317
      %v886 = vunpack.c.l.b16 %v318
      %v887 = vunpack.c.l.b16 %v319
      %v888 = vunpack.c.l.b16 %v320
      %v889 = vunpack.c.l.b16 %v321
      %v890 = vunpack.c.l.b16 %v322
      %v891 = vunpack.c.l.b16 %v323
      %v892 = vunpack.c.l.b16 %v324
      %v893 = vunpack.c.l.b16 %v325
      %v894 = vunpack.c.l.b16 %v326
      %v895 = vunpack.c.l.b16 %v327
      %v896 = vunpack.c.l.b16 %v328
      %v897 = vunpack.c.l.b16 %v329
      %v898 = vunpack.c.l.b16 %v330
      %v899 = vunpack.c.l.b16 %v331
      %v900 = vunpack.c.l.b16 %v332
      %v901 = vunpack.c.l.b16 %v333
      %v902 = vunpack.c.l.b16 %v334
      %v903 = vunpack.c.l.b16 %v335
      %v904 = vunpack.c.l.b16 %v336
      %v905 = vunpack.c.l.b16 %v337
      %v906 = vunpack.c.l.b16 %v338
      %v907 = vunpack.c.l.b16 %v339
      %v908 = vunpack.c.l.b16 %v340
      %v909 = vunpack.c.l.b16 %v341
      %v910 = vunpack.c.l.b16 %v342
      %v911 = vunpack.c.l.b16 %v343
      %v912 = vunpack.c.l.b16 %v344
      %v913 = vunpack.c.l.b16 %v345
      %v914 = vunpack.c.l.b16 %v346
      %v915 = vunpack.c.l.b16 %v347
      %v916 = vunpack.c.l.b16 %v348
      %v917 = vunpack.c.l.b16 %v349
      %v918 = vunpack.c.l.b16 %v350
      %v919 = vunpack.c.l.b16 %v351
      %v920 = vunpack.c.l.b16 %v352
      %v921 = vunpack.c.l.b16 %v353
      %v922 = vunpack.c.l.b16 %v354
      %v923 = vunpack.c.l.b16 %v355
      %v924 = vunpack.c.l.b16 %v356
      %v925 = vunpack.c.l.b16 %v357
      %v926 = vunpack.c.l.b16 %v358
      %v927 = vunpack.c.l.b16 %v359
      %v928 = vunpack.c.l.b16 %v360
      %v929 = vunpack.c.l.b16 %v361
      %v930 = vunpack.c.l.b16 %v362
      %v931 = vunpack.c.l.b16 %v363
      %v932 = vunpack.c.l.b16 %v364
      %v933 = vunpack.c.l.b16 %v365
      %v934 = vunpack.c.l.b16 %v366
      %v935 = vunpack.c.l.b16 %v367
      %v936 = vunpack.c.l.b16 %v368
      %v937 = vunpack.c.l.b16 %v369
      %v938 = vunpack.c.l.b16 %v370
      %v939 = vunpack.c.l.b16 %v371
      %v940 = vunpack.c.l.b16 %v372
      %v941 = vunpack.c.l.b16 %v373
      %v942 = vunpack.c.l.b16 %v374
      %v943 = vunpack.c.l.b16 %v375
      %v944 = vunpack.c.l.b16 %v376
      %v945 = vunpack.c.l.b16 %v377
      %v946 = vunpack.c.l.b16 %v378
      %v947 = vunpack.c.l.b16 %v379
      %v948 = vunpack.c.l.b16 %v380
      %v949 = vunpack.c.l.b16 %v381
      %v950 = vunpack.c.l.b16 %v382
      %v951 = vunpack.c.l.b16 %v383
      %v952 = vunpack.c.l.b16 %v384
      %v953 = vunpack.c.l.b16 %v385
      %v954 = vunpack.c.l.b16 %v386
      %v955 = vunpack.c.l.b16 %v387
      %v956 = vunpack.c.l.b16 %v388
      %v957 = vunpack.c.l.b16 %v389
      %v958 = vunpack.c.l.b16 %v390
      %v959 = vunpack.c.l.b16 %v391
      %v960 = vunpack.c.l.b16 %v392
      %v961 = vunpack.c.l.b16 %v393
      %v962 = vunpack.c.l.b16 %v394
      %v963 = vunpack.c.l.b16 %v395
      %v964 = vunpack.c.l.b16 %v396
      %v965 = vunpack.c.l.b16 %v397
      %v966 = vunpack.c.l.b16 %v398
      %v967 = vunpack.c.l.b16 %v399
      %v968 = vunpack.c.l.b16 %v400
      %v969 = vunpack.c.l.b16 %v401
      %v970 = vunpack.c.l.b16 %v402
      %v971 = vunpack.c.l.b16 %v403
      %v972 = vunpack.c.l.b16 %v404
      %v973 = vunpack.c.l.b16 %v405
      %v974 = vunpack.c.l.b16 %v406
      %v975 = vunpack.c.l.b16 %v407
      %v976 = vunpack.c.l.b16 %v408
      %v977 = vunpack.c.l.b16 %v409
      %v978 = vunpack.c.l.b16 %v410
      %v979 = vunpack.c.l.b16 %v411
      %v980 = vunpack.c.l.b16 %v412
      %v981 = vunpack.c.l.b16 %v413
      %v982 = vunpack.c.l.b16 %v414
      %v983 = vunpack.c.l.b16 %v415
      %v984 = vunpack.c.l.b16 %v416
      %v985 = vunpack.c.l.b16 %v417
      %v986 = vunpack.c.l.b16 %v418
      %v987 = vunpack.c.l.b16 %v419
      %v988 = vunpack.c.l.b16 %v420
      %v989 = vunpack.c.l.b16 %v421
      %v990 = vunpack.c.l.b16 %v422
      %v991 = vunpack.c.l.b16 %v423
      %v992 = vunpack.c.l.b16 %v424
      %v993 = vunpack.c.l.b16 %v425
      %v994 = vunpack.c.l.b16 %v426
      %v995 = vunpack.c.l.b16 %v427
      %v996 = vunpack.c.l.b16 %v428
      %v997 = vunpack.c.l.b16 %v429
      %v998 = vunpack.c.l.b16 %v430
      %v999 = vunpack.c.l.b16 %v431
      %v1000 = vunpack.c.l.b16 %v432
      %v1001 = vunpack.c.l.b16 %v433
      %v1002 = vunpack.c.l.b16 %v434
      %v1003 = vunpack.c.l.b16 %v435
      %v1004 = vunpack.c.l.b16 %v436
      %v1005 = vunpack.c.l.b16 %v437
      %v1006 = vunpack.c.l.b16 %v438
      %v1007 = vunpack.c.l.b16 %v439
      %v1008 = vunpack.c.l.b16 %v440
      %v1009 = vunpack.c.l.b16 %v441
      %v1010 = vunpack.c.l.b16 %v442
      %v1011 = vunpack.c.l.b16 %v443
      %v1012 = vunpack.c.l.b16 %v444
      %v1013 = vunpack.c.l.b16 %v445
      %v1014 = vunpack.c.l.b16 %v446
      %v1015 = vunpack.c.l.b16 %v447
      %v1016 = vunpack.c.l.b16 %v448
      %v1017 = vunpack.c.l.b16 %v449
      %v1018 = vunpack.c.l.b16 %v450
      %v1019 = vunpack.c.l.b16 %v451
      %v1020 = vunpack.c.l.b16 %v452
      %v1021 = vunpack.c.l.b16 %v453
      %v1022 = vunpack.c.l.b16 %v454
      %v1023 = vunpack.c.l.b16 %v455
      %v1024 = vunpack.c.l.b16 %v456
      %v1025 = vunpack.c.l.b16 %v457
      %v1026 = vunpack.c.l.b16 %v458
      %v1027 = vunpack.c.l.b16 %v459
      %v1028 = vunpack.c.l.b16 %v460
      %v1029 = vunpack.c.l.b16 %v461
      %v1030 = vunpack.c.l.b16 %v462
      %v1031 = vpack.c.b16 %v776, %v775
      %v1032 = vpack.c.b16 %v778, %v777
      %v1033 = vpack.c.b16 %v780, %v779
      %v1034 = vpack.c.b16 %v782, %v781
      %v1035 = vpack.c.b16 %v784, %v783
      %v1036 = vpack.c.b16 %v786, %v785
      %v1037 = vpack.c.b16 %v788, %v787
      %v1038 = vpack.c.b16 %v790, %v789
      %v1039 = vpack.c.b16 %v792, %v791
      %v1040 = vpack.c.b16 %v794, %v793
      %v1041 = vpack.c.b16 %v796, %v795
      %v1042 = vpack.c.b16 %v798, %v797
      %v1043 = vpack.c.b16 %v800, %v799
      %v1044 = vpack.c.b16 %v802, %v801
      %v1045 = vpack.c.b16 %v804, %v803
      %v1046 = vpack.c.b16 %v806, %v805
      %v1047 = vpack.c.b16 %v808, %v807
      %v1048 = vpack.c.b16 %v810, %v809
      %v1049 = vpack.c.b16 %v812, %v811
      %v1050 = vpack.c.b16 %v814, %v813
      %v1051 = vpack.c.b16 %v816, %v815
      %v1052 = vpack.c.b16 %v818, %v817
      %v1053 = vpack.c.b16 %v820, %v819
      %v1054 = vpack.c.b16 %v822, %v821
      %v1055 = vpack.c.b16 %v824, %v823
      %v1056 = vpack.c.b16 %v826, %v825
      %v1057 = vpack.c.b16 %v828, %v827
      %v1058 = vpack.c.b16 %v830, %v829
      %v1059 = vpack.c.b16 %v832, %v831
      %v1060 = vpack.c.b16 %v834, %v833
      %v1061 = vpack.c.b16 %v836, %v835
      %v1062 = vpack.c.b16 %v838, %v837
      %v1063 = vpack.c.b16 %v840, %v839
      %v1064 = vpack.c.b16 %v842, %v841
      %v1065 = vpack.c.b16 %v844, %v843
      %v1066 = vpack.c.b16 %v846, %v845
      %v1067 = vpack.c.b16 %v848, %v847
      %v1068 = vpack.c.b16 %v850, %v849
      %v1069 = vpack.c.b16 %v852, %v851
      %v1070 = vpack.c.b16 %v854, %v853
      %v1071 = vpack.c.b16 %v856, %v855
      %v1072 = vpack.c.b16 %v858, %v857
      %v1073 = vpack.c.b16 %v860, %v859
      %v1074 = vpack.c.b16 %v862, %v861
      %v1075 = vpack.c.b16 %v864, %v863
      %v1076 = vpack.c.b16 %v866, %v865
      %v1077 = vpack.c.b16 %v868, %v867
      %v1078 = vpack.c.b16 %v870, %v869
      %v1079 = vpack.c.b16 %v872, %v871
      %v1080 = vpack.c.b16 %v874, %v873
      %v1081 = vpack.c.b16 %v876, %v875
      %v1082 = vpack.c.b16 %v878, %v877
      %v1083 = vpack.c.b16 %v880, %v879
      %v1084 = vpack.c.b16 %v882, %v881
      %v1085 = vpack.c.b16 %v884, %v883
      %v1086 = vpack.c.b16 %v886, %v885
      %v1087 = vpack.c.b16 %v888, %v887
      %v1088 = vpack.c.b16 %v890, %v889
      %v1089 = vpack.c.b16 %v892, %v891
      %v1090 = vpack.c.b16 %v894, %v893
      %v1091 = vpack.c.b16 %v896, %v895
      %v1092 = vpack.c.b16 %v898, %v897
      %v1093 = vpack.c.b16 %v900, %v899
      %v1094 = vpack.c.b16 %v902, %v901
      %v1095 = vpack.c.b16 %v904, %v903
      %v1096 = vpack.c.b16 %v906, %v905
      %v1097 = vpack.c.b16 %v908, %v907
      %v1098 = vpack.c.b16 %v910, %v909
      %v1099 = vpack.c.b16 %v912, %v911
      %v1100 = vpack.c.b16 %v914, %v913
      %v1101 = vpack.c.b16 %v916, %v915
      %v1102 = vpack.c.b16 %v918, %v917
      %v1103 = vpack.c.b16 %v920, %v919
      %v1104 = vpack.c.b16 %v922, %v921
      %v1105 = vpack.c.b16 %v924, %v923
      %v1106 = vpack.c.b16 %v926, %v925
      %v1107 = vpack.c.b16 %v928, %v927
      %v1108 = vpack.c.b16 %v930, %v929
      %v1109 = vpack.c.b16 %v932, %v931
      %v1110 = vpack.c.b16 %v934, %v933
      %v1111 = vpack.c.b16 %v936, %v935
      %v1112 = vpack.c.b16 %v938, %v937
      %v1113 = vpack.c.b16 %v940, %v939
      %v1114 = vpack.c.b16 %v942, %v941
      %v1115 = vpack.c.b16 %v944, %v943
      %v1116 = vpack.c.b16 %v946, %v945
      %v1117 = vpack.c.b16 %v948, %v947
      %v1118 = vpack.c.b16 %v950, %v949
      %v1119 = vpack.c.b16 %v952, %v951
      %v1120 = vpack.c.b16 %v954, %v953
      %v1121 = vpack.c.b16 %v956, %v955
      %v1122 = vpack.c.b16 %v958, %v957
      %v1123 = vpack.c.b16 %v960, %v959
      %v1124 = vpack.c.b16 %v962, %v961
      %v1125 = vpack.c.b16 %v964, %v963
      %v1126 = vpack.c.b16 %v966, %v965
      %v1127 = vpack.c.b16 %v968, %v967
      %v1128 = vpack.c.b16 %v970, %v969
      %v1129 = vpack.c.b16 %v972, %v971
      %v1130 = vpack.c.b16 %v974, %v973
      %v1131 = vpack.c.b16 %v976, %v975
      %v1132 = vpack.c.b16 %v978, %v977
      %v1133 = vpack.c.b16 %v980, %v979
      %v1134 = vpack.c.b16 %v982, %v981
      %v1135 = vpack.c.b16 %v984, %v983
      %v1136 = vpack.c.b16 %v986, %v985
      %v1137 = vpack.c.b16 %v988, %v987
      %v1138 = vpack.c.b16 %v990, %v989
      %v1139 = vpack.c.b16 %v992, %v991
      %v1140 = vpack.c.b16 %v994, %v993
      %v1141 = vpack.c.b16 %v996, %v995
      %v1142 = vpack.c.b16 %v998, %v997
      %v1143 = vpack.c.b16 %v1000, %v999
      %v1144 = vpack.c.b16 %v1002, %v1001
      %v1145 = vpack.c.b16 %v1004, %v1003
      %v1146 = vpack.c.b16 %v1006, %v1005
      %v1147 = vpack.c.b16 %v1008, %v1007
      %v1148 = vpack.c.b16 %v1010, %v1009
      %v1149 = vpack.c.b16 %v1012, %v1011
      %v1150 = vpack.c.b16 %v1014, %v1013
      %v1151 = vpack.c.b16 %v1016, %v1015
      %v1152 = vpack.c.b16 %v1018, %v1017
      %v1153 = vpack.c.b16 %v1020, %v1019
      %v1154 = vpack.c.b16 %v1022, %v1021
      %v1155 = vpack.c.b16 %v1024, %v1023
      %v1156 = vpack.c.b16 %v1026, %v1025
      %v1157 = vpack.c.b16 %v1028, %v1027
      %v1158 = vpack.c.b16 %v1030, %v1029
      %1287 = vmatprep.subr.bf16.mxu0 0
      %1288 = vmatpush1.bf16.msra.mxu0 %v1038
      %1289 = vmatprep.subr.bf16.mxu0 0
      %1290 = vmatpush1.bf16.msra.mxu0 %v1037
      %1291 = vmatprep.subr.bf16.mxu0 0
      %1292 = vmatpush1.bf16.msra.mxu0 %v1036
      %1293 = vmatprep.subr.bf16.mxu0 0
      %1294 = vmatpush1.bf16.msra.mxu0 %v1035
      %1295 = vmatprep.subr.bf16.mxu0 0
      %1296 = vmatpush1.bf16.msra.mxu0 %v1034
      %1297 = vmatprep.subr.bf16.mxu0 0
      %1298 = vmatpush1.bf16.msra.mxu0 %v1033
      %1299 = vmatprep.subr.bf16.mxu0 0
      %1300 = vmatpush1.bf16.msra.mxu0 %v1032
      %1301 = vmatprep.subr.bf16.mxu0 0
      %1302 = vmatpush1.bf16.msra.mxu0 %v1031
      %1303 = vmatprep.subr.bf16.mxu0 0
      %1304 = vmatpush2.bf16.msra.mxu0 %v1046
      %1305 = vmatprep.subr.bf16.mxu0 0
      %1306 = vmatpush2.bf16.msra.mxu0 %v1045
      %1307 = vmatprep.subr.bf16.mxu0 0
      %1308 = vmatpush2.bf16.msra.mxu0 %v1044
      %1309 = vmatprep.subr.bf16.mxu0 0
      %1310 = vmatpush2.bf16.msra.mxu0 %v1043
      %1311 = vmatprep.subr.bf16.mxu0 0
      %1312 = vmatpush2.bf16.msra.mxu0 %v1042
      %1313 = vmatprep.subr.bf16.mxu0 0
      %1314 = vmatpush2.bf16.msra.mxu0 %v1041
      %1315 = vmatprep.subr.bf16.mxu0 0
      %1316 = vmatpush2.bf16.msra.mxu0 %v1040
      %1317 = vmatprep.subr.bf16.mxu0 0
      %1318 = vmatpush2.bf16.msra.mxu0 %v1039
      %1319 = vmatprep.mubr.bf16.mxu0 %v488
      %1320 = vmatmul.mubr.bf16.gmra.mxu0 %v487
      %v1321 = vpop.f32.mrf.mxu0
      %v1322 = vadd.f32 0.0, %v1321
      %v1323 = vpop.f32.mrf.mxu0
      %v1324 = vpop.f32.mrf.mxu0
      %v1325 = vpop.f32.mrf.mxu0
      %1326 = vdwg.mxu0
      %1327 = vmatprep.subr.bf16.mxu0 0
      %1328 = vmatpush1.bf16.msra.mxu0 %v1054
      %1329 = vmatprep.subr.bf16.mxu0 0
      %1330 = vmatpush1.bf16.msra.mxu0 %v1053
      %1331 = vmatprep.subr.bf16.mxu0 0
      %1332 = vmatpush1.bf16.msra.mxu0 %v1052
      %1333 = vmatprep.subr.bf16.mxu0 0
      %1334 = vmatpush1.bf16.msra.mxu0 %v1051
      %1335 = vmatprep.subr.bf16.mxu0 0
      %1336 = vmatpush1.bf16.msra.mxu0 %v1050
      %1337 = vmatprep.subr.bf16.mxu0 0
      %1338 = vmatpush1.bf16.msra.mxu0 %v1049
      %1339 = vmatprep.subr.bf16.mxu0 0
      %1340 = vmatpush1.bf16.msra.mxu0 %v1048
      %1341 = vmatprep.subr.bf16.mxu0 0
      %1342 = vmatpush1.bf16.msra.mxu0 %v1047
      %1343 = vmatprep.subr.bf16.mxu0 0
      %1344 = vmatpush2.bf16.msra.mxu0 %v1062
      %1345 = vmatprep.subr.bf16.mxu0 0
      %1346 = vmatpush2.bf16.msra.mxu0 %v1061
      %1347 = vmatprep.subr.bf16.mxu0 0
      %1348 = vmatpush2.bf16.msra.mxu0 %v1060
      %1349 = vmatprep.subr.bf16.mxu0 0
      %1350 = vmatpush2.bf16.msra.mxu0 %v1059
      %1351 = vmatprep.subr.bf16.mxu0 0
      %1352 = vmatpush2.bf16.msra.mxu0 %v1058
      %1353 = vmatprep.subr.bf16.mxu0 0
      %1354 = vmatpush2.bf16.msra.mxu0 %v1057
      %1355 = vmatprep.subr.bf16.mxu0 0
      %1356 = vmatpush2.bf16.msra.mxu0 %v1056
      %1357 = vmatprep.subr.bf16.mxu0 0
      %1358 = vmatpush2.bf16.msra.mxu0 %v1055
      %1359 = vmatprep.mubr.bf16.mxu0 %v490
      %1360 = vmatmul.mubr.bf16.gmra.mxu0 %v489
      %v1361 = vpop.f32.mrf.mxu0
      %v1362 = vadd.f32 %v1322, %v1361
      %v1363 = vpop.f32.mrf.mxu0
      %v1364 = vpop.f32.mrf.mxu0
      %v1365 = vpop.f32.mrf.mxu0
      %1366 = vdwg.mxu0
      %1367 = vmatprep.subr.bf16.mxu0 0
      %1368 = vmatpush1.bf16.msra.mxu0 %v1070
      %1369 = vmatprep.subr.bf16.mxu0 0
      %1370 = vmatpush1.bf16.msra.mxu0 %v1069
      %1371 = vmatprep.subr.bf16.mxu0 0
      %1372 = vmatpush1.bf16.msra.mxu0 %v1068
      %1373 = vmatprep.subr.bf16.mxu0 0
      %1374 = vmatpush1.bf16.msra.mxu0 %v1067
      %1375 = vmatprep.subr.bf16.mxu0 0
      %1376 = vmatpush1.bf16.msra.mxu0 %v1066
      %1377 = vmatprep.subr.bf16.mxu0 0
      %1378 = vmatpush1.bf16.msra.mxu0 %v1065
      %1379 = vmatprep.subr.bf16.mxu0 0
      %1380 = vmatpush1.bf16.msra.mxu0 %v1064
      %1381 = vmatprep.subr.bf16.mxu0 0
      %1382 = vmatpush1.bf16.msra.mxu0 %v1063
      %1383 = vmatprep.subr.bf16.mxu0 0
      %1384 = vmatpush2.bf16.msra.mxu0 %v1078
      %1385 = vmatprep.subr.bf16.mxu0 0
      %1386 = vmatpush2.bf16.msra.mxu0 %v1077
      %1387 = vmatprep.subr.bf16.mxu0 0
      %1388 = vmatpush2.bf16.msra.mxu0 %v1076
      %1389 = vmatprep.subr.bf16.mxu0 0
      %1390 = vmatpush2.bf16.msra.mxu0 %v1075
      %1391 = vmatprep.subr.bf16.mxu0 0
      %1392 = vmatpush2.bf16.msra.mxu0 %v1074
      %1393 = vmatprep.subr.bf16.mxu0 0
      %1394 = vmatpush2.bf16.msra.mxu0 %v1073
      %1395 = vmatprep.subr.bf16.mxu0 0
      %1396 = vmatpush2.bf16.msra.mxu0 %v1072
      %1397 = vmatprep.subr.bf16.mxu0 0
      %1398 = vmatpush2.bf16.msra.mxu0 %v1071
      %1399 = vmatprep.mubr.bf16.mxu0 %v492
      %1400 = vmatmul.mubr.bf16.gmra.mxu0 %v491
      %v1401 = vpop.f32.mrf.mxu0
      %v1402 = vadd.f32 %v1362, %v1401
      %v1403 = vpop.f32.mrf.mxu0
      %v1404 = vpop.f32.mrf.mxu0
      %v1405 = vpop.f32.mrf.mxu0
      %1406 = vdwg.mxu0
      %1407 = vmatprep.subr.bf16.mxu0 0
      %1408 = vmatpush1.bf16.msra.mxu0 %v1086
      %1409 = vmatprep.subr.bf16.mxu0 0
      %1410 = vmatpush1.bf16.msra.mxu0 %v1085
      %1411 = vmatprep.subr.bf16.mxu0 0
      %1412 = vmatpush1.bf16.msra.mxu0 %v1084
      %1413 = vmatprep.subr.bf16.mxu0 0
      %1414 = vmatpush1.bf16.msra.mxu0 %v1083
      %1415 = vmatprep.subr.bf16.mxu0 0
      %1416 = vmatpush1.bf16.msra.mxu0 %v1082
      %1417 = vmatprep.subr.bf16.mxu0 0
      %1418 = vmatpush1.bf16.msra.mxu0 %v1081
      %1419 = vmatprep.subr.bf16.mxu0 0
      %1420 = vmatpush1.bf16.msra.mxu0 %v1080
      %1421 = vmatprep.subr.bf16.mxu0 0
      %1422 = vmatpush1.bf16.msra.mxu0 %v1079
      %1423 = vmatprep.subr.bf16.mxu0 0
      %1424 = vmatpush2.bf16.msra.mxu0 %v1094
      %1425 = vmatprep.subr.bf16.mxu0 0
      %1426 = vmatpush2.bf16.msra.mxu0 %v1093
      %1427 = vmatprep.subr.bf16.mxu0 0
      %1428 = vmatpush2.bf16.msra.mxu0 %v1092
      %1429 = vmatprep.subr.bf16.mxu0 0
      %1430 = vmatpush2.bf16.msra.mxu0 %v1091
      %1431 = vmatprep.subr.bf16.mxu0 0
      %1432 = vmatpush2.bf16.msra.mxu0 %v1090
      %1433 = vmatprep.subr.bf16.mxu0 0
      %1434 = vmatpush2.bf16.msra.mxu0 %v1089
      %1435 = vmatprep.subr.bf16.mxu0 0
      %1436 = vmatpush2.bf16.msra.mxu0 %v1088
      %1437 = vmatprep.subr.bf16.mxu0 0
      %1438 = vmatpush2.bf16.msra.mxu0 %v1087
      %1439 = vmatprep.mubr.bf16.mxu0 %v494
      %1440 = vmatmul.mubr.bf16.gmra.mxu0 %v493
      %v1441 = vpop.f32.mrf.mxu0
      %v1442 = vadd.f32 %v1402, %v1441
      %v1443 = vpop.f32.mrf.mxu0
      %v1444 = vpop.f32.mrf.mxu0
      %v1445 = vpop.f32.mrf.mxu0
      %1446 = vdwg.mxu0
      %1447 = vmatprep.subr.bf16.mxu0 0
      %1448 = vmatpush1.bf16.msra.mxu0 %v1102
      %1449 = vmatprep.subr.bf16.mxu0 0
      %1450 = vmatpush1.bf16.msra.mxu0 %v1101
      %1451 = vmatprep.subr.bf16.mxu0 0
      %1452 = vmatpush1.bf16.msra.mxu0 %v1100
      %1453 = vmatprep.subr.bf16.mxu0 0
      %1454 = vmatpush1.bf16.msra.mxu0 %v1099
      %1455 = vmatprep.subr.bf16.mxu0 0
      %1456 = vmatpush1.bf16.msra.mxu0 %v1098
      %1457 = vmatprep.subr.bf16.mxu0 0
      %1458 = vmatpush1.bf16.msra.mxu0 %v1097
      %1459 = vmatprep.subr.bf16.mxu0 0
      %1460 = vmatpush1.bf16.msra.mxu0 %v1096
      %1461 = vmatprep.subr.bf16.mxu0 0
      %1462 = vmatpush1.bf16.msra.mxu0 %v1095
      %1463 = vmatprep.subr.bf16.mxu0 0
      %1464 = vmatpush2.bf16.msra.mxu0 %v1110
      %1465 = vmatprep.subr.bf16.mxu0 0
      %1466 = vmatpush2.bf16.msra.mxu0 %v1109
      %1467 = vmatprep.subr.bf16.mxu0 0
      %1468 = vmatpush2.bf16.msra.mxu0 %v1108
      %1469 = vmatprep.subr.bf16.mxu0 0
      %1470 = vmatpush2.bf16.msra.mxu0 %v1107
      %1471 = vmatprep.subr.bf16.mxu0 0
      %1472 = vmatpush2.bf16.msra.mxu0 %v1106
      %1473 = vmatprep.subr.bf16.mxu0 0
      %1474 = vmatpush2.bf16.msra.mxu0 %v1105
      %1475 = vmatprep.subr.bf16.mxu0 0
      %1476 = vmatpush2.bf16.msra.mxu0 %v1104
      %1477 = vmatprep.subr.bf16.mxu0 0
      %1478 = vmatpush2.bf16.msra.mxu0 %v1103
      %1479 = vmatprep.mubr.bf16.mxu0 %v496
      %1480 = vmatmul.mubr.bf16.gmra.mxu0 %v495
      %v1481 = vpop.f32.mrf.mxu0
      %v1482 = vadd.f32 %v1442, %v1481
      %v1483 = vpop.f32.mrf.mxu0
      %v1484 = vpop.f32.mrf.mxu0
      %v1485 = vpop.f32.mrf.mxu0
      %1486 = vdwg.mxu0
      %1487 = vmatprep.subr.bf16.mxu0 0
      %1488 = vmatpush1.bf16.msra.mxu0 %v1118
      %1489 = vmatprep.subr.bf16.mxu0 0
      %1490 = vmatpush1.bf16.msra.mxu0 %v1117
      %1491 = vmatprep.subr.bf16.mxu0 0
      %1492 = vmatpush1.bf16.msra.mxu0 %v1116
      %1493 = vmatprep.subr.bf16.mxu0 0
      %1494 = vmatpush1.bf16.msra.mxu0 %v1115
      %1495 = vmatprep.subr.bf16.mxu0 0
      %1496 = vmatpush1.bf16.msra.mxu0 %v1114
      %1497 = vmatprep.subr.bf16.mxu0 0
      %1498 = vmatpush1.bf16.msra.mxu0 %v1113
      %1499 = vmatprep.subr.bf16.mxu0 0
      %1500 = vmatpush1.bf16.msra.mxu0 %v1112
      %1501 = vmatprep.subr.bf16.mxu0 0
      %1502 = vmatpush1.bf16.msra.mxu0 %v1111
      %1503 = vmatprep.subr.bf16.mxu0 0
      %1504 = vmatpush2.bf16.msra.mxu0 %v1126
      %1505 = vmatprep.subr.bf16.mxu0 0
      %1506 = vmatpush2.bf16.msra.mxu0 %v1125
      %1507 = vmatprep.subr.bf16.mxu0 0
      %1508 = vmatpush2.bf16.msra.mxu0 %v1124
      %1509 = vmatprep.subr.bf16.mxu0 0
      %1510 = vmatpush2.bf16.msra.mxu0 %v1123
      %1511 = vmatprep.subr.bf16.mxu0 0
      %1512 = vmatpush2.bf16.msra.mxu0 %v1122
      %1513 = vmatprep.subr.bf16.mxu0 0
      %1514 = vmatpush2.bf16.msra.mxu0 %v1121
      %1515 = vmatprep.subr.bf16.mxu0 0
      %1516 = vmatpush2.bf16.msra.mxu0 %v1120
      %1517 = vmatprep.subr.bf16.mxu0 0
      %1518 = vmatpush2.bf16.msra.mxu0 %v1119
      %1519 = vmatprep.mubr.bf16.mxu0 %v498
      %1520 = vmatmul.mubr.bf16.gmra.mxu0 %v497
      %v1521 = vpop.f32.mrf.mxu0
      %v1522 = vadd.f32 %v1482, %v1521
      %v1523 = vpop.f32.mrf.mxu0
      %v1524 = vpop.f32.mrf.mxu0
      %v1525 = vpop.f32.mrf.mxu0
      %1526 = vdwg.mxu0
      %1527 = vmatprep.subr.bf16.mxu0 0
      %1528 = vmatpush1.bf16.msra.mxu0 %v1134
      %1529 = vmatprep.subr.bf16.mxu0 0
      %1530 = vmatpush1.bf16.msra.mxu0 %v1133
      %1531 = vmatprep.subr.bf16.mxu0 0
      %1532 = vmatpush1.bf16.msra.mxu0 %v1132
      %1533 = vmatprep.subr.bf16.mxu0 0
      %1534 = vmatpush1.bf16.msra.mxu0 %v1131
      %1535 = vmatprep.subr.bf16.mxu0 0
      %1536 = vmatpush1.bf16.msra.mxu0 %v1130
      %1537 = vmatprep.subr.bf16.mxu0 0
      %1538 = vmatpush1.bf16.msra.mxu0 %v1129
      %1539 = vmatprep.subr.bf16.mxu0 0
      %1540 = vmatpush1.bf16.msra.mxu0 %v1128
      %1541 = vmatprep.subr.bf16.mxu0 0
      %1542 = vmatpush1.bf16.msra.mxu0 %v1127
      %1543 = vmatprep.subr.bf16.mxu0 0
      %1544 = vmatpush2.bf16.msra.mxu0 %v1142
      %1545 = vmatprep.subr.bf16.mxu0 0
      %1546 = vmatpush2.bf16.msra.mxu0 %v1141
      %1547 = vmatprep.subr.bf16.mxu0 0
      %1548 = vmatpush2.bf16.msra.mxu0 %v1140
      %1549 = vmatprep.subr.bf16.mxu0 0
      %1550 = vmatpush2.bf16.msra.mxu0 %v1139
      %1551 = vmatprep.subr.bf16.mxu0 0
      %1552 = vmatpush2.bf16.msra.mxu0 %v1138
      %1553 = vmatprep.subr.bf16.mxu0 0
      %1554 = vmatpush2.bf16.msra.mxu0 %v1137
      %1555 = vmatprep.subr.bf16.mxu0 0
      %1556 = vmatpush2.bf16.msra.mxu0 %v1136
      %1557 = vmatprep.subr.bf16.mxu0 0
      %1558 = vmatpush2.bf16.msra.mxu0 %v1135
      %1559 = vmatprep.mubr.bf16.mxu0 %v500
      %1560 = vmatmul.mubr.bf16.gmra.mxu0 %v499
      %v1561 = vpop.f32.mrf.mxu0
      %v1562 = vadd.f32 %v1522, %v1561
      %v1563 = vpop.f32.mrf.mxu0
      %v1564 = vpop.f32.mrf.mxu0
      %v1565 = vpop.f32.mrf.mxu0
      %1566 = vdwg.mxu0
      %1567 = vmatprep.subr.bf16.mxu0 0
      %1568 = vmatpush1.bf16.msra.mxu0 %v1150
      %1569 = vmatprep.subr.bf16.mxu0 0
      %1570 = vmatpush1.bf16.msra.mxu0 %v1149
      %1571 = vmatprep.subr.bf16.mxu0 0
      %1572 = vmatpush1.bf16.msra.mxu0 %v1148
      %1573 = vmatprep.subr.bf16.mxu0 0
      %1574 = vmatpush1.bf16.msra.mxu0 %v1147
      %1575 = vmatprep.subr.bf16.mxu0 0
      %1576 = vmatpush1.bf16.msra.mxu0 %v1146
      %1577 = vmatprep.subr.bf16.mxu0 0
      %1578 = vmatpush1.bf16.msra.mxu0 %v1145
      %1579 = vmatprep.subr.bf16.mxu0 0
      %1580 = vmatpush1.bf16.msra.mxu0 %v1144
      %1581 = vmatprep.subr.bf16.mxu0 0
      %1582 = vmatpush1.bf16.msra.mxu0 %v1143
      %1583 = vmatprep.subr.bf16.mxu0 0
      %1584 = vmatpush2.bf16.msra.mxu0 %v1158
      %1585 = vmatprep.subr.bf16.mxu0 0
      %1586 = vmatpush2.bf16.msra.mxu0 %v1157
      %1587 = vmatprep.subr.bf16.mxu0 0
      %1588 = vmatpush2.bf16.msra.mxu0 %v1156
      %1589 = vmatprep.subr.bf16.mxu0 0
      %1590 = vmatpush2.bf16.msra.mxu0 %v1155
      %1591 = vmatprep.subr.bf16.mxu0 0
      %1592 = vmatpush2.bf16.msra.mxu0 %v1154
      %1593 = vmatprep.subr.bf16.mxu0 0
      %1594 = vmatpush2.bf16.msra.mxu0 %v1153
      %1595 = vmatprep.subr.bf16.mxu0 0
      %1596 = vmatpush2.bf16.msra.mxu0 %v1152
      %1597 = vmatprep.subr.bf16.mxu0 0
      %1598 = vmatpush2.bf16.msra.mxu0 %v1151
      %1599 = vmatprep.mubr.bf16.mxu0 %v502
      %1600 = vmatmul.mubr.bf16.gmra.mxu0 %v501
      %v1601 = vpop.f32.mrf.mxu0
      %v1602 = vadd.f32 %v1562, %v1601
      %v1603 = vpop.f32.mrf.mxu0
      %v1604 = vpop.f32.mrf.mxu0
      %v1605 = vpop.f32.mrf.mxu0
      %1606 = vdwg.mxu0
      %v1607 = vadd.f32 %v198, %v1602
      %1608 = vst [vmem:[#allocation2] sm:$0xff] %v1607
      %p1609 = scmp.eq.s32.totalorder %s18, 3
      // Predicated region
      $region33: #{discriminator_forward.9} parent=27 // pred_check
        %p1610 = pneg %p1609
      $region34: #{discriminator_forward.9} parent=27 // pred_check_branch
        %1612 = sbr.rel (%p1610) target = $region36
      $region35: #{discriminator_forward.9} parent=27 // pred_region
        %v1613 = vld [vmem:[#allocation2] sm:$0xff]
        %v1614 = vxor.u32 %v1613, 2147483648
        %v1615 = vmul.f32 %v1614, 1.442695
        %v1616 = vpow.pop %v1615
        %v1617 = vadd.f32 %v1616, 1.0
        %v1618 = vrcp.pop %v1617
        %v1619 = vmul.f32 1.0, %v1618
        %1620 = vst [vmem:[%s191] sm:$0xff] %v1619
      $region36: #{discriminator_forward.9} parent=27 // pred_fallthru
        _
      %p1621 = scmp.lt.s32.totalorder %s17, 0
      %s1622 = scalar_select %p1621, %s17, 0
      %s1623 = smul.addr %s1622, 8
      %s1624 = scalar_lea.vmem %s2, %s1623
      // Predicated region
      $region37: #{discriminator_forward.9} parent=27 // pred_check
        %p1625 = pneg %p97
      $region38: #{discriminator_forward.9} parent=27 // pred_check_branch
        %1627 = sbr.rel (%p1625) target = $region40
      $region39: #{discriminator_forward.9} parent=27 // pred_region
        _
      $region40: #{discriminator_forward.9} parent=27 // pred_fallthru
        _
      // Predicated region
      $region41: #{discriminator_forward.9} parent=27 // pred_check
        %p1628 = pneg %p97
      $region42: #{discriminator_forward.9} parent=27 // pred_check_branch
        %1630 = sbr.rel (%p1628) target = $region44
      $region43: #{discriminator_forward.9} parent=27 // pred_region
        %p1631 = scmp.lt.s32.totalorder %s17, 0
        %s1632 = scalar_select %p1631, %s17, 0
        %s1633 = smul.addr %s1632, 8
        %s1634 = scalar_lea.vmem %s2, %s1633
      $region44: #{discriminator_forward.9} parent=27 // pred_fallthru
        _
    $region28: #{discriminator_forward.9} parent=5 // pred_fallthru
      _
    %p1635 = scmp.le.s32.totalorder 2, %s8
    // Predicated region
    $region45: #{discriminator_forward.9} parent=5 // pred_check
      %p1636 = pneg %p1635
    $region46: #{discriminator_forward.9} parent=5 // pred_check_branch
      %1638 = sbr.rel (%p1636) target = $region48
    $region47: #{discriminator_forward.9} parent=5 // pred_region
      %s1639 = ssub.s32 %s8, 2
    $region48: #{discriminator_forward.9} parent=5 // pred_fallthru
      _
  $region6: #{discriminator_forward.9} parent=0 // loop_footer
    %s12 = sadd.s32 1, %s8
  $region7: #{discriminator_forward.9} parent=0 // loop_footer_branch
    %7 = sbr.rel target = $region3
  $region8: #{discriminator_forward.9} parent=0 // loop_exit
    _

</llo_original>
